<compile_context>
chip_gen: v7x
topology: tpu7x:2x2x1
jax: 0.10.0
libtpu: 0.0.40
codegen_flags: <defaults>
</compile_context>

<pallas_src>
import jax
import jax.numpy as jnp
import numpy as np
from jax.experimental import pallas as pl
from jax.experimental.pallas import tpu as pltpu

VOCAB = 256
EMB = 128
HID = 128
SEQ = 8
BATCH = 32
BT = 8            # batch tile per grid step
NUM_LAYERS = 2
EPS = 1e-5        # torch.nn.LayerNorm default eps


def lstm_lm_kernel(idx_ref, table_ref, g_e_ref, b_e_ref,
                   w_ih0_ref, w_hh0_ref, b0_ref,
                   w_ih1_ref, w_hh1_ref, b1_ref,
                   g_h_ref, b_h_ref, w_fc_ref, b_fc_ref,
                   h0_ref, c0_ref,
                   logp_ref, h_n_ref, c_n_ref):
    bt, seq = idx_ref.shape
    vocab = table_ref.shape[0]

    idx = idx_ref[...]                      # (BT, SEQ) int32, lane-dense
    table = table_ref[...]                  # (V, E)
    g_e = g_e_ref[...]
    b_e = b_e_ref[...]

    w_ih = (w_ih0_ref[...], w_ih1_ref[...])     # (E,4H), (H,4H)
    w_hh = (w_hh0_ref[...], w_hh1_ref[...])     # (H,4H)
    bias = (b0_ref[...], b1_ref[...])           # (1,4H)  (= b_ih + b_hh)

    h = [h0_ref[l] for l in range(NUM_LAYERS)]  # each (BT, H)
    c = [c0_ref[l] for l in range(NUM_LAYERS)]

    lane_iota = jax.lax.broadcasted_iota(jnp.int32, (bt, vocab), 1)

    def layer_norm(x, gamma, beta):
        # single-pass moments: one cross-lane reduction pair instead of two
        m1 = jnp.mean(x, axis=-1, keepdims=True)
        m2 = jnp.mean(x * x, axis=-1, keepdims=True)
        var = m2 - m1 * m1
        return (x - m1) * jax.lax.rsqrt(var + EPS) * gamma + beta

    # static unroll over the (short) sequence; recurrence is inherently serial
    for t in range(seq):
        ids_t = idx[:, t:t + 1]                              # (BT, 1)
        onehot = (lane_iota == ids_t).astype(table.dtype)    # (BT, V)
        emb = jnp.dot(onehot, table,
                      preferred_element_type=jnp.float32)    # (BT, E)
        x = layer_norm(emb, g_e, b_e)
        # dropout_emb: identity at inference

        for l in range(NUM_LAYERS):
            gates = (jnp.dot(x, w_ih[l], preferred_element_type=jnp.float32)
                     + jnp.dot(h[l], w_hh[l], preferred_element_type=jnp.float32)
                     + bias[l])                              # (BT, 4H)
            i_g = jax.nn.sigmoid(gates[:, 0 * HID:1 * HID])
            f_g = jax.nn.sigmoid(gates[:, 1 * HID:2 * HID])
            g_g = jnp.tanh(gates[:, 2 * HID:3 * HID])
            o_g = jax.nn.sigmoid(gates[:, 3 * HID:4 * HID])
            c[l] = f_g * c[l] + i_g * g_g
            h[l] = o_g * jnp.tanh(c[l])
            x = h[l]

    # LayerNorm on the top layer's last-step output (LN is per-position, so
    # normalizing only the last step equals norm-then-slice in the module)
    out = layer_norm(h[NUM_LAYERS - 1], g_h_ref[...], b_h_ref[...])
    # dropout_lstm_output: identity at inference

    logits = (jnp.dot(out, w_fc_ref[...], preferred_element_type=jnp.float32)
              + b_fc_ref[...])                               # (BT, V)
    m = jnp.max(logits, axis=-1, keepdims=True)
    z = logits - m
    lse = jnp.log(jnp.sum(jnp.exp(z), axis=-1, keepdims=True))
    logp_ref[...] = z - lse

    for l in range(NUM_LAYERS):
        h_n_ref[l] = h[l]
        c_n_ref[l] = c[l]


def lstm_lm_forward(input_seq, hidden, params):
    h0, c0 = hidden
    B, T = input_seq.shape
    assert B % BT == 0
    grid = (B // BT,)

    def full(shape):
        return pl.BlockSpec(shape, lambda b: (0,) * len(shape))

    in_specs = [
        pl.BlockSpec((BT, T), lambda b: (b, 0)),                 # idx
        full((VOCAB, EMB)),                                      # embedding table
        full((1, EMB)), full((1, EMB)),                          # g_e, b_e
        full((EMB, 4 * HID)), full((HID, 4 * HID)), full((1, 4 * HID)),  # layer 0
        full((HID, 4 * HID)), full((HID, 4 * HID)), full((1, 4 * HID)),  # layer 1
        full((1, HID)), full((1, HID)),                          # g_h, b_h
        full((HID, VOCAB)), full((1, VOCAB)),                    # fc
        pl.BlockSpec((NUM_LAYERS, BT, HID), lambda b: (0, b, 0)),  # h0
        pl.BlockSpec((NUM_LAYERS, BT, HID), lambda b: (0, b, 0)),  # c0
    ]
    out_specs = (
        pl.BlockSpec((BT, VOCAB), lambda b: (b, 0)),
        pl.BlockSpec((NUM_LAYERS, BT, HID), lambda b: (0, b, 0)),
        pl.BlockSpec((NUM_LAYERS, BT, HID), lambda b: (0, b, 0)),
    )
    out_shape = (
        jax.ShapeDtypeStruct((B, VOCAB), jnp.float32),
        jax.ShapeDtypeStruct((NUM_LAYERS, B, HID), jnp.float32),
        jax.ShapeDtypeStruct((NUM_LAYERS, B, HID), jnp.float32),
    )

    logp, h_n, c_n = pl.pallas_call(
        lstm_lm_kernel,
        grid=grid,
        in_specs=in_specs,
        out_specs=out_specs,
        out_shape=out_shape,
        compiler_params=pltpu.CompilerParams(
            dimension_semantics=("parallel",)),
    )(input_seq.astype(jnp.int32), params["table"],
      params["g_e"], params["b_e"],
      params["w_ih0"], params["w_hh0"], params["b0"],
      params["w_ih1"], params["w_hh1"], params["b1"],
      params["g_h"], params["b_h"],
      params["w_fc"], params["b_fc"],
      h0, c0)
    return logp, (h_n, c_n)


def reference_forward(input_seq, hidden, p):
    # pure-JAX reference mirroring eval-mode PyTorch LSTMLM semantics
    def ln(x, g, b):
        mu = x.mean(-1, keepdims=True)
        var = ((x - mu) ** 2).mean(-1, keepdims=True)
        return (x - mu) / jnp.sqrt(var + EPS) * g + b

    emb = ln(p["table"][input_seq], p["g_e"][0], p["b_e"][0])   # (B, T, E)
    h0, c0 = hidden
    h = [h0[l] for l in range(NUM_LAYERS)]
    c = [c0[l] for l in range(NUM_LAYERS)]
    w_ih = [p["w_ih0"], p["w_ih1"]]
    w_hh = [p["w_hh0"], p["w_hh1"]]
    bias = [p["b0"], p["b1"]]

    x_last = None
    for t in range(input_seq.shape[1]):
        x = emb[:, t, :]
        for l in range(NUM_LAYERS):
            gates = x @ w_ih[l] + h[l] @ w_hh[l] + bias[l]
            i_g = jax.nn.sigmoid(gates[:, 0 * HID:1 * HID])
            f_g = jax.nn.sigmoid(gates[:, 1 * HID:2 * HID])
            g_g = jnp.tanh(gates[:, 2 * HID:3 * HID])
            o_g = jax.nn.sigmoid(gates[:, 3 * HID:4 * HID])
            c[l] = f_g * c[l] + i_g * g_g
            h[l] = o_g * jnp.tanh(c[l])
            x = h[l]
        x_last = x

    out = ln(x_last, p["g_h"][0], p["b_h"][0])
    logits = out @ p["w_fc"] + p["b_fc"][0]
    return jax.nn.log_softmax(logits, axis=1), jnp.stack(h), jnp.stack(c)


if __name__ == "__main__":
    key = jax.random.PRNGKey(0)
    ks = jax.random.split(key, 10)

    def lin(k, shape, scale=0.08):
        return jax.random.normal(k, shape, jnp.float32) * scale

    table = jax.random.normal(ks[0], (VOCAB, EMB), jnp.float32) * 0.1
    table = table.at[0].set(0.0)                 # padding_idx=0 -> zero row

    params = dict(
        table=table,
        g_e=jnp.ones((1, EMB), jnp.float32),
        b_e=jnp.zeros((1, EMB), jnp.float32),
        w_ih0=lin(ks[1], (EMB, 4 * HID)),        # (in, 4H) = W_ih^T, gate order i,f,g,o
        w_hh0=lin(ks[2], (HID, 4 * HID)),
        b0=lin(ks[3], (1, 4 * HID), 0.01),       # b_ih + b_hh combined
        w_ih1=lin(ks[4], (HID, 4 * HID)),
        w_hh1=lin(ks[5], (HID, 4 * HID)),
        b1=lin(ks[6], (1, 4 * HID), 0.01),
        g_h=jnp.ones((1, HID), jnp.float32),
        b_h=jnp.zeros((1, HID), jnp.float32),
        w_fc=lin(ks[7], (HID, VOCAB)),
        b_fc=lin(ks[8], (1, VOCAB), 0.01),
    )

    input_seq = jax.random.randint(ks[9], (BATCH, SEQ), 0, VOCAB, dtype=jnp.int32)
    input_seq = input_seq.at[:, 0].set(0)        # exercise padding_idx rows

    # init_hidden(batch_size): zeros for (h0, c0)
    h0 = jnp.zeros((NUM_LAYERS, BATCH, HID), jnp.float32)
    c0 = jnp.zeros((NUM_LAYERS, BATCH, HID), jnp.float32)

    logp, (h_n, c_n) = lstm_lm_forward(input_seq, (h0, c0), params)
    logp = jax.block_until_ready(logp)

    ref_logp, ref_h, ref_c = reference_forward(input_seq, (h0, c0), params)

    assert logp.shape == (BATCH, VOCAB)
    assert h_n.shape == (NUM_LAYERS, BATCH, HID)
    assert c_n.shape == (NUM_LAYERS, BATCH, HID)
    assert np.allclose(np.asarray(logp), np.asarray(ref_logp), atol=1e-3, rtol=1e-3)
    assert np.allclose(np.asarray(h_n), np.asarray(ref_h), atol=1e-3, rtol=1e-3)
    assert np.allclose(np.asarray(c_n), np.asarray(ref_c), atol=1e-3, rtol=1e-3)
    print("KERNEL_OK")
</pallas_src>

<mosaic_0001>
module attributes {stable_mosaic.version = 11 : i64} {
  func.func @lstm_lm_kernel(%arg0: i32, %arg1: memref<8x8xi32, #tpu.memory_space<vmem>>, %arg2: memref<256x128xf32, #tpu.memory_space<vmem>>, %arg3: memref<1x128xf32, #tpu.memory_space<vmem>>, %arg4: memref<1x128xf32, #tpu.memory_space<vmem>>, %arg5: memref<128x512xf32, #tpu.memory_space<vmem>>, %arg6: memref<128x512xf32, #tpu.memory_space<vmem>>, %arg7: memref<1x512xf32, #tpu.memory_space<vmem>>, %arg8: memref<128x512xf32, #tpu.memory_space<vmem>>, %arg9: memref<128x512xf32, #tpu.memory_space<vmem>>, %arg10: memref<1x512xf32, #tpu.memory_space<vmem>>, %arg11: memref<1x128xf32, #tpu.memory_space<vmem>>, %arg12: memref<1x128xf32, #tpu.memory_space<vmem>>, %arg13: memref<128x256xf32, #tpu.memory_space<vmem>>, %arg14: memref<1x256xf32, #tpu.memory_space<vmem>>, %arg15: memref<2x8x128xf32, #tpu.memory_space<vmem>>, %arg16: memref<2x8x128xf32, #tpu.memory_space<vmem>>, %arg17: memref<8x256xf32, #tpu.memory_space<vmem>>, %arg18: memref<2x8x128xf32, #tpu.memory_space<vmem>>, %arg19: memref<2x8x128xf32, #tpu.memory_space<vmem>>) attributes {dimension_semantics = [#tpu.dimension_semantics<parallel>], iteration_bounds = array<i64: 4>, scalar_prefetch = 0 : i64, scratch_operands = 0 : i64, tpu.core_type = #tpu.core_type<tc>, window_params = [{transform_indices = @transform_0, window_bounds = array<i64: 8, 8>}, {pipeline_mode = #tpu.pipeline_mode<synchronous>, transform_indices = @transform_1, window_bounds = array<i64: 256, 128>}, {pipeline_mode = #tpu.pipeline_mode<synchronous>, transform_indices = @transform_2, window_bounds = array<i64: 1, 128>}, {pipeline_mode = #tpu.pipeline_mode<synchronous>, transform_indices = @transform_3, window_bounds = array<i64: 1, 128>}, {pipeline_mode = #tpu.pipeline_mode<synchronous>, transform_indices = @transform_4, window_bounds = array<i64: 128, 512>}, {pipeline_mode = #tpu.pipeline_mode<synchronous>, transform_indices = @transform_5, window_bounds = array<i64: 128, 512>}, {pipeline_mode = #tpu.pipeline_mode<synchronous>, transform_indices = @transform_6, window_bounds = array<i64: 1, 512>}, {pipeline_mode = #tpu.pipeline_mode<synchronous>, transform_indices = @transform_7, window_bounds = array<i64: 128, 512>}, {pipeline_mode = #tpu.pipeline_mode<synchronous>, transform_indices = @transform_8, window_bounds = array<i64: 128, 512>}, {pipeline_mode = #tpu.pipeline_mode<synchronous>, transform_indices = @transform_9, window_bounds = array<i64: 1, 512>}, {pipeline_mode = #tpu.pipeline_mode<synchronous>, transform_indices = @transform_10, window_bounds = array<i64: 1, 128>}, {pipeline_mode = #tpu.pipeline_mode<synchronous>, transform_indices = @transform_11, window_bounds = array<i64: 1, 128>}, {pipeline_mode = #tpu.pipeline_mode<synchronous>, transform_indices = @transform_12, window_bounds = array<i64: 128, 256>}, {pipeline_mode = #tpu.pipeline_mode<synchronous>, transform_indices = @transform_13, window_bounds = array<i64: 1, 256>}, {transform_indices = @transform_14, window_bounds = array<i64: 2, 8, 128>}, {transform_indices = @transform_15, window_bounds = array<i64: 2, 8, 128>}, {transform_indices = @transform_16, window_bounds = array<i64: 8, 256>}, {transform_indices = @transform_17, window_bounds = array<i64: 2, 8, 128>}, {transform_indices = @transform_18, window_bounds = array<i64: 2, 8, 128>}]} {
    %c0 = arith.constant 0 : index
    %c0_0 = arith.constant 0 : index
    %0 = vector.load %arg1[%c0, %c0_0] : memref<8x8xi32, #tpu.memory_space<vmem>>, vector<8x8xi32>
    %c0_1 = arith.constant 0 : index
    %c0_2 = arith.constant 0 : index
    %1 = vector.load %arg2[%c0_1, %c0_2] : memref<256x128xf32, #tpu.memory_space<vmem>>, vector<256x128xf32>
    %c0_3 = arith.constant 0 : index
    %c0_4 = arith.constant 0 : index
    %2 = vector.load %arg3[%c0_3, %c0_4] : memref<1x128xf32, #tpu.memory_space<vmem>>, vector<1x128xf32>
    %c0_5 = arith.constant 0 : index
    %c0_6 = arith.constant 0 : index
    %3 = vector.load %arg4[%c0_5, %c0_6] : memref<1x128xf32, #tpu.memory_space<vmem>>, vector<1x128xf32>
    %c0_7 = arith.constant 0 : index
    %c0_8 = arith.constant 0 : index
    %4 = vector.load %arg5[%c0_7, %c0_8] : memref<128x512xf32, #tpu.memory_space<vmem>>, vector<128x512xf32>
    %c0_9 = arith.constant 0 : index
    %c0_10 = arith.constant 0 : index
    %5 = vector.load %arg8[%c0_9, %c0_10] : memref<128x512xf32, #tpu.memory_space<vmem>>, vector<128x512xf32>
    %c0_11 = arith.constant 0 : index
    %c0_12 = arith.constant 0 : index
    %6 = vector.load %arg6[%c0_11, %c0_12] : memref<128x512xf32, #tpu.memory_space<vmem>>, vector<128x512xf32>
    %c0_13 = arith.constant 0 : index
    %c0_14 = arith.constant 0 : index
    %7 = vector.load %arg9[%c0_13, %c0_14] : memref<128x512xf32, #tpu.memory_space<vmem>>, vector<128x512xf32>
    %c0_15 = arith.constant 0 : index
    %c0_16 = arith.constant 0 : index
    %8 = vector.load %arg7[%c0_15, %c0_16] : memref<1x512xf32, #tpu.memory_space<vmem>>, vector<1x512xf32>
    %c0_17 = arith.constant 0 : index
    %c0_18 = arith.constant 0 : index
    %9 = vector.load %arg10[%c0_17, %c0_18] : memref<1x512xf32, #tpu.memory_space<vmem>>, vector<1x512xf32>
    %c0_19 = arith.constant 0 : index
    %c0_20 = arith.constant 0 : index
    %c0_21 = arith.constant 0 : index
    %10 = vector.load %arg15[%c0_19, %c0_20, %c0_21] : memref<2x8x128xf32, #tpu.memory_space<vmem>>, vector<1x8x128xf32>
    %11 = vector.shape_cast %10 : vector<1x8x128xf32> to vector<8x128xf32>
    %c1 = arith.constant 1 : index
    %c0_22 = arith.constant 0 : index
    %c0_23 = arith.constant 0 : index
    %12 = vector.load %arg15[%c1, %c0_22, %c0_23] : memref<2x8x128xf32, #tpu.memory_space<vmem>>, vector<1x8x128xf32>
    %13 = vector.shape_cast %12 : vector<1x8x128xf32> to vector<8x128xf32>
    %c0_24 = arith.constant 0 : index
    %c0_25 = arith.constant 0 : index
    %c0_26 = arith.constant 0 : index
    %14 = vector.load %arg16[%c0_24, %c0_25, %c0_26] : memref<2x8x128xf32, #tpu.memory_space<vmem>>, vector<1x8x128xf32>
    %15 = vector.shape_cast %14 : vector<1x8x128xf32> to vector<8x128xf32>
    %c1_27 = arith.constant 1 : index
    %c0_28 = arith.constant 0 : index
    %c0_29 = arith.constant 0 : index
    %16 = vector.load %arg16[%c1_27, %c0_28, %c0_29] : memref<2x8x128xf32, #tpu.memory_space<vmem>>, vector<1x8x128xf32>
    %17 = vector.shape_cast %16 : vector<1x8x128xf32> to vector<8x128xf32>
    %18 = tpu.iota {dimensions = array<i32: 1>} : vector<8x256xi32>
    %19 = vector.extract_strided_slice %0 {offsets = [0, 0], sizes = [8, 1], strides = [1, 1]} : vector<8x8xi32> to vector<8x1xi32>
    %20 = vector.broadcast %19 : vector<8x1xi32> to vector<8x256xi32>
    %21 = arith.cmpi eq, %18, %20 : vector<8x256xi32>
    %22 = arith.extui %21 : vector<8x256xi1> to vector<8x256xi32>
    %23 = arith.sitofp %22 : vector<8x256xi32> to vector<8x256xf32>
    %cst = arith.constant dense<0.000000e+00> : vector<8x128xf32>
    %24 = tpu.matmul %23, %1, %cst {dimension_numbers = #tpu.dot_dimension_numbers<[1], [0], [0], [1], [0, 0, 1, 1], [], []>} : vector<8x256xf32>, vector<256x128xf32>, vector<8x128xf32> -> vector<8x128xf32>
    %cst_30 = arith.constant dense<0.000000e+00> : vector<8xf32>
    %25 = vector.multi_reduction <add>, %24, %cst_30 [1] : vector<8x128xf32> to vector<8xf32>
    %26 = vector.shape_cast %25 : vector<8xf32> to vector<8x1xf32>
    %cst_31 = arith.constant 1.280000e+02 : f32
    %27 = vector.broadcast %cst_31 : f32 to vector<8x1xf32>
    %28 = arith.divf %26, %27 : vector<8x1xf32>
    %29 = arith.mulf %24, %24 : vector<8x128xf32>
    %cst_32 = arith.constant dense<0.000000e+00> : vector<8xf32>
    %30 = vector.multi_reduction <add>, %29, %cst_32 [1] : vector<8x128xf32> to vector<8xf32>
    %31 = vector.shape_cast %30 : vector<8xf32> to vector<8x1xf32>
    %cst_33 = arith.constant 1.280000e+02 : f32
    %32 = vector.broadcast %cst_33 : f32 to vector<8x1xf32>
    %33 = arith.divf %31, %32 : vector<8x1xf32>
    %34 = arith.mulf %28, %28 : vector<8x1xf32>
    %35 = arith.subf %33, %34 : vector<8x1xf32>
    %36 = vector.broadcast %28 : vector<8x1xf32> to vector<8x128xf32>
    %37 = arith.subf %24, %36 : vector<8x128xf32>
    %cst_34 = arith.constant 9.99999974E-6 : f32
    %38 = vector.broadcast %cst_34 : f32 to vector<8x1xf32>
    %39 = arith.addf %35, %38 : vector<8x1xf32>
    %40 = math.rsqrt %39 : vector<8x1xf32>
    %41 = vector.broadcast %40 : vector<8x1xf32> to vector<8x128xf32>
    %42 = arith.mulf %37, %41 : vector<8x128xf32>
    %43 = vector.broadcast %2 : vector<1x128xf32> to vector<8x128xf32>
    %44 = arith.mulf %42, %43 : vector<8x128xf32>
    %45 = vector.broadcast %3 : vector<1x128xf32> to vector<8x128xf32>
    %46 = arith.addf %44, %45 : vector<8x128xf32>
    %cst_35 = arith.constant dense<0.000000e+00> : vector<8x512xf32>
    %47 = tpu.matmul %46, %4, %cst_35 {dimension_numbers = #tpu.dot_dimension_numbers<[1], [0], [0], [1], [0, 0, 1, 1], [], []>} : vector<8x128xf32>, vector<128x512xf32>, vector<8x512xf32> -> vector<8x512xf32>
    %cst_36 = arith.constant dense<0.000000e+00> : vector<8x512xf32>
    %48 = tpu.matmul %11, %6, %cst_36 {dimension_numbers = #tpu.dot_dimension_numbers<[1], [0], [0], [1], [0, 0, 1, 1], [], []>} : vector<8x128xf32>, vector<128x512xf32>, vector<8x512xf32> -> vector<8x512xf32>
    %49 = arith.addf %47, %48 : vector<8x512xf32>
    %50 = vector.broadcast %8 : vector<1x512xf32> to vector<8x512xf32>
    %51 = arith.addf %49, %50 : vector<8x512xf32>
    %52 = vector.extract_strided_slice %51 {offsets = [0, 0], sizes = [8, 128], strides = [1, 1]} : vector<8x512xf32> to vector<8x128xf32>
    %53 = arith.negf %52 : vector<8x128xf32>
    %54 = math.exp %53 : vector<8x128xf32>
    %cst_37 = arith.constant 1.000000e+00 : f32
    %55 = vector.broadcast %cst_37 : f32 to vector<8x128xf32>
    %56 = arith.addf %55, %54 : vector<8x128xf32>
    %57 = arith.divf %55, %56 : vector<8x128xf32>
    %58 = vector.extract_strided_slice %51 {offsets = [0, 128], sizes = [8, 128], strides = [1, 1]} : vector<8x512xf32> to vector<8x128xf32>
    %59 = arith.negf %58 : vector<8x128xf32>
    %60 = math.exp %59 : vector<8x128xf32>
    %cst_38 = arith.constant 1.000000e+00 : f32
    %61 = vector.broadcast %cst_38 : f32 to vector<8x128xf32>
    %62 = arith.addf %61, %60 : vector<8x128xf32>
    %63 = arith.divf %61, %62 : vector<8x128xf32>
    %64 = vector.extract_strided_slice %51 {offsets = [0, 256], sizes = [8, 128], strides = [1, 1]} : vector<8x512xf32> to vector<8x128xf32>
    %65 = math.tanh %64 : vector<8x128xf32>
    %66 = vector.extract_strided_slice %51 {offsets = [0, 384], sizes = [8, 128], strides = [1, 1]} : vector<8x512xf32> to vector<8x128xf32>
    %67 = arith.negf %66 : vector<8x128xf32>
    %68 = math.exp %67 : vector<8x128xf32>
    %cst_39 = arith.constant 1.000000e+00 : f32
    %69 = vector.broadcast %cst_39 : f32 to vector<8x128xf32>
    %70 = arith.addf %69, %68 : vector<8x128xf32>
    %71 = arith.divf %69, %70 : vector<8x128xf32>
    %72 = arith.mulf %63, %15 : vector<8x128xf32>
    %73 = arith.mulf %57, %65 : vector<8x128xf32>
    %74 = arith.addf %72, %73 : vector<8x128xf32>
    %75 = math.tanh %74 : vector<8x128xf32>
    %76 = arith.mulf %71, %75 : vector<8x128xf32>
    %cst_40 = arith.constant dense<0.000000e+00> : vector<8x512xf32>
    %77 = tpu.matmul %76, %5, %cst_40 {dimension_numbers = #tpu.dot_dimension_numbers<[1], [0], [0], [1], [0, 0, 1, 1], [], []>} : vector<8x128xf32>, vector<128x512xf32>, vector<8x512xf32> -> vector<8x512xf32>
    %cst_41 = arith.constant dense<0.000000e+00> : vector<8x512xf32>
    %78 = tpu.matmul %13, %7, %cst_41 {dimension_numbers = #tpu.dot_dimension_numbers<[1], [0], [0], [1], [0, 0, 1, 1], [], []>} : vector<8x128xf32>, vector<128x512xf32>, vector<8x512xf32> -> vector<8x512xf32>
    %79 = arith.addf %77, %78 : vector<8x512xf32>
    %80 = vector.broadcast %9 : vector<1x512xf32> to vector<8x512xf32>
    %81 = arith.addf %79, %80 : vector<8x512xf32>
    %82 = vector.extract_strided_slice %81 {offsets = [0, 0], sizes = [8, 128], strides = [1, 1]} : vector<8x512xf32> to vector<8x128xf32>
    %83 = arith.negf %82 : vector<8x128xf32>
    %84 = math.exp %83 : vector<8x128xf32>
    %cst_42 = arith.constant 1.000000e+00 : f32
    %85 = vector.broadcast %cst_42 : f32 to vector<8x128xf32>
    %86 = arith.addf %85, %84 : vector<8x128xf32>
    %87 = arith.divf %85, %86 : vector<8x128xf32>
    %88 = vector.extract_strided_slice %81 {offsets = [0, 128], sizes = [8, 128], strides = [1, 1]} : vector<8x512xf32> to vector<8x128xf32>
    %89 = arith.negf %88 : vector<8x128xf32>
    %90 = math.exp %89 : vector<8x128xf32>
    %cst_43 = arith.constant 1.000000e+00 : f32
    %91 = vector.broadcast %cst_43 : f32 to vector<8x128xf32>
    %92 = arith.addf %91, %90 : vector<8x128xf32>
    %93 = arith.divf %91, %92 : vector<8x128xf32>
    %94 = vector.extract_strided_slice %81 {offsets = [0, 256], sizes = [8, 128], strides = [1, 1]} : vector<8x512xf32> to vector<8x128xf32>
    %95 = math.tanh %94 : vector<8x128xf32>
    %96 = vector.extract_strided_slice %81 {offsets = [0, 384], sizes = [8, 128], strides = [1, 1]} : vector<8x512xf32> to vector<8x128xf32>
    %97 = arith.negf %96 : vector<8x128xf32>
    %98 = math.exp %97 : vector<8x128xf32>
    %cst_44 = arith.constant 1.000000e+00 : f32
    %99 = vector.broadcast %cst_44 : f32 to vector<8x128xf32>
    %100 = arith.addf %99, %98 : vector<8x128xf32>
    %101 = arith.divf %99, %100 : vector<8x128xf32>
    %102 = arith.mulf %93, %17 : vector<8x128xf32>
    %103 = arith.mulf %87, %95 : vector<8x128xf32>
    %104 = arith.addf %102, %103 : vector<8x128xf32>
    %105 = math.tanh %104 : vector<8x128xf32>
    %106 = arith.mulf %101, %105 : vector<8x128xf32>
    %107 = vector.extract_strided_slice %0 {offsets = [0, 1], sizes = [8, 1], strides = [1, 1]} : vector<8x8xi32> to vector<8x1xi32>
    %108 = vector.broadcast %107 : vector<8x1xi32> to vector<8x256xi32>
    %109 = arith.cmpi eq, %18, %108 : vector<8x256xi32>
    %110 = arith.extui %109 : vector<8x256xi1> to vector<8x256xi32>
    %111 = arith.sitofp %110 : vector<8x256xi32> to vector<8x256xf32>
    %cst_45 = arith.constant dense<0.000000e+00> : vector<8x128xf32>
    %112 = tpu.matmul %111, %1, %cst_45 {dimension_numbers = #tpu.dot_dimension_numbers<[1], [0], [0], [1], [0, 0, 1, 1], [], []>} : vector<8x256xf32>, vector<256x128xf32>, vector<8x128xf32> -> vector<8x128xf32>
    %cst_46 = arith.constant dense<0.000000e+00> : vector<8xf32>
    %113 = vector.multi_reduction <add>, %112, %cst_46 [1] : vector<8x128xf32> to vector<8xf32>
    %114 = vector.shape_cast %113 : vector<8xf32> to vector<8x1xf32>
    %cst_47 = arith.constant 1.280000e+02 : f32
    %115 = vector.broadcast %cst_47 : f32 to vector<8x1xf32>
    %116 = arith.divf %114, %115 : vector<8x1xf32>
    %117 = arith.mulf %112, %112 : vector<8x128xf32>
    %cst_48 = arith.constant dense<0.000000e+00> : vector<8xf32>
    %118 = vector.multi_reduction <add>, %117, %cst_48 [1] : vector<8x128xf32> to vector<8xf32>
    %119 = vector.shape_cast %118 : vector<8xf32> to vector<8x1xf32>
    %cst_49 = arith.constant 1.280000e+02 : f32
    %120 = vector.broadcast %cst_49 : f32 to vector<8x1xf32>
    %121 = arith.divf %119, %120 : vector<8x1xf32>
    %122 = arith.mulf %116, %116 : vector<8x1xf32>
    %123 = arith.subf %121, %122 : vector<8x1xf32>
    %124 = vector.broadcast %116 : vector<8x1xf32> to vector<8x128xf32>
    %125 = arith.subf %112, %124 : vector<8x128xf32>
    %cst_50 = arith.constant 9.99999974E-6 : f32
    %126 = vector.broadcast %cst_50 : f32 to vector<8x1xf32>
    %127 = arith.addf %123, %126 : vector<8x1xf32>
    %128 = math.rsqrt %127 : vector<8x1xf32>
    %129 = vector.broadcast %128 : vector<8x1xf32> to vector<8x128xf32>
    %130 = arith.mulf %125, %129 : vector<8x128xf32>
    %131 = vector.broadcast %2 : vector<1x128xf32> to vector<8x128xf32>
    %132 = arith.mulf %130, %131 : vector<8x128xf32>
    %133 = vector.broadcast %3 : vector<1x128xf32> to vector<8x128xf32>
    %134 = arith.addf %132, %133 : vector<8x128xf32>
    %cst_51 = arith.constant dense<0.000000e+00> : vector<8x512xf32>
    %135 = tpu.matmul %134, %4, %cst_51 {dimension_numbers = #tpu.dot_dimension_numbers<[1], [0], [0], [1], [0, 0, 1, 1], [], []>} : vector<8x128xf32>, vector<128x512xf32>, vector<8x512xf32> -> vector<8x512xf32>
    %cst_52 = arith.constant dense<0.000000e+00> : vector<8x512xf32>
    %136 = tpu.matmul %76, %6, %cst_52 {dimension_numbers = #tpu.dot_dimension_numbers<[1], [0], [0], [1], [0, 0, 1, 1], [], []>} : vector<8x128xf32>, vector<128x512xf32>, vector<8x512xf32> -> vector<8x512xf32>
    %137 = arith.addf %135, %136 : vector<8x512xf32>
    %138 = vector.broadcast %8 : vector<1x512xf32> to vector<8x512xf32>
    %139 = arith.addf %137, %138 : vector<8x512xf32>
    %140 = vector.extract_strided_slice %139 {offsets = [0, 0], sizes = [8, 128], strides = [1, 1]} : vector<8x512xf32> to vector<8x128xf32>
    %141 = arith.negf %140 : vector<8x128xf32>
    %142 = math.exp %141 : vector<8x128xf32>
    %cst_53 = arith.constant 1.000000e+00 : f32
    %143 = vector.broadcast %cst_53 : f32 to vector<8x128xf32>
    %144 = arith.addf %143, %142 : vector<8x128xf32>
    %145 = arith.divf %143, %144 : vector<8x128xf32>
    %146 = vector.extract_strided_slice %139 {offsets = [0, 128], sizes = [8, 128], strides = [1, 1]} : vector<8x512xf32> to vector<8x128xf32>
    %147 = arith.negf %146 : vector<8x128xf32>
    %148 = math.exp %147 : vector<8x128xf32>
    %cst_54 = arith.constant 1.000000e+00 : f32
    %149 = vector.broadcast %cst_54 : f32 to vector<8x128xf32>
    %150 = arith.addf %149, %148 : vector<8x128xf32>
    %151 = arith.divf %149, %150 : vector<8x128xf32>
    %152 = vector.extract_strided_slice %139 {offsets = [0, 256], sizes = [8, 128], strides = [1, 1]} : vector<8x512xf32> to vector<8x128xf32>
    %153 = math.tanh %152 : vector<8x128xf32>
    %154 = vector.extract_strided_slice %139 {offsets = [0, 384], sizes = [8, 128], strides = [1, 1]} : vector<8x512xf32> to vector<8x128xf32>
    %155 = arith.negf %154 : vector<8x128xf32>
    %156 = math.exp %155 : vector<8x128xf32>
    %cst_55 = arith.constant 1.000000e+00 : f32
    %157 = vector.broadcast %cst_55 : f32 to vector<8x128xf32>
    %158 = arith.addf %157, %156 : vector<8x128xf32>
    %159 = arith.divf %157, %158 : vector<8x128xf32>
    %160 = arith.mulf %151, %74 : vector<8x128xf32>
    %161 = arith.mulf %145, %153 : vector<8x128xf32>
    %162 = arith.addf %160, %161 : vector<8x128xf32>
    %163 = math.tanh %162 : vector<8x128xf32>
    %164 = arith.mulf %159, %163 : vector<8x128xf32>
    %cst_56 = arith.constant dense<0.000000e+00> : vector<8x512xf32>
    %165 = tpu.matmul %164, %5, %cst_56 {dimension_numbers = #tpu.dot_dimension_numbers<[1], [0], [0], [1], [0, 0, 1, 1], [], []>} : vector<8x128xf32>, vector<128x512xf32>, vector<8x512xf32> -> vector<8x512xf32>
    %cst_57 = arith.constant dense<0.000000e+00> : vector<8x512xf32>
    %166 = tpu.matmul %106, %7, %cst_57 {dimension_numbers = #tpu.dot_dimension_numbers<[1], [0], [0], [1], [0, 0, 1, 1], [], []>} : vector<8x128xf32>, vector<128x512xf32>, vector<8x512xf32> -> vector<8x512xf32>
    %167 = arith.addf %165, %166 : vector<8x512xf32>
    %168 = vector.broadcast %9 : vector<1x512xf32> to vector<8x512xf32>
    %169 = arith.addf %167, %168 : vector<8x512xf32>
    %170 = vector.extract_strided_slice %169 {offsets = [0, 0], sizes = [8, 128], strides = [1, 1]} : vector<8x512xf32> to vector<8x128xf32>
    %171 = arith.negf %170 : vector<8x128xf32>
    %172 = math.exp %171 : vector<8x128xf32>
    %cst_58 = arith.constant 1.000000e+00 : f32
    %173 = vector.broadcast %cst_58 : f32 to vector<8x128xf32>
    %174 = arith.addf %173, %172 : vector<8x128xf32>
    %175 = arith.divf %173, %174 : vector<8x128xf32>
    %176 = vector.extract_strided_slice %169 {offsets = [0, 128], sizes = [8, 128], strides = [1, 1]} : vector<8x512xf32> to vector<8x128xf32>
    %177 = arith.negf %176 : vector<8x128xf32>
    %178 = math.exp %177 : vector<8x128xf32>
    %cst_59 = arith.constant 1.000000e+00 : f32
    %179 = vector.broadcast %cst_59 : f32 to vector<8x128xf32>
    %180 = arith.addf %179, %178 : vector<8x128xf32>
    %181 = arith.divf %179, %180 : vector<8x128xf32>
    %182 = vector.extract_strided_slice %169 {offsets = [0, 256], sizes = [8, 128], strides = [1, 1]} : vector<8x512xf32> to vector<8x128xf32>
    %183 = math.tanh %182 : vector<8x128xf32>
    %184 = vector.extract_strided_slice %169 {offsets = [0, 384], sizes = [8, 128], strides = [1, 1]} : vector<8x512xf32> to vector<8x128xf32>
    %185 = arith.negf %184 : vector<8x128xf32>
    %186 = math.exp %185 : vector<8x128xf32>
    %cst_60 = arith.constant 1.000000e+00 : f32
    %187 = vector.broadcast %cst_60 : f32 to vector<8x128xf32>
    %188 = arith.addf %187, %186 : vector<8x128xf32>
    %189 = arith.divf %187, %188 : vector<8x128xf32>
    %190 = arith.mulf %181, %104 : vector<8x128xf32>
    %191 = arith.mulf %175, %183 : vector<8x128xf32>
    %192 = arith.addf %190, %191 : vector<8x128xf32>
    %193 = math.tanh %192 : vector<8x128xf32>
    %194 = arith.mulf %189, %193 : vector<8x128xf32>
    %195 = vector.extract_strided_slice %0 {offsets = [0, 2], sizes = [8, 1], strides = [1, 1]} : vector<8x8xi32> to vector<8x1xi32>
    %196 = vector.broadcast %195 : vector<8x1xi32> to vector<8x256xi32>
    %197 = arith.cmpi eq, %18, %196 : vector<8x256xi32>
    %198 = arith.extui %197 : vector<8x256xi1> to vector<8x256xi32>
    %199 = arith.sitofp %198 : vector<8x256xi32> to vector<8x256xf32>
    %cst_61 = arith.constant dense<0.000000e+00> : vector<8x128xf32>
    %200 = tpu.matmul %199, %1, %cst_61 {dimension_numbers = #tpu.dot_dimension_numbers<[1], [0], [0], [1], [0, 0, 1, 1], [], []>} : vector<8x256xf32>, vector<256x128xf32>, vector<8x128xf32> -> vector<8x128xf32>
    %cst_62 = arith.constant dense<0.000000e+00> : vector<8xf32>
    %201 = vector.multi_reduction <add>, %200, %cst_62 [1] : vector<8x128xf32> to vector<8xf32>
    %202 = vector.shape_cast %201 : vector<8xf32> to vector<8x1xf32>
    %cst_63 = arith.constant 1.280000e+02 : f32
    %203 = vector.broadcast %cst_63 : f32 to vector<8x1xf32>
    %204 = arith.divf %202, %203 : vector<8x1xf32>
    %205 = arith.mulf %200, %200 : vector<8x128xf32>
    %cst_64 = arith.constant dense<0.000000e+00> : vector<8xf32>
    %206 = vector.multi_reduction <add>, %205, %cst_64 [1] : vector<8x128xf32> to vector<8xf32>
    %207 = vector.shape_cast %206 : vector<8xf32> to vector<8x1xf32>
    %cst_65 = arith.constant 1.280000e+02 : f32
    %208 = vector.broadcast %cst_65 : f32 to vector<8x1xf32>
    %209 = arith.divf %207, %208 : vector<8x1xf32>
    %210 = arith.mulf %204, %204 : vector<8x1xf32>
    %211 = arith.subf %209, %210 : vector<8x1xf32>
    %212 = vector.broadcast %204 : vector<8x1xf32> to vector<8x128xf32>
    %213 = arith.subf %200, %212 : vector<8x128xf32>
    %cst_66 = arith.constant 9.99999974E-6 : f32
    %214 = vector.broadcast %cst_66 : f32 to vector<8x1xf32>
    %215 = arith.addf %211, %214 : vector<8x1xf32>
    %216 = math.rsqrt %215 : vector<8x1xf32>
    %217 = vector.broadcast %216 : vector<8x1xf32> to vector<8x128xf32>
    %218 = arith.mulf %213, %217 : vector<8x128xf32>
    %219 = vector.broadcast %2 : vector<1x128xf32> to vector<8x128xf32>
    %220 = arith.mulf %218, %219 : vector<8x128xf32>
    %221 = vector.broadcast %3 : vector<1x128xf32> to vector<8x128xf32>
    %222 = arith.addf %220, %221 : vector<8x128xf32>
    %cst_67 = arith.constant dense<0.000000e+00> : vector<8x512xf32>
    %223 = tpu.matmul %222, %4, %cst_67 {dimension_numbers = #tpu.dot_dimension_numbers<[1], [0], [0], [1], [0, 0, 1, 1], [], []>} : vector<8x128xf32>, vector<128x512xf32>, vector<8x512xf32> -> vector<8x512xf32>
    %cst_68 = arith.constant dense<0.000000e+00> : vector<8x512xf32>
    %224 = tpu.matmul %164, %6, %cst_68 {dimension_numbers = #tpu.dot_dimension_numbers<[1], [0], [0], [1], [0, 0, 1, 1], [], []>} : vector<8x128xf32>, vector<128x512xf32>, vector<8x512xf32> -> vector<8x512xf32>
    %225 = arith.addf %223, %224 : vector<8x512xf32>
    %226 = vector.broadcast %8 : vector<1x512xf32> to vector<8x512xf32>
    %227 = arith.addf %225, %226 : vector<8x512xf32>
    %228 = vector.extract_strided_slice %227 {offsets = [0, 0], sizes = [8, 128], strides = [1, 1]} : vector<8x512xf32> to vector<8x128xf32>
    %229 = arith.negf %228 : vector<8x128xf32>
    %230 = math.exp %229 : vector<8x128xf32>
    %cst_69 = arith.constant 1.000000e+00 : f32
    %231 = vector.broadcast %cst_69 : f32 to vector<8x128xf32>
    %232 = arith.addf %231, %230 : vector<8x128xf32>
    %233 = arith.divf %231, %232 : vector<8x128xf32>
    %234 = vector.extract_strided_slice %227 {offsets = [0, 128], sizes = [8, 128], strides = [1, 1]} : vector<8x512xf32> to vector<8x128xf32>
    %235 = arith.negf %234 : vector<8x128xf32>
    %236 = math.exp %235 : vector<8x128xf32>
    %cst_70 = arith.constant 1.000000e+00 : f32
    %237 = vector.broadcast %cst_70 : f32 to vector<8x128xf32>
    %238 = arith.addf %237, %236 : vector<8x128xf32>
    %239 = arith.divf %237, %238 : vector<8x128xf32>
    %240 = vector.extract_strided_slice %227 {offsets = [0, 256], sizes = [8, 128], strides = [1, 1]} : vector<8x512xf32> to vector<8x128xf32>
    %241 = math.tanh %240 : vector<8x128xf32>
    %242 = vector.extract_strided_slice %227 {offsets = [0, 384], sizes = [8, 128], strides = [1, 1]} : vector<8x512xf32> to vector<8x128xf32>
    %243 = arith.negf %242 : vector<8x128xf32>
    %244 = math.exp %243 : vector<8x128xf32>
    %cst_71 = arith.constant 1.000000e+00 : f32
    %245 = vector.broadcast %cst_71 : f32 to vector<8x128xf32>
    %246 = arith.addf %245, %244 : vector<8x128xf32>
    %247 = arith.divf %245, %246 : vector<8x128xf32>
    %248 = arith.mulf %239, %162 : vector<8x128xf32>
    %249 = arith.mulf %233, %241 : vector<8x128xf32>
    %250 = arith.addf %248, %249 : vector<8x128xf32>
    %251 = math.tanh %250 : vector<8x128xf32>
    %252 = arith.mulf %247, %251 : vector<8x128xf32>
    %cst_72 = arith.constant dense<0.000000e+00> : vector<8x512xf32>
    %253 = tpu.matmul %252, %5, %cst_72 {dimension_numbers = #tpu.dot_dimension_numbers<[1], [0], [0], [1], [0, 0, 1, 1], [], []>} : vector<8x128xf32>, vector<128x512xf32>, vector<8x512xf32> -> vector<8x512xf32>
    %cst_73 = arith.constant dense<0.000000e+00> : vector<8x512xf32>
    %254 = tpu.matmul %194, %7, %cst_73 {dimension_numbers = #tpu.dot_dimension_numbers<[1], [0], [0], [1], [0, 0, 1, 1], [], []>} : vector<8x128xf32>, vector<128x512xf32>, vector<8x512xf32> -> vector<8x512xf32>
    %255 = arith.addf %253, %254 : vector<8x512xf32>
    %256 = vector.broadcast %9 : vector<1x512xf32> to vector<8x512xf32>
    %257 = arith.addf %255, %256 : vector<8x512xf32>
    %258 = vector.extract_strided_slice %257 {offsets = [0, 0], sizes = [8, 128], strides = [1, 1]} : vector<8x512xf32> to vector<8x128xf32>
    %259 = arith.negf %258 : vector<8x128xf32>
    %260 = math.exp %259 : vector<8x128xf32>
    %cst_74 = arith.constant 1.000000e+00 : f32
    %261 = vector.broadcast %cst_74 : f32 to vector<8x128xf32>
    %262 = arith.addf %261, %260 : vector<8x128xf32>
    %263 = arith.divf %261, %262 : vector<8x128xf32>
    %264 = vector.extract_strided_slice %257 {offsets = [0, 128], sizes = [8, 128], strides = [1, 1]} : vector<8x512xf32> to vector<8x128xf32>
    %265 = arith.negf %264 : vector<8x128xf32>
    %266 = math.exp %265 : vector<8x128xf32>
    %cst_75 = arith.constant 1.000000e+00 : f32
    %267 = vector.broadcast %cst_75 : f32 to vector<8x128xf32>
    %268 = arith.addf %267, %266 : vector<8x128xf32>
    %269 = arith.divf %267, %268 : vector<8x128xf32>
    %270 = vector.extract_strided_slice %257 {offsets = [0, 256], sizes = [8, 128], strides = [1, 1]} : vector<8x512xf32> to vector<8x128xf32>
    %271 = math.tanh %270 : vector<8x128xf32>
    %272 = vector.extract_strided_slice %257 {offsets = [0, 384], sizes = [8, 128], strides = [1, 1]} : vector<8x512xf32> to vector<8x128xf32>
    %273 = arith.negf %272 : vector<8x128xf32>
    %274 = math.exp %273 : vector<8x128xf32>
    %cst_76 = arith.constant 1.000000e+00 : f32
    %275 = vector.broadcast %cst_76 : f32 to vector<8x128xf32>
    %276 = arith.addf %275, %274 : vector<8x128xf32>
    %277 = arith.divf %275, %276 : vector<8x128xf32>
    %278 = arith.mulf %269, %192 : vector<8x128xf32>
    %279 = arith.mulf %263, %271 : vector<8x128xf32>
    %280 = arith.addf %278, %279 : vector<8x128xf32>
    %281 = math.tanh %280 : vector<8x128xf32>
    %282 = arith.mulf %277, %281 : vector<8x128xf32>
    %283 = vector.extract_strided_slice %0 {offsets = [0, 3], sizes = [8, 1], strides = [1, 1]} : vector<8x8xi32> to vector<8x1xi32>
    %284 = vector.broadcast %283 : vector<8x1xi32> to vector<8x256xi32>
    %285 = arith.cmpi eq, %18, %284 : vector<8x256xi32>
    %286 = arith.extui %285 : vector<8x256xi1> to vector<8x256xi32>
    %287 = arith.sitofp %286 : vector<8x256xi32> to vector<8x256xf32>
    %cst_77 = arith.constant dense<0.000000e+00> : vector<8x128xf32>
    %288 = tpu.matmul %287, %1, %cst_77 {dimension_numbers = #tpu.dot_dimension_numbers<[1], [0], [0], [1], [0, 0, 1, 1], [], []>} : vector<8x256xf32>, vector<256x128xf32>, vector<8x128xf32> -> vector<8x128xf32>
    %cst_78 = arith.constant dense<0.000000e+00> : vector<8xf32>
    %289 = vector.multi_reduction <add>, %288, %cst_78 [1] : vector<8x128xf32> to vector<8xf32>
    %290 = vector.shape_cast %289 : vector<8xf32> to vector<8x1xf32>
    %cst_79 = arith.constant 1.280000e+02 : f32
    %291 = vector.broadcast %cst_79 : f32 to vector<8x1xf32>
    %292 = arith.divf %290, %291 : vector<8x1xf32>
    %293 = arith.mulf %288, %288 : vector<8x128xf32>
    %cst_80 = arith.constant dense<0.000000e+00> : vector<8xf32>
    %294 = vector.multi_reduction <add>, %293, %cst_80 [1] : vector<8x128xf32> to vector<8xf32>
    %295 = vector.shape_cast %294 : vector<8xf32> to vector<8x1xf32>
    %cst_81 = arith.constant 1.280000e+02 : f32
    %296 = vector.broadcast %cst_81 : f32 to vector<8x1xf32>
    %297 = arith.divf %295, %296 : vector<8x1xf32>
    %298 = arith.mulf %292, %292 : vector<8x1xf32>
    %299 = arith.subf %297, %298 : vector<8x1xf32>
    %300 = vector.broadcast %292 : vector<8x1xf32> to vector<8x128xf32>
    %301 = arith.subf %288, %300 : vector<8x128xf32>
    %cst_82 = arith.constant 9.99999974E-6 : f32
    %302 = vector.broadcast %cst_82 : f32 to vector<8x1xf32>
    %303 = arith.addf %299, %302 : vector<8x1xf32>
    %304 = math.rsqrt %303 : vector<8x1xf32>
    %305 = vector.broadcast %304 : vector<8x1xf32> to vector<8x128xf32>
    %306 = arith.mulf %301, %305 : vector<8x128xf32>
    %307 = vector.broadcast %2 : vector<1x128xf32> to vector<8x128xf32>
    %308 = arith.mulf %306, %307 : vector<8x128xf32>
    %309 = vector.broadcast %3 : vector<1x128xf32> to vector<8x128xf32>
    %310 = arith.addf %308, %309 : vector<8x128xf32>
    %cst_83 = arith.constant dense<0.000000e+00> : vector<8x512xf32>
    %311 = tpu.matmul %310, %4, %cst_83 {dimension_numbers = #tpu.dot_dimension_numbers<[1], [0], [0], [1], [0, 0, 1, 1], [], []>} : vector<8x128xf32>, vector<128x512xf32>, vector<8x512xf32> -> vector<8x512xf32>
    %cst_84 = arith.constant dense<0.000000e+00> : vector<8x512xf32>
    %312 = tpu.matmul %252, %6, %cst_84 {dimension_numbers = #tpu.dot_dimension_numbers<[1], [0], [0], [1], [0, 0, 1, 1], [], []>} : vector<8x128xf32>, vector<128x512xf32>, vector<8x512xf32> -> vector<8x512xf32>
    %313 = arith.addf %311, %312 : vector<8x512xf32>
    %314 = vector.broadcast %8 : vector<1x512xf32> to vector<8x512xf32>
    %315 = arith.addf %313, %314 : vector<8x512xf32>
    %316 = vector.extract_strided_slice %315 {offsets = [0, 0], sizes = [8, 128], strides = [1, 1]} : vector<8x512xf32> to vector<8x128xf32>
    %317 = arith.negf %316 : vector<8x128xf32>
    %318 = math.exp %317 : vector<8x128xf32>
    %cst_85 = arith.constant 1.000000e+00 : f32
    %319 = vector.broadcast %cst_85 : f32 to vector<8x128xf32>
    %320 = arith.addf %319, %318 : vector<8x128xf32>
    %321 = arith.divf %319, %320 : vector<8x128xf32>
    %322 = vector.extract_strided_slice %315 {offsets = [0, 128], sizes = [8, 128], strides = [1, 1]} : vector<8x512xf32> to vector<8x128xf32>
    %323 = arith.negf %322 : vector<8x128xf32>
    %324 = math.exp %323 : vector<8x128xf32>
    %cst_86 = arith.constant 1.000000e+00 : f32
    %325 = vector.broadcast %cst_86 : f32 to vector<8x128xf32>
    %326 = arith.addf %325, %324 : vector<8x128xf32>
    %327 = arith.divf %325, %326 : vector<8x128xf32>
    %328 = vector.extract_strided_slice %315 {offsets = [0, 256], sizes = [8, 128], strides = [1, 1]} : vector<8x512xf32> to vector<8x128xf32>
    %329 = math.tanh %328 : vector<8x128xf32>
    %330 = vector.extract_strided_slice %315 {offsets = [0, 384], sizes = [8, 128], strides = [1, 1]} : vector<8x512xf32> to vector<8x128xf32>
    %331 = arith.negf %330 : vector<8x128xf32>
    %332 = math.exp %331 : vector<8x128xf32>
    %cst_87 = arith.constant 1.000000e+00 : f32
    %333 = vector.broadcast %cst_87 : f32 to vector<8x128xf32>
    %334 = arith.addf %333, %332 : vector<8x128xf32>
    %335 = arith.divf %333, %334 : vector<8x128xf32>
    %336 = arith.mulf %327, %250 : vector<8x128xf32>
    %337 = arith.mulf %321, %329 : vector<8x128xf32>
    %338 = arith.addf %336, %337 : vector<8x128xf32>
    %339 = math.tanh %338 : vector<8x128xf32>
    %340 = arith.mulf %335, %339 : vector<8x128xf32>
    %cst_88 = arith.constant dense<0.000000e+00> : vector<8x512xf32>
    %341 = tpu.matmul %340, %5, %cst_88 {dimension_numbers = #tpu.dot_dimension_numbers<[1], [0], [0], [1], [0, 0, 1, 1], [], []>} : vector<8x128xf32>, vector<128x512xf32>, vector<8x512xf32> -> vector<8x512xf32>
    %cst_89 = arith.constant dense<0.000000e+00> : vector<8x512xf32>
    %342 = tpu.matmul %282, %7, %cst_89 {dimension_numbers = #tpu.dot_dimension_numbers<[1], [0], [0], [1], [0, 0, 1, 1], [], []>} : vector<8x128xf32>, vector<128x512xf32>, vector<8x512xf32> -> vector<8x512xf32>
    %343 = arith.addf %341, %342 : vector<8x512xf32>
    %344 = vector.broadcast %9 : vector<1x512xf32> to vector<8x512xf32>
    %345 = arith.addf %343, %344 : vector<8x512xf32>
    %346 = vector.extract_strided_slice %345 {offsets = [0, 0], sizes = [8, 128], strides = [1, 1]} : vector<8x512xf32> to vector<8x128xf32>
    %347 = arith.negf %346 : vector<8x128xf32>
    %348 = math.exp %347 : vector<8x128xf32>
    %cst_90 = arith.constant 1.000000e+00 : f32
    %349 = vector.broadcast %cst_90 : f32 to vector<8x128xf32>
    %350 = arith.addf %349, %348 : vector<8x128xf32>
    %351 = arith.divf %349, %350 : vector<8x128xf32>
    %352 = vector.extract_strided_slice %345 {offsets = [0, 128], sizes = [8, 128], strides = [1, 1]} : vector<8x512xf32> to vector<8x128xf32>
    %353 = arith.negf %352 : vector<8x128xf32>
    %354 = math.exp %353 : vector<8x128xf32>
    %cst_91 = arith.constant 1.000000e+00 : f32
    %355 = vector.broadcast %cst_91 : f32 to vector<8x128xf32>
    %356 = arith.addf %355, %354 : vector<8x128xf32>
    %357 = arith.divf %355, %356 : vector<8x128xf32>
    %358 = vector.extract_strided_slice %345 {offsets = [0, 256], sizes = [8, 128], strides = [1, 1]} : vector<8x512xf32> to vector<8x128xf32>
    %359 = math.tanh %358 : vector<8x128xf32>
    %360 = vector.extract_strided_slice %345 {offsets = [0, 384], sizes = [8, 128], strides = [1, 1]} : vector<8x512xf32> to vector<8x128xf32>
    %361 = arith.negf %360 : vector<8x128xf32>
    %362 = math.exp %361 : vector<8x128xf32>
    %cst_92 = arith.constant 1.000000e+00 : f32
    %363 = vector.broadcast %cst_92 : f32 to vector<8x128xf32>
    %364 = arith.addf %363, %362 : vector<8x128xf32>
    %365 = arith.divf %363, %364 : vector<8x128xf32>
    %366 = arith.mulf %357, %280 : vector<8x128xf32>
    %367 = arith.mulf %351, %359 : vector<8x128xf32>
    %368 = arith.addf %366, %367 : vector<8x128xf32>
    %369 = math.tanh %368 : vector<8x128xf32>
    %370 = arith.mulf %365, %369 : vector<8x128xf32>
    %371 = vector.extract_strided_slice %0 {offsets = [0, 4], sizes = [8, 1], strides = [1, 1]} : vector<8x8xi32> to vector<8x1xi32>
    %372 = vector.broadcast %371 : vector<8x1xi32> to vector<8x256xi32>
    %373 = arith.cmpi eq, %18, %372 : vector<8x256xi32>
    %374 = arith.extui %373 : vector<8x256xi1> to vector<8x256xi32>
    %375 = arith.sitofp %374 : vector<8x256xi32> to vector<8x256xf32>
    %cst_93 = arith.constant dense<0.000000e+00> : vector<8x128xf32>
    %376 = tpu.matmul %375, %1, %cst_93 {dimension_numbers = #tpu.dot_dimension_numbers<[1], [0], [0], [1], [0, 0, 1, 1], [], []>} : vector<8x256xf32>, vector<256x128xf32>, vector<8x128xf32> -> vector<8x128xf32>
    %cst_94 = arith.constant dense<0.000000e+00> : vector<8xf32>
    %377 = vector.multi_reduction <add>, %376, %cst_94 [1] : vector<8x128xf32> to vector<8xf32>
    %378 = vector.shape_cast %377 : vector<8xf32> to vector<8x1xf32>
    %cst_95 = arith.constant 1.280000e+02 : f32
    %379 = vector.broadcast %cst_95 : f32 to vector<8x1xf32>
    %380 = arith.divf %378, %379 : vector<8x1xf32>
    %381 = arith.mulf %376, %376 : vector<8x128xf32>
    %cst_96 = arith.constant dense<0.000000e+00> : vector<8xf32>
    %382 = vector.multi_reduction <add>, %381, %cst_96 [1] : vector<8x128xf32> to vector<8xf32>
    %383 = vector.shape_cast %382 : vector<8xf32> to vector<8x1xf32>
    %cst_97 = arith.constant 1.280000e+02 : f32
    %384 = vector.broadcast %cst_97 : f32 to vector<8x1xf32>
    %385 = arith.divf %383, %384 : vector<8x1xf32>
    %386 = arith.mulf %380, %380 : vector<8x1xf32>
    %387 = arith.subf %385, %386 : vector<8x1xf32>
    %388 = vector.broadcast %380 : vector<8x1xf32> to vector<8x128xf32>
    %389 = arith.subf %376, %388 : vector<8x128xf32>
    %cst_98 = arith.constant 9.99999974E-6 : f32
    %390 = vector.broadcast %cst_98 : f32 to vector<8x1xf32>
    %391 = arith.addf %387, %390 : vector<8x1xf32>
    %392 = math.rsqrt %391 : vector<8x1xf32>
    %393 = vector.broadcast %392 : vector<8x1xf32> to vector<8x128xf32>
    %394 = arith.mulf %389, %393 : vector<8x128xf32>
    %395 = vector.broadcast %2 : vector<1x128xf32> to vector<8x128xf32>
    %396 = arith.mulf %394, %395 : vector<8x128xf32>
    %397 = vector.broadcast %3 : vector<1x128xf32> to vector<8x128xf32>
    %398 = arith.addf %396, %397 : vector<8x128xf32>
    %cst_99 = arith.constant dense<0.000000e+00> : vector<8x512xf32>
    %399 = tpu.matmul %398, %4, %cst_99 {dimension_numbers = #tpu.dot_dimension_numbers<[1], [0], [0], [1], [0, 0, 1, 1], [], []>} : vector<8x128xf32>, vector<128x512xf32>, vector<8x512xf32> -> vector<8x512xf32>
    %cst_100 = arith.constant dense<0.000000e+00> : vector<8x512xf32>
    %400 = tpu.matmul %340, %6, %cst_100 {dimension_numbers = #tpu.dot_dimension_numbers<[1], [0], [0], [1], [0, 0, 1, 1], [], []>} : vector<8x128xf32>, vector<128x512xf32>, vector<8x512xf32> -> vector<8x512xf32>
    %401 = arith.addf %399, %400 : vector<8x512xf32>
    %402 = vector.broadcast %8 : vector<1x512xf32> to vector<8x512xf32>
    %403 = arith.addf %401, %402 : vector<8x512xf32>
    %404 = vector.extract_strided_slice %403 {offsets = [0, 0], sizes = [8, 128], strides = [1, 1]} : vector<8x512xf32> to vector<8x128xf32>
    %405 = arith.negf %404 : vector<8x128xf32>
    %406 = math.exp %405 : vector<8x128xf32>
    %cst_101 = arith.constant 1.000000e+00 : f32
    %407 = vector.broadcast %cst_101 : f32 to vector<8x128xf32>
    %408 = arith.addf %407, %406 : vector<8x128xf32>
    %409 = arith.divf %407, %408 : vector<8x128xf32>
    %410 = vector.extract_strided_slice %403 {offsets = [0, 128], sizes = [8, 128], strides = [1, 1]} : vector<8x512xf32> to vector<8x128xf32>
    %411 = arith.negf %410 : vector<8x128xf32>
    %412 = math.exp %411 : vector<8x128xf32>
    %cst_102 = arith.constant 1.000000e+00 : f32
    %413 = vector.broadcast %cst_102 : f32 to vector<8x128xf32>
    %414 = arith.addf %413, %412 : vector<8x128xf32>
    %415 = arith.divf %413, %414 : vector<8x128xf32>
    %416 = vector.extract_strided_slice %403 {offsets = [0, 256], sizes = [8, 128], strides = [1, 1]} : vector<8x512xf32> to vector<8x128xf32>
    %417 = math.tanh %416 : vector<8x128xf32>
    %418 = vector.extract_strided_slice %403 {offsets = [0, 384], sizes = [8, 128], strides = [1, 1]} : vector<8x512xf32> to vector<8x128xf32>
    %419 = arith.negf %418 : vector<8x128xf32>
    %420 = math.exp %419 : vector<8x128xf32>
    %cst_103 = arith.constant 1.000000e+00 : f32
    %421 = vector.broadcast %cst_103 : f32 to vector<8x128xf32>
    %422 = arith.addf %421, %420 : vector<8x128xf32>
    %423 = arith.divf %421, %422 : vector<8x128xf32>
    %424 = arith.mulf %415, %338 : vector<8x128xf32>
    %425 = arith.mulf %409, %417 : vector<8x128xf32>
    %426 = arith.addf %424, %425 : vector<8x128xf32>
    %427 = math.tanh %426 : vector<8x128xf32>
    %428 = arith.mulf %423, %427 : vector<8x128xf32>
    %cst_104 = arith.constant dense<0.000000e+00> : vector<8x512xf32>
    %429 = tpu.matmul %428, %5, %cst_104 {dimension_numbers = #tpu.dot_dimension_numbers<[1], [0], [0], [1], [0, 0, 1, 1], [], []>} : vector<8x128xf32>, vector<128x512xf32>, vector<8x512xf32> -> vector<8x512xf32>
    %cst_105 = arith.constant dense<0.000000e+00> : vector<8x512xf32>
    %430 = tpu.matmul %370, %7, %cst_105 {dimension_numbers = #tpu.dot_dimension_numbers<[1], [0], [0], [1], [0, 0, 1, 1], [], []>} : vector<8x128xf32>, vector<128x512xf32>, vector<8x512xf32> -> vector<8x512xf32>
    %431 = arith.addf %429, %430 : vector<8x512xf32>
    %432 = vector.broadcast %9 : vector<1x512xf32> to vector<8x512xf32>
    %433 = arith.addf %431, %432 : vector<8x512xf32>
    %434 = vector.extract_strided_slice %433 {offsets = [0, 0], sizes = [8, 128], strides = [1, 1]} : vector<8x512xf32> to vector<8x128xf32>
    %435 = arith.negf %434 : vector<8x128xf32>
    %436 = math.exp %435 : vector<8x128xf32>
    %cst_106 = arith.constant 1.000000e+00 : f32
    %437 = vector.broadcast %cst_106 : f32 to vector<8x128xf32>
    %438 = arith.addf %437, %436 : vector<8x128xf32>
    %439 = arith.divf %437, %438 : vector<8x128xf32>
    %440 = vector.extract_strided_slice %433 {offsets = [0, 128], sizes = [8, 128], strides = [1, 1]} : vector<8x512xf32> to vector<8x128xf32>
    %441 = arith.negf %440 : vector<8x128xf32>
    %442 = math.exp %441 : vector<8x128xf32>
    %cst_107 = arith.constant 1.000000e+00 : f32
    %443 = vector.broadcast %cst_107 : f32 to vector<8x128xf32>
    %444 = arith.addf %443, %442 : vector<8x128xf32>
    %445 = arith.divf %443, %444 : vector<8x128xf32>
    %446 = vector.extract_strided_slice %433 {offsets = [0, 256], sizes = [8, 128], strides = [1, 1]} : vector<8x512xf32> to vector<8x128xf32>
    %447 = math.tanh %446 : vector<8x128xf32>
    %448 = vector.extract_strided_slice %433 {offsets = [0, 384], sizes = [8, 128], strides = [1, 1]} : vector<8x512xf32> to vector<8x128xf32>
    %449 = arith.negf %448 : vector<8x128xf32>
    %450 = math.exp %449 : vector<8x128xf32>
    %cst_108 = arith.constant 1.000000e+00 : f32
    %451 = vector.broadcast %cst_108 : f32 to vector<8x128xf32>
    %452 = arith.addf %451, %450 : vector<8x128xf32>
    %453 = arith.divf %451, %452 : vector<8x128xf32>
    %454 = arith.mulf %445, %368 : vector<8x128xf32>
    %455 = arith.mulf %439, %447 : vector<8x128xf32>
    %456 = arith.addf %454, %455 : vector<8x128xf32>
    %457 = math.tanh %456 : vector<8x128xf32>
    %458 = arith.mulf %453, %457 : vector<8x128xf32>
    %459 = vector.extract_strided_slice %0 {offsets = [0, 5], sizes = [8, 1], strides = [1, 1]} : vector<8x8xi32> to vector<8x1xi32>
    %460 = vector.broadcast %459 : vector<8x1xi32> to vector<8x256xi32>
    %461 = arith.cmpi eq, %18, %460 : vector<8x256xi32>
    %462 = arith.extui %461 : vector<8x256xi1> to vector<8x256xi32>
    %463 = arith.sitofp %462 : vector<8x256xi32> to vector<8x256xf32>
    %cst_109 = arith.constant dense<0.000000e+00> : vector<8x128xf32>
    %464 = tpu.matmul %463, %1, %cst_109 {dimension_numbers = #tpu.dot_dimension_numbers<[1], [0], [0], [1], [0, 0, 1, 1], [], []>} : vector<8x256xf32>, vector<256x128xf32>, vector<8x128xf32> -> vector<8x128xf32>
    %cst_110 = arith.constant dense<0.000000e+00> : vector<8xf32>
    %465 = vector.multi_reduction <add>, %464, %cst_110 [1] : vector<8x128xf32> to vector<8xf32>
    %466 = vector.shape_cast %465 : vector<8xf32> to vector<8x1xf32>
    %cst_111 = arith.constant 1.280000e+02 : f32
    %467 = vector.broadcast %cst_111 : f32 to vector<8x1xf32>
    %468 = arith.divf %466, %467 : vector<8x1xf32>
    %469 = arith.mulf %464, %464 : vector<8x128xf32>
    %cst_112 = arith.constant dense<0.000000e+00> : vector<8xf32>
    %470 = vector.multi_reduction <add>, %469, %cst_112 [1] : vector<8x128xf32> to vector<8xf32>
    %471 = vector.shape_cast %470 : vector<8xf32> to vector<8x1xf32>
    %cst_113 = arith.constant 1.280000e+02 : f32
    %472 = vector.broadcast %cst_113 : f32 to vector<8x1xf32>
    %473 = arith.divf %471, %472 : vector<8x1xf32>
    %474 = arith.mulf %468, %468 : vector<8x1xf32>
    %475 = arith.subf %473, %474 : vector<8x1xf32>
    %476 = vector.broadcast %468 : vector<8x1xf32> to vector<8x128xf32>
    %477 = arith.subf %464, %476 : vector<8x128xf32>
    %cst_114 = arith.constant 9.99999974E-6 : f32
    %478 = vector.broadcast %cst_114 : f32 to vector<8x1xf32>
    %479 = arith.addf %475, %478 : vector<8x1xf32>
    %480 = math.rsqrt %479 : vector<8x1xf32>
    %481 = vector.broadcast %480 : vector<8x1xf32> to vector<8x128xf32>
    %482 = arith.mulf %477, %481 : vector<8x128xf32>
    %483 = vector.broadcast %2 : vector<1x128xf32> to vector<8x128xf32>
    %484 = arith.mulf %482, %483 : vector<8x128xf32>
    %485 = vector.broadcast %3 : vector<1x128xf32> to vector<8x128xf32>
    %486 = arith.addf %484, %485 : vector<8x128xf32>
    %cst_115 = arith.constant dense<0.000000e+00> : vector<8x512xf32>
    %487 = tpu.matmul %486, %4, %cst_115 {dimension_numbers = #tpu.dot_dimension_numbers<[1], [0], [0], [1], [0, 0, 1, 1], [], []>} : vector<8x128xf32>, vector<128x512xf32>, vector<8x512xf32> -> vector<8x512xf32>
    %cst_116 = arith.constant dense<0.000000e+00> : vector<8x512xf32>
    %488 = tpu.matmul %428, %6, %cst_116 {dimension_numbers = #tpu.dot_dimension_numbers<[1], [0], [0], [1], [0, 0, 1, 1], [], []>} : vector<8x128xf32>, vector<128x512xf32>, vector<8x512xf32> -> vector<8x512xf32>
    %489 = arith.addf %487, %488 : vector<8x512xf32>
    %490 = vector.broadcast %8 : vector<1x512xf32> to vector<8x512xf32>
    %491 = arith.addf %489, %490 : vector<8x512xf32>
    %492 = vector.extract_strided_slice %491 {offsets = [0, 0], sizes = [8, 128], strides = [1, 1]} : vector<8x512xf32> to vector<8x128xf32>
    %493 = arith.negf %492 : vector<8x128xf32>
    %494 = math.exp %493 : vector<8x128xf32>
    %cst_117 = arith.constant 1.000000e+00 : f32
    %495 = vector.broadcast %cst_117 : f32 to vector<8x128xf32>
    %496 = arith.addf %495, %494 : vector<8x128xf32>
    %497 = arith.divf %495, %496 : vector<8x128xf32>
    %498 = vector.extract_strided_slice %491 {offsets = [0, 128], sizes = [8, 128], strides = [1, 1]} : vector<8x512xf32> to vector<8x128xf32>
    %499 = arith.negf %498 : vector<8x128xf32>
    %500 = math.exp %499 : vector<8x128xf32>
    %cst_118 = arith.constant 1.000000e+00 : f32
    %501 = vector.broadcast %cst_118 : f32 to vector<8x128xf32>
    %502 = arith.addf %501, %500 : vector<8x128xf32>
    %503 = arith.divf %501, %502 : vector<8x128xf32>
    %504 = vector.extract_strided_slice %491 {offsets = [0, 256], sizes = [8, 128], strides = [1, 1]} : vector<8x512xf32> to vector<8x128xf32>
    %505 = math.tanh %504 : vector<8x128xf32>
    %506 = vector.extract_strided_slice %491 {offsets = [0, 384], sizes = [8, 128], strides = [1, 1]} : vector<8x512xf32> to vector<8x128xf32>
    %507 = arith.negf %506 : vector<8x128xf32>
    %508 = math.exp %507 : vector<8x128xf32>
    %cst_119 = arith.constant 1.000000e+00 : f32
    %509 = vector.broadcast %cst_119 : f32 to vector<8x128xf32>
    %510 = arith.addf %509, %508 : vector<8x128xf32>
    %511 = arith.divf %509, %510 : vector<8x128xf32>
    %512 = arith.mulf %503, %426 : vector<8x128xf32>
    %513 = arith.mulf %497, %505 : vector<8x128xf32>
    %514 = arith.addf %512, %513 : vector<8x128xf32>
    %515 = math.tanh %514 : vector<8x128xf32>
    %516 = arith.mulf %511, %515 : vector<8x128xf32>
    %cst_120 = arith.constant dense<0.000000e+00> : vector<8x512xf32>
    %517 = tpu.matmul %516, %5, %cst_120 {dimension_numbers = #tpu.dot_dimension_numbers<[1], [0], [0], [1], [0, 0, 1, 1], [], []>} : vector<8x128xf32>, vector<128x512xf32>, vector<8x512xf32> -> vector<8x512xf32>
    %cst_121 = arith.constant dense<0.000000e+00> : vector<8x512xf32>
    %518 = tpu.matmul %458, %7, %cst_121 {dimension_numbers = #tpu.dot_dimension_numbers<[1], [0], [0], [1], [0, 0, 1, 1], [], []>} : vector<8x128xf32>, vector<128x512xf32>, vector<8x512xf32> -> vector<8x512xf32>
    %519 = arith.addf %517, %518 : vector<8x512xf32>
    %520 = vector.broadcast %9 : vector<1x512xf32> to vector<8x512xf32>
    %521 = arith.addf %519, %520 : vector<8x512xf32>
    %522 = vector.extract_strided_slice %521 {offsets = [0, 0], sizes = [8, 128], strides = [1, 1]} : vector<8x512xf32> to vector<8x128xf32>
    %523 = arith.negf %522 : vector<8x128xf32>
    %524 = math.exp %523 : vector<8x128xf32>
    %cst_122 = arith.constant 1.000000e+00 : f32
    %525 = vector.broadcast %cst_122 : f32 to vector<8x128xf32>
    %526 = arith.addf %525, %524 : vector<8x128xf32>
    %527 = arith.divf %525, %526 : vector<8x128xf32>
    %528 = vector.extract_strided_slice %521 {offsets = [0, 128], sizes = [8, 128], strides = [1, 1]} : vector<8x512xf32> to vector<8x128xf32>
    %529 = arith.negf %528 : vector<8x128xf32>
    %530 = math.exp %529 : vector<8x128xf32>
    %cst_123 = arith.constant 1.000000e+00 : f32
    %531 = vector.broadcast %cst_123 : f32 to vector<8x128xf32>
    %532 = arith.addf %531, %530 : vector<8x128xf32>
    %533 = arith.divf %531, %532 : vector<8x128xf32>
    %534 = vector.extract_strided_slice %521 {offsets = [0, 256], sizes = [8, 128], strides = [1, 1]} : vector<8x512xf32> to vector<8x128xf32>
    %535 = math.tanh %534 : vector<8x128xf32>
    %536 = vector.extract_strided_slice %521 {offsets = [0, 384], sizes = [8, 128], strides = [1, 1]} : vector<8x512xf32> to vector<8x128xf32>
    %537 = arith.negf %536 : vector<8x128xf32>
    %538 = math.exp %537 : vector<8x128xf32>
    %cst_124 = arith.constant 1.000000e+00 : f32
    %539 = vector.broadcast %cst_124 : f32 to vector<8x128xf32>
    %540 = arith.addf %539, %538 : vector<8x128xf32>
    %541 = arith.divf %539, %540 : vector<8x128xf32>
    %542 = arith.mulf %533, %456 : vector<8x128xf32>
    %543 = arith.mulf %527, %535 : vector<8x128xf32>
    %544 = arith.addf %542, %543 : vector<8x128xf32>
    %545 = math.tanh %544 : vector<8x128xf32>
    %546 = arith.mulf %541, %545 : vector<8x128xf32>
    %547 = vector.extract_strided_slice %0 {offsets = [0, 6], sizes = [8, 1], strides = [1, 1]} : vector<8x8xi32> to vector<8x1xi32>
    %548 = vector.broadcast %547 : vector<8x1xi32> to vector<8x256xi32>
    %549 = arith.cmpi eq, %18, %548 : vector<8x256xi32>
    %550 = arith.extui %549 : vector<8x256xi1> to vector<8x256xi32>
    %551 = arith.sitofp %550 : vector<8x256xi32> to vector<8x256xf32>
    %cst_125 = arith.constant dense<0.000000e+00> : vector<8x128xf32>
    %552 = tpu.matmul %551, %1, %cst_125 {dimension_numbers = #tpu.dot_dimension_numbers<[1], [0], [0], [1], [0, 0, 1, 1], [], []>} : vector<8x256xf32>, vector<256x128xf32>, vector<8x128xf32> -> vector<8x128xf32>
    %cst_126 = arith.constant dense<0.000000e+00> : vector<8xf32>
    %553 = vector.multi_reduction <add>, %552, %cst_126 [1] : vector<8x128xf32> to vector<8xf32>
    %554 = vector.shape_cast %553 : vector<8xf32> to vector<8x1xf32>
    %cst_127 = arith.constant 1.280000e+02 : f32
    %555 = vector.broadcast %cst_127 : f32 to vector<8x1xf32>
    %556 = arith.divf %554, %555 : vector<8x1xf32>
    %557 = arith.mulf %552, %552 : vector<8x128xf32>
    %cst_128 = arith.constant dense<0.000000e+00> : vector<8xf32>
    %558 = vector.multi_reduction <add>, %557, %cst_128 [1] : vector<8x128xf32> to vector<8xf32>
    %559 = vector.shape_cast %558 : vector<8xf32> to vector<8x1xf32>
    %cst_129 = arith.constant 1.280000e+02 : f32
    %560 = vector.broadcast %cst_129 : f32 to vector<8x1xf32>
    %561 = arith.divf %559, %560 : vector<8x1xf32>
    %562 = arith.mulf %556, %556 : vector<8x1xf32>
    %563 = arith.subf %561, %562 : vector<8x1xf32>
    %564 = vector.broadcast %556 : vector<8x1xf32> to vector<8x128xf32>
    %565 = arith.subf %552, %564 : vector<8x128xf32>
    %cst_130 = arith.constant 9.99999974E-6 : f32
    %566 = vector.broadcast %cst_130 : f32 to vector<8x1xf32>
    %567 = arith.addf %563, %566 : vector<8x1xf32>
    %568 = math.rsqrt %567 : vector<8x1xf32>
    %569 = vector.broadcast %568 : vector<8x1xf32> to vector<8x128xf32>
    %570 = arith.mulf %565, %569 : vector<8x128xf32>
    %571 = vector.broadcast %2 : vector<1x128xf32> to vector<8x128xf32>
    %572 = arith.mulf %570, %571 : vector<8x128xf32>
    %573 = vector.broadcast %3 : vector<1x128xf32> to vector<8x128xf32>
    %574 = arith.addf %572, %573 : vector<8x128xf32>
    %cst_131 = arith.constant dense<0.000000e+00> : vector<8x512xf32>
    %575 = tpu.matmul %574, %4, %cst_131 {dimension_numbers = #tpu.dot_dimension_numbers<[1], [0], [0], [1], [0, 0, 1, 1], [], []>} : vector<8x128xf32>, vector<128x512xf32>, vector<8x512xf32> -> vector<8x512xf32>
    %cst_132 = arith.constant dense<0.000000e+00> : vector<8x512xf32>
    %576 = tpu.matmul %516, %6, %cst_132 {dimension_numbers = #tpu.dot_dimension_numbers<[1], [0], [0], [1], [0, 0, 1, 1], [], []>} : vector<8x128xf32>, vector<128x512xf32>, vector<8x512xf32> -> vector<8x512xf32>
    %577 = arith.addf %575, %576 : vector<8x512xf32>
    %578 = vector.broadcast %8 : vector<1x512xf32> to vector<8x512xf32>
    %579 = arith.addf %577, %578 : vector<8x512xf32>
    %580 = vector.extract_strided_slice %579 {offsets = [0, 0], sizes = [8, 128], strides = [1, 1]} : vector<8x512xf32> to vector<8x128xf32>
    %581 = arith.negf %580 : vector<8x128xf32>
    %582 = math.exp %581 : vector<8x128xf32>
    %cst_133 = arith.constant 1.000000e+00 : f32
    %583 = vector.broadcast %cst_133 : f32 to vector<8x128xf32>
    %584 = arith.addf %583, %582 : vector<8x128xf32>
    %585 = arith.divf %583, %584 : vector<8x128xf32>
    %586 = vector.extract_strided_slice %579 {offsets = [0, 128], sizes = [8, 128], strides = [1, 1]} : vector<8x512xf32> to vector<8x128xf32>
    %587 = arith.negf %586 : vector<8x128xf32>
    %588 = math.exp %587 : vector<8x128xf32>
    %cst_134 = arith.constant 1.000000e+00 : f32
    %589 = vector.broadcast %cst_134 : f32 to vector<8x128xf32>
    %590 = arith.addf %589, %588 : vector<8x128xf32>
    %591 = arith.divf %589, %590 : vector<8x128xf32>
    %592 = vector.extract_strided_slice %579 {offsets = [0, 256], sizes = [8, 128], strides = [1, 1]} : vector<8x512xf32> to vector<8x128xf32>
    %593 = math.tanh %592 : vector<8x128xf32>
    %594 = vector.extract_strided_slice %579 {offsets = [0, 384], sizes = [8, 128], strides = [1, 1]} : vector<8x512xf32> to vector<8x128xf32>
    %595 = arith.negf %594 : vector<8x128xf32>
    %596 = math.exp %595 : vector<8x128xf32>
    %cst_135 = arith.constant 1.000000e+00 : f32
    %597 = vector.broadcast %cst_135 : f32 to vector<8x128xf32>
    %598 = arith.addf %597, %596 : vector<8x128xf32>
    %599 = arith.divf %597, %598 : vector<8x128xf32>
    %600 = arith.mulf %591, %514 : vector<8x128xf32>
    %601 = arith.mulf %585, %593 : vector<8x128xf32>
    %602 = arith.addf %600, %601 : vector<8x128xf32>
    %603 = math.tanh %602 : vector<8x128xf32>
    %604 = arith.mulf %599, %603 : vector<8x128xf32>
    %cst_136 = arith.constant dense<0.000000e+00> : vector<8x512xf32>
    %605 = tpu.matmul %604, %5, %cst_136 {dimension_numbers = #tpu.dot_dimension_numbers<[1], [0], [0], [1], [0, 0, 1, 1], [], []>} : vector<8x128xf32>, vector<128x512xf32>, vector<8x512xf32> -> vector<8x512xf32>
    %cst_137 = arith.constant dense<0.000000e+00> : vector<8x512xf32>
    %606 = tpu.matmul %546, %7, %cst_137 {dimension_numbers = #tpu.dot_dimension_numbers<[1], [0], [0], [1], [0, 0, 1, 1], [], []>} : vector<8x128xf32>, vector<128x512xf32>, vector<8x512xf32> -> vector<8x512xf32>
    %607 = arith.addf %605, %606 : vector<8x512xf32>
    %608 = vector.broadcast %9 : vector<1x512xf32> to vector<8x512xf32>
    %609 = arith.addf %607, %608 : vector<8x512xf32>
    %610 = vector.extract_strided_slice %609 {offsets = [0, 0], sizes = [8, 128], strides = [1, 1]} : vector<8x512xf32> to vector<8x128xf32>
    %611 = arith.negf %610 : vector<8x128xf32>
    %612 = math.exp %611 : vector<8x128xf32>
    %cst_138 = arith.constant 1.000000e+00 : f32
    %613 = vector.broadcast %cst_138 : f32 to vector<8x128xf32>
    %614 = arith.addf %613, %612 : vector<8x128xf32>
    %615 = arith.divf %613, %614 : vector<8x128xf32>
    %616 = vector.extract_strided_slice %609 {offsets = [0, 128], sizes = [8, 128], strides = [1, 1]} : vector<8x512xf32> to vector<8x128xf32>
    %617 = arith.negf %616 : vector<8x128xf32>
    %618 = math.exp %617 : vector<8x128xf32>
    %cst_139 = arith.constant 1.000000e+00 : f32
    %619 = vector.broadcast %cst_139 : f32 to vector<8x128xf32>
    %620 = arith.addf %619, %618 : vector<8x128xf32>
    %621 = arith.divf %619, %620 : vector<8x128xf32>
    %622 = vector.extract_strided_slice %609 {offsets = [0, 256], sizes = [8, 128], strides = [1, 1]} : vector<8x512xf32> to vector<8x128xf32>
    %623 = math.tanh %622 : vector<8x128xf32>
    %624 = vector.extract_strided_slice %609 {offsets = [0, 384], sizes = [8, 128], strides = [1, 1]} : vector<8x512xf32> to vector<8x128xf32>
    %625 = arith.negf %624 : vector<8x128xf32>
    %626 = math.exp %625 : vector<8x128xf32>
    %cst_140 = arith.constant 1.000000e+00 : f32
    %627 = vector.broadcast %cst_140 : f32 to vector<8x128xf32>
    %628 = arith.addf %627, %626 : vector<8x128xf32>
    %629 = arith.divf %627, %628 : vector<8x128xf32>
    %630 = arith.mulf %621, %544 : vector<8x128xf32>
    %631 = arith.mulf %615, %623 : vector<8x128xf32>
    %632 = arith.addf %630, %631 : vector<8x128xf32>
    %633 = math.tanh %632 : vector<8x128xf32>
    %634 = arith.mulf %629, %633 : vector<8x128xf32>
    %635 = vector.extract_strided_slice %0 {offsets = [0, 7], sizes = [8, 1], strides = [1, 1]} : vector<8x8xi32> to vector<8x1xi32>
    %636 = vector.broadcast %635 : vector<8x1xi32> to vector<8x256xi32>
    %637 = arith.cmpi eq, %18, %636 : vector<8x256xi32>
    %638 = arith.extui %637 : vector<8x256xi1> to vector<8x256xi32>
    %639 = arith.sitofp %638 : vector<8x256xi32> to vector<8x256xf32>
    %cst_141 = arith.constant dense<0.000000e+00> : vector<8x128xf32>
    %640 = tpu.matmul %639, %1, %cst_141 {dimension_numbers = #tpu.dot_dimension_numbers<[1], [0], [0], [1], [0, 0, 1, 1], [], []>} : vector<8x256xf32>, vector<256x128xf32>, vector<8x128xf32> -> vector<8x128xf32>
    %cst_142 = arith.constant dense<0.000000e+00> : vector<8xf32>
    %641 = vector.multi_reduction <add>, %640, %cst_142 [1] : vector<8x128xf32> to vector<8xf32>
    %642 = vector.shape_cast %641 : vector<8xf32> to vector<8x1xf32>
    %cst_143 = arith.constant 1.280000e+02 : f32
    %643 = vector.broadcast %cst_143 : f32 to vector<8x1xf32>
    %644 = arith.divf %642, %643 : vector<8x1xf32>
    %645 = arith.mulf %640, %640 : vector<8x128xf32>
    %cst_144 = arith.constant dense<0.000000e+00> : vector<8xf32>
    %646 = vector.multi_reduction <add>, %645, %cst_144 [1] : vector<8x128xf32> to vector<8xf32>
    %647 = vector.shape_cast %646 : vector<8xf32> to vector<8x1xf32>
    %cst_145 = arith.constant 1.280000e+02 : f32
    %648 = vector.broadcast %cst_145 : f32 to vector<8x1xf32>
    %649 = arith.divf %647, %648 : vector<8x1xf32>
    %650 = arith.mulf %644, %644 : vector<8x1xf32>
    %651 = arith.subf %649, %650 : vector<8x1xf32>
    %652 = vector.broadcast %644 : vector<8x1xf32> to vector<8x128xf32>
    %653 = arith.subf %640, %652 : vector<8x128xf32>
    %cst_146 = arith.constant 9.99999974E-6 : f32
    %654 = vector.broadcast %cst_146 : f32 to vector<8x1xf32>
    %655 = arith.addf %651, %654 : vector<8x1xf32>
    %656 = math.rsqrt %655 : vector<8x1xf32>
    %657 = vector.broadcast %656 : vector<8x1xf32> to vector<8x128xf32>
    %658 = arith.mulf %653, %657 : vector<8x128xf32>
    %659 = vector.broadcast %2 : vector<1x128xf32> to vector<8x128xf32>
    %660 = arith.mulf %658, %659 : vector<8x128xf32>
    %661 = vector.broadcast %3 : vector<1x128xf32> to vector<8x128xf32>
    %662 = arith.addf %660, %661 : vector<8x128xf32>
    %cst_147 = arith.constant dense<0.000000e+00> : vector<8x512xf32>
    %663 = tpu.matmul %662, %4, %cst_147 {dimension_numbers = #tpu.dot_dimension_numbers<[1], [0], [0], [1], [0, 0, 1, 1], [], []>} : vector<8x128xf32>, vector<128x512xf32>, vector<8x512xf32> -> vector<8x512xf32>
    %cst_148 = arith.constant dense<0.000000e+00> : vector<8x512xf32>
    %664 = tpu.matmul %604, %6, %cst_148 {dimension_numbers = #tpu.dot_dimension_numbers<[1], [0], [0], [1], [0, 0, 1, 1], [], []>} : vector<8x128xf32>, vector<128x512xf32>, vector<8x512xf32> -> vector<8x512xf32>
    %665 = arith.addf %663, %664 : vector<8x512xf32>
    %666 = vector.broadcast %8 : vector<1x512xf32> to vector<8x512xf32>
    %667 = arith.addf %665, %666 : vector<8x512xf32>
    %668 = vector.extract_strided_slice %667 {offsets = [0, 0], sizes = [8, 128], strides = [1, 1]} : vector<8x512xf32> to vector<8x128xf32>
    %669 = arith.negf %668 : vector<8x128xf32>
    %670 = math.exp %669 : vector<8x128xf32>
    %cst_149 = arith.constant 1.000000e+00 : f32
    %671 = vector.broadcast %cst_149 : f32 to vector<8x128xf32>
    %672 = arith.addf %671, %670 : vector<8x128xf32>
    %673 = arith.divf %671, %672 : vector<8x128xf32>
    %674 = vector.extract_strided_slice %667 {offsets = [0, 128], sizes = [8, 128], strides = [1, 1]} : vector<8x512xf32> to vector<8x128xf32>
    %675 = arith.negf %674 : vector<8x128xf32>
    %676 = math.exp %675 : vector<8x128xf32>
    %cst_150 = arith.constant 1.000000e+00 : f32
    %677 = vector.broadcast %cst_150 : f32 to vector<8x128xf32>
    %678 = arith.addf %677, %676 : vector<8x128xf32>
    %679 = arith.divf %677, %678 : vector<8x128xf32>
    %680 = vector.extract_strided_slice %667 {offsets = [0, 256], sizes = [8, 128], strides = [1, 1]} : vector<8x512xf32> to vector<8x128xf32>
    %681 = math.tanh %680 : vector<8x128xf32>
    %682 = vector.extract_strided_slice %667 {offsets = [0, 384], sizes = [8, 128], strides = [1, 1]} : vector<8x512xf32> to vector<8x128xf32>
    %683 = arith.negf %682 : vector<8x128xf32>
    %684 = math.exp %683 : vector<8x128xf32>
    %cst_151 = arith.constant 1.000000e+00 : f32
    %685 = vector.broadcast %cst_151 : f32 to vector<8x128xf32>
    %686 = arith.addf %685, %684 : vector<8x128xf32>
    %687 = arith.divf %685, %686 : vector<8x128xf32>
    %688 = arith.mulf %679, %602 : vector<8x128xf32>
    %689 = arith.mulf %673, %681 : vector<8x128xf32>
    %690 = arith.addf %688, %689 : vector<8x128xf32>
    %691 = math.tanh %690 : vector<8x128xf32>
    %692 = arith.mulf %687, %691 : vector<8x128xf32>
    %cst_152 = arith.constant dense<0.000000e+00> : vector<8x512xf32>
    %693 = tpu.matmul %692, %5, %cst_152 {dimension_numbers = #tpu.dot_dimension_numbers<[1], [0], [0], [1], [0, 0, 1, 1], [], []>} : vector<8x128xf32>, vector<128x512xf32>, vector<8x512xf32> -> vector<8x512xf32>
    %cst_153 = arith.constant dense<0.000000e+00> : vector<8x512xf32>
    %694 = tpu.matmul %634, %7, %cst_153 {dimension_numbers = #tpu.dot_dimension_numbers<[1], [0], [0], [1], [0, 0, 1, 1], [], []>} : vector<8x128xf32>, vector<128x512xf32>, vector<8x512xf32> -> vector<8x512xf32>
    %695 = arith.addf %693, %694 : vector<8x512xf32>
    %696 = vector.broadcast %9 : vector<1x512xf32> to vector<8x512xf32>
    %697 = arith.addf %695, %696 : vector<8x512xf32>
    %698 = vector.extract_strided_slice %697 {offsets = [0, 0], sizes = [8, 128], strides = [1, 1]} : vector<8x512xf32> to vector<8x128xf32>
    %699 = arith.negf %698 : vector<8x128xf32>
    %700 = math.exp %699 : vector<8x128xf32>
    %cst_154 = arith.constant 1.000000e+00 : f32
    %701 = vector.broadcast %cst_154 : f32 to vector<8x128xf32>
    %702 = arith.addf %701, %700 : vector<8x128xf32>
    %703 = arith.divf %701, %702 : vector<8x128xf32>
    %704 = vector.extract_strided_slice %697 {offsets = [0, 128], sizes = [8, 128], strides = [1, 1]} : vector<8x512xf32> to vector<8x128xf32>
    %705 = arith.negf %704 : vector<8x128xf32>
    %706 = math.exp %705 : vector<8x128xf32>
    %cst_155 = arith.constant 1.000000e+00 : f32
    %707 = vector.broadcast %cst_155 : f32 to vector<8x128xf32>
    %708 = arith.addf %707, %706 : vector<8x128xf32>
    %709 = arith.divf %707, %708 : vector<8x128xf32>
    %710 = vector.extract_strided_slice %697 {offsets = [0, 256], sizes = [8, 128], strides = [1, 1]} : vector<8x512xf32> to vector<8x128xf32>
    %711 = math.tanh %710 : vector<8x128xf32>
    %712 = vector.extract_strided_slice %697 {offsets = [0, 384], sizes = [8, 128], strides = [1, 1]} : vector<8x512xf32> to vector<8x128xf32>
    %713 = arith.negf %712 : vector<8x128xf32>
    %714 = math.exp %713 : vector<8x128xf32>
    %cst_156 = arith.constant 1.000000e+00 : f32
    %715 = vector.broadcast %cst_156 : f32 to vector<8x128xf32>
    %716 = arith.addf %715, %714 : vector<8x128xf32>
    %717 = arith.divf %715, %716 : vector<8x128xf32>
    %718 = arith.mulf %709, %632 : vector<8x128xf32>
    %719 = arith.mulf %703, %711 : vector<8x128xf32>
    %720 = arith.addf %718, %719 : vector<8x128xf32>
    %721 = math.tanh %720 : vector<8x128xf32>
    %722 = arith.mulf %717, %721 : vector<8x128xf32>
    %c0_157 = arith.constant 0 : index
    %c0_158 = arith.constant 0 : index
    %723 = vector.load %arg11[%c0_157, %c0_158] : memref<1x128xf32, #tpu.memory_space<vmem>>, vector<1x128xf32>
    %c0_159 = arith.constant 0 : index
    %c0_160 = arith.constant 0 : index
    %724 = vector.load %arg12[%c0_159, %c0_160] : memref<1x128xf32, #tpu.memory_space<vmem>>, vector<1x128xf32>
    %cst_161 = arith.constant dense<0.000000e+00> : vector<8xf32>
    %725 = vector.multi_reduction <add>, %722, %cst_161 [1] : vector<8x128xf32> to vector<8xf32>
    %726 = vector.shape_cast %725 : vector<8xf32> to vector<8x1xf32>
    %cst_162 = arith.constant 1.280000e+02 : f32
    %727 = vector.broadcast %cst_162 : f32 to vector<8x1xf32>
    %728 = arith.divf %726, %727 : vector<8x1xf32>
    %729 = arith.mulf %722, %722 : vector<8x128xf32>
    %cst_163 = arith.constant dense<0.000000e+00> : vector<8xf32>
    %730 = vector.multi_reduction <add>, %729, %cst_163 [1] : vector<8x128xf32> to vector<8xf32>
    %731 = vector.shape_cast %730 : vector<8xf32> to vector<8x1xf32>
    %cst_164 = arith.constant 1.280000e+02 : f32
    %732 = vector.broadcast %cst_164 : f32 to vector<8x1xf32>
    %733 = arith.divf %731, %732 : vector<8x1xf32>
    %734 = arith.mulf %728, %728 : vector<8x1xf32>
    %735 = arith.subf %733, %734 : vector<8x1xf32>
    %736 = vector.broadcast %728 : vector<8x1xf32> to vector<8x128xf32>
    %737 = arith.subf %722, %736 : vector<8x128xf32>
    %cst_165 = arith.constant 9.99999974E-6 : f32
    %738 = vector.broadcast %cst_165 : f32 to vector<8x1xf32>
    %739 = arith.addf %735, %738 : vector<8x1xf32>
    %740 = math.rsqrt %739 : vector<8x1xf32>
    %741 = vector.broadcast %740 : vector<8x1xf32> to vector<8x128xf32>
    %742 = arith.mulf %737, %741 : vector<8x128xf32>
    %743 = vector.broadcast %723 : vector<1x128xf32> to vector<8x128xf32>
    %744 = arith.mulf %742, %743 : vector<8x128xf32>
    %745 = vector.broadcast %724 : vector<1x128xf32> to vector<8x128xf32>
    %746 = arith.addf %744, %745 : vector<8x128xf32>
    %c0_166 = arith.constant 0 : index
    %c0_167 = arith.constant 0 : index
    %747 = vector.load %arg13[%c0_166, %c0_167] : memref<128x256xf32, #tpu.memory_space<vmem>>, vector<128x256xf32>
    %cst_168 = arith.constant dense<0.000000e+00> : vector<8x256xf32>
    %748 = tpu.matmul %746, %747, %cst_168 {dimension_numbers = #tpu.dot_dimension_numbers<[1], [0], [0], [1], [0, 0, 1, 1], [], []>} : vector<8x128xf32>, vector<128x256xf32>, vector<8x256xf32> -> vector<8x256xf32>
    %c0_169 = arith.constant 0 : index
    %c0_170 = arith.constant 0 : index
    %749 = vector.load %arg14[%c0_169, %c0_170] : memref<1x256xf32, #tpu.memory_space<vmem>>, vector<1x256xf32>
    %750 = vector.broadcast %749 : vector<1x256xf32> to vector<8x256xf32>
    %751 = arith.addf %748, %750 : vector<8x256xf32>
    %cst_171 = arith.constant dense<0xFF800000> : vector<8xf32>
    %752 = vector.multi_reduction <maximumf>, %751, %cst_171 [1] : vector<8x256xf32> to vector<8xf32>
    %753 = vector.shape_cast %752 : vector<8xf32> to vector<8x1xf32>
    %754 = vector.broadcast %753 : vector<8x1xf32> to vector<8x256xf32>
    %755 = arith.subf %751, %754 : vector<8x256xf32>
    %756 = math.exp %755 : vector<8x256xf32>
    %cst_172 = arith.constant dense<0.000000e+00> : vector<8xf32>
    %757 = vector.multi_reduction <add>, %756, %cst_172 [1] : vector<8x256xf32> to vector<8xf32>
    %758 = vector.shape_cast %757 : vector<8xf32> to vector<8x1xf32>
    %759 = math.log %758 : vector<8x1xf32>
    %760 = vector.broadcast %759 : vector<8x1xf32> to vector<8x256xf32>
    %761 = arith.subf %755, %760 : vector<8x256xf32>
    %c0_173 = arith.constant 0 : index
    %c0_174 = arith.constant 0 : index
    %762 = vector.load %arg17[%c0_173, %c0_174] : memref<8x256xf32, #tpu.memory_space<vmem>>, vector<8x256xf32>
    tpu.vector_store %arg17[%c0_173, %c0_174], %761 {strides = array<i32>} : memref<8x256xf32, #tpu.memory_space<vmem>>, vector<8x256xf32>,
    %c0_175 = arith.constant 0 : index
    %c0_176 = arith.constant 0 : index
    %c0_177 = arith.constant 0 : index
    %763 = vector.load %arg18[%c0_175, %c0_176, %c0_177] : memref<2x8x128xf32, #tpu.memory_space<vmem>>, vector<1x8x128xf32>
    %764 = vector.shape_cast %763 : vector<1x8x128xf32> to vector<8x128xf32>
    %765 = vector.shape_cast %692 : vector<8x128xf32> to vector<1x8x128xf32>
    tpu.vector_store %arg18[%c0_175, %c0_176, %c0_177], %765 {strides = array<i32>} : memref<2x8x128xf32, #tpu.memory_space<vmem>>, vector<1x8x128xf32>,
    %c0_178 = arith.constant 0 : index
    %c0_179 = arith.constant 0 : index
    %c0_180 = arith.constant 0 : index
    %766 = vector.load %arg19[%c0_178, %c0_179, %c0_180] : memref<2x8x128xf32, #tpu.memory_space<vmem>>, vector<1x8x128xf32>
    %767 = vector.shape_cast %766 : vector<1x8x128xf32> to vector<8x128xf32>
    %768 = vector.shape_cast %690 : vector<8x128xf32> to vector<1x8x128xf32>
    tpu.vector_store %arg19[%c0_178, %c0_179, %c0_180], %768 {strides = array<i32>} : memref<2x8x128xf32, #tpu.memory_space<vmem>>, vector<1x8x128xf32>,
    %c1_181 = arith.constant 1 : index
    %c0_182 = arith.constant 0 : index
    %c0_183 = arith.constant 0 : index
    %769 = vector.load %arg18[%c1_181, %c0_182, %c0_183] : memref<2x8x128xf32, #tpu.memory_space<vmem>>, vector<1x8x128xf32>
    %770 = vector.shape_cast %769 : vector<1x8x128xf32> to vector<8x128xf32>
    %771 = vector.shape_cast %722 : vector<8x128xf32> to vector<1x8x128xf32>
    tpu.vector_store %arg18[%c1_181, %c0_182, %c0_183], %771 {strides = array<i32>} : memref<2x8x128xf32, #tpu.memory_space<vmem>>, vector<1x8x128xf32>,
    %c1_184 = arith.constant 1 : index
    %c0_185 = arith.constant 0 : index
    %c0_186 = arith.constant 0 : index
    %772 = vector.load %arg19[%c1_184, %c0_185, %c0_186] : memref<2x8x128xf32, #tpu.memory_space<vmem>>, vector<1x8x128xf32>
    %773 = vector.shape_cast %772 : vector<1x8x128xf32> to vector<8x128xf32>
    %774 = vector.shape_cast %720 : vector<8x128xf32> to vector<1x8x128xf32>
    tpu.vector_store %arg19[%c1_184, %c0_185, %c0_186], %774 {strides = array<i32>} : memref<2x8x128xf32, #tpu.memory_space<vmem>>, vector<1x8x128xf32>,
    return
  }
  func.func @transform_0(%arg0: i32) -> (i32, i32) {
    %c0_i32 = arith.constant 0 : i32
    %c0_i32_0 = arith.constant 0 : i32
    return %arg0, %c0_i32 : i32, i32
  }
  func.func @transform_1(%arg0: i32) -> (i32, i32) {
    %c0_i32 = arith.constant 0 : i32
    %c0_i32_0 = arith.constant 0 : i32
    %c0_i32_1 = arith.constant 0 : i32
    return %c0_i32, %c0_i32_0 : i32, i32
  }
  func.func @transform_2(%arg0: i32) -> (i32, i32) {
    %c0_i32 = arith.constant 0 : i32
    %c0_i32_0 = arith.constant 0 : i32
    %c0_i32_1 = arith.constant 0 : i32
    return %c0_i32, %c0_i32_0 : i32, i32
  }
  func.func @transform_3(%arg0: i32) -> (i32, i32) {
    %c0_i32 = arith.constant 0 : i32
    %c0_i32_0 = arith.constant 0 : i32
    %c0_i32_1 = arith.constant 0 : i32
    return %c0_i32, %c0_i32_0 : i32, i32
  }
  func.func @transform_4(%arg0: i32) -> (i32, i32) {
    %c0_i32 = arith.constant 0 : i32
    %c0_i32_0 = arith.constant 0 : i32
    %c0_i32_1 = arith.constant 0 : i32
    return %c0_i32, %c0_i32_0 : i32, i32
  }
  func.func @transform_5(%arg0: i32) -> (i32, i32) {
    %c0_i32 = arith.constant 0 : i32
    %c0_i32_0 = arith.constant 0 : i32
    %c0_i32_1 = arith.constant 0 : i32
    return %c0_i32, %c0_i32_0 : i32, i32
  }
  func.func @transform_6(%arg0: i32) -> (i32, i32) {
    %c0_i32 = arith.constant 0 : i32
    %c0_i32_0 = arith.constant 0 : i32
    %c0_i32_1 = arith.constant 0 : i32
    return %c0_i32, %c0_i32_0 : i32, i32
  }
  func.func @transform_7(%arg0: i32) -> (i32, i32) {
    %c0_i32 = arith.constant 0 : i32
    %c0_i32_0 = arith.constant 0 : i32
    %c0_i32_1 = arith.constant 0 : i32
    return %c0_i32, %c0_i32_0 : i32, i32
  }
  func.func @transform_8(%arg0: i32) -> (i32, i32) {
    %c0_i32 = arith.constant 0 : i32
    %c0_i32_0 = arith.constant 0 : i32
    %c0_i32_1 = arith.constant 0 : i32
    return %c0_i32, %c0_i32_0 : i32, i32
  }
  func.func @transform_9(%arg0: i32) -> (i32, i32) {
    %c0_i32 = arith.constant 0 : i32
    %c0_i32_0 = arith.constant 0 : i32
    %c0_i32_1 = arith.constant 0 : i32
    return %c0_i32, %c0_i32_0 : i32, i32
  }
  func.func @transform_10(%arg0: i32) -> (i32, i32) {
    %c0_i32 = arith.constant 0 : i32
    %c0_i32_0 = arith.constant 0 : i32
    %c0_i32_1 = arith.constant 0 : i32
    return %c0_i32, %c0_i32_0 : i32, i32
  }
  func.func @transform_11(%arg0: i32) -> (i32, i32) {
    %c0_i32 = arith.constant 0 : i32
    %c0_i32_0 = arith.constant 0 : i32
    %c0_i32_1 = arith.constant 0 : i32
    return %c0_i32, %c0_i32_0 : i32, i32
  }
  func.func @transform_12(%arg0: i32) -> (i32, i32) {
    %c0_i32 = arith.constant 0 : i32
    %c0_i32_0 = arith.constant 0 : i32
    %c0_i32_1 = arith.constant 0 : i32
    return %c0_i32, %c0_i32_0 : i32, i32
  }
  func.func @transform_13(%arg0: i32) -> (i32, i32) {
    %c0_i32 = arith.constant 0 : i32
    %c0_i32_0 = arith.constant 0 : i32
    %c0_i32_1 = arith.constant 0 : i32
    return %c0_i32, %c0_i32_0 : i32, i32
  }
  func.func @transform_14(%arg0: i32) -> (i32, i32, i32) {
    %c0_i32 = arith.constant 0 : i32
    %c0_i32_0 = arith.constant 0 : i32
    %c0_i32_1 = arith.constant 0 : i32
    return %c0_i32, %arg0, %c0_i32_0 : i32, i32, i32
  }
  func.func @transform_15(%arg0: i32) -> (i32, i32, i32) {
    %c0_i32 = arith.constant 0 : i32
    %c0_i32_0 = arith.constant 0 : i32
    %c0_i32_1 = arith.constant 0 : i32
    return %c0_i32, %arg0, %c0_i32_0 : i32, i32, i32
  }
  func.func @transform_16(%arg0: i32) -> (i32, i32) {
    %c0_i32 = arith.constant 0 : i32
    %c0_i32_0 = arith.constant 0 : i32
    return %arg0, %c0_i32 : i32, i32
  }
  func.func @transform_17(%arg0: i32) -> (i32, i32, i32) {
    %c0_i32 = arith.constant 0 : i32
    %c0_i32_0 = arith.constant 0 : i32
    %c0_i32_1 = arith.constant 0 : i32
    return %c0_i32, %arg0, %c0_i32_0 : i32, i32, i32
  }
  func.func @transform_18(%arg0: i32) -> (i32, i32, i32) {
    %c0_i32 = arith.constant 0 : i32
    %c0_i32_0 = arith.constant 0 : i32
    %c0_i32_1 = arith.constant 0 : i32
    return %c0_i32, %arg0, %c0_i32_0 : i32, i32, i32
  }
}

</mosaic_0001>

<llo_original>
// kernel: tpu_custom_call.1
$region0: #{tpu_custom_call.1}
  #allocation0 [shape = 'u32[]', space=smem, size = 0x4, offset = 0x4, fixed_abs, tag = 'smem constant byte address 0x4 - core index']
  #allocation1 [shape = 'u32[144,128]{1,0:T(1,128)}', space=vmem, size = 0x12000, scoped, tag = 'internal scratch']
  %s0 = inlined_call_operand.vmem [shape: s32[32,8], index: 0, kind: input, shape index: {}]
  %s1 = inlined_call_operand.hbm [shape: f32[256,128], index: 1, kind: input, shape index: {}]
  %s2 = inlined_call_operand.vmem [shape: f32[1,128], index: 2, kind: input, shape index: {}]
  %s3 = inlined_call_operand.vmem [shape: f32[1,128], index: 3, kind: input, shape index: {}]
  %s4 = inlined_call_operand.hbm [shape: f32[128,512], index: 4, kind: input, shape index: {}]
  %s5 = inlined_call_operand.hbm [shape: f32[128,512], index: 5, kind: input, shape index: {}]
  %s6 = inlined_call_operand.vmem [shape: f32[1,512], index: 6, kind: input, shape index: {}]
  %s7 = inlined_call_operand.hbm [shape: f32[128,512], index: 7, kind: input, shape index: {}]
  %s8 = inlined_call_operand.hbm [shape: f32[128,512], index: 8, kind: input, shape index: {}]
  %s9 = inlined_call_operand.vmem [shape: f32[1,512], index: 9, kind: input, shape index: {}]
  %s10 = inlined_call_operand.vmem [shape: f32[1,128], index: 10, kind: input, shape index: {}]
  %s11 = inlined_call_operand.vmem [shape: f32[1,128], index: 11, kind: input, shape index: {}]
  %s12 = inlined_call_operand.hbm [shape: f32[128,256], index: 12, kind: input, shape index: {}]
  %s13 = inlined_call_operand.vmem [shape: f32[1,256], index: 13, kind: input, shape index: {}]
  %s14 = inlined_call_operand.vmem [shape: f32[2,32,128], index: 14, kind: input, shape index: {}]
  %s15 = inlined_call_operand.hbm [shape: f32[2,32,128], index: 15, kind: input, shape index: {}]
  %s16 = inlined_call_operand.hbm [shape: f32[32,256], index: 16, kind: output, shape index: {0}]
  %s17 = inlined_call_operand.hbm [shape: f32[2,32,128], index: 17, kind: output, shape index: {1}]
  %s18 = inlined_call_operand.hbm [shape: f32[2,32,128], index: 18, kind: output, shape index: {2}]
  %19 = xla_tuple %s16, %s17, %s18
  %s20 = sld [smem:[#allocation0]]
  $region179: #{tpu_custom_call.1} parent=0
    _
  %s22 = ssub.s32 1, %s20
  %s23 = scalar_select 0, %s22, %s20
  $region1: #{tpu_custom_call.1} parent=0
    #allocation2 [shape = 'u8[131072]{0}', space=vmem, size = 0x20000, scoped, tag = 'input window, operand 1, single buffered']
    #allocation3 [shape = 's32[2]{0}', space=sflag, size = 0x8, scoped, tag = 'scoped memory for tpu_custom_call.1']
    #allocation4 [shape = 's32[2]{0}', space=sflag, size = 0x8, scoped, tag = 'scoped memory for tpu_custom_call.1']
    #allocation5 [shape = 'u8[262144]{0}', space=vmem, size = 0x40000, scoped, tag = 'input window, operand 4, single buffered']
    #allocation6 [shape = 's32[1]{0}', space=sflag, size = 0x4, scoped, tag = 'scoped memory for tpu_custom_call.1']
    #allocation7 [shape = 'u8[262144]{0}', space=vmem, size = 0x40000, scoped, tag = 'input window, operand 5, single buffered']
    #allocation8 [shape = 'u8[262144]{0}', space=vmem, size = 0x40000, scoped, tag = 'input window, operand 7, single buffered']
    #allocation9 [shape = 's32[1]{0}', space=sflag, size = 0x4, scoped, tag = 'scoped memory for tpu_custom_call.1']
    #allocation10 [shape = 'u8[262144]{0}', space=vmem, size = 0x40000, scoped, tag = 'input window, operand 8, single buffered']
    #allocation11 [shape = 'u8[131072]{0}', space=vmem, size = 0x20000, scoped, tag = 'input window, operand 12, single buffered']
    #allocation12 [shape = 's32[1]{0}', space=sflag, size = 0x4, scoped, tag = 'scoped memory for tpu_custom_call.1']
    #allocation13 [shape = 'u8[16384]{0}', space=vmem, size = 0x4000, scoped, tag = 'input window, operand 14']
    #allocation14 [shape = 'u8[16384]{0}', space=vmem, size = 0x4000, scoped, tag = 'input window, operand 15']
    #allocation15 [shape = 'u8[16384]{0}', space=vmem, size = 0x4000, scoped, tag = 'output window, operand 0']
    #allocation16 [shape = 'u8[16384]{0}', space=vmem, size = 0x4000, scoped, tag = 'output window, operand 1']
    #allocation17 [shape = 's32[2]{0}', space=sflag, size = 0x8, scoped, tag = 'scoped memory for tpu_custom_call.1']
    #allocation18 [shape = 'u8[16384]{0}', space=vmem, size = 0x4000, scoped, tag = 'output window, operand 2']
    %24 = vsyncpa [#allocation3], 0
    %25 = vsyncpa [#allocation6], 0
    %26 = vsyncpa [#allocation9], 0
    %27 = vsyncpa [#allocation12], 0
    %28 = vsyncpa [#allocation4], 0
    %s29 = scalar_lea.sflag [#allocation4], 1
    %30 = vsyncpa %s29, 0
    %31 = vsyncpa [#allocation17], 0
    %s32 = scalar_lea.sflag [#allocation17], 1
    %33 = vsyncpa %s32, 0
    loop: start=0, step=1, limit=6
    $region2: #{tpu_custom_call.1} parent=1 // loop_pre_header
      _
    $region3: #{tpu_custom_call.1} parent=1 // loop_header
      %s35 = sphi 0, %s39
      %p36 = scmp.ge.s32.totalorder %s35, 6
      %s45 = sphi 0, %s47
      %s48 = sphi 0, %s45
      %s49 = sphi 0, %s48
      %s65 = sphi 0, %s49
      %s69 = sphi 0, %s69
      %s71 = sphi 0, %s69
      %s72 = sphi 0, %s71
      %s86 = sphi 0, %s72
      %s90 = sphi 0, %s90
      %s92 = sphi 0, %s90
      %s93 = sphi 0, %s92
      %s107 = sphi 0, %s93
      %s111 = sphi 0, %s111
      %s113 = sphi 0, %s111
      %s114 = sphi 0, %s113
      %s128 = sphi 0, %s114
      %s132 = sphi 0, %s132
      %s134 = sphi 0, %s132
      %s135 = sphi 0, %s134
      %s149 = sphi 0, %s135
      %s153 = sphi 0, %s153
      %s155 = sphi 0, %s153
      %s156 = sphi 0, %s155
      %s170 = sphi 0, %s156
      %s174 = sphi 0, %s174
      %s176 = sphi 0, %s174
      %s177 = sphi 0, %s176
      %s191 = sphi 0, %s177
      %s195 = sphi 0, %s195
      %s197 = sphi 0, %s195
      %s198 = sphi 0, %s197
      %s212 = sphi 0, %s198
      %s216 = sphi 0, %s216
      %s218 = sphi 0, %s216
      %s219 = sphi 0, %s218
      %s233 = sphi 0, %s219
      %s237 = sphi 0, %s237
      %s239 = sphi 0, %s237
      %s240 = sphi 0, %s239
      %s254 = sphi 0, %s240
      %s258 = sphi 0, %s258
      %s260 = sphi 0, %s258
      %s261 = sphi 0, %s260
      %s275 = sphi 0, %s261
      %s279 = sphi 0, %s279
      %s281 = sphi 0, %s279
      %s282 = sphi 0, %s281
      %s296 = sphi 0, %s282
      %s300 = sphi 0, %s300
      %s302 = sphi 0, %s300
      %s303 = sphi 0, %s302
      %s317 = sphi 0, %s303
      %s321 = sphi 0, %s321
      %s323 = sphi 0, %s321
      %s324 = sphi 0, %s323
      %s338 = sphi 0, %s324
      %s344 = sphi 0, %s346
      %s347 = sphi 0, %s344
      %s348 = sphi 0, %s347
      %s364 = sphi 0, %s348
      %s370 = sphi 0, %s372
      %s373 = sphi 0, %s370
      %s374 = sphi 0, %s373
      %s390 = sphi 0, %s374
      %s396 = sphi 0, %s398
      %s399 = sphi 0, %s396
      %s400 = sphi 0, %s399
      %s416 = sphi 0, %s400
      %s422 = sphi 0, %s424
      %s425 = sphi 0, %s422
      %s426 = sphi 0, %s425
      %s442 = sphi 0, %s426
      %s448 = sphi 0, %s450
      %s451 = sphi 0, %s448
      %s452 = sphi 0, %s451
      %s468 = sphi 0, %s452
    $region4: #{tpu_custom_call.1} parent=1 // loop_header_branch
      %38 = sbr.rel (%p36) target = $region8
    $region5: #{tpu_custom_call.1} parent=1 // loop_body
      %s40 = ssub.s32 %s35, 1
      %s41 = ssub.s32 %s35, 2
      %s42 = sadd.s32 %s35, 1
      %s43 = ssub.s32 %s35, %s42
      %p44 = scmp.eq.s32.totalorder %s43, 0
      %s46 = sadd.s32 %s45, 1
      %s47 = scalar_select %p44, %s45, %s46
      %p50 = pneg %p44
      %p51 = scmp.eq.s32.totalorder %s35, 3
      %p52 = por %p50, %p51
      %p53 = scmp.ne.s32.totalorder %s45, %s48
      %p54 = scmp.eq.s32.totalorder %s35, 0
      %p55 = por %p53, %p54
      %p56 = scmp.ne.s32.totalorder %s45, %s48
      %p57 = scmp.eq.s32.totalorder %s40, 3
      %p58 = por %p56, %p57
      %p59 = scmp.ne.s32.totalorder %s48, %s49
      %p60 = scmp.eq.s32.totalorder %s40, 0
      %p61 = por %p59, %p60
      %p62 = scmp.ne.s32.totalorder %s48, %s49
      %p63 = scmp.eq.s32.totalorder %s41, 3
      %p64 = por %p62, %p63
      %p66 = scmp.ne.s32.totalorder %s49, %s65
      %p67 = scmp.eq.s32.totalorder %s41, 0
      %p68 = por %p66, %p67
      %s70 = sadd.s32 %s69, 1
      %p73 = scmp.eq.s32.totalorder %s35, 3
      %p74 = scmp.ne.s32.totalorder %s69, %s71
      %p75 = scmp.eq.s32.totalorder %s35, 0
      %p76 = por %p74, %p75
      %p77 = scmp.ne.s32.totalorder %s69, %s71
      %p78 = scmp.eq.s32.totalorder %s40, 3
      %p79 = por %p77, %p78
      %p80 = scmp.ne.s32.totalorder %s71, %s72
      %p81 = scmp.eq.s32.totalorder %s40, 0
      %p82 = por %p80, %p81
      %p83 = scmp.ne.s32.totalorder %s71, %s72
      %p84 = scmp.eq.s32.totalorder %s41, 3
      %p85 = por %p83, %p84
      %p87 = scmp.ne.s32.totalorder %s72, %s86
      %p88 = scmp.eq.s32.totalorder %s41, 0
      %p89 = por %p87, %p88
      %s91 = sadd.s32 %s90, 1
      %p94 = scmp.eq.s32.totalorder %s35, 3
      %p95 = scmp.ne.s32.totalorder %s90, %s92
      %p96 = scmp.eq.s32.totalorder %s35, 0
      %p97 = por %p95, %p96
      %p98 = scmp.ne.s32.totalorder %s90, %s92
      %p99 = scmp.eq.s32.totalorder %s40, 3
      %p100 = por %p98, %p99
      %p101 = scmp.ne.s32.totalorder %s92, %s93
      %p102 = scmp.eq.s32.totalorder %s40, 0
      %p103 = por %p101, %p102
      %p104 = scmp.ne.s32.totalorder %s92, %s93
      %p105 = scmp.eq.s32.totalorder %s41, 3
      %p106 = por %p104, %p105
      %p108 = scmp.ne.s32.totalorder %s93, %s107
      %p109 = scmp.eq.s32.totalorder %s41, 0
      %p110 = por %p108, %p109
      %s112 = sadd.s32 %s111, 1
      %p115 = scmp.eq.s32.totalorder %s35, 3
      %p116 = scmp.ne.s32.totalorder %s111, %s113
      %p117 = scmp.eq.s32.totalorder %s35, 0
      %p118 = por %p116, %p117
      %p119 = scmp.ne.s32.totalorder %s111, %s113
      %p120 = scmp.eq.s32.totalorder %s40, 3
      %p121 = por %p119, %p120
      %p122 = scmp.ne.s32.totalorder %s113, %s114
      %p123 = scmp.eq.s32.totalorder %s40, 0
      %p124 = por %p122, %p123
      %p125 = scmp.ne.s32.totalorder %s113, %s114
      %p126 = scmp.eq.s32.totalorder %s41, 3
      %p127 = por %p125, %p126
      %p129 = scmp.ne.s32.totalorder %s114, %s128
      %p130 = scmp.eq.s32.totalorder %s41, 0
      %p131 = por %p129, %p130
      %s133 = sadd.s32 %s132, 1
      %p136 = scmp.eq.s32.totalorder %s35, 3
      %p137 = scmp.ne.s32.totalorder %s132, %s134
      %p138 = scmp.eq.s32.totalorder %s35, 0
      %p139 = por %p137, %p138
      %p140 = scmp.ne.s32.totalorder %s132, %s134
      %p141 = scmp.eq.s32.totalorder %s40, 3
      %p142 = por %p140, %p141
      %p143 = scmp.ne.s32.totalorder %s134, %s135
      %p144 = scmp.eq.s32.totalorder %s40, 0
      %p145 = por %p143, %p144
      %p146 = scmp.ne.s32.totalorder %s134, %s135
      %p147 = scmp.eq.s32.totalorder %s41, 3
      %p148 = por %p146, %p147
      %p150 = scmp.ne.s32.totalorder %s135, %s149
      %p151 = scmp.eq.s32.totalorder %s41, 0
      %p152 = por %p150, %p151
      %s154 = sadd.s32 %s153, 1
      %p157 = scmp.eq.s32.totalorder %s35, 3
      %p158 = scmp.ne.s32.totalorder %s153, %s155
      %p159 = scmp.eq.s32.totalorder %s35, 0
      %p160 = por %p158, %p159
      %p161 = scmp.ne.s32.totalorder %s153, %s155
      %p162 = scmp.eq.s32.totalorder %s40, 3
      %p163 = por %p161, %p162
      %p164 = scmp.ne.s32.totalorder %s155, %s156
      %p165 = scmp.eq.s32.totalorder %s40, 0
      %p166 = por %p164, %p165
      %p167 = scmp.ne.s32.totalorder %s155, %s156
      %p168 = scmp.eq.s32.totalorder %s41, 3
      %p169 = por %p167, %p168
      %p171 = scmp.ne.s32.totalorder %s156, %s170
      %p172 = scmp.eq.s32.totalorder %s41, 0
      %p173 = por %p171, %p172
      %s175 = sadd.s32 %s174, 1
      %p178 = scmp.eq.s32.totalorder %s35, 3
      %p179 = scmp.ne.s32.totalorder %s174, %s176
      %p180 = scmp.eq.s32.totalorder %s35, 0
      %p181 = por %p179, %p180
      %p182 = scmp.ne.s32.totalorder %s174, %s176
      %p183 = scmp.eq.s32.totalorder %s40, 3
      %p184 = por %p182, %p183
      %p185 = scmp.ne.s32.totalorder %s176, %s177
      %p186 = scmp.eq.s32.totalorder %s40, 0
      %p187 = por %p185, %p186
      %p188 = scmp.ne.s32.totalorder %s176, %s177
      %p189 = scmp.eq.s32.totalorder %s41, 3
      %p190 = por %p188, %p189
      %p192 = scmp.ne.s32.totalorder %s177, %s191
      %p193 = scmp.eq.s32.totalorder %s41, 0
      %p194 = por %p192, %p193
      %s196 = sadd.s32 %s195, 1
      %p199 = scmp.eq.s32.totalorder %s35, 3
      %p200 = scmp.ne.s32.totalorder %s195, %s197
      %p201 = scmp.eq.s32.totalorder %s35, 0
      %p202 = por %p200, %p201
      %p203 = scmp.ne.s32.totalorder %s195, %s197
      %p204 = scmp.eq.s32.totalorder %s40, 3
      %p205 = por %p203, %p204
      %p206 = scmp.ne.s32.totalorder %s197, %s198
      %p207 = scmp.eq.s32.totalorder %s40, 0
      %p208 = por %p206, %p207
      %p209 = scmp.ne.s32.totalorder %s197, %s198
      %p210 = scmp.eq.s32.totalorder %s41, 3
      %p211 = por %p209, %p210
      %p213 = scmp.ne.s32.totalorder %s198, %s212
      %p214 = scmp.eq.s32.totalorder %s41, 0
      %p215 = por %p213, %p214
      %s217 = sadd.s32 %s216, 1
      %p220 = scmp.eq.s32.totalorder %s35, 3
      %p221 = scmp.ne.s32.totalorder %s216, %s218
      %p222 = scmp.eq.s32.totalorder %s35, 0
      %p223 = por %p221, %p222
      %p224 = scmp.ne.s32.totalorder %s216, %s218
      %p225 = scmp.eq.s32.totalorder %s40, 3
      %p226 = por %p224, %p225
      %p227 = scmp.ne.s32.totalorder %s218, %s219
      %p228 = scmp.eq.s32.totalorder %s40, 0
      %p229 = por %p227, %p228
      %p230 = scmp.ne.s32.totalorder %s218, %s219
      %p231 = scmp.eq.s32.totalorder %s41, 3
      %p232 = por %p230, %p231
      %p234 = scmp.ne.s32.totalorder %s219, %s233
      %p235 = scmp.eq.s32.totalorder %s41, 0
      %p236 = por %p234, %p235
      %s238 = sadd.s32 %s237, 1
      %p241 = scmp.eq.s32.totalorder %s35, 3
      %p242 = scmp.ne.s32.totalorder %s237, %s239
      %p243 = scmp.eq.s32.totalorder %s35, 0
      %p244 = por %p242, %p243
      %p245 = scmp.ne.s32.totalorder %s237, %s239
      %p246 = scmp.eq.s32.totalorder %s40, 3
      %p247 = por %p245, %p246
      %p248 = scmp.ne.s32.totalorder %s239, %s240
      %p249 = scmp.eq.s32.totalorder %s40, 0
      %p250 = por %p248, %p249
      %p251 = scmp.ne.s32.totalorder %s239, %s240
      %p252 = scmp.eq.s32.totalorder %s41, 3
      %p253 = por %p251, %p252
      %p255 = scmp.ne.s32.totalorder %s240, %s254
      %p256 = scmp.eq.s32.totalorder %s41, 0
      %p257 = por %p255, %p256
      %s259 = sadd.s32 %s258, 1
      %p262 = scmp.eq.s32.totalorder %s35, 3
      %p263 = scmp.ne.s32.totalorder %s258, %s260
      %p264 = scmp.eq.s32.totalorder %s35, 0
      %p265 = por %p263, %p264
      %p266 = scmp.ne.s32.totalorder %s258, %s260
      %p267 = scmp.eq.s32.totalorder %s40, 3
      %p268 = por %p266, %p267
      %p269 = scmp.ne.s32.totalorder %s260, %s261
      %p270 = scmp.eq.s32.totalorder %s40, 0
      %p271 = por %p269, %p270
      %p272 = scmp.ne.s32.totalorder %s260, %s261
      %p273 = scmp.eq.s32.totalorder %s41, 3
      %p274 = por %p272, %p273
      %p276 = scmp.ne.s32.totalorder %s261, %s275
      %p277 = scmp.eq.s32.totalorder %s41, 0
      %p278 = por %p276, %p277
      %s280 = sadd.s32 %s279, 1
      %p283 = scmp.eq.s32.totalorder %s35, 3
      %p284 = scmp.ne.s32.totalorder %s279, %s281
      %p285 = scmp.eq.s32.totalorder %s35, 0
      %p286 = por %p284, %p285
      %p287 = scmp.ne.s32.totalorder %s279, %s281
      %p288 = scmp.eq.s32.totalorder %s40, 3
      %p289 = por %p287, %p288
      %p290 = scmp.ne.s32.totalorder %s281, %s282
      %p291 = scmp.eq.s32.totalorder %s40, 0
      %p292 = por %p290, %p291
      %p293 = scmp.ne.s32.totalorder %s281, %s282
      %p294 = scmp.eq.s32.totalorder %s41, 3
      %p295 = por %p293, %p294
      %p297 = scmp.ne.s32.totalorder %s282, %s296
      %p298 = scmp.eq.s32.totalorder %s41, 0
      %p299 = por %p297, %p298
      %s301 = sadd.s32 %s300, 1
      %p304 = scmp.eq.s32.totalorder %s35, 3
      %p305 = scmp.ne.s32.totalorder %s300, %s302
      %p306 = scmp.eq.s32.totalorder %s35, 0
      %p307 = por %p305, %p306
      %p308 = scmp.ne.s32.totalorder %s300, %s302
      %p309 = scmp.eq.s32.totalorder %s40, 3
      %p310 = por %p308, %p309
      %p311 = scmp.ne.s32.totalorder %s302, %s303
      %p312 = scmp.eq.s32.totalorder %s40, 0
      %p313 = por %p311, %p312
      %p314 = scmp.ne.s32.totalorder %s302, %s303
      %p315 = scmp.eq.s32.totalorder %s41, 3
      %p316 = por %p314, %p315
      %p318 = scmp.ne.s32.totalorder %s303, %s317
      %p319 = scmp.eq.s32.totalorder %s41, 0
      %p320 = por %p318, %p319
      %s322 = sadd.s32 %s321, 1
      %p325 = scmp.eq.s32.totalorder %s35, 3
      %p326 = scmp.ne.s32.totalorder %s321, %s323
      %p327 = scmp.eq.s32.totalorder %s35, 0
      %p328 = por %p326, %p327
      %p329 = scmp.ne.s32.totalorder %s321, %s323
      %p330 = scmp.eq.s32.totalorder %s40, 3
      %p331 = por %p329, %p330
      %p332 = scmp.ne.s32.totalorder %s323, %s324
      %p333 = scmp.eq.s32.totalorder %s40, 0
      %p334 = por %p332, %p333
      %p335 = scmp.ne.s32.totalorder %s323, %s324
      %p336 = scmp.eq.s32.totalorder %s41, 3
      %p337 = por %p335, %p336
      %p339 = scmp.ne.s32.totalorder %s324, %s338
      %p340 = scmp.eq.s32.totalorder %s41, 0
      %p341 = por %p339, %p340
      %s342 = ssub.s32 %s35, %s42
      %p343 = scmp.eq.s32.totalorder %s342, 0
      %s345 = sadd.s32 %s344, 1
      %s346 = scalar_select %p343, %s344, %s345
      %p349 = pneg %p343
      %p350 = scmp.eq.s32.totalorder %s35, 3
      %p351 = por %p349, %p350
      %p352 = scmp.ne.s32.totalorder %s344, %s347
      %p353 = scmp.eq.s32.totalorder %s35, 0
      %p354 = por %p352, %p353
      %p355 = scmp.ne.s32.totalorder %s344, %s347
      %p356 = scmp.eq.s32.totalorder %s40, 3
      %p357 = por %p355, %p356
      %p358 = scmp.ne.s32.totalorder %s347, %s348
      %p359 = scmp.eq.s32.totalorder %s40, 0
      %p360 = por %p358, %p359
      %p361 = scmp.ne.s32.totalorder %s347, %s348
      %p362 = scmp.eq.s32.totalorder %s41, 3
      %p363 = por %p361, %p362
      %p365 = scmp.ne.s32.totalorder %s348, %s364
      %p366 = scmp.eq.s32.totalorder %s41, 0
      %p367 = por %p365, %p366
      %s368 = ssub.s32 %s35, %s42
      %p369 = scmp.eq.s32.totalorder %s368, 0
      %s371 = sadd.s32 %s370, 1
      %s372 = scalar_select %p369, %s370, %s371
      %p375 = pneg %p369
      %p376 = scmp.eq.s32.totalorder %s35, 3
      %p377 = por %p375, %p376
      %p378 = scmp.ne.s32.totalorder %s370, %s373
      %p379 = scmp.eq.s32.totalorder %s35, 0
      %p380 = por %p378, %p379
      %p381 = scmp.ne.s32.totalorder %s370, %s373
      %p382 = scmp.eq.s32.totalorder %s40, 3
      %p383 = por %p381, %p382
      %p384 = scmp.ne.s32.totalorder %s373, %s374
      %p385 = scmp.eq.s32.totalorder %s40, 0
      %p386 = por %p384, %p385
      %p387 = scmp.ne.s32.totalorder %s373, %s374
      %p388 = scmp.eq.s32.totalorder %s41, 3
      %p389 = por %p387, %p388
      %p391 = scmp.ne.s32.totalorder %s374, %s390
      %p392 = scmp.eq.s32.totalorder %s41, 0
      %p393 = por %p391, %p392
      %s394 = ssub.s32 %s35, %s42
      %p395 = scmp.eq.s32.totalorder %s394, 0
      %s397 = sadd.s32 %s396, 1
      %s398 = scalar_select %p395, %s396, %s397
      %p401 = pneg %p395
      %p402 = scmp.eq.s32.totalorder %s35, 3
      %p403 = por %p401, %p402
      %p404 = scmp.ne.s32.totalorder %s396, %s399
      %p405 = scmp.eq.s32.totalorder %s35, 0
      %p406 = por %p404, %p405
      %p407 = scmp.ne.s32.totalorder %s396, %s399
      %p408 = scmp.eq.s32.totalorder %s40, 3
      %p409 = por %p407, %p408
      %p410 = scmp.ne.s32.totalorder %s399, %s400
      %p411 = scmp.eq.s32.totalorder %s40, 0
      %p412 = por %p410, %p411
      %p413 = scmp.ne.s32.totalorder %s399, %s400
      %p414 = scmp.eq.s32.totalorder %s41, 3
      %p415 = por %p413, %p414
      %p417 = scmp.ne.s32.totalorder %s400, %s416
      %p418 = scmp.eq.s32.totalorder %s41, 0
      %p419 = por %p417, %p418
      %s420 = ssub.s32 %s35, %s42
      %p421 = scmp.eq.s32.totalorder %s420, 0
      %s423 = sadd.s32 %s422, 1
      %s424 = scalar_select %p421, %s422, %s423
      %p427 = pneg %p421
      %p428 = scmp.eq.s32.totalorder %s35, 3
      %p429 = por %p427, %p428
      %p430 = scmp.ne.s32.totalorder %s422, %s425
      %p431 = scmp.eq.s32.totalorder %s35, 0
      %p432 = por %p430, %p431
      %p433 = scmp.ne.s32.totalorder %s422, %s425
      %p434 = scmp.eq.s32.totalorder %s40, 3
      %p435 = por %p433, %p434
      %p436 = scmp.ne.s32.totalorder %s425, %s426
      %p437 = scmp.eq.s32.totalorder %s40, 0
      %p438 = por %p436, %p437
      %p439 = scmp.ne.s32.totalorder %s425, %s426
      %p440 = scmp.eq.s32.totalorder %s41, 3
      %p441 = por %p439, %p440
      %p443 = scmp.ne.s32.totalorder %s426, %s442
      %p444 = scmp.eq.s32.totalorder %s41, 0
      %p445 = por %p443, %p444
      %s446 = ssub.s32 %s35, %s42
      %p447 = scmp.eq.s32.totalorder %s446, 0
      %s449 = sadd.s32 %s448, 1
      %s450 = scalar_select %p447, %s448, %s449
      %p453 = pneg %p447
      %p454 = scmp.eq.s32.totalorder %s35, 3
      %p455 = por %p453, %p454
      %p456 = scmp.ne.s32.totalorder %s448, %s451
      %p457 = scmp.eq.s32.totalorder %s35, 0
      %p458 = por %p456, %p457
      %p459 = scmp.ne.s32.totalorder %s448, %s451
      %p460 = scmp.eq.s32.totalorder %s40, 3
      %p461 = por %p459, %p460
      %p462 = scmp.ne.s32.totalorder %s451, %s452
      %p463 = scmp.eq.s32.totalorder %s40, 0
      %p464 = por %p462, %p463
      %p465 = scmp.ne.s32.totalorder %s451, %s452
      %p466 = scmp.eq.s32.totalorder %s41, 3
      %p467 = por %p465, %p466
      %p469 = scmp.ne.s32.totalorder %s452, %s468
      %p470 = scmp.eq.s32.totalorder %s41, 0
      %p471 = por %p469, %p470
      %p472 = scmp.le.s32.totalorder 1, %s35
      %p473 = scmp.lt.s32.totalorder %s35, 5
      %p474 = pnand %p472, %p473
      %p475 = pneg %p474
      // Predicated region
      $region9: #{tpu_custom_call.1} parent=5 // pred_check
        _
      $region10: #{tpu_custom_call.1} parent=5 // pred_check_branch
        %477 = sbr.rel (%p474) target = $region12
      $region11: #{tpu_custom_call.1} parent=5 // pred_region
        %s478 = ssub.s32 %s35, 1
        // Predicated region
        $region13: #{tpu_custom_call.1} parent=11 // pred_check
          %p479 = pneg %p82
        $region14: #{tpu_custom_call.1} parent=11 // pred_check_branch
          %481 = sbr.rel (%p479) target = $region16
        $region15: #{tpu_custom_call.1} parent=11 // pred_region
          %s483 = ssub.s32 4096, 4096
          %484 = vsyncadd [#allocation3], %s483
          %s485 = sshll.u32 [#allocation2], 4
          %s486 = int_to_ptr.vmem [resolvable:$true] %s485
          %491 = dma.hbm_to_vmem [thread:$0]  %s1, 4096, %s486, [#allocation3], 128, 128, 8
        $region16: #{tpu_custom_call.1} parent=11 // pred_fallthru
          _
        // Predicated region
        $region17: #{tpu_custom_call.1} parent=11 // pred_check
          %p492 = pneg %p103
        $region18: #{tpu_custom_call.1} parent=11 // pred_check_branch
          %494 = sbr.rel (%p492) target = $region20
        $region19: #{tpu_custom_call.1} parent=11 // pred_region
          _
        $region20: #{tpu_custom_call.1} parent=11 // pred_fallthru
          _
        // Predicated region
        $region21: #{tpu_custom_call.1} parent=11 // pred_check
          %p495 = pneg %p124
        $region22: #{tpu_custom_call.1} parent=11 // pred_check_branch
          %497 = sbr.rel (%p495) target = $region24
        $region23: #{tpu_custom_call.1} parent=11 // pred_region
          _
        $region24: #{tpu_custom_call.1} parent=11 // pred_fallthru
          _
        // Predicated region
        $region25: #{tpu_custom_call.1} parent=11 // pred_check
          %p498 = pneg %p145
        $region26: #{tpu_custom_call.1} parent=11 // pred_check_branch
          %500 = sbr.rel (%p498) target = $region28
        $region27: #{tpu_custom_call.1} parent=11 // pred_region
          %s502 = ssub.s32 8192, 8192
          %503 = vsyncadd [#allocation6], %s502
          %s504 = sshll.u32 [#allocation5], 4
          %s505 = int_to_ptr.vmem [resolvable:$true] %s504
          %510 = dma.hbm_to_vmem [thread:$0]  %s4, 8192, %s505, [#allocation6], 512, 512, 32
        $region28: #{tpu_custom_call.1} parent=11 // pred_fallthru
          _
        // Predicated region
        $region29: #{tpu_custom_call.1} parent=11 // pred_check
          %p511 = pneg %p166
        $region30: #{tpu_custom_call.1} parent=11 // pred_check_branch
          %513 = sbr.rel (%p511) target = $region32
        $region31: #{tpu_custom_call.1} parent=11 // pred_region
          %s515 = ssub.s32 8192, 8192
          %516 = vsyncadd [#allocation6], %s515
          %s517 = sshll.u32 [#allocation7], 4
          %s518 = int_to_ptr.vmem [resolvable:$true] %s517
          %523 = dma.hbm_to_vmem [thread:$0]  %s5, 8192, %s518, [#allocation6], 512, 512, 32
        $region32: #{tpu_custom_call.1} parent=11 // pred_fallthru
          _
        // Predicated region
        $region33: #{tpu_custom_call.1} parent=11 // pred_check
          %p524 = pneg %p187
        $region34: #{tpu_custom_call.1} parent=11 // pred_check_branch
          %526 = sbr.rel (%p524) target = $region36
        $region35: #{tpu_custom_call.1} parent=11 // pred_region
          _
        $region36: #{tpu_custom_call.1} parent=11 // pred_fallthru
          _
        // Predicated region
        $region37: #{tpu_custom_call.1} parent=11 // pred_check
          %p527 = pneg %p208
        $region38: #{tpu_custom_call.1} parent=11 // pred_check_branch
          %529 = sbr.rel (%p527) target = $region40
        $region39: #{tpu_custom_call.1} parent=11 // pred_region
          %s531 = ssub.s32 8192, 8192
          %532 = vsyncadd [#allocation9], %s531
          %s533 = sshll.u32 [#allocation8], 4
          %s534 = int_to_ptr.vmem [resolvable:$true] %s533
          %539 = dma.hbm_to_vmem [thread:$0]  %s7, 8192, %s534, [#allocation9], 512, 512, 32
        $region40: #{tpu_custom_call.1} parent=11 // pred_fallthru
          _
        // Predicated region
        $region41: #{tpu_custom_call.1} parent=11 // pred_check
          %p540 = pneg %p229
        $region42: #{tpu_custom_call.1} parent=11 // pred_check_branch
          %542 = sbr.rel (%p540) target = $region44
        $region43: #{tpu_custom_call.1} parent=11 // pred_region
          %s544 = ssub.s32 8192, 8192
          %545 = vsyncadd [#allocation9], %s544
          %s546 = sshll.u32 [#allocation10], 4
          %s547 = int_to_ptr.vmem [resolvable:$true] %s546
          %552 = dma.hbm_to_vmem [thread:$0]  %s8, 8192, %s547, [#allocation9], 512, 512, 32
        $region44: #{tpu_custom_call.1} parent=11 // pred_fallthru
          _
        // Predicated region
        $region45: #{tpu_custom_call.1} parent=11 // pred_check
          %p553 = pneg %p250
        $region46: #{tpu_custom_call.1} parent=11 // pred_check_branch
          %555 = sbr.rel (%p553) target = $region48
        $region47: #{tpu_custom_call.1} parent=11 // pred_region
          _
        $region48: #{tpu_custom_call.1} parent=11 // pred_fallthru
          _
        // Predicated region
        $region49: #{tpu_custom_call.1} parent=11 // pred_check
          %p556 = pneg %p271
        $region50: #{tpu_custom_call.1} parent=11 // pred_check_branch
          %558 = sbr.rel (%p556) target = $region52
        $region51: #{tpu_custom_call.1} parent=11 // pred_region
          _
        $region52: #{tpu_custom_call.1} parent=11 // pred_fallthru
          _
        // Predicated region
        $region53: #{tpu_custom_call.1} parent=11 // pred_check
          %p559 = pneg %p292
        $region54: #{tpu_custom_call.1} parent=11 // pred_check_branch
          %561 = sbr.rel (%p559) target = $region56
        $region55: #{tpu_custom_call.1} parent=11 // pred_region
          _
        $region56: #{tpu_custom_call.1} parent=11 // pred_fallthru
          _
        // Predicated region
        $region57: #{tpu_custom_call.1} parent=11 // pred_check
          %p562 = pneg %p313
        $region58: #{tpu_custom_call.1} parent=11 // pred_check_branch
          %564 = sbr.rel (%p562) target = $region60
        $region59: #{tpu_custom_call.1} parent=11 // pred_region
          %s566 = ssub.s32 4096, 4096
          %567 = vsyncadd [#allocation12], %s566
          %s568 = sshll.u32 [#allocation11], 4
          %s569 = int_to_ptr.vmem [resolvable:$true] %s568
          %574 = dma.hbm_to_vmem [thread:$0]  %s12, 4096, %s569, [#allocation12], 256, 256, 16
        $region60: #{tpu_custom_call.1} parent=11 // pred_fallthru
          _
        // Predicated region
        $region61: #{tpu_custom_call.1} parent=11 // pred_check
          %p575 = pneg %p334
        $region62: #{tpu_custom_call.1} parent=11 // pred_check_branch
          %577 = sbr.rel (%p575) target = $region64
        $region63: #{tpu_custom_call.1} parent=11 // pred_region
          _
        $region64: #{tpu_custom_call.1} parent=11 // pred_fallthru
          _
      $region12: #{tpu_custom_call.1} parent=5 // pred_fallthru
        _
      %p578 = scmp.lt.s32.totalorder %s35, 4
      // Predicated region
      $region65: #{tpu_custom_call.1} parent=5 // pred_check
        %p579 = pneg %p578
      $region66: #{tpu_custom_call.1} parent=5 // pred_check_branch
        %581 = sbr.rel (%p579) target = $region68
      $region67: #{tpu_custom_call.1} parent=5 // pred_region
        // Predicated region
        $region69: #{tpu_custom_call.1} parent=67 // pred_check
          %p582 = pneg %p55
        $region70: #{tpu_custom_call.1} parent=67 // pred_check_branch
          %584 = sbr.rel (%p582) target = $region72
        $region71: #{tpu_custom_call.1} parent=67 // pred_region
          %p585 = scmp.lt.s32.totalorder %s35, 3
          %s586 = scalar_select %p585, %s35, 3
          %s587 = smul.addr %s586, 8
          %s588 = scalar_lea.vmem %s0, %s587
        $region72: #{tpu_custom_call.1} parent=67 // pred_fallthru
          _
        // Predicated region
        $region73: #{tpu_custom_call.1} parent=67 // pred_check
          %p589 = pneg %p354
        $region74: #{tpu_custom_call.1} parent=67 // pred_check_branch
          %591 = sbr.rel (%p589) target = $region76
        $region75: #{tpu_custom_call.1} parent=67 // pred_region
          %s592 = sand.u32 %s344, 1
          %s593 = sand.u32 %s344, 1
          %s594 = smul.addr %s593, 16
          %s595 = scalar_lea.vmem [#allocation13], %s594
          %s596 = smul.addr %s35, 8
          %s597 = scalar_lea.vmem %s14, %s596
          // Predicated region
          $region77: #{tpu_custom_call.1} parent=75 // pred_check
            _
          $region78: #{tpu_custom_call.1} parent=75 // pred_check_branch
            %599 = sbr.rel (0) target = $region80
          $region79: #{tpu_custom_call.1} parent=75 // pred_region
            // Predicated region
            $region81: #{tpu_custom_call.1} parent=79 // pred_check
              _
            $region82: #{tpu_custom_call.1} parent=79 // pred_check_branch
              %601 = sbr.rel (0) target = $region84
            $region83: #{tpu_custom_call.1} parent=79 // pred_region
              // Predicated region
              $region96: #{tpu_custom_call.1} parent=83 // pred_check
                _
              $region97: #{tpu_custom_call.1} parent=83 // pred_check_branch
                %618 = sbr.rel (0) target = $region99
              $region98: #{tpu_custom_call.1} parent=83 // pred_region
                loop: start=0, step=1, limit=1
                $region100: #{tpu_custom_call.1} parent=98 // loop_pre_header
                  _
                $region101: #{tpu_custom_call.1} parent=98 // loop_header
                  %s620 = sphi 0, %s624
                  %p621 = scmp.ge.s32.totalorder %s620, 1
                  %s625 = sphi %s597, %s597
                  %s626 = sphi %s595, %s595
                $region102: #{tpu_custom_call.1} parent=98 // loop_header_branch
                  %623 = sbr.rel (%p621) target = $region106
                $region103: #{tpu_custom_call.1} parent=98 // loop_body
                  %v627 = vld [vmem:[%s625] sm:$0xff]
                  %628 = vst [vmem:[%s626] sm:$0xff] %v627
                  %v629 = vld [vmem:[%s625 + $0x20] sm:$0xff]
                  %630 = vst [vmem:[%s626 + $0x8] sm:$0xff] %v629
                $region104: #{tpu_custom_call.1} parent=98 // loop_footer
                  %s624 = sadd.s32 1, %s620
                $region105: #{tpu_custom_call.1} parent=98 // loop_footer_branch
                  %619 = sbr.rel target = $region101
                $region106: #{tpu_custom_call.1} parent=98 // loop_exit
                  _
              $region99: #{tpu_custom_call.1} parent=83 // pred_fallthru
                _
              // Predicated region
              $region107: #{tpu_custom_call.1} parent=83 // pred_check
                _
              $region108: #{tpu_custom_call.1} parent=83 // pred_check_branch
                %632 = sbr.rel target = $region110
              $region109: #{tpu_custom_call.1} parent=83 // pred_region
                _
              $region110: #{tpu_custom_call.1} parent=83 // pred_fallthru
                _
            $region84: #{tpu_custom_call.1} parent=79 // pred_fallthru
              _
            // Predicated region
            $region85: #{tpu_custom_call.1} parent=79 // pred_check
              _
            $region86: #{tpu_custom_call.1} parent=79 // pred_check_branch
              %603 = sbr.rel target = $region88
            $region87: #{tpu_custom_call.1} parent=79 // pred_region
              loop: start=0, step=1, limit=1
              $region89: #{tpu_custom_call.1} parent=87 // loop_pre_header
                _
              $region90: #{tpu_custom_call.1} parent=87 // loop_header
                %s606 = sphi 0, %s610
                %p607 = scmp.ge.s32.totalorder %s606, 1
                %s611 = sphi %s597, %s597
                %s612 = sphi %s595, %s595
              $region91: #{tpu_custom_call.1} parent=87 // loop_header_branch
                %609 = sbr.rel (%p607) target = $region95
              $region92: #{tpu_custom_call.1} parent=87 // loop_body
                %v613 = vld [vmem:[%s611] sm:$0xff]
                %614 = vst [vmem:[%s612] sm:$0xff] %v613
                %v615 = vld [vmem:[%s611 + $0x20] sm:$0xff]
                %616 = vst [vmem:[%s612 + $0x8] sm:$0xff] %v615
              $region93: #{tpu_custom_call.1} parent=87 // loop_footer
                %s610 = sadd.s32 1, %s606
              $region94: #{tpu_custom_call.1} parent=87 // loop_footer_branch
                %605 = sbr.rel target = $region90
              $region95: #{tpu_custom_call.1} parent=87 // loop_exit
                _
            $region88: #{tpu_custom_call.1} parent=79 // pred_fallthru
              _
          $region80: #{tpu_custom_call.1} parent=75 // pred_fallthru
            _
          %633 = vnop
        $region76: #{tpu_custom_call.1} parent=67 // pred_fallthru
          _
        // Predicated region
        $region111: #{tpu_custom_call.1} parent=67 // pred_check
          %p634 = pneg %p380
        $region112: #{tpu_custom_call.1} parent=67 // pred_check_branch
          %636 = sbr.rel (%p634) target = $region114
        $region113: #{tpu_custom_call.1} parent=67 // pred_region
          %s637 = sand.u32 %s35, 1
          %s638 = scalar_lea.sflag [#allocation3], %s637
          %s639 = sand.u32 %s370, 1
          %s640 = smul.addr %s639, 16
          %s641 = scalar_lea.vmem [#allocation14], %s640
          %s643 = ssub.s32 256, 256
          %644 = vsyncadd %s638, %s643
          %s645 = smul.addr %s35, 128
          %s646 = scalar_lea.hbm %s15, %s645
          %s647 = sshll.u32 %s641, 4
          %s648 = int_to_ptr.vmem [resolvable:$true] %s647
          %653 = dma.hbm_to_vmem [thread:$0]  %s646, 256, %s648, %s638, 512, 128, 8
        $region114: #{tpu_custom_call.1} parent=67 // pred_fallthru
          _
      $region68: #{tpu_custom_call.1} parent=5 // pred_fallthru
        _
      %p654 = scmp.le.s32.totalorder 1, %s35
      %p655 = scmp.lt.s32.totalorder %s35, 5
      %p656 = pnand %p654, %p655
      %p657 = pneg %p656
      // Predicated region
      $region115: #{tpu_custom_call.1} parent=5 // pred_check
        _
      $region116: #{tpu_custom_call.1} parent=5 // pred_check_branch
        %659 = sbr.rel (%p656) target = $region118
      $region117: #{tpu_custom_call.1} parent=5 // pred_region
        %s660 = ssub.s32 %s35, 1
        // Predicated region
        $region119: #{tpu_custom_call.1} parent=117 // pred_check
          %p661 = pneg %p82
        $region120: #{tpu_custom_call.1} parent=117 // pred_check_branch
          %663 = sbr.rel (%p661) target = $region122
        $region121: #{tpu_custom_call.1} parent=117 // pred_region
          %664 = dma.done [#allocation3], 4096
        $region122: #{tpu_custom_call.1} parent=117 // pred_fallthru
          _
        // Predicated region
        $region123: #{tpu_custom_call.1} parent=117 // pred_check
          %p665 = pneg %p145
        $region124: #{tpu_custom_call.1} parent=117 // pred_check_branch
          %667 = sbr.rel (%p665) target = $region126
        $region125: #{tpu_custom_call.1} parent=117 // pred_region
          %668 = dma.done [#allocation6], 8192
        $region126: #{tpu_custom_call.1} parent=117 // pred_fallthru
          _
        // Predicated region
        $region127: #{tpu_custom_call.1} parent=117 // pred_check
          %p669 = pneg %p166
        $region128: #{tpu_custom_call.1} parent=117 // pred_check_branch
          %671 = sbr.rel (%p669) target = $region130
        $region129: #{tpu_custom_call.1} parent=117 // pred_region
          %672 = dma.done [#allocation6], 8192
        $region130: #{tpu_custom_call.1} parent=117 // pred_fallthru
          _
        // Predicated region
        $region131: #{tpu_custom_call.1} parent=117 // pred_check
          %p673 = pneg %p208
        $region132: #{tpu_custom_call.1} parent=117 // pred_check_branch
          %675 = sbr.rel (%p673) target = $region134
        $region133: #{tpu_custom_call.1} parent=117 // pred_region
          %676 = dma.done [#allocation9], 8192
        $region134: #{tpu_custom_call.1} parent=117 // pred_fallthru
          _
        // Predicated region
        $region135: #{tpu_custom_call.1} parent=117 // pred_check
          %p677 = pneg %p229
        $region136: #{tpu_custom_call.1} parent=117 // pred_check_branch
          %679 = sbr.rel (%p677) target = $region138
        $region137: #{tpu_custom_call.1} parent=117 // pred_region
          %680 = dma.done [#allocation9], 8192
        $region138: #{tpu_custom_call.1} parent=117 // pred_fallthru
          _
        // Predicated region
        $region139: #{tpu_custom_call.1} parent=117 // pred_check
          %p681 = pneg %p313
        $region140: #{tpu_custom_call.1} parent=117 // pred_check_branch
          %683 = sbr.rel (%p681) target = $region142
        $region141: #{tpu_custom_call.1} parent=117 // pred_region
          %684 = dma.done [#allocation12], 4096
        $region142: #{tpu_custom_call.1} parent=117 // pred_fallthru
          _
        %s685 = sand.u32 %s347, 1
        %s686 = sand.u32 %s347, 1
        %s687 = smul.addr %s686, 16
        %s688 = scalar_lea.vmem [#allocation13], %s687
        // Predicated region
        $region143: #{tpu_custom_call.1} parent=117 // pred_check
          %p689 = pneg %p360
        $region144: #{tpu_custom_call.1} parent=117 // pred_check_branch
          %691 = sbr.rel (%p689) target = $region146
        $region145: #{tpu_custom_call.1} parent=117 // pred_region
          _
        $region146: #{tpu_custom_call.1} parent=117 // pred_fallthru
          _
        %s692 = sand.u32 %s40, 1
        %s693 = scalar_lea.sflag [#allocation3], %s692
        %s694 = sand.u32 %s373, 1
        %s695 = smul.addr %s694, 16
        %s696 = scalar_lea.vmem [#allocation14], %s695
        // Predicated region
        $region147: #{tpu_custom_call.1} parent=117 // pred_check
          %p697 = pneg %p386
        $region148: #{tpu_custom_call.1} parent=117 // pred_check_branch
          %699 = sbr.rel (%p697) target = $region150
        $region149: #{tpu_custom_call.1} parent=117 // pred_region
          %700 = dma.done %s693, 256
        $region150: #{tpu_custom_call.1} parent=117 // pred_fallthru
          _
        %p701 = scmp.lt.s32.totalorder %s40, 3
        %s702 = scalar_select %p701, %s40, 3
        %s703 = smul.addr %s702, 8
        %s704 = scalar_lea.vmem %s0, %s703
        %p705 = pneg %p61
        %p706 = pneg %p58
        %p707 = pneg %p82
        %p708 = pneg %p79
        %p709 = pneg %p103
        %p710 = pneg %p100
        %p711 = pneg %p124
        %p712 = pneg %p121
        %p713 = pneg %p145
        %p714 = pneg %p142
        %p715 = pneg %p166
        %p716 = pneg %p163
        %p717 = pneg %p187
        %p718 = pneg %p184
        %p719 = pneg %p208
        %p720 = pneg %p205
        %p721 = pneg %p229
        %p722 = pneg %p226
        %p723 = pneg %p250
        %p724 = pneg %p247
        %p725 = pneg %p271
        %p726 = pneg %p268
        %p727 = pneg %p292
        %p728 = pneg %p289
        %p729 = pneg %p313
        %p730 = pneg %p310
        %p731 = pneg %p334
        %p732 = pneg %p331
        %s733 = sand.u32 %s347, 1
        %s734 = sand.u32 %s347, 1
        %s735 = smul.addr %s734, 16
        %s736 = scalar_lea.vmem [#allocation13], %s735
        %p737 = pneg %p360
        %p738 = pneg %p357
        %s739 = sand.u32 %s40, 1
        %s740 = scalar_lea.sflag [#allocation3], %s739
        %s741 = sand.u32 %s373, 1
        %s742 = smul.addr %s741, 16
        %s743 = scalar_lea.vmem [#allocation14], %s742
        %p744 = pneg %p386
        %p745 = pneg %p383
        %p746 = pneg %p412
        %p747 = pneg %p409
        %s748 = sand.u32 %s399, 1
        %s749 = scalar_lea.sflag [#allocation4], %s748
        %s750 = sand.u32 %s399, 1
        %s751 = smul.addr %s750, 16
        %s752 = scalar_lea.vmem [#allocation15], %s751
        %p753 = pneg %p438
        %p754 = pneg %p435
        %s755 = sand.u32 %s40, 1
        %s756 = scalar_lea.sflag [#allocation17], %s755
        %s757 = sand.u32 %s425, 1
        %s758 = smul.addr %s757, 16
        %s759 = scalar_lea.vmem [#allocation16], %s758
        %p760 = pneg %p464
        %p761 = pneg %p461
        %s762 = sand.u32 %s40, 1
        %s763 = scalar_lea.sflag [#allocation17], %s762
        %s764 = sand.u32 %s451, 1
        %s765 = smul.addr %s764, 16
        %s766 = scalar_lea.vmem [#allocation18], %s765
        %p767 = scmp.lt.s32.totalorder %s40, 3
        %s768 = scalar_select %p767, %s40, 3
        %s769 = smul.addr %s768, 8
        %s770 = scalar_lea.vmem %s0, %s769
        %v771 = vld [vmem:[%s770] sm:$0xff]
        %v772 = vld [vmem:[#allocation2] sm:$0xff]
        %v773 = vld [vmem:[#allocation2 + $0x8] sm:$0xff]
        %v774 = vld [vmem:[#allocation2 + $0x10] sm:$0xff]
        %v775 = vld [vmem:[#allocation2 + $0x18] sm:$0xff]
        %v776 = vld [vmem:[#allocation2 + $0x20] sm:$0xff]
        %v777 = vld [vmem:[#allocation2 + $0x28] sm:$0xff]
        %v778 = vld [vmem:[#allocation2 + $0x30] sm:$0xff]
        %v779 = vld [vmem:[#allocation2 + $0x38] sm:$0xff]
        %v780 = vld [vmem:[#allocation2 + $0x40] sm:$0xff]
        %v781 = vld [vmem:[#allocation2 + $0x48] sm:$0xff]
        %v782 = vld [vmem:[#allocation2 + $0x50] sm:$0xff]
        %v783 = vld [vmem:[#allocation2 + $0x58] sm:$0xff]
        %v784 = vld [vmem:[#allocation2 + $0x60] sm:$0xff]
        %v785 = vld [vmem:[#allocation2 + $0x68] sm:$0xff]
        %v786 = vld [vmem:[#allocation2 + $0x70] sm:$0xff]
        %v787 = vld [vmem:[#allocation2 + $0x78] sm:$0xff]
        %v788 = vld [vmem:[#allocation2 + $0x80] sm:$0xff]
        %v789 = vld [vmem:[#allocation2 + $0x88] sm:$0xff]
        %v790 = vld [vmem:[#allocation2 + $0x90] sm:$0xff]
        %v791 = vld [vmem:[#allocation2 + $0x98] sm:$0xff]
        %v792 = vld [vmem:[#allocation2 + $0xa0] sm:$0xff]
        %v793 = vld [vmem:[#allocation2 + $0xa8] sm:$0xff]
        %v794 = vld [vmem:[#allocation2 + $0xb0] sm:$0xff]
        %v795 = vld [vmem:[#allocation2 + $0xb8] sm:$0xff]
        %v796 = vld [vmem:[#allocation2 + $0xc0] sm:$0xff]
        %v797 = vld [vmem:[#allocation2 + $0xc8] sm:$0xff]
        %v798 = vld [vmem:[#allocation2 + $0xd0] sm:$0xff]
        %v799 = vld [vmem:[#allocation2 + $0xd8] sm:$0xff]
        %v800 = vld [vmem:[#allocation2 + $0xe0] sm:$0xff]
        %v801 = vld [vmem:[#allocation2 + $0xe8] sm:$0xff]
        %v802 = vld [vmem:[#allocation2 + $0xf0] sm:$0xff]
        %v803 = vld [vmem:[#allocation2 + $0xf8] sm:$0xff]
        %v804 = vld [vmem:[%s2] sm:$0x1]
        %v805 = vld [vmem:[%s3] sm:$0x1]
        %v806 = vld [vmem:[#allocation5] sm:$0xff]
        %v807 = vld [vmem:[#allocation5 + $0x8] sm:$0xff]
        %v808 = vld [vmem:[#allocation5 + $0x10] sm:$0xff]
        %v809 = vld [vmem:[#allocation5 + $0x18] sm:$0xff]
        %v810 = vld [vmem:[#allocation5 + $0x20] sm:$0xff]
        %v811 = vld [vmem:[#allocation5 + $0x28] sm:$0xff]
        %v812 = vld [vmem:[#allocation5 + $0x30] sm:$0xff]
        %v813 = vld [vmem:[#allocation5 + $0x38] sm:$0xff]
        %v814 = vld [vmem:[#allocation5 + $0x40] sm:$0xff]
        %v815 = vld [vmem:[#allocation5 + $0x48] sm:$0xff]
        %v816 = vld [vmem:[#allocation5 + $0x50] sm:$0xff]
        %v817 = vld [vmem:[#allocation5 + $0x58] sm:$0xff]
        %v818 = vld [vmem:[#allocation5 + $0x60] sm:$0xff]
        %v819 = vld [vmem:[#allocation5 + $0x68] sm:$0xff]
        %v820 = vld [vmem:[#allocation5 + $0x70] sm:$0xff]
        %v821 = vld [vmem:[#allocation5 + $0x78] sm:$0xff]
        %v822 = vld [vmem:[#allocation5 + $0x80] sm:$0xff]
        %v823 = vld [vmem:[#allocation5 + $0x88] sm:$0xff]
        %v824 = vld [vmem:[#allocation5 + $0x90] sm:$0xff]
        %v825 = vld [vmem:[#allocation5 + $0x98] sm:$0xff]
        %v826 = vld [vmem:[#allocation5 + $0xa0] sm:$0xff]
        %v827 = vld [vmem:[#allocation5 + $0xa8] sm:$0xff]
        %v828 = vld [vmem:[#allocation5 + $0xb0] sm:$0xff]
        %v829 = vld [vmem:[#allocation5 + $0xb8] sm:$0xff]
        %v830 = vld [vmem:[#allocation5 + $0xc0] sm:$0xff]
        %v831 = vld [vmem:[#allocation5 + $0xc8] sm:$0xff]
        %v832 = vld [vmem:[#allocation5 + $0xd0] sm:$0xff]
        %v833 = vld [vmem:[#allocation5 + $0xd8] sm:$0xff]
        %v834 = vld [vmem:[#allocation5 + $0xe0] sm:$0xff]
        %v835 = vld [vmem:[#allocation5 + $0xe8] sm:$0xff]
        %v836 = vld [vmem:[#allocation5 + $0xf0] sm:$0xff]
        %v837 = vld [vmem:[#allocation5 + $0xf8] sm:$0xff]
        %v838 = vld [vmem:[#allocation5 + $0x100] sm:$0xff]
        %v839 = vld [vmem:[#allocation5 + $0x108] sm:$0xff]
        %v840 = vld [vmem:[#allocation5 + $0x110] sm:$0xff]
        %v841 = vld [vmem:[#allocation5 + $0x118] sm:$0xff]
        %v842 = vld [vmem:[#allocation5 + $0x120] sm:$0xff]
        %v843 = vld [vmem:[#allocation5 + $0x128] sm:$0xff]
        %v844 = vld [vmem:[#allocation5 + $0x130] sm:$0xff]
        %v845 = vld [vmem:[#allocation5 + $0x138] sm:$0xff]
        %v846 = vld [vmem:[#allocation5 + $0x140] sm:$0xff]
        %v847 = vld [vmem:[#allocation5 + $0x148] sm:$0xff]
        %v848 = vld [vmem:[#allocation5 + $0x150] sm:$0xff]
        %v849 = vld [vmem:[#allocation5 + $0x158] sm:$0xff]
        %v850 = vld [vmem:[#allocation5 + $0x160] sm:$0xff]
        %v851 = vld [vmem:[#allocation5 + $0x168] sm:$0xff]
        %v852 = vld [vmem:[#allocation5 + $0x170] sm:$0xff]
        %v853 = vld [vmem:[#allocation5 + $0x178] sm:$0xff]
        %v854 = vld [vmem:[#allocation5 + $0x180] sm:$0xff]
        %v855 = vld [vmem:[#allocation5 + $0x188] sm:$0xff]
        %v856 = vld [vmem:[#allocation5 + $0x190] sm:$0xff]
        %v857 = vld [vmem:[#allocation5 + $0x198] sm:$0xff]
        %v858 = vld [vmem:[#allocation5 + $0x1a0] sm:$0xff]
        %v859 = vld [vmem:[#allocation5 + $0x1a8] sm:$0xff]
        %v860 = vld [vmem:[#allocation5 + $0x1b0] sm:$0xff]
        %v861 = vld [vmem:[#allocation5 + $0x1b8] sm:$0xff]
        %v862 = vld [vmem:[#allocation5 + $0x1c0] sm:$0xff]
        %v863 = vld [vmem:[#allocation5 + $0x1c8] sm:$0xff]
        %v864 = vld [vmem:[#allocation5 + $0x1d0] sm:$0xff]
        %v865 = vld [vmem:[#allocation5 + $0x1d8] sm:$0xff]
        %v866 = vld [vmem:[#allocation5 + $0x1e0] sm:$0xff]
        %v867 = vld [vmem:[#allocation5 + $0x1e8] sm:$0xff]
        %v868 = vld [vmem:[#allocation5 + $0x1f0] sm:$0xff]
        %v869 = vld [vmem:[#allocation5 + $0x1f8] sm:$0xff]
        %v870 = vld [vmem:[#allocation8] sm:$0xff]
        %v871 = vld [vmem:[#allocation8 + $0x8] sm:$0xff]
        %v872 = vld [vmem:[#allocation8 + $0x10] sm:$0xff]
        %v873 = vld [vmem:[#allocation8 + $0x18] sm:$0xff]
        %v874 = vld [vmem:[#allocation8 + $0x20] sm:$0xff]
        %v875 = vld [vmem:[#allocation8 + $0x28] sm:$0xff]
        %v876 = vld [vmem:[#allocation8 + $0x30] sm:$0xff]
        %v877 = vld [vmem:[#allocation8 + $0x38] sm:$0xff]
        %v878 = vld [vmem:[#allocation8 + $0x40] sm:$0xff]
        %v879 = vld [vmem:[#allocation8 + $0x48] sm:$0xff]
        %v880 = vld [vmem:[#allocation8 + $0x50] sm:$0xff]
        %v881 = vld [vmem:[#allocation8 + $0x58] sm:$0xff]
        %v882 = vld [vmem:[#allocation8 + $0x60] sm:$0xff]
        %v883 = vld [vmem:[#allocation8 + $0x68] sm:$0xff]
        %v884 = vld [vmem:[#allocation8 + $0x70] sm:$0xff]
        %v885 = vld [vmem:[#allocation8 + $0x78] sm:$0xff]
        %v886 = vld [vmem:[#allocation8 + $0x80] sm:$0xff]
        %v887 = vld [vmem:[#allocation8 + $0x88] sm:$0xff]
        %v888 = vld [vmem:[#allocation8 + $0x90] sm:$0xff]
        %v889 = vld [vmem:[#allocation8 + $0x98] sm:$0xff]
        %v890 = vld [vmem:[#allocation8 + $0xa0] sm:$0xff]
        %v891 = vld [vmem:[#allocation8 + $0xa8] sm:$0xff]
        %v892 = vld [vmem:[#allocation8 + $0xb0] sm:$0xff]
        %v893 = vld [vmem:[#allocation8 + $0xb8] sm:$0xff]
        %v894 = vld [vmem:[#allocation8 + $0xc0] sm:$0xff]
        %v895 = vld [vmem:[#allocation8 + $0xc8] sm:$0xff]
        %v896 = vld [vmem:[#allocation8 + $0xd0] sm:$0xff]
        %v897 = vld [vmem:[#allocation8 + $0xd8] sm:$0xff]
        %v898 = vld [vmem:[#allocation8 + $0xe0] sm:$0xff]
        %v899 = vld [vmem:[#allocation8 + $0xe8] sm:$0xff]
        %v900 = vld [vmem:[#allocation8 + $0xf0] sm:$0xff]
        %v901 = vld [vmem:[#allocation8 + $0xf8] sm:$0xff]
        %v902 = vld [vmem:[#allocation8 + $0x100] sm:$0xff]
        %v903 = vld [vmem:[#allocation8 + $0x108] sm:$0xff]
        %v904 = vld [vmem:[#allocation8 + $0x110] sm:$0xff]
        %v905 = vld [vmem:[#allocation8 + $0x118] sm:$0xff]
        %v906 = vld [vmem:[#allocation8 + $0x120] sm:$0xff]
        %v907 = vld [vmem:[#allocation8 + $0x128] sm:$0xff]
        %v908 = vld [vmem:[#allocation8 + $0x130] sm:$0xff]
        %v909 = vld [vmem:[#allocation8 + $0x138] sm:$0xff]
        %v910 = vld [vmem:[#allocation8 + $0x140] sm:$0xff]
        %v911 = vld [vmem:[#allocation8 + $0x148] sm:$0xff]
        %v912 = vld [vmem:[#allocation8 + $0x150] sm:$0xff]
        %v913 = vld [vmem:[#allocation8 + $0x158] sm:$0xff]
        %v914 = vld [vmem:[#allocation8 + $0x160] sm:$0xff]
        %v915 = vld [vmem:[#allocation8 + $0x168] sm:$0xff]
        %v916 = vld [vmem:[#allocation8 + $0x170] sm:$0xff]
        %v917 = vld [vmem:[#allocation8 + $0x178] sm:$0xff]
        %v918 = vld [vmem:[#allocation8 + $0x180] sm:$0xff]
        %v919 = vld [vmem:[#allocation8 + $0x188] sm:$0xff]
        %v920 = vld [vmem:[#allocation8 + $0x190] sm:$0xff]
        %v921 = vld [vmem:[#allocation8 + $0x198] sm:$0xff]
        %v922 = vld [vmem:[#allocation8 + $0x1a0] sm:$0xff]
        %v923 = vld [vmem:[#allocation8 + $0x1a8] sm:$0xff]
        %v924 = vld [vmem:[#allocation8 + $0x1b0] sm:$0xff]
        %v925 = vld [vmem:[#allocation8 + $0x1b8] sm:$0xff]
        %v926 = vld [vmem:[#allocation8 + $0x1c0] sm:$0xff]
        %v927 = vld [vmem:[#allocation8 + $0x1c8] sm:$0xff]
        %v928 = vld [vmem:[#allocation8 + $0x1d0] sm:$0xff]
        %v929 = vld [vmem:[#allocation8 + $0x1d8] sm:$0xff]
        %v930 = vld [vmem:[#allocation8 + $0x1e0] sm:$0xff]
        %v931 = vld [vmem:[#allocation8 + $0x1e8] sm:$0xff]
        %v932 = vld [vmem:[#allocation8 + $0x1f0] sm:$0xff]
        %v933 = vld [vmem:[#allocation8 + $0x1f8] sm:$0xff]
        %v934 = vld [vmem:[#allocation7] sm:$0xff]
        %v935 = vld [vmem:[#allocation7 + $0x8] sm:$0xff]
        %v936 = vld [vmem:[#allocation7 + $0x10] sm:$0xff]
        %v937 = vld [vmem:[#allocation7 + $0x18] sm:$0xff]
        %v938 = vld [vmem:[#allocation7 + $0x20] sm:$0xff]
        %v939 = vld [vmem:[#allocation7 + $0x28] sm:$0xff]
        %v940 = vld [vmem:[#allocation7 + $0x30] sm:$0xff]
        %v941 = vld [vmem:[#allocation7 + $0x38] sm:$0xff]
        %v942 = vld [vmem:[#allocation7 + $0x40] sm:$0xff]
        %v943 = vld [vmem:[#allocation7 + $0x48] sm:$0xff]
        %v944 = vld [vmem:[#allocation7 + $0x50] sm:$0xff]
        %v945 = vld [vmem:[#allocation7 + $0x58] sm:$0xff]
        %v946 = vld [vmem:[#allocation7 + $0x60] sm:$0xff]
        %v947 = vld [vmem:[#allocation7 + $0x68] sm:$0xff]
        %v948 = vld [vmem:[#allocation7 + $0x70] sm:$0xff]
        %v949 = vld [vmem:[#allocation7 + $0x78] sm:$0xff]
        %v950 = vld [vmem:[#allocation7 + $0x80] sm:$0xff]
        %v951 = vld [vmem:[#allocation7 + $0x88] sm:$0xff]
        %v952 = vld [vmem:[#allocation7 + $0x90] sm:$0xff]
        %v953 = vld [vmem:[#allocation7 + $0x98] sm:$0xff]
        %v954 = vld [vmem:[#allocation7 + $0xa0] sm:$0xff]
        %v955 = vld [vmem:[#allocation7 + $0xa8] sm:$0xff]
        %v956 = vld [vmem:[#allocation7 + $0xb0] sm:$0xff]
        %v957 = vld [vmem:[#allocation7 + $0xb8] sm:$0xff]
        %v958 = vld [vmem:[#allocation7 + $0xc0] sm:$0xff]
        %v959 = vld [vmem:[#allocation7 + $0xc8] sm:$0xff]
        %v960 = vld [vmem:[#allocation7 + $0xd0] sm:$0xff]
        %v961 = vld [vmem:[#allocation7 + $0xd8] sm:$0xff]
        %v962 = vld [vmem:[#allocation7 + $0xe0] sm:$0xff]
        %v963 = vld [vmem:[#allocation7 + $0xe8] sm:$0xff]
        %v964 = vld [vmem:[#allocation7 + $0xf0] sm:$0xff]
        %v965 = vld [vmem:[#allocation7 + $0xf8] sm:$0xff]
        %v966 = vld [vmem:[#allocation7 + $0x100] sm:$0xff]
        %v967 = vld [vmem:[#allocation7 + $0x108] sm:$0xff]
        %v968 = vld [vmem:[#allocation7 + $0x110] sm:$0xff]
        %v969 = vld [vmem:[#allocation7 + $0x118] sm:$0xff]
        %v970 = vld [vmem:[#allocation7 + $0x120] sm:$0xff]
        %v971 = vld [vmem:[#allocation7 + $0x128] sm:$0xff]
        %v972 = vld [vmem:[#allocation7 + $0x130] sm:$0xff]
        %v973 = vld [vmem:[#allocation7 + $0x138] sm:$0xff]
        %v974 = vld [vmem:[#allocation7 + $0x140] sm:$0xff]
        %v975 = vld [vmem:[#allocation7 + $0x148] sm:$0xff]
        %v976 = vld [vmem:[#allocation7 + $0x150] sm:$0xff]
        %v977 = vld [vmem:[#allocation7 + $0x158] sm:$0xff]
        %v978 = vld [vmem:[#allocation7 + $0x160] sm:$0xff]
        %v979 = vld [vmem:[#allocation7 + $0x168] sm:$0xff]
        %v980 = vld [vmem:[#allocation7 + $0x170] sm:$0xff]
        %v981 = vld [vmem:[#allocation7 + $0x178] sm:$0xff]
        %v982 = vld [vmem:[#allocation7 + $0x180] sm:$0xff]
        %v983 = vld [vmem:[#allocation7 + $0x188] sm:$0xff]
        %v984 = vld [vmem:[#allocation7 + $0x190] sm:$0xff]
        %v985 = vld [vmem:[#allocation7 + $0x198] sm:$0xff]
        %v986 = vld [vmem:[#allocation7 + $0x1a0] sm:$0xff]
        %v987 = vld [vmem:[#allocation7 + $0x1a8] sm:$0xff]
        %v988 = vld [vmem:[#allocation7 + $0x1b0] sm:$0xff]
        %v989 = vld [vmem:[#allocation7 + $0x1b8] sm:$0xff]
        %v990 = vld [vmem:[#allocation7 + $0x1c0] sm:$0xff]
        %v991 = vld [vmem:[#allocation7 + $0x1c8] sm:$0xff]
        %v992 = vld [vmem:[#allocation7 + $0x1d0] sm:$0xff]
        %v993 = vld [vmem:[#allocation7 + $0x1d8] sm:$0xff]
        %v994 = vld [vmem:[#allocation7 + $0x1e0] sm:$0xff]
        %v995 = vld [vmem:[#allocation7 + $0x1e8] sm:$0xff]
        %v996 = vld [vmem:[#allocation7 + $0x1f0] sm:$0xff]
        %v997 = vld [vmem:[#allocation7 + $0x1f8] sm:$0xff]
        %v998 = vld [vmem:[#allocation10] sm:$0xff]
        %v999 = vld [vmem:[#allocation10 + $0x8] sm:$0xff]
        %v1000 = vld [vmem:[#allocation10 + $0x10] sm:$0xff]
        %v1001 = vld [vmem:[#allocation10 + $0x18] sm:$0xff]
        %v1002 = vld [vmem:[#allocation10 + $0x20] sm:$0xff]
        %v1003 = vld [vmem:[#allocation10 + $0x28] sm:$0xff]
        %v1004 = vld [vmem:[#allocation10 + $0x30] sm:$0xff]
        %v1005 = vld [vmem:[#allocation10 + $0x38] sm:$0xff]
        %v1006 = vld [vmem:[#allocation10 + $0x40] sm:$0xff]
        %v1007 = vld [vmem:[#allocation10 + $0x48] sm:$0xff]
        %v1008 = vld [vmem:[#allocation10 + $0x50] sm:$0xff]
        %v1009 = vld [vmem:[#allocation10 + $0x58] sm:$0xff]
        %v1010 = vld [vmem:[#allocation10 + $0x60] sm:$0xff]
        %v1011 = vld [vmem:[#allocation10 + $0x68] sm:$0xff]
        %v1012 = vld [vmem:[#allocation10 + $0x70] sm:$0xff]
        %v1013 = vld [vmem:[#allocation10 + $0x78] sm:$0xff]
        %v1014 = vld [vmem:[#allocation10 + $0x80] sm:$0xff]
        %v1015 = vld [vmem:[#allocation10 + $0x88] sm:$0xff]
        %v1016 = vld [vmem:[#allocation10 + $0x90] sm:$0xff]
        %v1017 = vld [vmem:[#allocation10 + $0x98] sm:$0xff]
        %v1018 = vld [vmem:[#allocation10 + $0xa0] sm:$0xff]
        %v1019 = vld [vmem:[#allocation10 + $0xa8] sm:$0xff]
        %v1020 = vld [vmem:[#allocation10 + $0xb0] sm:$0xff]
        %v1021 = vld [vmem:[#allocation10 + $0xb8] sm:$0xff]
        %v1022 = vld [vmem:[#allocation10 + $0xc0] sm:$0xff]
        %v1023 = vld [vmem:[#allocation10 + $0xc8] sm:$0xff]
        %v1024 = vld [vmem:[#allocation10 + $0xd0] sm:$0xff]
        %v1025 = vld [vmem:[#allocation10 + $0xd8] sm:$0xff]
        %v1026 = vld [vmem:[#allocation10 + $0xe0] sm:$0xff]
        %v1027 = vld [vmem:[#allocation10 + $0xe8] sm:$0xff]
        %v1028 = vld [vmem:[#allocation10 + $0xf0] sm:$0xff]
        %v1029 = vld [vmem:[#allocation10 + $0xf8] sm:$0xff]
        %v1030 = vld [vmem:[#allocation10 + $0x100] sm:$0xff]
        %v1031 = vld [vmem:[#allocation10 + $0x108] sm:$0xff]
        %v1032 = vld [vmem:[#allocation10 + $0x110] sm:$0xff]
        %v1033 = vld [vmem:[#allocation10 + $0x118] sm:$0xff]
        %v1034 = vld [vmem:[#allocation10 + $0x120] sm:$0xff]
        %v1035 = vld [vmem:[#allocation10 + $0x128] sm:$0xff]
        %v1036 = vld [vmem:[#allocation10 + $0x130] sm:$0xff]
        %v1037 = vld [vmem:[#allocation10 + $0x138] sm:$0xff]
        %v1038 = vld [vmem:[#allocation10 + $0x140] sm:$0xff]
        %v1039 = vld [vmem:[#allocation10 + $0x148] sm:$0xff]
        %v1040 = vld [vmem:[#allocation10 + $0x150] sm:$0xff]
        %v1041 = vld [vmem:[#allocation10 + $0x158] sm:$0xff]
        %v1042 = vld [vmem:[#allocation10 + $0x160] sm:$0xff]
        %v1043 = vld [vmem:[#allocation10 + $0x168] sm:$0xff]
        %v1044 = vld [vmem:[#allocation10 + $0x170] sm:$0xff]
        %v1045 = vld [vmem:[#allocation10 + $0x178] sm:$0xff]
        %v1046 = vld [vmem:[#allocation10 + $0x180] sm:$0xff]
        %v1047 = vld [vmem:[#allocation10 + $0x188] sm:$0xff]
        %v1048 = vld [vmem:[#allocation10 + $0x190] sm:$0xff]
        %v1049 = vld [vmem:[#allocation10 + $0x198] sm:$0xff]
        %v1050 = vld [vmem:[#allocation10 + $0x1a0] sm:$0xff]
        %v1051 = vld [vmem:[#allocation10 + $0x1a8] sm:$0xff]
        %v1052 = vld [vmem:[#allocation10 + $0x1b0] sm:$0xff]
        %v1053 = vld [vmem:[#allocation10 + $0x1b8] sm:$0xff]
        %v1054 = vld [vmem:[#allocation10 + $0x1c0] sm:$0xff]
        %v1055 = vld [vmem:[#allocation10 + $0x1c8] sm:$0xff]
        %v1056 = vld [vmem:[#allocation10 + $0x1d0] sm:$0xff]
        %v1057 = vld [vmem:[#allocation10 + $0x1d8] sm:$0xff]
        %v1058 = vld [vmem:[#allocation10 + $0x1e0] sm:$0xff]
        %v1059 = vld [vmem:[#allocation10 + $0x1e8] sm:$0xff]
        %v1060 = vld [vmem:[#allocation10 + $0x1f0] sm:$0xff]
        %v1061 = vld [vmem:[#allocation10 + $0x1f8] sm:$0xff]
        %v1062 = vld [vmem:[%s6] sm:$0xf]
        %v1063 = vld [vmem:[%s9] sm:$0xf]
        %v1064 = vld [vmem:[%s688] sm:$0xff]
        %s1065 = scalar_lea.vmem %s688, 8 [#allocation13]
        %v1066 = vld [vmem:[%s1065] sm:$0xff]
        %v1067 = vld [vmem:[%s696] sm:$0xff]
        %s1068 = scalar_lea.vmem %s696, 8 [#allocation14]
        %v1069 = vld [vmem:[%s1068] sm:$0xff]
        %v1070 = vlaneseq
        %v1071 = vand.u32 %v1070, 127
        %v1072 = vadd.s32 %v1071, 128
        %1073 = vset.pattern.permute.xlu0 0
        %1074 = vperm.xlu0 %1073, %v771
        %v1075 = vpop.permute.xlu0 %1074
        %vm1076 = vcmp.eq.s32.totalorder %v1071, %v1075
        %vm1077 = vcmp.eq.s32.totalorder %v1072, %v1075
        %v1078 = vsel %vm1076, 1, 0
        %v1079 = vsel %vm1077, 1, 0
        %v1080 = vcvt.s32.f32 %v1078
        %v1081 = vcvt.s32.f32 %v1079
        %1082 = vmatprep.subr.mxu0 0.0
        %1083 = vmatpush1.msra.mxu0 %v772
        %1084 = vmatprep.subr.mxu0 0.0
        %1085 = vmatpush1.msra.mxu0 %v773
        %1086 = vmatprep.subr.mxu0 0.0
        %1087 = vmatpush1.msra.mxu0 %v774
        %1088 = vmatprep.subr.mxu0 0.0
        %1089 = vmatpush1.msra.mxu0 %v775
        %1090 = vmatprep.subr.mxu0 0.0
        %1091 = vmatpush1.msra.mxu0 %v776
        %1092 = vmatprep.subr.mxu0 0.0
        %1093 = vmatpush1.msra.mxu0 %v777
        %1094 = vmatprep.subr.mxu0 0.0
        %1095 = vmatpush1.msra.mxu0 %v778
        %1096 = vmatprep.subr.mxu0 0.0
        %1097 = vmatpush1.msra.mxu0 %v779
        %1098 = vmatprep.subr.mxu0 0.0
        %1099 = vmatpush1.msra.mxu0 %v780
        %1100 = vmatprep.subr.mxu0 0.0
        %1101 = vmatpush1.msra.mxu0 %v781
        %1102 = vmatprep.subr.mxu0 0.0
        %1103 = vmatpush1.msra.mxu0 %v782
        %1104 = vmatprep.subr.mxu0 0.0
        %1105 = vmatpush1.msra.mxu0 %v783
        %1106 = vmatprep.subr.mxu0 0.0
        %1107 = vmatpush1.msra.mxu0 %v784
        %1108 = vmatprep.subr.mxu0 0.0
        %1109 = vmatpush1.msra.mxu0 %v785
        %1110 = vmatprep.subr.mxu0 0.0
        %1111 = vmatpush1.msra.mxu0 %v786
        %1112 = vmatprep.subr.mxu0 0.0
        %1113 = vmatpush1.msra.mxu0 %v787
        %1114 = vmatprep.subr.mxu0 0.0
        %1115 = vmatpush1.msra.mxu0 %v788
        %1116 = vmatprep.subr.mxu0 0.0
        %1117 = vmatpush1.msra.mxu0 %v789
        %1118 = vmatprep.subr.mxu0 0.0
        %1119 = vmatpush1.msra.mxu0 %v790
        %1120 = vmatprep.subr.mxu0 0.0
        %1121 = vmatpush1.msra.mxu0 %v791
        %1122 = vmatprep.subr.mxu0 0.0
        %1123 = vmatpush1.msra.mxu0 %v792
        %1124 = vmatprep.subr.mxu0 0.0
        %1125 = vmatpush1.msra.mxu0 %v793
        %1126 = vmatprep.subr.mxu0 0.0
        %1127 = vmatpush1.msra.mxu0 %v794
        %1128 = vmatprep.subr.mxu0 0.0
        %1129 = vmatpush1.msra.mxu0 %v795
        %1130 = vmatprep.subr.mxu0 0.0
        %1131 = vmatpush1.msra.mxu0 %v796
        %1132 = vmatprep.subr.mxu0 0.0
        %1133 = vmatpush1.msra.mxu0 %v797
        %1134 = vmatprep.subr.mxu0 0.0
        %1135 = vmatpush1.msra.mxu0 %v798
        %1136 = vmatprep.subr.mxu0 0.0
        %1137 = vmatpush1.msra.mxu0 %v799
        %1138 = vmatprep.subr.mxu0 0.0
        %1139 = vmatpush1.msra.mxu0 %v800
        %1140 = vmatprep.subr.mxu0 0.0
        %1141 = vmatpush1.msra.mxu0 %v801
        %1142 = vmatprep.subr.mxu0 0.0
        %1143 = vmatpush1.msra.mxu0 %v802
        %1144 = vmatprep.subr.mxu0 0.0
        %1145 = vmatpush1.msra.mxu0 %v803
        %1146 = vmatprep.mubr.f32.mxu0 %v1081
        %1147 = vmatmul.mubr.f32.gmra.mrb[0].mxu0 %v1080
        %v1148 = vpop.f32.mrb[0].mxu0
        %v1149 = vadd.f32 0.0, %v1148
        %v1150 = vpop.f32.mrb[0].mxu0
        %1151 = vdwg.mxu0
        %1152 = vadd.xlane.f32.xlu0 %v1149
        %v1153 = vpop.xlane.xlu0 %1152
        %v1154 = vrcp.pop 128.0
        %v1155 = vmul.f32 %v1153, %v1154
        %v1156 = vmul.f32 %v1149, %v1149
        %1157 = vadd.xlane.f32.xlu0 %v1156
        %v1158 = vpop.xlane.xlu0 %1157
        %v1159 = vmul.f32 %v1158, %v1154
        %v1160 = vmul.f32 %v1155, %v1155
        %v1161 = vsub.f32 %v1159, %v1160
        %v1162 = vsub.f32 %v1149, %v1155
        %v1163 = vadd.f32 %v1161, 1e-05
        %v1164 = vrsqrt.pop %v1163
        %v1165 = vmul.f32 %v1162, %v1164
        %v1167 = vlaneseq
        %v1168 = vshrl.u32 %v1167, 7
        %v1169 = vsub.s32 0, %v1168
        %v1170 = vrot.slane %v804, %v1169
        %v1172 = vmul.f32 %v1165, %v1170
        %v1174 = vlaneseq
        %v1175 = vshrl.u32 %v1174, 7
        %v1176 = vsub.s32 0, %v1175
        %v1177 = vrot.slane %v805, %v1176
        %v1179 = vadd.f32 %v1172, %v1177
        %1180 = vmatprep.subr.mxu0 %v935
        %1181 = vmatpush1.msra.mxu0 %v934
        %1182 = vmatprep.subr.mxu0 %v939
        %1183 = vmatpush1.msra.mxu0 %v938
        %1184 = vmatprep.subr.mxu0 %v943
        %1185 = vmatpush1.msra.mxu0 %v942
        %1186 = vmatprep.subr.mxu0 %v947
        %1187 = vmatpush1.msra.mxu0 %v946
        %1188 = vmatprep.subr.mxu0 %v951
        %1189 = vmatpush1.msra.mxu0 %v950
        %1190 = vmatprep.subr.mxu0 %v955
        %1191 = vmatpush1.msra.mxu0 %v954
        %1192 = vmatprep.subr.mxu0 %v959
        %1193 = vmatpush1.msra.mxu0 %v958
        %1194 = vmatprep.subr.mxu0 %v963
        %1195 = vmatpush1.msra.mxu0 %v962
        %1196 = vmatprep.subr.mxu0 %v967
        %1197 = vmatpush1.msra.mxu0 %v966
        %1198 = vmatprep.subr.mxu0 %v971
        %1199 = vmatpush1.msra.mxu0 %v970
        %1200 = vmatprep.subr.mxu0 %v975
        %1201 = vmatpush1.msra.mxu0 %v974
        %1202 = vmatprep.subr.mxu0 %v979
        %1203 = vmatpush1.msra.mxu0 %v978
        %1204 = vmatprep.subr.mxu0 %v983
        %1205 = vmatpush1.msra.mxu0 %v982
        %1206 = vmatprep.subr.mxu0 %v987
        %1207 = vmatpush1.msra.mxu0 %v986
        %1208 = vmatprep.subr.mxu0 %v991
        %1209 = vmatpush1.msra.mxu0 %v990
        %1210 = vmatprep.subr.mxu0 %v995
        %1211 = vmatpush1.msra.mxu0 %v994
        %1212 = vmatprep.subr.mxu0 0.0
        %1213 = vmatpush1.msra.mxu0 0.0
        %1214 = vmatprep.subr.mxu0 0.0
        %1215 = vmatpush1.msra.mxu0 0.0
        %1216 = vmatprep.subr.mxu0 0.0
        %1217 = vmatpush1.msra.mxu0 0.0
        %1218 = vmatprep.subr.mxu0 0.0
        %1219 = vmatpush1.msra.mxu0 0.0
        %1220 = vmatprep.subr.mxu0 0.0
        %1221 = vmatpush1.msra.mxu0 0.0
        %1222 = vmatprep.subr.mxu0 0.0
        %1223 = vmatpush1.msra.mxu0 0.0
        %1224 = vmatprep.subr.mxu0 0.0
        %1225 = vmatpush1.msra.mxu0 0.0
        %1226 = vmatprep.subr.mxu0 0.0
        %1227 = vmatpush1.msra.mxu0 0.0
        %1228 = vmatprep.subr.mxu0 0.0
        %1229 = vmatpush1.msra.mxu0 0.0
        %1230 = vmatprep.subr.mxu0 0.0
        %1231 = vmatpush1.msra.mxu0 0.0
        %1232 = vmatprep.subr.mxu0 0.0
        %1233 = vmatpush1.msra.mxu0 0.0
        %1234 = vmatprep.subr.mxu0 0.0
        %1235 = vmatpush1.msra.mxu0 0.0
        %1236 = vmatprep.subr.mxu0 0.0
        %1237 = vmatpush1.msra.mxu0 0.0
        %1238 = vmatprep.subr.mxu0 0.0
        %1239 = vmatpush1.msra.mxu0 0.0
        %1240 = vmatprep.subr.mxu0 0.0
        %1241 = vmatpush1.msra.mxu0 0.0
        %1242 = vmatprep.subr.mxu0 0.0
        %1243 = vmatpush1.msra.mxu0 0.0
        %1244 = vmatprep.mubr.f32.mxu0 0.0
        %1245 = vmatmul.mubr.f32.gmra.mrb[0].mxu0 %v1064
        %v1246 = vpop.f32.mrb[0].mxu0
        %v1247 = vadd.f32 0.0, %v1246
        %v1248 = vpop.f32.mrb[0].mxu0
        %v1249 = vadd.f32 0.0, %v1248
        %1250 = vdwg.mxu0
        %1251 = vmatprep.subr.mxu0 %v937
        %1252 = vmatpush1.msra.mxu0 %v936
        %1253 = vmatprep.subr.mxu0 %v941
        %1254 = vmatpush1.msra.mxu0 %v940
        %1255 = vmatprep.subr.mxu0 %v945
        %1256 = vmatpush1.msra.mxu0 %v944
        %1257 = vmatprep.subr.mxu0 %v949
        %1258 = vmatpush1.msra.mxu0 %v948
        %1259 = vmatprep.subr.mxu0 %v953
        %1260 = vmatpush1.msra.mxu0 %v952
        %1261 = vmatprep.subr.mxu0 %v957
        %1262 = vmatpush1.msra.mxu0 %v956
        %1263 = vmatprep.subr.mxu0 %v961
        %1264 = vmatpush1.msra.mxu0 %v960
        %1265 = vmatprep.subr.mxu0 %v965
        %1266 = vmatpush1.msra.mxu0 %v964
        %1267 = vmatprep.subr.mxu0 %v969
        %1268 = vmatpush1.msra.mxu0 %v968
        %1269 = vmatprep.subr.mxu0 %v973
        %1270 = vmatpush1.msra.mxu0 %v972
        %1271 = vmatprep.subr.mxu0 %v977
        %1272 = vmatpush1.msra.mxu0 %v976
        %1273 = vmatprep.subr.mxu0 %v981
        %1274 = vmatpush1.msra.mxu0 %v980
        %1275 = vmatprep.subr.mxu0 %v985
        %1276 = vmatpush1.msra.mxu0 %v984
        %1277 = vmatprep.subr.mxu0 %v989
        %1278 = vmatpush1.msra.mxu0 %v988
        %1279 = vmatprep.subr.mxu0 %v993
        %1280 = vmatpush1.msra.mxu0 %v992
        %1281 = vmatprep.subr.mxu0 %v997
        %1282 = vmatpush1.msra.mxu0 %v996
        %1283 = vmatprep.subr.mxu0 0.0
        %1284 = vmatpush1.msra.mxu0 0.0
        %1285 = vmatprep.subr.mxu0 0.0
        %1286 = vmatpush1.msra.mxu0 0.0
        %1287 = vmatprep.subr.mxu0 0.0
        %1288 = vmatpush1.msra.mxu0 0.0
        %1289 = vmatprep.subr.mxu0 0.0
        %1290 = vmatpush1.msra.mxu0 0.0
        %1291 = vmatprep.subr.mxu0 0.0
        %1292 = vmatpush1.msra.mxu0 0.0
        %1293 = vmatprep.subr.mxu0 0.0
        %1294 = vmatpush1.msra.mxu0 0.0
        %1295 = vmatprep.subr.mxu0 0.0
        %1296 = vmatpush1.msra.mxu0 0.0
        %1297 = vmatprep.subr.mxu0 0.0
        %1298 = vmatpush1.msra.mxu0 0.0
        %1299 = vmatprep.subr.mxu0 0.0
        %1300 = vmatpush1.msra.mxu0 0.0
        %1301 = vmatprep.subr.mxu0 0.0
        %1302 = vmatpush1.msra.mxu0 0.0
        %1303 = vmatprep.subr.mxu0 0.0
        %1304 = vmatpush1.msra.mxu0 0.0
        %1305 = vmatprep.subr.mxu0 0.0
        %1306 = vmatpush1.msra.mxu0 0.0
        %1307 = vmatprep.subr.mxu0 0.0
        %1308 = vmatpush1.msra.mxu0 0.0
        %1309 = vmatprep.subr.mxu0 0.0
        %1310 = vmatpush1.msra.mxu0 0.0
        %1311 = vmatprep.subr.mxu0 0.0
        %1312 = vmatpush1.msra.mxu0 0.0
        %1313 = vmatprep.subr.mxu0 0.0
        %1314 = vmatpush1.msra.mxu0 0.0
        %1315 = vmatprep.mubr.f32.mxu0 0.0
        %1316 = vmatmul.mubr.f32.gmra.mrb[0].mxu0 %v1064
        %v1317 = vpop.f32.mrb[0].mxu0
        %v1318 = vadd.f32 0.0, %v1317
        %v1319 = vpop.f32.mrb[0].mxu0
        %v1320 = vadd.f32 0.0, %v1319
        %1321 = vdwg.mxu0
        %1322 = vmatprep.subr.mxu0 %v807
        %1323 = vmatpush1.msra.mxu0 %v806
        %1324 = vmatprep.subr.mxu0 %v811
        %1325 = vmatpush1.msra.mxu0 %v810
        %1326 = vmatprep.subr.mxu0 %v815
        %1327 = vmatpush1.msra.mxu0 %v814
        %1328 = vmatprep.subr.mxu0 %v819
        %1329 = vmatpush1.msra.mxu0 %v818
        %1330 = vmatprep.subr.mxu0 %v823
        %1331 = vmatpush1.msra.mxu0 %v822
        %1332 = vmatprep.subr.mxu0 %v827
        %1333 = vmatpush1.msra.mxu0 %v826
        %1334 = vmatprep.subr.mxu0 %v831
        %1335 = vmatpush1.msra.mxu0 %v830
        %1336 = vmatprep.subr.mxu0 %v835
        %1337 = vmatpush1.msra.mxu0 %v834
        %1338 = vmatprep.subr.mxu0 %v839
        %1339 = vmatpush1.msra.mxu0 %v838
        %1340 = vmatprep.subr.mxu0 %v843
        %1341 = vmatpush1.msra.mxu0 %v842
        %1342 = vmatprep.subr.mxu0 %v847
        %1343 = vmatpush1.msra.mxu0 %v846
        %1344 = vmatprep.subr.mxu0 %v851
        %1345 = vmatpush1.msra.mxu0 %v850
        %1346 = vmatprep.subr.mxu0 %v855
        %1347 = vmatpush1.msra.mxu0 %v854
        %1348 = vmatprep.subr.mxu0 %v859
        %1349 = vmatpush1.msra.mxu0 %v858
        %1350 = vmatprep.subr.mxu0 %v863
        %1351 = vmatpush1.msra.mxu0 %v862
        %1352 = vmatprep.subr.mxu0 %v867
        %1353 = vmatpush1.msra.mxu0 %v866
        %1354 = vmatprep.subr.mxu0 0.0
        %1355 = vmatpush1.msra.mxu0 0.0
        %1356 = vmatprep.subr.mxu0 0.0
        %1357 = vmatpush1.msra.mxu0 0.0
        %1358 = vmatprep.subr.mxu0 0.0
        %1359 = vmatpush1.msra.mxu0 0.0
        %1360 = vmatprep.subr.mxu0 0.0
        %1361 = vmatpush1.msra.mxu0 0.0
        %1362 = vmatprep.subr.mxu0 0.0
        %1363 = vmatpush1.msra.mxu0 0.0
        %1364 = vmatprep.subr.mxu0 0.0
        %1365 = vmatpush1.msra.mxu0 0.0
        %1366 = vmatprep.subr.mxu0 0.0
        %1367 = vmatpush1.msra.mxu0 0.0
        %1368 = vmatprep.subr.mxu0 0.0
        %1369 = vmatpush1.msra.mxu0 0.0
        %1370 = vmatprep.subr.mxu0 0.0
        %1371 = vmatpush1.msra.mxu0 0.0
        %1372 = vmatprep.subr.mxu0 0.0
        %1373 = vmatpush1.msra.mxu0 0.0
        %1374 = vmatprep.subr.mxu0 0.0
        %1375 = vmatpush1.msra.mxu0 0.0
        %1376 = vmatprep.subr.mxu0 0.0
        %1377 = vmatpush1.msra.mxu0 0.0
        %1378 = vmatprep.subr.mxu0 0.0
        %1379 = vmatpush1.msra.mxu0 0.0
        %1380 = vmatprep.subr.mxu0 0.0
        %1381 = vmatpush1.msra.mxu0 0.0
        %1382 = vmatprep.subr.mxu0 0.0
        %1383 = vmatpush1.msra.mxu0 0.0
        %1384 = vmatprep.subr.mxu0 0.0
        %1385 = vmatpush1.msra.mxu0 0.0
        %1386 = vmatprep.mubr.f32.mxu0 0.0
        %1387 = vmatmul.mubr.f32.gmra.mrb[0].mxu0 %v1179
        %v1388 = vpop.f32.mrb[0].mxu0
        %v1389 = vadd.f32 %v1247, %v1388
        %v1390 = vpop.f32.mrb[0].mxu0
        %v1391 = vadd.f32 %v1249, %v1390
        %1392 = vdwg.mxu0
        %1393 = vmatprep.subr.mxu0 %v809
        %1394 = vmatpush1.msra.mxu0 %v808
        %1395 = vmatprep.subr.mxu0 %v813
        %1396 = vmatpush1.msra.mxu0 %v812
        %1397 = vmatprep.subr.mxu0 %v817
        %1398 = vmatpush1.msra.mxu0 %v816
        %1399 = vmatprep.subr.mxu0 %v821
        %1400 = vmatpush1.msra.mxu0 %v820
        %1401 = vmatprep.subr.mxu0 %v825
        %1402 = vmatpush1.msra.mxu0 %v824
        %1403 = vmatprep.subr.mxu0 %v829
        %1404 = vmatpush1.msra.mxu0 %v828
        %1405 = vmatprep.subr.mxu0 %v833
        %1406 = vmatpush1.msra.mxu0 %v832
        %1407 = vmatprep.subr.mxu0 %v837
        %1408 = vmatpush1.msra.mxu0 %v836
        %1409 = vmatprep.subr.mxu0 %v841
        %1410 = vmatpush1.msra.mxu0 %v840
        %1411 = vmatprep.subr.mxu0 %v845
        %1412 = vmatpush1.msra.mxu0 %v844
        %1413 = vmatprep.subr.mxu0 %v849
        %1414 = vmatpush1.msra.mxu0 %v848
        %1415 = vmatprep.subr.mxu0 %v853
        %1416 = vmatpush1.msra.mxu0 %v852
        %1417 = vmatprep.subr.mxu0 %v857
        %1418 = vmatpush1.msra.mxu0 %v856
        %1419 = vmatprep.subr.mxu0 %v861
        %1420 = vmatpush1.msra.mxu0 %v860
        %1421 = vmatprep.subr.mxu0 %v865
        %1422 = vmatpush1.msra.mxu0 %v864
        %1423 = vmatprep.subr.mxu0 %v869
        %1424 = vmatpush1.msra.mxu0 %v868
        %1425 = vmatprep.subr.mxu0 0.0
        %1426 = vmatpush1.msra.mxu0 0.0
        %1427 = vmatprep.subr.mxu0 0.0
        %1428 = vmatpush1.msra.mxu0 0.0
        %1429 = vmatprep.subr.mxu0 0.0
        %1430 = vmatpush1.msra.mxu0 0.0
        %1431 = vmatprep.subr.mxu0 0.0
        %1432 = vmatpush1.msra.mxu0 0.0
        %1433 = vmatprep.subr.mxu0 0.0
        %1434 = vmatpush1.msra.mxu0 0.0
        %1435 = vmatprep.subr.mxu0 0.0
        %1436 = vmatpush1.msra.mxu0 0.0
        %1437 = vmatprep.subr.mxu0 0.0
        %1438 = vmatpush1.msra.mxu0 0.0
        %1439 = vmatprep.subr.mxu0 0.0
        %1440 = vmatpush1.msra.mxu0 0.0
        %1441 = vmatprep.subr.mxu0 0.0
        %1442 = vmatpush1.msra.mxu0 0.0
        %1443 = vmatprep.subr.mxu0 0.0
        %1444 = vmatpush1.msra.mxu0 0.0
        %1445 = vmatprep.subr.mxu0 0.0
        %1446 = vmatpush1.msra.mxu0 0.0
        %1447 = vmatprep.subr.mxu0 0.0
        %1448 = vmatpush1.msra.mxu0 0.0
        %1449 = vmatprep.subr.mxu0 0.0
        %1450 = vmatpush1.msra.mxu0 0.0
        %1451 = vmatprep.subr.mxu0 0.0
        %1452 = vmatpush1.msra.mxu0 0.0
        %1453 = vmatprep.subr.mxu0 0.0
        %1454 = vmatpush1.msra.mxu0 0.0
        %1455 = vmatprep.subr.mxu0 0.0
        %1456 = vmatpush1.msra.mxu0 0.0
        %1457 = vmatprep.mubr.f32.mxu0 0.0
        %1458 = vmatmul.mubr.f32.gmra.mrb[0].mxu0 %v1179
        %v1459 = vpop.f32.mrb[0].mxu0
        %v1460 = vadd.f32 %v1318, %v1459
        %v1461 = vpop.f32.mrb[0].mxu0
        %v1462 = vadd.f32 %v1320, %v1461
        %1463 = vdwg.mxu0
        %v1465 = vlaneseq
        %v1466 = vshrl.u32 %v1465, 7
        %v1467 = vsub.s32 0, %v1466
        %v1468 = vrot.slane %v1062, %v1467
        %v1469 = vlaneseq
        %v1470 = vshrl.u32 %v1469, 7
        %v1471 = vsub.s32 1, %v1470
        %v1472 = vrot.slane %v1062, %v1471
        %v1473 = vlaneseq
        %v1474 = vshrl.u32 %v1473, 7
        %v1475 = vsub.s32 2, %v1474
        %v1476 = vrot.slane %v1062, %v1475
        %v1477 = vlaneseq
        %v1478 = vshrl.u32 %v1477, 7
        %v1479 = vsub.s32 3, %v1478
        %v1480 = vrot.slane %v1062, %v1479
        %v1485 = vadd.f32 %v1389, %v1468
        %v1486 = vadd.f32 %v1391, %v1472
        %v1487 = vadd.f32 %v1460, %v1476
        %v1488 = vadd.f32 %v1462, %v1480
        %v1489 = vxor.u32 %v1485, 2147483648
        %v1490 = vmul.f32 %v1489, 1.442695
        %v1491 = vpow.pop %v1490
        %v1492 = vadd.f32 %v1491, 1.0
        %v1493 = vrcp.pop %v1492
        %v1494 = vmul.f32 1.0, %v1493
        %v1495 = vxor.u32 %v1486, 2147483648
        %v1496 = vmul.f32 %v1495, 1.442695
        %v1497 = vpow.pop %v1496
        %v1498 = vadd.f32 %v1497, 1.0
        %v1499 = vrcp.pop %v1498
        %v1500 = vmul.f32 1.0, %v1499
        %v1501 = vtanh.pop %v1487
        %v1502 = vxor.u32 %v1488, 2147483648
        %v1503 = vmul.f32 %v1502, 1.442695
        %v1504 = vpow.pop %v1503
        %v1505 = vadd.f32 %v1504, 1.0
        %v1506 = vrcp.pop %v1505
        %v1507 = vmul.f32 1.0, %v1506
        %v1508 = vmul.f32 %v1500, %v1067
        %v1509 = vmul.f32 %v1494, %v1501
        %v1510 = vadd.f32 %v1508, %v1509
        %v1511 = vtanh.pop %v1510
        %v1512 = vmul.f32 %v1507, %v1511
        %1513 = vmatprep.subr.mxu0 %v999
        %1514 = vmatpush1.msra.mxu0 %v998
        %1515 = vmatprep.subr.mxu0 %v1003
        %1516 = vmatpush1.msra.mxu0 %v1002
        %1517 = vmatprep.subr.mxu0 %v1007
        %1518 = vmatpush1.msra.mxu0 %v1006
        %1519 = vmatprep.subr.mxu0 %v1011
        %1520 = vmatpush1.msra.mxu0 %v1010
        %1521 = vmatprep.subr.mxu0 %v1015
        %1522 = vmatpush1.msra.mxu0 %v1014
        %1523 = vmatprep.subr.mxu0 %v1019
        %1524 = vmatpush1.msra.mxu0 %v1018
        %1525 = vmatprep.subr.mxu0 %v1023
        %1526 = vmatpush1.msra.mxu0 %v1022
        %1527 = vmatprep.subr.mxu0 %v1027
        %1528 = vmatpush1.msra.mxu0 %v1026
        %1529 = vmatprep.subr.mxu0 %v1031
        %1530 = vmatpush1.msra.mxu0 %v1030
        %1531 = vmatprep.subr.mxu0 %v1035
        %1532 = vmatpush1.msra.mxu0 %v1034
        %1533 = vmatprep.subr.mxu0 %v1039
        %1534 = vmatpush1.msra.mxu0 %v1038
        %1535 = vmatprep.subr.mxu0 %v1043
        %1536 = vmatpush1.msra.mxu0 %v1042
        %1537 = vmatprep.subr.mxu0 %v1047
        %1538 = vmatpush1.msra.mxu0 %v1046
        %1539 = vmatprep.subr.mxu0 %v1051
        %1540 = vmatpush1.msra.mxu0 %v1050
        %1541 = vmatprep.subr.mxu0 %v1055
        %1542 = vmatpush1.msra.mxu0 %v1054
        %1543 = vmatprep.subr.mxu0 %v1059
        %1544 = vmatpush1.msra.mxu0 %v1058
        %1545 = vmatprep.subr.mxu0 0.0
        %1546 = vmatpush1.msra.mxu0 0.0
        %1547 = vmatprep.subr.mxu0 0.0
        %1548 = vmatpush1.msra.mxu0 0.0
        %1549 = vmatprep.subr.mxu0 0.0
        %1550 = vmatpush1.msra.mxu0 0.0
        %1551 = vmatprep.subr.mxu0 0.0
        %1552 = vmatpush1.msra.mxu0 0.0
        %1553 = vmatprep.subr.mxu0 0.0
        %1554 = vmatpush1.msra.mxu0 0.0
        %1555 = vmatprep.subr.mxu0 0.0
        %1556 = vmatpush1.msra.mxu0 0.0
        %1557 = vmatprep.subr.mxu0 0.0
        %1558 = vmatpush1.msra.mxu0 0.0
        %1559 = vmatprep.subr.mxu0 0.0
        %1560 = vmatpush1.msra.mxu0 0.0
        %1561 = vmatprep.subr.mxu0 0.0
        %1562 = vmatpush1.msra.mxu0 0.0
        %1563 = vmatprep.subr.mxu0 0.0
        %1564 = vmatpush1.msra.mxu0 0.0
        %1565 = vmatprep.subr.mxu0 0.0
        %1566 = vmatpush1.msra.mxu0 0.0
        %1567 = vmatprep.subr.mxu0 0.0
        %1568 = vmatpush1.msra.mxu0 0.0
        %1569 = vmatprep.subr.mxu0 0.0
        %1570 = vmatpush1.msra.mxu0 0.0
        %1571 = vmatprep.subr.mxu0 0.0
        %1572 = vmatpush1.msra.mxu0 0.0
        %1573 = vmatprep.subr.mxu0 0.0
        %1574 = vmatpush1.msra.mxu0 0.0
        %1575 = vmatprep.subr.mxu0 0.0
        %1576 = vmatpush1.msra.mxu0 0.0
        %1577 = vmatprep.mubr.f32.mxu0 0.0
        %1578 = vmatmul.mubr.f32.gmra.mrb[0].mxu0 %v1066
        %v1579 = vpop.f32.mrb[0].mxu0
        %v1580 = vadd.f32 0.0, %v1579
        %v1581 = vpop.f32.mrb[0].mxu0
        %v1582 = vadd.f32 0.0, %v1581
        %1583 = vdwg.mxu0
        %1584 = vmatprep.subr.mxu0 %v1001
        %1585 = vmatpush1.msra.mxu0 %v1000
        %1586 = vmatprep.subr.mxu0 %v1005
        %1587 = vmatpush1.msra.mxu0 %v1004
        %1588 = vmatprep.subr.mxu0 %v1009
        %1589 = vmatpush1.msra.mxu0 %v1008
        %1590 = vmatprep.subr.mxu0 %v1013
        %1591 = vmatpush1.msra.mxu0 %v1012
        %1592 = vmatprep.subr.mxu0 %v1017
        %1593 = vmatpush1.msra.mxu0 %v1016
        %1594 = vmatprep.subr.mxu0 %v1021
        %1595 = vmatpush1.msra.mxu0 %v1020
        %1596 = vmatprep.subr.mxu0 %v1025
        %1597 = vmatpush1.msra.mxu0 %v1024
        %1598 = vmatprep.subr.mxu0 %v1029
        %1599 = vmatpush1.msra.mxu0 %v1028
        %1600 = vmatprep.subr.mxu0 %v1033
        %1601 = vmatpush1.msra.mxu0 %v1032
        %1602 = vmatprep.subr.mxu0 %v1037
        %1603 = vmatpush1.msra.mxu0 %v1036
        %1604 = vmatprep.subr.mxu0 %v1041
        %1605 = vmatpush1.msra.mxu0 %v1040
        %1606 = vmatprep.subr.mxu0 %v1045
        %1607 = vmatpush1.msra.mxu0 %v1044
        %1608 = vmatprep.subr.mxu0 %v1049
        %1609 = vmatpush1.msra.mxu0 %v1048
        %1610 = vmatprep.subr.mxu0 %v1053
        %1611 = vmatpush1.msra.mxu0 %v1052
        %1612 = vmatprep.subr.mxu0 %v1057
        %1613 = vmatpush1.msra.mxu0 %v1056
        %1614 = vmatprep.subr.mxu0 %v1061
        %1615 = vmatpush1.msra.mxu0 %v1060
        %1616 = vmatprep.subr.mxu0 0.0
        %1617 = vmatpush1.msra.mxu0 0.0
        %1618 = vmatprep.subr.mxu0 0.0
        %1619 = vmatpush1.msra.mxu0 0.0
        %1620 = vmatprep.subr.mxu0 0.0
        %1621 = vmatpush1.msra.mxu0 0.0
        %1622 = vmatprep.subr.mxu0 0.0
        %1623 = vmatpush1.msra.mxu0 0.0
        %1624 = vmatprep.subr.mxu0 0.0
        %1625 = vmatpush1.msra.mxu0 0.0
        %1626 = vmatprep.subr.mxu0 0.0
        %1627 = vmatpush1.msra.mxu0 0.0
        %1628 = vmatprep.subr.mxu0 0.0
        %1629 = vmatpush1.msra.mxu0 0.0
        %1630 = vmatprep.subr.mxu0 0.0
        %1631 = vmatpush1.msra.mxu0 0.0
        %1632 = vmatprep.subr.mxu0 0.0
        %1633 = vmatpush1.msra.mxu0 0.0
        %1634 = vmatprep.subr.mxu0 0.0
        %1635 = vmatpush1.msra.mxu0 0.0
        %1636 = vmatprep.subr.mxu0 0.0
        %1637 = vmatpush1.msra.mxu0 0.0
        %1638 = vmatprep.subr.mxu0 0.0
        %1639 = vmatpush1.msra.mxu0 0.0
        %1640 = vmatprep.subr.mxu0 0.0
        %1641 = vmatpush1.msra.mxu0 0.0
        %1642 = vmatprep.subr.mxu0 0.0
        %1643 = vmatpush1.msra.mxu0 0.0
        %1644 = vmatprep.subr.mxu0 0.0
        %1645 = vmatpush1.msra.mxu0 0.0
        %1646 = vmatprep.subr.mxu0 0.0
        %1647 = vmatpush1.msra.mxu0 0.0
        %1648 = vmatprep.mubr.f32.mxu0 0.0
        %1649 = vmatmul.mubr.f32.gmra.mrb[0].mxu0 %v1066
        %v1650 = vpop.f32.mrb[0].mxu0
        %v1651 = vadd.f32 0.0, %v1650
        %v1652 = vpop.f32.mrb[0].mxu0
        %v1653 = vadd.f32 0.0, %v1652
        %1654 = vdwg.mxu0
        %1655 = vmatprep.subr.mxu0 %v871
        %1656 = vmatpush1.msra.mxu0 %v870
        %1657 = vmatprep.subr.mxu0 %v875
        %1658 = vmatpush1.msra.mxu0 %v874
        %1659 = vmatprep.subr.mxu0 %v879
        %1660 = vmatpush1.msra.mxu0 %v878
        %1661 = vmatprep.subr.mxu0 %v883
        %1662 = vmatpush1.msra.mxu0 %v882
        %1663 = vmatprep.subr.mxu0 %v887
        %1664 = vmatpush1.msra.mxu0 %v886
        %1665 = vmatprep.subr.mxu0 %v891
        %1666 = vmatpush1.msra.mxu0 %v890
        %1667 = vmatprep.subr.mxu0 %v895
        %1668 = vmatpush1.msra.mxu0 %v894
        %1669 = vmatprep.subr.mxu0 %v899
        %1670 = vmatpush1.msra.mxu0 %v898
        %1671 = vmatprep.subr.mxu0 %v903
        %1672 = vmatpush1.msra.mxu0 %v902
        %1673 = vmatprep.subr.mxu0 %v907
        %1674 = vmatpush1.msra.mxu0 %v906
        %1675 = vmatprep.subr.mxu0 %v911
        %1676 = vmatpush1.msra.mxu0 %v910
        %1677 = vmatprep.subr.mxu0 %v915
        %1678 = vmatpush1.msra.mxu0 %v914
        %1679 = vmatprep.subr.mxu0 %v919
        %1680 = vmatpush1.msra.mxu0 %v918
        %1681 = vmatprep.subr.mxu0 %v923
        %1682 = vmatpush1.msra.mxu0 %v922
        %1683 = vmatprep.subr.mxu0 %v927
        %1684 = vmatpush1.msra.mxu0 %v926
        %1685 = vmatprep.subr.mxu0 %v931
        %1686 = vmatpush1.msra.mxu0 %v930
        %1687 = vmatprep.subr.mxu0 0.0
        %1688 = vmatpush1.msra.mxu0 0.0
        %1689 = vmatprep.subr.mxu0 0.0
        %1690 = vmatpush1.msra.mxu0 0.0
        %1691 = vmatprep.subr.mxu0 0.0
        %1692 = vmatpush1.msra.mxu0 0.0
        %1693 = vmatprep.subr.mxu0 0.0
        %1694 = vmatpush1.msra.mxu0 0.0
        %1695 = vmatprep.subr.mxu0 0.0
        %1696 = vmatpush1.msra.mxu0 0.0
        %1697 = vmatprep.subr.mxu0 0.0
        %1698 = vmatpush1.msra.mxu0 0.0
        %1699 = vmatprep.subr.mxu0 0.0
        %1700 = vmatpush1.msra.mxu0 0.0
        %1701 = vmatprep.subr.mxu0 0.0
        %1702 = vmatpush1.msra.mxu0 0.0
        %1703 = vmatprep.subr.mxu0 0.0
        %1704 = vmatpush1.msra.mxu0 0.0
        %1705 = vmatprep.subr.mxu0 0.0
        %1706 = vmatpush1.msra.mxu0 0.0
        %1707 = vmatprep.subr.mxu0 0.0
        %1708 = vmatpush1.msra.mxu0 0.0
        %1709 = vmatprep.subr.mxu0 0.0
        %1710 = vmatpush1.msra.mxu0 0.0
        %1711 = vmatprep.subr.mxu0 0.0
        %1712 = vmatpush1.msra.mxu0 0.0
        %1713 = vmatprep.subr.mxu0 0.0
        %1714 = vmatpush1.msra.mxu0 0.0
        %1715 = vmatprep.subr.mxu0 0.0
        %1716 = vmatpush1.msra.mxu0 0.0
        %1717 = vmatprep.subr.mxu0 0.0
        %1718 = vmatpush1.msra.mxu0 0.0
        %1719 = vmatprep.mubr.f32.mxu0 0.0
        %1720 = vmatmul.mubr.f32.gmra.mrb[0].mxu0 %v1512
        %v1721 = vpop.f32.mrb[0].mxu0
        %v1722 = vadd.f32 %v1580, %v1721
        %v1723 = vpop.f32.mrb[0].mxu0
        %v1724 = vadd.f32 %v1582, %v1723
        %1725 = vdwg.mxu0
        %1726 = vmatprep.subr.mxu0 %v873
        %1727 = vmatpush1.msra.mxu0 %v872
        %1728 = vmatprep.subr.mxu0 %v877
        %1729 = vmatpush1.msra.mxu0 %v876
        %1730 = vmatprep.subr.mxu0 %v881
        %1731 = vmatpush1.msra.mxu0 %v880
        %1732 = vmatprep.subr.mxu0 %v885
        %1733 = vmatpush1.msra.mxu0 %v884
        %1734 = vmatprep.subr.mxu0 %v889
        %1735 = vmatpush1.msra.mxu0 %v888
        %1736 = vmatprep.subr.mxu0 %v893
        %1737 = vmatpush1.msra.mxu0 %v892
        %1738 = vmatprep.subr.mxu0 %v897
        %1739 = vmatpush1.msra.mxu0 %v896
        %1740 = vmatprep.subr.mxu0 %v901
        %1741 = vmatpush1.msra.mxu0 %v900
        %1742 = vmatprep.subr.mxu0 %v905
        %1743 = vmatpush1.msra.mxu0 %v904
        %1744 = vmatprep.subr.mxu0 %v909
        %1745 = vmatpush1.msra.mxu0 %v908
        %1746 = vmatprep.subr.mxu0 %v913
        %1747 = vmatpush1.msra.mxu0 %v912
        %1748 = vmatprep.subr.mxu0 %v917
        %1749 = vmatpush1.msra.mxu0 %v916
        %1750 = vmatprep.subr.mxu0 %v921
        %1751 = vmatpush1.msra.mxu0 %v920
        %1752 = vmatprep.subr.mxu0 %v925
        %1753 = vmatpush1.msra.mxu0 %v924
        %1754 = vmatprep.subr.mxu0 %v929
        %1755 = vmatpush1.msra.mxu0 %v928
        %1756 = vmatprep.subr.mxu0 %v933
        %1757 = vmatpush1.msra.mxu0 %v932
        %1758 = vmatprep.subr.mxu0 0.0
        %1759 = vmatpush1.msra.mxu0 0.0
        %1760 = vmatprep.subr.mxu0 0.0
        %1761 = vmatpush1.msra.mxu0 0.0
        %1762 = vmatprep.subr.mxu0 0.0
        %1763 = vmatpush1.msra.mxu0 0.0
        %1764 = vmatprep.subr.mxu0 0.0
        %1765 = vmatpush1.msra.mxu0 0.0
        %1766 = vmatprep.subr.mxu0 0.0
        %1767 = vmatpush1.msra.mxu0 0.0
        %1768 = vmatprep.subr.mxu0 0.0
        %1769 = vmatpush1.msra.mxu0 0.0
        %1770 = vmatprep.subr.mxu0 0.0
        %1771 = vmatpush1.msra.mxu0 0.0
        %1772 = vmatprep.subr.mxu0 0.0
        %1773 = vmatpush1.msra.mxu0 0.0
        %1774 = vmatprep.subr.mxu0 0.0
        %1775 = vmatpush1.msra.mxu0 0.0
        %1776 = vmatprep.subr.mxu0 0.0
        %1777 = vmatpush1.msra.mxu0 0.0
        %1778 = vmatprep.subr.mxu0 0.0
        %1779 = vmatpush1.msra.mxu0 0.0
        %1780 = vmatprep.subr.mxu0 0.0
        %1781 = vmatpush1.msra.mxu0 0.0
        %1782 = vmatprep.subr.mxu0 0.0
        %1783 = vmatpush1.msra.mxu0 0.0
        %1784 = vmatprep.subr.mxu0 0.0
        %1785 = vmatpush1.msra.mxu0 0.0
        %1786 = vmatprep.subr.mxu0 0.0
        %1787 = vmatpush1.msra.mxu0 0.0
        %1788 = vmatprep.subr.mxu0 0.0
        %1789 = vmatpush1.msra.mxu0 0.0
        %1790 = vmatprep.mubr.f32.mxu0 0.0
        %1791 = vmatmul.mubr.f32.gmra.mrb[0].mxu0 %v1512
        %v1792 = vpop.f32.mrb[0].mxu0
        %v1793 = vadd.f32 %v1651, %v1792
        %v1794 = vpop.f32.mrb[0].mxu0
        %v1795 = vadd.f32 %v1653, %v1794
        %1796 = vdwg.mxu0
        %v1798 = vlaneseq
        %v1799 = vshrl.u32 %v1798, 7
        %v1800 = vsub.s32 0, %v1799
        %v1801 = vrot.slane %v1063, %v1800
        %v1802 = vlaneseq
        %v1803 = vshrl.u32 %v1802, 7
        %v1804 = vsub.s32 1, %v1803
        %v1805 = vrot.slane %v1063, %v1804
        %v1806 = vlaneseq
        %v1807 = vshrl.u32 %v1806, 7
        %v1808 = vsub.s32 2, %v1807
        %v1809 = vrot.slane %v1063, %v1808
        %v1810 = vlaneseq
        %v1811 = vshrl.u32 %v1810, 7
        %v1812 = vsub.s32 3, %v1811
        %v1813 = vrot.slane %v1063, %v1812
        %v1818 = vadd.f32 %v1722, %v1801
        %v1819 = vadd.f32 %v1724, %v1805
        %v1820 = vadd.f32 %v1793, %v1809
        %v1821 = vadd.f32 %v1795, %v1813
        %v1822 = vxor.u32 %v1818, 2147483648
        %v1823 = vmul.f32 %v1822, 1.442695
        %v1824 = vpow.pop %v1823
        %v1825 = vadd.f32 %v1824, 1.0
        %v1826 = vrcp.pop %v1825
        %v1827 = vmul.f32 1.0, %v1826
        %v1828 = vxor.u32 %v1819, 2147483648
        %v1829 = vmul.f32 %v1828, 1.442695
        %v1830 = vpow.pop %v1829
        %v1831 = vadd.f32 %v1830, 1.0
        %v1832 = vrcp.pop %v1831
        %v1833 = vmul.f32 1.0, %v1832
        %v1834 = vtanh.pop %v1820
        %v1835 = vxor.u32 %v1821, 2147483648
        %v1836 = vmul.f32 %v1835, 1.442695
        %v1837 = vpow.pop %v1836
        %v1838 = vadd.f32 %v1837, 1.0
        %v1839 = vrcp.pop %v1838
        %v1840 = vmul.f32 1.0, %v1839
        %v1841 = vmul.f32 %v1833, %v1069
        %v1842 = vmul.f32 %v1827, %v1834
        %v1843 = vadd.f32 %v1841, %v1842
        %v1844 = vtanh.pop %v1843
        %v1845 = vmul.f32 %v1840, %v1844
        %1846 = vset.pattern.permute.xlu0 1
        %1847 = vperm.xlu0 %1846, %v771
        %v1848 = vpop.permute.xlu0 %1847
        %vm1849 = vcmp.eq.s32.totalorder %v1071, %v1848
        %vm1850 = vcmp.eq.s32.totalorder %v1072, %v1848
        %v1851 = vsel %vm1849, 1, 0
        %v1852 = vsel %vm1850, 1, 0
        %v1853 = vcvt.s32.f32 %v1851
        %v1854 = vcvt.s32.f32 %v1852
        %1855 = vmatprep.subr.mxu0 0.0
        %1856 = vmatpush1.msra.mxu0 %v772
        %1857 = vmatprep.subr.mxu0 0.0
        %1858 = vmatpush1.msra.mxu0 %v773
        %1859 = vmatprep.subr.mxu0 0.0
        %1860 = vmatpush1.msra.mxu0 %v774
        %1861 = vmatprep.subr.mxu0 0.0
        %1862 = vmatpush1.msra.mxu0 %v775
        %1863 = vmatprep.subr.mxu0 0.0
        %1864 = vmatpush1.msra.mxu0 %v776
        %1865 = vmatprep.subr.mxu0 0.0
        %1866 = vmatpush1.msra.mxu0 %v777
        %1867 = vmatprep.subr.mxu0 0.0
        %1868 = vmatpush1.msra.mxu0 %v778
        %1869 = vmatprep.subr.mxu0 0.0
        %1870 = vmatpush1.msra.mxu0 %v779
        %1871 = vmatprep.subr.mxu0 0.0
        %1872 = vmatpush1.msra.mxu0 %v780
        %1873 = vmatprep.subr.mxu0 0.0
        %1874 = vmatpush1.msra.mxu0 %v781
        %1875 = vmatprep.subr.mxu0 0.0
        %1876 = vmatpush1.msra.mxu0 %v782
        %1877 = vmatprep.subr.mxu0 0.0
        %1878 = vmatpush1.msra.mxu0 %v783
        %1879 = vmatprep.subr.mxu0 0.0
        %1880 = vmatpush1.msra.mxu0 %v784
        %1881 = vmatprep.subr.mxu0 0.0
        %1882 = vmatpush1.msra.mxu0 %v785
        %1883 = vmatprep.subr.mxu0 0.0
        %1884 = vmatpush1.msra.mxu0 %v786
        %1885 = vmatprep.subr.mxu0 0.0
        %1886 = vmatpush1.msra.mxu0 %v787
        %1887 = vmatprep.subr.mxu0 0.0
        %1888 = vmatpush1.msra.mxu0 %v788
        %1889 = vmatprep.subr.mxu0 0.0
        %1890 = vmatpush1.msra.mxu0 %v789
        %1891 = vmatprep.subr.mxu0 0.0
        %1892 = vmatpush1.msra.mxu0 %v790
        %1893 = vmatprep.subr.mxu0 0.0
        %1894 = vmatpush1.msra.mxu0 %v791
        %1895 = vmatprep.subr.mxu0 0.0
        %1896 = vmatpush1.msra.mxu0 %v792
        %1897 = vmatprep.subr.mxu0 0.0
        %1898 = vmatpush1.msra.mxu0 %v793
        %1899 = vmatprep.subr.mxu0 0.0
        %1900 = vmatpush1.msra.mxu0 %v794
        %1901 = vmatprep.subr.mxu0 0.0
        %1902 = vmatpush1.msra.mxu0 %v795
        %1903 = vmatprep.subr.mxu0 0.0
        %1904 = vmatpush1.msra.mxu0 %v796
        %1905 = vmatprep.subr.mxu0 0.0
        %1906 = vmatpush1.msra.mxu0 %v797
        %1907 = vmatprep.subr.mxu0 0.0
        %1908 = vmatpush1.msra.mxu0 %v798
        %1909 = vmatprep.subr.mxu0 0.0
        %1910 = vmatpush1.msra.mxu0 %v799
        %1911 = vmatprep.subr.mxu0 0.0
        %1912 = vmatpush1.msra.mxu0 %v800
        %1913 = vmatprep.subr.mxu0 0.0
        %1914 = vmatpush1.msra.mxu0 %v801
        %1915 = vmatprep.subr.mxu0 0.0
        %1916 = vmatpush1.msra.mxu0 %v802
        %1917 = vmatprep.subr.mxu0 0.0
        %1918 = vmatpush1.msra.mxu0 %v803
        %1919 = vmatprep.mubr.f32.mxu0 %v1854
        %1920 = vmatmul.mubr.f32.gmra.mrb[0].mxu0 %v1853
        %v1921 = vpop.f32.mrb[0].mxu0
        %v1922 = vadd.f32 0.0, %v1921
        %v1923 = vpop.f32.mrb[0].mxu0
        %1924 = vdwg.mxu0
        %1925 = vadd.xlane.f32.xlu0 %v1922
        %v1926 = vpop.xlane.xlu0 %1925
        %v1927 = vmul.f32 %v1926, %v1154
        %v1928 = vmul.f32 %v1922, %v1922
        %1929 = vadd.xlane.f32.xlu0 %v1928
        %v1930 = vpop.xlane.xlu0 %1929
        %v1931 = vmul.f32 %v1930, %v1154
        %v1932 = vmul.f32 %v1927, %v1927
        %v1933 = vsub.f32 %v1931, %v1932
        %v1934 = vsub.f32 %v1922, %v1927
        %v1935 = vadd.f32 %v1933, 1e-05
        %v1936 = vrsqrt.pop %v1935
        %v1937 = vmul.f32 %v1934, %v1936
        %v1938 = vmul.f32 %v1937, %v1170
        %v1939 = vadd.f32 %v1938, %v1177
        %1940 = vmatprep.subr.mxu0 %v935
        %1941 = vmatpush1.msra.mxu0 %v934
        %1942 = vmatprep.subr.mxu0 %v939
        %1943 = vmatpush1.msra.mxu0 %v938
        %1944 = vmatprep.subr.mxu0 %v943
        %1945 = vmatpush1.msra.mxu0 %v942
        %1946 = vmatprep.subr.mxu0 %v947
        %1947 = vmatpush1.msra.mxu0 %v946
        %1948 = vmatprep.subr.mxu0 %v951
        %1949 = vmatpush1.msra.mxu0 %v950
        %1950 = vmatprep.subr.mxu0 %v955
        %1951 = vmatpush1.msra.mxu0 %v954
        %1952 = vmatprep.subr.mxu0 %v959
        %1953 = vmatpush1.msra.mxu0 %v958
        %1954 = vmatprep.subr.mxu0 %v963
        %1955 = vmatpush1.msra.mxu0 %v962
        %1956 = vmatprep.subr.mxu0 %v967
        %1957 = vmatpush1.msra.mxu0 %v966
        %1958 = vmatprep.subr.mxu0 %v971
        %1959 = vmatpush1.msra.mxu0 %v970
        %1960 = vmatprep.subr.mxu0 %v975
        %1961 = vmatpush1.msra.mxu0 %v974
        %1962 = vmatprep.subr.mxu0 %v979
        %1963 = vmatpush1.msra.mxu0 %v978
        %1964 = vmatprep.subr.mxu0 %v983
        %1965 = vmatpush1.msra.mxu0 %v982
        %1966 = vmatprep.subr.mxu0 %v987
        %1967 = vmatpush1.msra.mxu0 %v986
        %1968 = vmatprep.subr.mxu0 %v991
        %1969 = vmatpush1.msra.mxu0 %v990
        %1970 = vmatprep.subr.mxu0 %v995
        %1971 = vmatpush1.msra.mxu0 %v994
        %1972 = vmatprep.subr.mxu0 0.0
        %1973 = vmatpush1.msra.mxu0 0.0
        %1974 = vmatprep.subr.mxu0 0.0
        %1975 = vmatpush1.msra.mxu0 0.0
        %1976 = vmatprep.subr.mxu0 0.0
        %1977 = vmatpush1.msra.mxu0 0.0
        %1978 = vmatprep.subr.mxu0 0.0
        %1979 = vmatpush1.msra.mxu0 0.0
        %1980 = vmatprep.subr.mxu0 0.0
        %1981 = vmatpush1.msra.mxu0 0.0
        %1982 = vmatprep.subr.mxu0 0.0
        %1983 = vmatpush1.msra.mxu0 0.0
        %1984 = vmatprep.subr.mxu0 0.0
        %1985 = vmatpush1.msra.mxu0 0.0
        %1986 = vmatprep.subr.mxu0 0.0
        %1987 = vmatpush1.msra.mxu0 0.0
        %1988 = vmatprep.subr.mxu0 0.0
        %1989 = vmatpush1.msra.mxu0 0.0
        %1990 = vmatprep.subr.mxu0 0.0
        %1991 = vmatpush1.msra.mxu0 0.0
        %1992 = vmatprep.subr.mxu0 0.0
        %1993 = vmatpush1.msra.mxu0 0.0
        %1994 = vmatprep.subr.mxu0 0.0
        %1995 = vmatpush1.msra.mxu0 0.0
        %1996 = vmatprep.subr.mxu0 0.0
        %1997 = vmatpush1.msra.mxu0 0.0
        %1998 = vmatprep.subr.mxu0 0.0
        %1999 = vmatpush1.msra.mxu0 0.0
        %2000 = vmatprep.subr.mxu0 0.0
        %2001 = vmatpush1.msra.mxu0 0.0
        %2002 = vmatprep.subr.mxu0 0.0
        %2003 = vmatpush1.msra.mxu0 0.0
        %2004 = vmatprep.mubr.f32.mxu0 0.0
        %2005 = vmatmul.mubr.f32.gmra.mrb[0].mxu0 %v1512
        %v2006 = vpop.f32.mrb[0].mxu0
        %v2007 = vadd.f32 0.0, %v2006
        %v2008 = vpop.f32.mrb[0].mxu0
        %v2009 = vadd.f32 0.0, %v2008
        %2010 = vdwg.mxu0
        %2011 = vmatprep.subr.mxu0 %v937
        %2012 = vmatpush1.msra.mxu0 %v936
        %2013 = vmatprep.subr.mxu0 %v941
        %2014 = vmatpush1.msra.mxu0 %v940
        %2015 = vmatprep.subr.mxu0 %v945
        %2016 = vmatpush1.msra.mxu0 %v944
        %2017 = vmatprep.subr.mxu0 %v949
        %2018 = vmatpush1.msra.mxu0 %v948
        %2019 = vmatprep.subr.mxu0 %v953
        %2020 = vmatpush1.msra.mxu0 %v952
        %2021 = vmatprep.subr.mxu0 %v957
        %2022 = vmatpush1.msra.mxu0 %v956
        %2023 = vmatprep.subr.mxu0 %v961
        %2024 = vmatpush1.msra.mxu0 %v960
        %2025 = vmatprep.subr.mxu0 %v965
        %2026 = vmatpush1.msra.mxu0 %v964
        %2027 = vmatprep.subr.mxu0 %v969
        %2028 = vmatpush1.msra.mxu0 %v968
        %2029 = vmatprep.subr.mxu0 %v973
        %2030 = vmatpush1.msra.mxu0 %v972
        %2031 = vmatprep.subr.mxu0 %v977
        %2032 = vmatpush1.msra.mxu0 %v976
        %2033 = vmatprep.subr.mxu0 %v981
        %2034 = vmatpush1.msra.mxu0 %v980
        %2035 = vmatprep.subr.mxu0 %v985
        %2036 = vmatpush1.msra.mxu0 %v984
        %2037 = vmatprep.subr.mxu0 %v989
        %2038 = vmatpush1.msra.mxu0 %v988
        %2039 = vmatprep.subr.mxu0 %v993
        %2040 = vmatpush1.msra.mxu0 %v992
        %2041 = vmatprep.subr.mxu0 %v997
        %2042 = vmatpush1.msra.mxu0 %v996
        %2043 = vmatprep.subr.mxu0 0.0
        %2044 = vmatpush1.msra.mxu0 0.0
        %2045 = vmatprep.subr.mxu0 0.0
        %2046 = vmatpush1.msra.mxu0 0.0
        %2047 = vmatprep.subr.mxu0 0.0
        %2048 = vmatpush1.msra.mxu0 0.0
        %2049 = vmatprep.subr.mxu0 0.0
        %2050 = vmatpush1.msra.mxu0 0.0
        %2051 = vmatprep.subr.mxu0 0.0
        %2052 = vmatpush1.msra.mxu0 0.0
        %2053 = vmatprep.subr.mxu0 0.0
        %2054 = vmatpush1.msra.mxu0 0.0
        %2055 = vmatprep.subr.mxu0 0.0
        %2056 = vmatpush1.msra.mxu0 0.0
        %2057 = vmatprep.subr.mxu0 0.0
        %2058 = vmatpush1.msra.mxu0 0.0
        %2059 = vmatprep.subr.mxu0 0.0
        %2060 = vmatpush1.msra.mxu0 0.0
        %2061 = vmatprep.subr.mxu0 0.0
        %2062 = vmatpush1.msra.mxu0 0.0
        %2063 = vmatprep.subr.mxu0 0.0
        %2064 = vmatpush1.msra.mxu0 0.0
        %2065 = vmatprep.subr.mxu0 0.0
        %2066 = vmatpush1.msra.mxu0 0.0
        %2067 = vmatprep.subr.mxu0 0.0
        %2068 = vmatpush1.msra.mxu0 0.0
        %2069 = vmatprep.subr.mxu0 0.0
        %2070 = vmatpush1.msra.mxu0 0.0
        %2071 = vmatprep.subr.mxu0 0.0
        %2072 = vmatpush1.msra.mxu0 0.0
        %2073 = vmatprep.subr.mxu0 0.0
        %2074 = vmatpush1.msra.mxu0 0.0
        %2075 = vmatprep.mubr.f32.mxu0 0.0
        %2076 = vmatmul.mubr.f32.gmra.mrb[0].mxu0 %v1512
        %v2077 = vpop.f32.mrb[0].mxu0
        %v2078 = vadd.f32 0.0, %v2077
        %v2079 = vpop.f32.mrb[0].mxu0
        %v2080 = vadd.f32 0.0, %v2079
        %2081 = vdwg.mxu0
        %2082 = vmatprep.subr.mxu0 %v807
        %2083 = vmatpush1.msra.mxu0 %v806
        %2084 = vmatprep.subr.mxu0 %v811
        %2085 = vmatpush1.msra.mxu0 %v810
        %2086 = vmatprep.subr.mxu0 %v815
        %2087 = vmatpush1.msra.mxu0 %v814
        %2088 = vmatprep.subr.mxu0 %v819
        %2089 = vmatpush1.msra.mxu0 %v818
        %2090 = vmatprep.subr.mxu0 %v823
        %2091 = vmatpush1.msra.mxu0 %v822
        %2092 = vmatprep.subr.mxu0 %v827
        %2093 = vmatpush1.msra.mxu0 %v826
        %2094 = vmatprep.subr.mxu0 %v831
        %2095 = vmatpush1.msra.mxu0 %v830
        %2096 = vmatprep.subr.mxu0 %v835
        %2097 = vmatpush1.msra.mxu0 %v834
        %2098 = vmatprep.subr.mxu0 %v839
        %2099 = vmatpush1.msra.mxu0 %v838
        %2100 = vmatprep.subr.mxu0 %v843
        %2101 = vmatpush1.msra.mxu0 %v842
        %2102 = vmatprep.subr.mxu0 %v847
        %2103 = vmatpush1.msra.mxu0 %v846
        %2104 = vmatprep.subr.mxu0 %v851
        %2105 = vmatpush1.msra.mxu0 %v850
        %2106 = vmatprep.subr.mxu0 %v855
        %2107 = vmatpush1.msra.mxu0 %v854
        %2108 = vmatprep.subr.mxu0 %v859
        %2109 = vmatpush1.msra.mxu0 %v858
        %2110 = vmatprep.subr.mxu0 %v863
        %2111 = vmatpush1.msra.mxu0 %v862
        %2112 = vmatprep.subr.mxu0 %v867
        %2113 = vmatpush1.msra.mxu0 %v866
        %2114 = vmatprep.subr.mxu0 0.0
        %2115 = vmatpush1.msra.mxu0 0.0
        %2116 = vmatprep.subr.mxu0 0.0
        %2117 = vmatpush1.msra.mxu0 0.0
        %2118 = vmatprep.subr.mxu0 0.0
        %2119 = vmatpush1.msra.mxu0 0.0
        %2120 = vmatprep.subr.mxu0 0.0
        %2121 = vmatpush1.msra.mxu0 0.0
        %2122 = vmatprep.subr.mxu0 0.0
        %2123 = vmatpush1.msra.mxu0 0.0
        %2124 = vmatprep.subr.mxu0 0.0
        %2125 = vmatpush1.msra.mxu0 0.0
        %2126 = vmatprep.subr.mxu0 0.0
        %2127 = vmatpush1.msra.mxu0 0.0
        %2128 = vmatprep.subr.mxu0 0.0
        %2129 = vmatpush1.msra.mxu0 0.0
        %2130 = vmatprep.subr.mxu0 0.0
        %2131 = vmatpush1.msra.mxu0 0.0
        %2132 = vmatprep.subr.mxu0 0.0
        %2133 = vmatpush1.msra.mxu0 0.0
        %2134 = vmatprep.subr.mxu0 0.0
        %2135 = vmatpush1.msra.mxu0 0.0
        %2136 = vmatprep.subr.mxu0 0.0
        %2137 = vmatpush1.msra.mxu0 0.0
        %2138 = vmatprep.subr.mxu0 0.0
        %2139 = vmatpush1.msra.mxu0 0.0
        %2140 = vmatprep.subr.mxu0 0.0
        %2141 = vmatpush1.msra.mxu0 0.0
        %2142 = vmatprep.subr.mxu0 0.0
        %2143 = vmatpush1.msra.mxu0 0.0
        %2144 = vmatprep.subr.mxu0 0.0
        %2145 = vmatpush1.msra.mxu0 0.0
        %2146 = vmatprep.mubr.f32.mxu0 0.0
        %2147 = vmatmul.mubr.f32.gmra.mrb[0].mxu0 %v1939
        %v2148 = vpop.f32.mrb[0].mxu0
        %v2149 = vadd.f32 %v2007, %v2148
        %v2150 = vpop.f32.mrb[0].mxu0
        %v2151 = vadd.f32 %v2009, %v2150
        %2152 = vdwg.mxu0
        %2153 = vmatprep.subr.mxu0 %v809
        %2154 = vmatpush1.msra.mxu0 %v808
        %2155 = vmatprep.subr.mxu0 %v813
        %2156 = vmatpush1.msra.mxu0 %v812
        %2157 = vmatprep.subr.mxu0 %v817
        %2158 = vmatpush1.msra.mxu0 %v816
        %2159 = vmatprep.subr.mxu0 %v821
        %2160 = vmatpush1.msra.mxu0 %v820
        %2161 = vmatprep.subr.mxu0 %v825
        %2162 = vmatpush1.msra.mxu0 %v824
        %2163 = vmatprep.subr.mxu0 %v829
        %2164 = vmatpush1.msra.mxu0 %v828
        %2165 = vmatprep.subr.mxu0 %v833
        %2166 = vmatpush1.msra.mxu0 %v832
        %2167 = vmatprep.subr.mxu0 %v837
        %2168 = vmatpush1.msra.mxu0 %v836
        %2169 = vmatprep.subr.mxu0 %v841
        %2170 = vmatpush1.msra.mxu0 %v840
        %2171 = vmatprep.subr.mxu0 %v845
        %2172 = vmatpush1.msra.mxu0 %v844
        %2173 = vmatprep.subr.mxu0 %v849
        %2174 = vmatpush1.msra.mxu0 %v848
        %2175 = vmatprep.subr.mxu0 %v853
        %2176 = vmatpush1.msra.mxu0 %v852
        %2177 = vmatprep.subr.mxu0 %v857
        %2178 = vmatpush1.msra.mxu0 %v856
        %2179 = vmatprep.subr.mxu0 %v861
        %2180 = vmatpush1.msra.mxu0 %v860
        %2181 = vmatprep.subr.mxu0 %v865
        %2182 = vmatpush1.msra.mxu0 %v864
        %2183 = vmatprep.subr.mxu0 %v869
        %2184 = vmatpush1.msra.mxu0 %v868
        %2185 = vmatprep.subr.mxu0 0.0
        %2186 = vmatpush1.msra.mxu0 0.0
        %2187 = vmatprep.subr.mxu0 0.0
        %2188 = vmatpush1.msra.mxu0 0.0
        %2189 = vmatprep.subr.mxu0 0.0
        %2190 = vmatpush1.msra.mxu0 0.0
        %2191 = vmatprep.subr.mxu0 0.0
        %2192 = vmatpush1.msra.mxu0 0.0
        %2193 = vmatprep.subr.mxu0 0.0
        %2194 = vmatpush1.msra.mxu0 0.0
        %2195 = vmatprep.subr.mxu0 0.0
        %2196 = vmatpush1.msra.mxu0 0.0
        %2197 = vmatprep.subr.mxu0 0.0
        %2198 = vmatpush1.msra.mxu0 0.0
        %2199 = vmatprep.subr.mxu0 0.0
        %2200 = vmatpush1.msra.mxu0 0.0
        %2201 = vmatprep.subr.mxu0 0.0
        %2202 = vmatpush1.msra.mxu0 0.0
        %2203 = vmatprep.subr.mxu0 0.0
        %2204 = vmatpush1.msra.mxu0 0.0
        %2205 = vmatprep.subr.mxu0 0.0
        %2206 = vmatpush1.msra.mxu0 0.0
        %2207 = vmatprep.subr.mxu0 0.0
        %2208 = vmatpush1.msra.mxu0 0.0
        %2209 = vmatprep.subr.mxu0 0.0
        %2210 = vmatpush1.msra.mxu0 0.0
        %2211 = vmatprep.subr.mxu0 0.0
        %2212 = vmatpush1.msra.mxu0 0.0
        %2213 = vmatprep.subr.mxu0 0.0
        %2214 = vmatpush1.msra.mxu0 0.0
        %2215 = vmatprep.subr.mxu0 0.0
        %2216 = vmatpush1.msra.mxu0 0.0
        %2217 = vmatprep.mubr.f32.mxu0 0.0
        %2218 = vmatmul.mubr.f32.gmra.mrb[0].mxu0 %v1939
        %v2219 = vpop.f32.mrb[0].mxu0
        %v2220 = vadd.f32 %v2078, %v2219
        %v2221 = vpop.f32.mrb[0].mxu0
        %v2222 = vadd.f32 %v2080, %v2221
        %2223 = vdwg.mxu0
        %v2224 = vadd.f32 %v2149, %v1468
        %v2225 = vadd.f32 %v2151, %v1472
        %v2226 = vadd.f32 %v2220, %v1476
        %v2227 = vadd.f32 %v2222, %v1480
        %v2228 = vxor.u32 %v2224, 2147483648
        %v2229 = vmul.f32 %v2228, 1.442695
        %v2230 = vpow.pop %v2229
        %v2231 = vadd.f32 %v2230, 1.0
        %v2232 = vrcp.pop %v2231
        %v2233 = vmul.f32 1.0, %v2232
        %v2234 = vxor.u32 %v2225, 2147483648
        %v2235 = vmul.f32 %v2234, 1.442695
        %v2236 = vpow.pop %v2235
        %v2237 = vadd.f32 %v2236, 1.0
        %v2238 = vrcp.pop %v2237
        %v2239 = vmul.f32 1.0, %v2238
        %v2240 = vtanh.pop %v2226
        %v2241 = vxor.u32 %v2227, 2147483648
        %v2242 = vmul.f32 %v2241, 1.442695
        %v2243 = vpow.pop %v2242
        %v2244 = vadd.f32 %v2243, 1.0
        %v2245 = vrcp.pop %v2244
        %v2246 = vmul.f32 1.0, %v2245
        %v2247 = vmul.f32 %v2239, %v1510
        %v2248 = vmul.f32 %v2233, %v2240
        %v2249 = vadd.f32 %v2247, %v2248
        %v2250 = vtanh.pop %v2249
        %v2251 = vmul.f32 %v2246, %v2250
        %2252 = vmatprep.subr.mxu0 %v999
        %2253 = vmatpush1.msra.mxu0 %v998
        %2254 = vmatprep.subr.mxu0 %v1003
        %2255 = vmatpush1.msra.mxu0 %v1002
        %2256 = vmatprep.subr.mxu0 %v1007
        %2257 = vmatpush1.msra.mxu0 %v1006
        %2258 = vmatprep.subr.mxu0 %v1011
        %2259 = vmatpush1.msra.mxu0 %v1010
        %2260 = vmatprep.subr.mxu0 %v1015
        %2261 = vmatpush1.msra.mxu0 %v1014
        %2262 = vmatprep.subr.mxu0 %v1019
        %2263 = vmatpush1.msra.mxu0 %v1018
        %2264 = vmatprep.subr.mxu0 %v1023
        %2265 = vmatpush1.msra.mxu0 %v1022
        %2266 = vmatprep.subr.mxu0 %v1027
        %2267 = vmatpush1.msra.mxu0 %v1026
        %2268 = vmatprep.subr.mxu0 %v1031
        %2269 = vmatpush1.msra.mxu0 %v1030
        %2270 = vmatprep.subr.mxu0 %v1035
        %2271 = vmatpush1.msra.mxu0 %v1034
        %2272 = vmatprep.subr.mxu0 %v1039
        %2273 = vmatpush1.msra.mxu0 %v1038
        %2274 = vmatprep.subr.mxu0 %v1043
        %2275 = vmatpush1.msra.mxu0 %v1042
        %2276 = vmatprep.subr.mxu0 %v1047
        %2277 = vmatpush1.msra.mxu0 %v1046
        %2278 = vmatprep.subr.mxu0 %v1051
        %2279 = vmatpush1.msra.mxu0 %v1050
        %2280 = vmatprep.subr.mxu0 %v1055
        %2281 = vmatpush1.msra.mxu0 %v1054
        %2282 = vmatprep.subr.mxu0 %v1059
        %2283 = vmatpush1.msra.mxu0 %v1058
        %2284 = vmatprep.subr.mxu0 0.0
        %2285 = vmatpush1.msra.mxu0 0.0
        %2286 = vmatprep.subr.mxu0 0.0
        %2287 = vmatpush1.msra.mxu0 0.0
        %2288 = vmatprep.subr.mxu0 0.0
        %2289 = vmatpush1.msra.mxu0 0.0
        %2290 = vmatprep.subr.mxu0 0.0
        %2291 = vmatpush1.msra.mxu0 0.0
        %2292 = vmatprep.subr.mxu0 0.0
        %2293 = vmatpush1.msra.mxu0 0.0
        %2294 = vmatprep.subr.mxu0 0.0
        %2295 = vmatpush1.msra.mxu0 0.0
        %2296 = vmatprep.subr.mxu0 0.0
        %2297 = vmatpush1.msra.mxu0 0.0
        %2298 = vmatprep.subr.mxu0 0.0
        %2299 = vmatpush1.msra.mxu0 0.0
        %2300 = vmatprep.subr.mxu0 0.0
        %2301 = vmatpush1.msra.mxu0 0.0
        %2302 = vmatprep.subr.mxu0 0.0
        %2303 = vmatpush1.msra.mxu0 0.0
        %2304 = vmatprep.subr.mxu0 0.0
        %2305 = vmatpush1.msra.mxu0 0.0
        %2306 = vmatprep.subr.mxu0 0.0
        %2307 = vmatpush1.msra.mxu0 0.0
        %2308 = vmatprep.subr.mxu0 0.0
        %2309 = vmatpush1.msra.mxu0 0.0
        %2310 = vmatprep.subr.mxu0 0.0
        %2311 = vmatpush1.msra.mxu0 0.0
        %2312 = vmatprep.subr.mxu0 0.0
        %2313 = vmatpush1.msra.mxu0 0.0
        %2314 = vmatprep.subr.mxu0 0.0
        %2315 = vmatpush1.msra.mxu0 0.0
        %2316 = vmatprep.mubr.f32.mxu0 0.0
        %2317 = vmatmul.mubr.f32.gmra.mrb[0].mxu0 %v1845
        %v2318 = vpop.f32.mrb[0].mxu0
        %v2319 = vadd.f32 0.0, %v2318
        %v2320 = vpop.f32.mrb[0].mxu0
        %v2321 = vadd.f32 0.0, %v2320
        %2322 = vdwg.mxu0
        %2323 = vmatprep.subr.mxu0 %v1001
        %2324 = vmatpush1.msra.mxu0 %v1000
        %2325 = vmatprep.subr.mxu0 %v1005
        %2326 = vmatpush1.msra.mxu0 %v1004
        %2327 = vmatprep.subr.mxu0 %v1009
        %2328 = vmatpush1.msra.mxu0 %v1008
        %2329 = vmatprep.subr.mxu0 %v1013
        %2330 = vmatpush1.msra.mxu0 %v1012
        %2331 = vmatprep.subr.mxu0 %v1017
        %2332 = vmatpush1.msra.mxu0 %v1016
        %2333 = vmatprep.subr.mxu0 %v1021
        %2334 = vmatpush1.msra.mxu0 %v1020
        %2335 = vmatprep.subr.mxu0 %v1025
        %2336 = vmatpush1.msra.mxu0 %v1024
        %2337 = vmatprep.subr.mxu0 %v1029
        %2338 = vmatpush1.msra.mxu0 %v1028
        %2339 = vmatprep.subr.mxu0 %v1033
        %2340 = vmatpush1.msra.mxu0 %v1032
        %2341 = vmatprep.subr.mxu0 %v1037
        %2342 = vmatpush1.msra.mxu0 %v1036
        %2343 = vmatprep.subr.mxu0 %v1041
        %2344 = vmatpush1.msra.mxu0 %v1040
        %2345 = vmatprep.subr.mxu0 %v1045
        %2346 = vmatpush1.msra.mxu0 %v1044
        %2347 = vmatprep.subr.mxu0 %v1049
        %2348 = vmatpush1.msra.mxu0 %v1048
        %2349 = vmatprep.subr.mxu0 %v1053
        %2350 = vmatpush1.msra.mxu0 %v1052
        %2351 = vmatprep.subr.mxu0 %v1057
        %2352 = vmatpush1.msra.mxu0 %v1056
        %2353 = vmatprep.subr.mxu0 %v1061
        %2354 = vmatpush1.msra.mxu0 %v1060
        %2355 = vmatprep.subr.mxu0 0.0
        %2356 = vmatpush1.msra.mxu0 0.0
        %2357 = vmatprep.subr.mxu0 0.0
        %2358 = vmatpush1.msra.mxu0 0.0
        %2359 = vmatprep.subr.mxu0 0.0
        %2360 = vmatpush1.msra.mxu0 0.0
        %2361 = vmatprep.subr.mxu0 0.0
        %2362 = vmatpush1.msra.mxu0 0.0
        %2363 = vmatprep.subr.mxu0 0.0
        %2364 = vmatpush1.msra.mxu0 0.0
        %2365 = vmatprep.subr.mxu0 0.0
        %2366 = vmatpush1.msra.mxu0 0.0
        %2367 = vmatprep.subr.mxu0 0.0
        %2368 = vmatpush1.msra.mxu0 0.0
        %2369 = vmatprep.subr.mxu0 0.0
        %2370 = vmatpush1.msra.mxu0 0.0
        %2371 = vmatprep.subr.mxu0 0.0
        %2372 = vmatpush1.msra.mxu0 0.0
        %2373 = vmatprep.subr.mxu0 0.0
        %2374 = vmatpush1.msra.mxu0 0.0
        %2375 = vmatprep.subr.mxu0 0.0
        %2376 = vmatpush1.msra.mxu0 0.0
        %2377 = vmatprep.subr.mxu0 0.0
        %2378 = vmatpush1.msra.mxu0 0.0
        %2379 = vmatprep.subr.mxu0 0.0
        %2380 = vmatpush1.msra.mxu0 0.0
        %2381 = vmatprep.subr.mxu0 0.0
        %2382 = vmatpush1.msra.mxu0 0.0
        %2383 = vmatprep.subr.mxu0 0.0
        %2384 = vmatpush1.msra.mxu0 0.0
        %2385 = vmatprep.subr.mxu0 0.0
        %2386 = vmatpush1.msra.mxu0 0.0
        %2387 = vmatprep.mubr.f32.mxu0 0.0
        %2388 = vmatmul.mubr.f32.gmra.mrb[0].mxu0 %v1845
        %v2389 = vpop.f32.mrb[0].mxu0
        %v2390 = vadd.f32 0.0, %v2389
        %v2391 = vpop.f32.mrb[0].mxu0
        %v2392 = vadd.f32 0.0, %v2391
        %2393 = vdwg.mxu0
        %2394 = vmatprep.subr.mxu0 %v871
        %2395 = vmatpush1.msra.mxu0 %v870
        %2396 = vmatprep.subr.mxu0 %v875
        %2397 = vmatpush1.msra.mxu0 %v874
        %2398 = vmatprep.subr.mxu0 %v879
        %2399 = vmatpush1.msra.mxu0 %v878
        %2400 = vmatprep.subr.mxu0 %v883
        %2401 = vmatpush1.msra.mxu0 %v882
        %2402 = vmatprep.subr.mxu0 %v887
        %2403 = vmatpush1.msra.mxu0 %v886
        %2404 = vmatprep.subr.mxu0 %v891
        %2405 = vmatpush1.msra.mxu0 %v890
        %2406 = vmatprep.subr.mxu0 %v895
        %2407 = vmatpush1.msra.mxu0 %v894
        %2408 = vmatprep.subr.mxu0 %v899
        %2409 = vmatpush1.msra.mxu0 %v898
        %2410 = vmatprep.subr.mxu0 %v903
        %2411 = vmatpush1.msra.mxu0 %v902
        %2412 = vmatprep.subr.mxu0 %v907
        %2413 = vmatpush1.msra.mxu0 %v906
        %2414 = vmatprep.subr.mxu0 %v911
        %2415 = vmatpush1.msra.mxu0 %v910
        %2416 = vmatprep.subr.mxu0 %v915
        %2417 = vmatpush1.msra.mxu0 %v914
        %2418 = vmatprep.subr.mxu0 %v919
        %2419 = vmatpush1.msra.mxu0 %v918
        %2420 = vmatprep.subr.mxu0 %v923
        %2421 = vmatpush1.msra.mxu0 %v922
        %2422 = vmatprep.subr.mxu0 %v927
        %2423 = vmatpush1.msra.mxu0 %v926
        %2424 = vmatprep.subr.mxu0 %v931
        %2425 = vmatpush1.msra.mxu0 %v930
        %2426 = vmatprep.subr.mxu0 0.0
        %2427 = vmatpush1.msra.mxu0 0.0
        %2428 = vmatprep.subr.mxu0 0.0
        %2429 = vmatpush1.msra.mxu0 0.0
        %2430 = vmatprep.subr.mxu0 0.0
        %2431 = vmatpush1.msra.mxu0 0.0
        %2432 = vmatprep.subr.mxu0 0.0
        %2433 = vmatpush1.msra.mxu0 0.0
        %2434 = vmatprep.subr.mxu0 0.0
        %2435 = vmatpush1.msra.mxu0 0.0
        %2436 = vmatprep.subr.mxu0 0.0
        %2437 = vmatpush1.msra.mxu0 0.0
        %2438 = vmatprep.subr.mxu0 0.0
        %2439 = vmatpush1.msra.mxu0 0.0
        %2440 = vmatprep.subr.mxu0 0.0
        %2441 = vmatpush1.msra.mxu0 0.0
        %2442 = vmatprep.subr.mxu0 0.0
        %2443 = vmatpush1.msra.mxu0 0.0
        %2444 = vmatprep.subr.mxu0 0.0
        %2445 = vmatpush1.msra.mxu0 0.0
        %2446 = vmatprep.subr.mxu0 0.0
        %2447 = vmatpush1.msra.mxu0 0.0
        %2448 = vmatprep.subr.mxu0 0.0
        %2449 = vmatpush1.msra.mxu0 0.0
        %2450 = vmatprep.subr.mxu0 0.0
        %2451 = vmatpush1.msra.mxu0 0.0
        %2452 = vmatprep.subr.mxu0 0.0
        %2453 = vmatpush1.msra.mxu0 0.0
        %2454 = vmatprep.subr.mxu0 0.0
        %2455 = vmatpush1.msra.mxu0 0.0
        %2456 = vmatprep.subr.mxu0 0.0
        %2457 = vmatpush1.msra.mxu0 0.0
        %2458 = vmatprep.mubr.f32.mxu0 0.0
        %2459 = vmatmul.mubr.f32.gmra.mrb[0].mxu0 %v2251
        %v2460 = vpop.f32.mrb[0].mxu0
        %v2461 = vadd.f32 %v2319, %v2460
        %v2462 = vpop.f32.mrb[0].mxu0
        %v2463 = vadd.f32 %v2321, %v2462
        %2464 = vdwg.mxu0
        %2465 = vmatprep.subr.mxu0 %v873
        %2466 = vmatpush1.msra.mxu0 %v872
        %2467 = vmatprep.subr.mxu0 %v877
        %2468 = vmatpush1.msra.mxu0 %v876
        %2469 = vmatprep.subr.mxu0 %v881
        %2470 = vmatpush1.msra.mxu0 %v880
        %2471 = vmatprep.subr.mxu0 %v885
        %2472 = vmatpush1.msra.mxu0 %v884
        %2473 = vmatprep.subr.mxu0 %v889
        %2474 = vmatpush1.msra.mxu0 %v888
        %2475 = vmatprep.subr.mxu0 %v893
        %2476 = vmatpush1.msra.mxu0 %v892
        %2477 = vmatprep.subr.mxu0 %v897
        %2478 = vmatpush1.msra.mxu0 %v896
        %2479 = vmatprep.subr.mxu0 %v901
        %2480 = vmatpush1.msra.mxu0 %v900
        %2481 = vmatprep.subr.mxu0 %v905
        %2482 = vmatpush1.msra.mxu0 %v904
        %2483 = vmatprep.subr.mxu0 %v909
        %2484 = vmatpush1.msra.mxu0 %v908
        %2485 = vmatprep.subr.mxu0 %v913
        %2486 = vmatpush1.msra.mxu0 %v912
        %2487 = vmatprep.subr.mxu0 %v917
        %2488 = vmatpush1.msra.mxu0 %v916
        %2489 = vmatprep.subr.mxu0 %v921
        %2490 = vmatpush1.msra.mxu0 %v920
        %2491 = vmatprep.subr.mxu0 %v925
        %2492 = vmatpush1.msra.mxu0 %v924
        %2493 = vmatprep.subr.mxu0 %v929
        %2494 = vmatpush1.msra.mxu0 %v928
        %2495 = vmatprep.subr.mxu0 %v933
        %2496 = vmatpush1.msra.mxu0 %v932
        %2497 = vmatprep.subr.mxu0 0.0
        %2498 = vmatpush1.msra.mxu0 0.0
        %2499 = vmatprep.subr.mxu0 0.0
        %2500 = vmatpush1.msra.mxu0 0.0
        %2501 = vmatprep.subr.mxu0 0.0
        %2502 = vmatpush1.msra.mxu0 0.0
        %2503 = vmatprep.subr.mxu0 0.0
        %2504 = vmatpush1.msra.mxu0 0.0
        %2505 = vmatprep.subr.mxu0 0.0
        %2506 = vmatpush1.msra.mxu0 0.0
        %2507 = vmatprep.subr.mxu0 0.0
        %2508 = vmatpush1.msra.mxu0 0.0
        %2509 = vmatprep.subr.mxu0 0.0
        %2510 = vmatpush1.msra.mxu0 0.0
        %2511 = vmatprep.subr.mxu0 0.0
        %2512 = vmatpush1.msra.mxu0 0.0
        %2513 = vmatprep.subr.mxu0 0.0
        %2514 = vmatpush1.msra.mxu0 0.0
        %2515 = vmatprep.subr.mxu0 0.0
        %2516 = vmatpush1.msra.mxu0 0.0
        %2517 = vmatprep.subr.mxu0 0.0
        %2518 = vmatpush1.msra.mxu0 0.0
        %2519 = vmatprep.subr.mxu0 0.0
        %2520 = vmatpush1.msra.mxu0 0.0
        %2521 = vmatprep.subr.mxu0 0.0
        %2522 = vmatpush1.msra.mxu0 0.0
        %2523 = vmatprep.subr.mxu0 0.0
        %2524 = vmatpush1.msra.mxu0 0.0
        %2525 = vmatprep.subr.mxu0 0.0
        %2526 = vmatpush1.msra.mxu0 0.0
        %2527 = vmatprep.subr.mxu0 0.0
        %2528 = vmatpush1.msra.mxu0 0.0
        %2529 = vmatprep.mubr.f32.mxu0 0.0
        %2530 = vmatmul.mubr.f32.gmra.mrb[0].mxu0 %v2251
        %v2531 = vpop.f32.mrb[0].mxu0
        %v2532 = vadd.f32 %v2390, %v2531
        %v2533 = vpop.f32.mrb[0].mxu0
        %v2534 = vadd.f32 %v2392, %v2533
        %2535 = vdwg.mxu0
        %v2536 = vadd.f32 %v2461, %v1801
        %v2537 = vadd.f32 %v2463, %v1805
        %v2538 = vadd.f32 %v2532, %v1809
        %v2539 = vadd.f32 %v2534, %v1813
        %v2540 = vxor.u32 %v2536, 2147483648
        %v2541 = vmul.f32 %v2540, 1.442695
        %v2542 = vpow.pop %v2541
        %v2543 = vadd.f32 %v2542, 1.0
        %v2544 = vrcp.pop %v2543
        %v2545 = vmul.f32 1.0, %v2544
        %v2546 = vxor.u32 %v2537, 2147483648
        %v2547 = vmul.f32 %v2546, 1.442695
        %v2548 = vpow.pop %v2547
        %v2549 = vadd.f32 %v2548, 1.0
        %v2550 = vrcp.pop %v2549
        %v2551 = vmul.f32 1.0, %v2550
        %v2552 = vtanh.pop %v2538
        %v2553 = vxor.u32 %v2539, 2147483648
        %v2554 = vmul.f32 %v2553, 1.442695
        %v2555 = vpow.pop %v2554
        %v2556 = vadd.f32 %v2555, 1.0
        %v2557 = vrcp.pop %v2556
        %v2558 = vmul.f32 1.0, %v2557
        %v2559 = vmul.f32 %v2551, %v1843
        %v2560 = vmul.f32 %v2545, %v2552
        %v2561 = vadd.f32 %v2559, %v2560
        %v2562 = vtanh.pop %v2561
        %v2563 = vmul.f32 %v2558, %v2562
        %2564 = vset.pattern.permute.xlu0 2
        %2565 = vperm.xlu0 %2564, %v771
        %v2566 = vpop.permute.xlu0 %2565
        %vm2567 = vcmp.eq.s32.totalorder %v1071, %v2566
        %vm2568 = vcmp.eq.s32.totalorder %v1072, %v2566
        %v2569 = vsel %vm2567, 1, 0
        %v2570 = vsel %vm2568, 1, 0
        %v2571 = vcvt.s32.f32 %v2569
        %v2572 = vcvt.s32.f32 %v2570
        %2573 = vmatprep.subr.mxu0 0.0
        %2574 = vmatpush1.msra.mxu0 %v772
        %2575 = vmatprep.subr.mxu0 0.0
        %2576 = vmatpush1.msra.mxu0 %v773
        %2577 = vmatprep.subr.mxu0 0.0
        %2578 = vmatpush1.msra.mxu0 %v774
        %2579 = vmatprep.subr.mxu0 0.0
        %2580 = vmatpush1.msra.mxu0 %v775
        %2581 = vmatprep.subr.mxu0 0.0
        %2582 = vmatpush1.msra.mxu0 %v776
        %2583 = vmatprep.subr.mxu0 0.0
        %2584 = vmatpush1.msra.mxu0 %v777
        %2585 = vmatprep.subr.mxu0 0.0
        %2586 = vmatpush1.msra.mxu0 %v778
        %2587 = vmatprep.subr.mxu0 0.0
        %2588 = vmatpush1.msra.mxu0 %v779
        %2589 = vmatprep.subr.mxu0 0.0
        %2590 = vmatpush1.msra.mxu0 %v780
        %2591 = vmatprep.subr.mxu0 0.0
        %2592 = vmatpush1.msra.mxu0 %v781
        %2593 = vmatprep.subr.mxu0 0.0
        %2594 = vmatpush1.msra.mxu0 %v782
        %2595 = vmatprep.subr.mxu0 0.0
        %2596 = vmatpush1.msra.mxu0 %v783
        %2597 = vmatprep.subr.mxu0 0.0
        %2598 = vmatpush1.msra.mxu0 %v784
        %2599 = vmatprep.subr.mxu0 0.0
        %2600 = vmatpush1.msra.mxu0 %v785
        %2601 = vmatprep.subr.mxu0 0.0
        %2602 = vmatpush1.msra.mxu0 %v786
        %2603 = vmatprep.subr.mxu0 0.0
        %2604 = vmatpush1.msra.mxu0 %v787
        %2605 = vmatprep.subr.mxu0 0.0
        %2606 = vmatpush1.msra.mxu0 %v788
        %2607 = vmatprep.subr.mxu0 0.0
        %2608 = vmatpush1.msra.mxu0 %v789
        %2609 = vmatprep.subr.mxu0 0.0
        %2610 = vmatpush1.msra.mxu0 %v790
        %2611 = vmatprep.subr.mxu0 0.0
        %2612 = vmatpush1.msra.mxu0 %v791
        %2613 = vmatprep.subr.mxu0 0.0
        %2614 = vmatpush1.msra.mxu0 %v792
        %2615 = vmatprep.subr.mxu0 0.0
        %2616 = vmatpush1.msra.mxu0 %v793
        %2617 = vmatprep.subr.mxu0 0.0
        %2618 = vmatpush1.msra.mxu0 %v794
        %2619 = vmatprep.subr.mxu0 0.0
        %2620 = vmatpush1.msra.mxu0 %v795
        %2621 = vmatprep.subr.mxu0 0.0
        %2622 = vmatpush1.msra.mxu0 %v796
        %2623 = vmatprep.subr.mxu0 0.0
        %2624 = vmatpush1.msra.mxu0 %v797
        %2625 = vmatprep.subr.mxu0 0.0
        %2626 = vmatpush1.msra.mxu0 %v798
        %2627 = vmatprep.subr.mxu0 0.0
        %2628 = vmatpush1.msra.mxu0 %v799
        %2629 = vmatprep.subr.mxu0 0.0
        %2630 = vmatpush1.msra.mxu0 %v800
        %2631 = vmatprep.subr.mxu0 0.0
        %2632 = vmatpush1.msra.mxu0 %v801
        %2633 = vmatprep.subr.mxu0 0.0
        %2634 = vmatpush1.msra.mxu0 %v802
        %2635 = vmatprep.subr.mxu0 0.0
        %2636 = vmatpush1.msra.mxu0 %v803
        %2637 = vmatprep.mubr.f32.mxu0 %v2572
        %2638 = vmatmul.mubr.f32.gmra.mrb[0].mxu0 %v2571
        %v2639 = vpop.f32.mrb[0].mxu0
        %v2640 = vadd.f32 0.0, %v2639
        %v2641 = vpop.f32.mrb[0].mxu0
        %2642 = vdwg.mxu0
        %2643 = vadd.xlane.f32.xlu0 %v2640
        %v2644 = vpop.xlane.xlu0 %2643
        %v2645 = vmul.f32 %v2644, %v1154
        %v2646 = vmul.f32 %v2640, %v2640
        %2647 = vadd.xlane.f32.xlu0 %v2646
        %v2648 = vpop.xlane.xlu0 %2647
        %v2649 = vmul.f32 %v2648, %v1154
        %v2650 = vmul.f32 %v2645, %v2645
        %v2651 = vsub.f32 %v2649, %v2650
        %v2652 = vsub.f32 %v2640, %v2645
        %v2653 = vadd.f32 %v2651, 1e-05
        %v2654 = vrsqrt.pop %v2653
        %v2655 = vmul.f32 %v2652, %v2654
        %v2656 = vmul.f32 %v2655, %v1170
        %v2657 = vadd.f32 %v2656, %v1177
        %2658 = vmatprep.subr.mxu0 %v935
        %2659 = vmatpush1.msra.mxu0 %v934
        %2660 = vmatprep.subr.mxu0 %v939
        %2661 = vmatpush1.msra.mxu0 %v938
        %2662 = vmatprep.subr.mxu0 %v943
        %2663 = vmatpush1.msra.mxu0 %v942
        %2664 = vmatprep.subr.mxu0 %v947
        %2665 = vmatpush1.msra.mxu0 %v946
        %2666 = vmatprep.subr.mxu0 %v951
        %2667 = vmatpush1.msra.mxu0 %v950
        %2668 = vmatprep.subr.mxu0 %v955
        %2669 = vmatpush1.msra.mxu0 %v954
        %2670 = vmatprep.subr.mxu0 %v959
        %2671 = vmatpush1.msra.mxu0 %v958
        %2672 = vmatprep.subr.mxu0 %v963
        %2673 = vmatpush1.msra.mxu0 %v962
        %2674 = vmatprep.subr.mxu0 %v967
        %2675 = vmatpush1.msra.mxu0 %v966
        %2676 = vmatprep.subr.mxu0 %v971
        %2677 = vmatpush1.msra.mxu0 %v970
        %2678 = vmatprep.subr.mxu0 %v975
        %2679 = vmatpush1.msra.mxu0 %v974
        %2680 = vmatprep.subr.mxu0 %v979
        %2681 = vmatpush1.msra.mxu0 %v978
        %2682 = vmatprep.subr.mxu0 %v983
        %2683 = vmatpush1.msra.mxu0 %v982
        %2684 = vmatprep.subr.mxu0 %v987
        %2685 = vmatpush1.msra.mxu0 %v986
        %2686 = vmatprep.subr.mxu0 %v991
        %2687 = vmatpush1.msra.mxu0 %v990
        %2688 = vmatprep.subr.mxu0 %v995
        %2689 = vmatpush1.msra.mxu0 %v994
        %2690 = vmatprep.subr.mxu0 0.0
        %2691 = vmatpush1.msra.mxu0 0.0
        %2692 = vmatprep.subr.mxu0 0.0
        %2693 = vmatpush1.msra.mxu0 0.0
        %2694 = vmatprep.subr.mxu0 0.0
        %2695 = vmatpush1.msra.mxu0 0.0
        %2696 = vmatprep.subr.mxu0 0.0
        %2697 = vmatpush1.msra.mxu0 0.0
        %2698 = vmatprep.subr.mxu0 0.0
        %2699 = vmatpush1.msra.mxu0 0.0
        %2700 = vmatprep.subr.mxu0 0.0
        %2701 = vmatpush1.msra.mxu0 0.0
        %2702 = vmatprep.subr.mxu0 0.0
        %2703 = vmatpush1.msra.mxu0 0.0
        %2704 = vmatprep.subr.mxu0 0.0
        %2705 = vmatpush1.msra.mxu0 0.0
        %2706 = vmatprep.subr.mxu0 0.0
        %2707 = vmatpush1.msra.mxu0 0.0
        %2708 = vmatprep.subr.mxu0 0.0
        %2709 = vmatpush1.msra.mxu0 0.0
        %2710 = vmatprep.subr.mxu0 0.0
        %2711 = vmatpush1.msra.mxu0 0.0
        %2712 = vmatprep.subr.mxu0 0.0
        %2713 = vmatpush1.msra.mxu0 0.0
        %2714 = vmatprep.subr.mxu0 0.0
        %2715 = vmatpush1.msra.mxu0 0.0
        %2716 = vmatprep.subr.mxu0 0.0
        %2717 = vmatpush1.msra.mxu0 0.0
        %2718 = vmatprep.subr.mxu0 0.0
        %2719 = vmatpush1.msra.mxu0 0.0
        %2720 = vmatprep.subr.mxu0 0.0
        %2721 = vmatpush1.msra.mxu0 0.0
        %2722 = vmatprep.mubr.f32.mxu0 0.0
        %2723 = vmatmul.mubr.f32.gmra.mrb[0].mxu0 %v2251
        %v2724 = vpop.f32.mrb[0].mxu0
        %v2725 = vadd.f32 0.0, %v2724
        %v2726 = vpop.f32.mrb[0].mxu0
        %v2727 = vadd.f32 0.0, %v2726
        %2728 = vdwg.mxu0
        %2729 = vmatprep.subr.mxu0 %v937
        %2730 = vmatpush1.msra.mxu0 %v936
        %2731 = vmatprep.subr.mxu0 %v941
        %2732 = vmatpush1.msra.mxu0 %v940
        %2733 = vmatprep.subr.mxu0 %v945
        %2734 = vmatpush1.msra.mxu0 %v944
        %2735 = vmatprep.subr.mxu0 %v949
        %2736 = vmatpush1.msra.mxu0 %v948
        %2737 = vmatprep.subr.mxu0 %v953
        %2738 = vmatpush1.msra.mxu0 %v952
        %2739 = vmatprep.subr.mxu0 %v957
        %2740 = vmatpush1.msra.mxu0 %v956
        %2741 = vmatprep.subr.mxu0 %v961
        %2742 = vmatpush1.msra.mxu0 %v960
        %2743 = vmatprep.subr.mxu0 %v965
        %2744 = vmatpush1.msra.mxu0 %v964
        %2745 = vmatprep.subr.mxu0 %v969
        %2746 = vmatpush1.msra.mxu0 %v968
        %2747 = vmatprep.subr.mxu0 %v973
        %2748 = vmatpush1.msra.mxu0 %v972
        %2749 = vmatprep.subr.mxu0 %v977
        %2750 = vmatpush1.msra.mxu0 %v976
        %2751 = vmatprep.subr.mxu0 %v981
        %2752 = vmatpush1.msra.mxu0 %v980
        %2753 = vmatprep.subr.mxu0 %v985
        %2754 = vmatpush1.msra.mxu0 %v984
        %2755 = vmatprep.subr.mxu0 %v989
        %2756 = vmatpush1.msra.mxu0 %v988
        %2757 = vmatprep.subr.mxu0 %v993
        %2758 = vmatpush1.msra.mxu0 %v992
        %2759 = vmatprep.subr.mxu0 %v997
        %2760 = vmatpush1.msra.mxu0 %v996
        %2761 = vmatprep.subr.mxu0 0.0
        %2762 = vmatpush1.msra.mxu0 0.0
        %2763 = vmatprep.subr.mxu0 0.0
        %2764 = vmatpush1.msra.mxu0 0.0
        %2765 = vmatprep.subr.mxu0 0.0
        %2766 = vmatpush1.msra.mxu0 0.0
        %2767 = vmatprep.subr.mxu0 0.0
        %2768 = vmatpush1.msra.mxu0 0.0
        %2769 = vmatprep.subr.mxu0 0.0
        %2770 = vmatpush1.msra.mxu0 0.0
        %2771 = vmatprep.subr.mxu0 0.0
        %2772 = vmatpush1.msra.mxu0 0.0
        %2773 = vmatprep.subr.mxu0 0.0
        %2774 = vmatpush1.msra.mxu0 0.0
        %2775 = vmatprep.subr.mxu0 0.0
        %2776 = vmatpush1.msra.mxu0 0.0
        %2777 = vmatprep.subr.mxu0 0.0
        %2778 = vmatpush1.msra.mxu0 0.0
        %2779 = vmatprep.subr.mxu0 0.0
        %2780 = vmatpush1.msra.mxu0 0.0
        %2781 = vmatprep.subr.mxu0 0.0
        %2782 = vmatpush1.msra.mxu0 0.0
        %2783 = vmatprep.subr.mxu0 0.0
        %2784 = vmatpush1.msra.mxu0 0.0
        %2785 = vmatprep.subr.mxu0 0.0
        %2786 = vmatpush1.msra.mxu0 0.0
        %2787 = vmatprep.subr.mxu0 0.0
        %2788 = vmatpush1.msra.mxu0 0.0
        %2789 = vmatprep.subr.mxu0 0.0
        %2790 = vmatpush1.msra.mxu0 0.0
        %2791 = vmatprep.subr.mxu0 0.0
        %2792 = vmatpush1.msra.mxu0 0.0
        %2793 = vmatprep.mubr.f32.mxu0 0.0
        %2794 = vmatmul.mubr.f32.gmra.mrb[0].mxu0 %v2251
        %v2795 = vpop.f32.mrb[0].mxu0
        %v2796 = vadd.f32 0.0, %v2795
        %v2797 = vpop.f32.mrb[0].mxu0
        %v2798 = vadd.f32 0.0, %v2797
        %2799 = vdwg.mxu0
        %2800 = vmatprep.subr.mxu0 %v807
        %2801 = vmatpush1.msra.mxu0 %v806
        %2802 = vmatprep.subr.mxu0 %v811
        %2803 = vmatpush1.msra.mxu0 %v810
        %2804 = vmatprep.subr.mxu0 %v815
        %2805 = vmatpush1.msra.mxu0 %v814
        %2806 = vmatprep.subr.mxu0 %v819
        %2807 = vmatpush1.msra.mxu0 %v818
        %2808 = vmatprep.subr.mxu0 %v823
        %2809 = vmatpush1.msra.mxu0 %v822
        %2810 = vmatprep.subr.mxu0 %v827
        %2811 = vmatpush1.msra.mxu0 %v826
        %2812 = vmatprep.subr.mxu0 %v831
        %2813 = vmatpush1.msra.mxu0 %v830
        %2814 = vmatprep.subr.mxu0 %v835
        %2815 = vmatpush1.msra.mxu0 %v834
        %2816 = vmatprep.subr.mxu0 %v839
        %2817 = vmatpush1.msra.mxu0 %v838
        %2818 = vmatprep.subr.mxu0 %v843
        %2819 = vmatpush1.msra.mxu0 %v842
        %2820 = vmatprep.subr.mxu0 %v847
        %2821 = vmatpush1.msra.mxu0 %v846
        %2822 = vmatprep.subr.mxu0 %v851
        %2823 = vmatpush1.msra.mxu0 %v850
        %2824 = vmatprep.subr.mxu0 %v855
        %2825 = vmatpush1.msra.mxu0 %v854
        %2826 = vmatprep.subr.mxu0 %v859
        %2827 = vmatpush1.msra.mxu0 %v858
        %2828 = vmatprep.subr.mxu0 %v863
        %2829 = vmatpush1.msra.mxu0 %v862
        %2830 = vmatprep.subr.mxu0 %v867
        %2831 = vmatpush1.msra.mxu0 %v866
        %2832 = vmatprep.subr.mxu0 0.0
        %2833 = vmatpush1.msra.mxu0 0.0
        %2834 = vmatprep.subr.mxu0 0.0
        %2835 = vmatpush1.msra.mxu0 0.0
        %2836 = vmatprep.subr.mxu0 0.0
        %2837 = vmatpush1.msra.mxu0 0.0
        %2838 = vmatprep.subr.mxu0 0.0
        %2839 = vmatpush1.msra.mxu0 0.0
        %2840 = vmatprep.subr.mxu0 0.0
        %2841 = vmatpush1.msra.mxu0 0.0
        %2842 = vmatprep.subr.mxu0 0.0
        %2843 = vmatpush1.msra.mxu0 0.0
        %2844 = vmatprep.subr.mxu0 0.0
        %2845 = vmatpush1.msra.mxu0 0.0
        %2846 = vmatprep.subr.mxu0 0.0
        %2847 = vmatpush1.msra.mxu0 0.0
        %2848 = vmatprep.subr.mxu0 0.0
        %2849 = vmatpush1.msra.mxu0 0.0
        %2850 = vmatprep.subr.mxu0 0.0
        %2851 = vmatpush1.msra.mxu0 0.0
        %2852 = vmatprep.subr.mxu0 0.0
        %2853 = vmatpush1.msra.mxu0 0.0
        %2854 = vmatprep.subr.mxu0 0.0
        %2855 = vmatpush1.msra.mxu0 0.0
        %2856 = vmatprep.subr.mxu0 0.0
        %2857 = vmatpush1.msra.mxu0 0.0
        %2858 = vmatprep.subr.mxu0 0.0
        %2859 = vmatpush1.msra.mxu0 0.0
        %2860 = vmatprep.subr.mxu0 0.0
        %2861 = vmatpush1.msra.mxu0 0.0
        %2862 = vmatprep.subr.mxu0 0.0
        %2863 = vmatpush1.msra.mxu0 0.0
        %2864 = vmatprep.mubr.f32.mxu0 0.0
        %2865 = vmatmul.mubr.f32.gmra.mrb[0].mxu0 %v2657
        %v2866 = vpop.f32.mrb[0].mxu0
        %v2867 = vadd.f32 %v2725, %v2866
        %v2868 = vpop.f32.mrb[0].mxu0
        %v2869 = vadd.f32 %v2727, %v2868
        %2870 = vdwg.mxu0
        %2871 = vmatprep.subr.mxu0 %v809
        %2872 = vmatpush1.msra.mxu0 %v808
        %2873 = vmatprep.subr.mxu0 %v813
        %2874 = vmatpush1.msra.mxu0 %v812
        %2875 = vmatprep.subr.mxu0 %v817
        %2876 = vmatpush1.msra.mxu0 %v816
        %2877 = vmatprep.subr.mxu0 %v821
        %2878 = vmatpush1.msra.mxu0 %v820
        %2879 = vmatprep.subr.mxu0 %v825
        %2880 = vmatpush1.msra.mxu0 %v824
        %2881 = vmatprep.subr.mxu0 %v829
        %2882 = vmatpush1.msra.mxu0 %v828
        %2883 = vmatprep.subr.mxu0 %v833
        %2884 = vmatpush1.msra.mxu0 %v832
        %2885 = vmatprep.subr.mxu0 %v837
        %2886 = vmatpush1.msra.mxu0 %v836
        %2887 = vmatprep.subr.mxu0 %v841
        %2888 = vmatpush1.msra.mxu0 %v840
        %2889 = vmatprep.subr.mxu0 %v845
        %2890 = vmatpush1.msra.mxu0 %v844
        %2891 = vmatprep.subr.mxu0 %v849
        %2892 = vmatpush1.msra.mxu0 %v848
        %2893 = vmatprep.subr.mxu0 %v853
        %2894 = vmatpush1.msra.mxu0 %v852
        %2895 = vmatprep.subr.mxu0 %v857
        %2896 = vmatpush1.msra.mxu0 %v856
        %2897 = vmatprep.subr.mxu0 %v861
        %2898 = vmatpush1.msra.mxu0 %v860
        %2899 = vmatprep.subr.mxu0 %v865
        %2900 = vmatpush1.msra.mxu0 %v864
        %2901 = vmatprep.subr.mxu0 %v869
        %2902 = vmatpush1.msra.mxu0 %v868
        %2903 = vmatprep.subr.mxu0 0.0
        %2904 = vmatpush1.msra.mxu0 0.0
        %2905 = vmatprep.subr.mxu0 0.0
        %2906 = vmatpush1.msra.mxu0 0.0
        %2907 = vmatprep.subr.mxu0 0.0
        %2908 = vmatpush1.msra.mxu0 0.0
        %2909 = vmatprep.subr.mxu0 0.0
        %2910 = vmatpush1.msra.mxu0 0.0
        %2911 = vmatprep.subr.mxu0 0.0
        %2912 = vmatpush1.msra.mxu0 0.0
        %2913 = vmatprep.subr.mxu0 0.0
        %2914 = vmatpush1.msra.mxu0 0.0
        %2915 = vmatprep.subr.mxu0 0.0
        %2916 = vmatpush1.msra.mxu0 0.0
        %2917 = vmatprep.subr.mxu0 0.0
        %2918 = vmatpush1.msra.mxu0 0.0
        %2919 = vmatprep.subr.mxu0 0.0
        %2920 = vmatpush1.msra.mxu0 0.0
        %2921 = vmatprep.subr.mxu0 0.0
        %2922 = vmatpush1.msra.mxu0 0.0
        %2923 = vmatprep.subr.mxu0 0.0
        %2924 = vmatpush1.msra.mxu0 0.0
        %2925 = vmatprep.subr.mxu0 0.0
        %2926 = vmatpush1.msra.mxu0 0.0
        %2927 = vmatprep.subr.mxu0 0.0
        %2928 = vmatpush1.msra.mxu0 0.0
        %2929 = vmatprep.subr.mxu0 0.0
        %2930 = vmatpush1.msra.mxu0 0.0
        %2931 = vmatprep.subr.mxu0 0.0
        %2932 = vmatpush1.msra.mxu0 0.0
        %2933 = vmatprep.subr.mxu0 0.0
        %2934 = vmatpush1.msra.mxu0 0.0
        %2935 = vmatprep.mubr.f32.mxu0 0.0
        %2936 = vmatmul.mubr.f32.gmra.mrb[0].mxu0 %v2657
        %v2937 = vpop.f32.mrb[0].mxu0
        %v2938 = vadd.f32 %v2796, %v2937
        %v2939 = vpop.f32.mrb[0].mxu0
        %v2940 = vadd.f32 %v2798, %v2939
        %2941 = vdwg.mxu0
        %v2942 = vadd.f32 %v2867, %v1468
        %v2943 = vadd.f32 %v2869, %v1472
        %v2944 = vadd.f32 %v2938, %v1476
        %v2945 = vadd.f32 %v2940, %v1480
        %v2946 = vxor.u32 %v2942, 2147483648
        %v2947 = vmul.f32 %v2946, 1.442695
        %v2948 = vpow.pop %v2947
        %v2949 = vadd.f32 %v2948, 1.0
        %v2950 = vrcp.pop %v2949
        %v2951 = vmul.f32 1.0, %v2950
        %v2952 = vxor.u32 %v2943, 2147483648
        %v2953 = vmul.f32 %v2952, 1.442695
        %v2954 = vpow.pop %v2953
        %v2955 = vadd.f32 %v2954, 1.0
        %v2956 = vrcp.pop %v2955
        %v2957 = vmul.f32 1.0, %v2956
        %v2958 = vtanh.pop %v2944
        %v2959 = vxor.u32 %v2945, 2147483648
        %v2960 = vmul.f32 %v2959, 1.442695
        %v2961 = vpow.pop %v2960
        %v2962 = vadd.f32 %v2961, 1.0
        %v2963 = vrcp.pop %v2962
        %v2964 = vmul.f32 1.0, %v2963
        %v2965 = vmul.f32 %v2957, %v2249
        %v2966 = vmul.f32 %v2951, %v2958
        %v2967 = vadd.f32 %v2965, %v2966
        %v2968 = vtanh.pop %v2967
        %v2969 = vmul.f32 %v2964, %v2968
        %2970 = vmatprep.subr.mxu0 %v999
        %2971 = vmatpush1.msra.mxu0 %v998
        %2972 = vmatprep.subr.mxu0 %v1003
        %2973 = vmatpush1.msra.mxu0 %v1002
        %2974 = vmatprep.subr.mxu0 %v1007
        %2975 = vmatpush1.msra.mxu0 %v1006
        %2976 = vmatprep.subr.mxu0 %v1011
        %2977 = vmatpush1.msra.mxu0 %v1010
        %2978 = vmatprep.subr.mxu0 %v1015
        %2979 = vmatpush1.msra.mxu0 %v1014
        %2980 = vmatprep.subr.mxu0 %v1019
        %2981 = vmatpush1.msra.mxu0 %v1018
        %2982 = vmatprep.subr.mxu0 %v1023
        %2983 = vmatpush1.msra.mxu0 %v1022
        %2984 = vmatprep.subr.mxu0 %v1027
        %2985 = vmatpush1.msra.mxu0 %v1026
        %2986 = vmatprep.subr.mxu0 %v1031
        %2987 = vmatpush1.msra.mxu0 %v1030
        %2988 = vmatprep.subr.mxu0 %v1035
        %2989 = vmatpush1.msra.mxu0 %v1034
        %2990 = vmatprep.subr.mxu0 %v1039
        %2991 = vmatpush1.msra.mxu0 %v1038
        %2992 = vmatprep.subr.mxu0 %v1043
        %2993 = vmatpush1.msra.mxu0 %v1042
        %2994 = vmatprep.subr.mxu0 %v1047
        %2995 = vmatpush1.msra.mxu0 %v1046
        %2996 = vmatprep.subr.mxu0 %v1051
        %2997 = vmatpush1.msra.mxu0 %v1050
        %2998 = vmatprep.subr.mxu0 %v1055
        %2999 = vmatpush1.msra.mxu0 %v1054
        %3000 = vmatprep.subr.mxu0 %v1059
        %3001 = vmatpush1.msra.mxu0 %v1058
        %3002 = vmatprep.subr.mxu0 0.0
        %3003 = vmatpush1.msra.mxu0 0.0
        %3004 = vmatprep.subr.mxu0 0.0
        %3005 = vmatpush1.msra.mxu0 0.0
        %3006 = vmatprep.subr.mxu0 0.0
        %3007 = vmatpush1.msra.mxu0 0.0
        %3008 = vmatprep.subr.mxu0 0.0
        %3009 = vmatpush1.msra.mxu0 0.0
        %3010 = vmatprep.subr.mxu0 0.0
        %3011 = vmatpush1.msra.mxu0 0.0
        %3012 = vmatprep.subr.mxu0 0.0
        %3013 = vmatpush1.msra.mxu0 0.0
        %3014 = vmatprep.subr.mxu0 0.0
        %3015 = vmatpush1.msra.mxu0 0.0
        %3016 = vmatprep.subr.mxu0 0.0
        %3017 = vmatpush1.msra.mxu0 0.0
        %3018 = vmatprep.subr.mxu0 0.0
        %3019 = vmatpush1.msra.mxu0 0.0
        %3020 = vmatprep.subr.mxu0 0.0
        %3021 = vmatpush1.msra.mxu0 0.0
        %3022 = vmatprep.subr.mxu0 0.0
        %3023 = vmatpush1.msra.mxu0 0.0
        %3024 = vmatprep.subr.mxu0 0.0
        %3025 = vmatpush1.msra.mxu0 0.0
        %3026 = vmatprep.subr.mxu0 0.0
        %3027 = vmatpush1.msra.mxu0 0.0
        %3028 = vmatprep.subr.mxu0 0.0
        %3029 = vmatpush1.msra.mxu0 0.0
        %3030 = vmatprep.subr.mxu0 0.0
        %3031 = vmatpush1.msra.mxu0 0.0
        %3032 = vmatprep.subr.mxu0 0.0
        %3033 = vmatpush1.msra.mxu0 0.0
        %3034 = vmatprep.mubr.f32.mxu0 0.0
        %3035 = vmatmul.mubr.f32.gmra.mrb[0].mxu0 %v2563
        %v3036 = vpop.f32.mrb[0].mxu0
        %v3037 = vadd.f32 0.0, %v3036
        %v3038 = vpop.f32.mrb[0].mxu0
        %v3039 = vadd.f32 0.0, %v3038
        %3040 = vdwg.mxu0
        %3041 = vmatprep.subr.mxu0 %v1001
        %3042 = vmatpush1.msra.mxu0 %v1000
        %3043 = vmatprep.subr.mxu0 %v1005
        %3044 = vmatpush1.msra.mxu0 %v1004
        %3045 = vmatprep.subr.mxu0 %v1009
        %3046 = vmatpush1.msra.mxu0 %v1008
        %3047 = vmatprep.subr.mxu0 %v1013
        %3048 = vmatpush1.msra.mxu0 %v1012
        %3049 = vmatprep.subr.mxu0 %v1017
        %3050 = vmatpush1.msra.mxu0 %v1016
        %3051 = vmatprep.subr.mxu0 %v1021
        %3052 = vmatpush1.msra.mxu0 %v1020
        %3053 = vmatprep.subr.mxu0 %v1025
        %3054 = vmatpush1.msra.mxu0 %v1024
        %3055 = vmatprep.subr.mxu0 %v1029
        %3056 = vmatpush1.msra.mxu0 %v1028
        %3057 = vmatprep.subr.mxu0 %v1033
        %3058 = vmatpush1.msra.mxu0 %v1032
        %3059 = vmatprep.subr.mxu0 %v1037
        %3060 = vmatpush1.msra.mxu0 %v1036
        %3061 = vmatprep.subr.mxu0 %v1041
        %3062 = vmatpush1.msra.mxu0 %v1040
        %3063 = vmatprep.subr.mxu0 %v1045
        %3064 = vmatpush1.msra.mxu0 %v1044
        %3065 = vmatprep.subr.mxu0 %v1049
        %3066 = vmatpush1.msra.mxu0 %v1048
        %3067 = vmatprep.subr.mxu0 %v1053
        %3068 = vmatpush1.msra.mxu0 %v1052
        %3069 = vmatprep.subr.mxu0 %v1057
        %3070 = vmatpush1.msra.mxu0 %v1056
        %3071 = vmatprep.subr.mxu0 %v1061
        %3072 = vmatpush1.msra.mxu0 %v1060
        %3073 = vmatprep.subr.mxu0 0.0
        %3074 = vmatpush1.msra.mxu0 0.0
        %3075 = vmatprep.subr.mxu0 0.0
        %3076 = vmatpush1.msra.mxu0 0.0
        %3077 = vmatprep.subr.mxu0 0.0
        %3078 = vmatpush1.msra.mxu0 0.0
        %3079 = vmatprep.subr.mxu0 0.0
        %3080 = vmatpush1.msra.mxu0 0.0
        %3081 = vmatprep.subr.mxu0 0.0
        %3082 = vmatpush1.msra.mxu0 0.0
        %3083 = vmatprep.subr.mxu0 0.0
        %3084 = vmatpush1.msra.mxu0 0.0
        %3085 = vmatprep.subr.mxu0 0.0
        %3086 = vmatpush1.msra.mxu0 0.0
        %3087 = vmatprep.subr.mxu0 0.0
        %3088 = vmatpush1.msra.mxu0 0.0
        %3089 = vmatprep.subr.mxu0 0.0
        %3090 = vmatpush1.msra.mxu0 0.0
        %3091 = vmatprep.subr.mxu0 0.0
        %3092 = vmatpush1.msra.mxu0 0.0
        %3093 = vmatprep.subr.mxu0 0.0
        %3094 = vmatpush1.msra.mxu0 0.0
        %3095 = vmatprep.subr.mxu0 0.0
        %3096 = vmatpush1.msra.mxu0 0.0
        %3097 = vmatprep.subr.mxu0 0.0
        %3098 = vmatpush1.msra.mxu0 0.0
        %3099 = vmatprep.subr.mxu0 0.0
        %3100 = vmatpush1.msra.mxu0 0.0
        %3101 = vmatprep.subr.mxu0 0.0
        %3102 = vmatpush1.msra.mxu0 0.0
        %3103 = vmatprep.subr.mxu0 0.0
        %3104 = vmatpush1.msra.mxu0 0.0
        %3105 = vmatprep.mubr.f32.mxu0 0.0
        %3106 = vmatmul.mubr.f32.gmra.mrb[0].mxu0 %v2563
        %v3107 = vpop.f32.mrb[0].mxu0
        %v3108 = vadd.f32 0.0, %v3107
        %v3109 = vpop.f32.mrb[0].mxu0
        %v3110 = vadd.f32 0.0, %v3109
        %3111 = vdwg.mxu0
        %3112 = vmatprep.subr.mxu0 %v871
        %3113 = vmatpush1.msra.mxu0 %v870
        %3114 = vmatprep.subr.mxu0 %v875
        %3115 = vmatpush1.msra.mxu0 %v874
        %3116 = vmatprep.subr.mxu0 %v879
        %3117 = vmatpush1.msra.mxu0 %v878
        %3118 = vmatprep.subr.mxu0 %v883
        %3119 = vmatpush1.msra.mxu0 %v882
        %3120 = vmatprep.subr.mxu0 %v887
        %3121 = vmatpush1.msra.mxu0 %v886
        %3122 = vmatprep.subr.mxu0 %v891
        %3123 = vmatpush1.msra.mxu0 %v890
        %3124 = vmatprep.subr.mxu0 %v895
        %3125 = vmatpush1.msra.mxu0 %v894
        %3126 = vmatprep.subr.mxu0 %v899
        %3127 = vmatpush1.msra.mxu0 %v898
        %3128 = vmatprep.subr.mxu0 %v903
        %3129 = vmatpush1.msra.mxu0 %v902
        %3130 = vmatprep.subr.mxu0 %v907
        %3131 = vmatpush1.msra.mxu0 %v906
        %3132 = vmatprep.subr.mxu0 %v911
        %3133 = vmatpush1.msra.mxu0 %v910
        %3134 = vmatprep.subr.mxu0 %v915
        %3135 = vmatpush1.msra.mxu0 %v914
        %3136 = vmatprep.subr.mxu0 %v919
        %3137 = vmatpush1.msra.mxu0 %v918
        %3138 = vmatprep.subr.mxu0 %v923
        %3139 = vmatpush1.msra.mxu0 %v922
        %3140 = vmatprep.subr.mxu0 %v927
        %3141 = vmatpush1.msra.mxu0 %v926
        %3142 = vmatprep.subr.mxu0 %v931
        %3143 = vmatpush1.msra.mxu0 %v930
        %3144 = vmatprep.subr.mxu0 0.0
        %3145 = vmatpush1.msra.mxu0 0.0
        %3146 = vmatprep.subr.mxu0 0.0
        %3147 = vmatpush1.msra.mxu0 0.0
        %3148 = vmatprep.subr.mxu0 0.0
        %3149 = vmatpush1.msra.mxu0 0.0
        %3150 = vmatprep.subr.mxu0 0.0
        %3151 = vmatpush1.msra.mxu0 0.0
        %3152 = vmatprep.subr.mxu0 0.0
        %3153 = vmatpush1.msra.mxu0 0.0
        %3154 = vmatprep.subr.mxu0 0.0
        %3155 = vmatpush1.msra.mxu0 0.0
        %3156 = vmatprep.subr.mxu0 0.0
        %3157 = vmatpush1.msra.mxu0 0.0
        %3158 = vmatprep.subr.mxu0 0.0
        %3159 = vmatpush1.msra.mxu0 0.0
        %3160 = vmatprep.subr.mxu0 0.0
        %3161 = vmatpush1.msra.mxu0 0.0
        %3162 = vmatprep.subr.mxu0 0.0
        %3163 = vmatpush1.msra.mxu0 0.0
        %3164 = vmatprep.subr.mxu0 0.0
        %3165 = vmatpush1.msra.mxu0 0.0
        %3166 = vmatprep.subr.mxu0 0.0
        %3167 = vmatpush1.msra.mxu0 0.0
        %3168 = vmatprep.subr.mxu0 0.0
        %3169 = vmatpush1.msra.mxu0 0.0
        %3170 = vmatprep.subr.mxu0 0.0
        %3171 = vmatpush1.msra.mxu0 0.0
        %3172 = vmatprep.subr.mxu0 0.0
        %3173 = vmatpush1.msra.mxu0 0.0
        %3174 = vmatprep.subr.mxu0 0.0
        %3175 = vmatpush1.msra.mxu0 0.0
        %3176 = vmatprep.mubr.f32.mxu0 0.0
        %3177 = vmatmul.mubr.f32.gmra.mrb[0].mxu0 %v2969
        %v3178 = vpop.f32.mrb[0].mxu0
        %v3179 = vadd.f32 %v3037, %v3178
        %v3180 = vpop.f32.mrb[0].mxu0
        %v3181 = vadd.f32 %v3039, %v3180
        %3182 = vdwg.mxu0
        %3183 = vmatprep.subr.mxu0 %v873
        %3184 = vmatpush1.msra.mxu0 %v872
        %3185 = vmatprep.subr.mxu0 %v877
        %3186 = vmatpush1.msra.mxu0 %v876
        %3187 = vmatprep.subr.mxu0 %v881
        %3188 = vmatpush1.msra.mxu0 %v880
        %3189 = vmatprep.subr.mxu0 %v885
        %3190 = vmatpush1.msra.mxu0 %v884
        %3191 = vmatprep.subr.mxu0 %v889
        %3192 = vmatpush1.msra.mxu0 %v888
        %3193 = vmatprep.subr.mxu0 %v893
        %3194 = vmatpush1.msra.mxu0 %v892
        %3195 = vmatprep.subr.mxu0 %v897
        %3196 = vmatpush1.msra.mxu0 %v896
        %3197 = vmatprep.subr.mxu0 %v901
        %3198 = vmatpush1.msra.mxu0 %v900
        %3199 = vmatprep.subr.mxu0 %v905
        %3200 = vmatpush1.msra.mxu0 %v904
        %3201 = vmatprep.subr.mxu0 %v909
        %3202 = vmatpush1.msra.mxu0 %v908
        %3203 = vmatprep.subr.mxu0 %v913
        %3204 = vmatpush1.msra.mxu0 %v912
        %3205 = vmatprep.subr.mxu0 %v917
        %3206 = vmatpush1.msra.mxu0 %v916
        %3207 = vmatprep.subr.mxu0 %v921
        %3208 = vmatpush1.msra.mxu0 %v920
        %3209 = vmatprep.subr.mxu0 %v925
        %3210 = vmatpush1.msra.mxu0 %v924
        %3211 = vmatprep.subr.mxu0 %v929
        %3212 = vmatpush1.msra.mxu0 %v928
        %3213 = vmatprep.subr.mxu0 %v933
        %3214 = vmatpush1.msra.mxu0 %v932
        %3215 = vmatprep.subr.mxu0 0.0
        %3216 = vmatpush1.msra.mxu0 0.0
        %3217 = vmatprep.subr.mxu0 0.0
        %3218 = vmatpush1.msra.mxu0 0.0
        %3219 = vmatprep.subr.mxu0 0.0
        %3220 = vmatpush1.msra.mxu0 0.0
        %3221 = vmatprep.subr.mxu0 0.0
        %3222 = vmatpush1.msra.mxu0 0.0
        %3223 = vmatprep.subr.mxu0 0.0
        %3224 = vmatpush1.msra.mxu0 0.0
        %3225 = vmatprep.subr.mxu0 0.0
        %3226 = vmatpush1.msra.mxu0 0.0
        %3227 = vmatprep.subr.mxu0 0.0
        %3228 = vmatpush1.msra.mxu0 0.0
        %3229 = vmatprep.subr.mxu0 0.0
        %3230 = vmatpush1.msra.mxu0 0.0
        %3231 = vmatprep.subr.mxu0 0.0
        %3232 = vmatpush1.msra.mxu0 0.0
        %3233 = vmatprep.subr.mxu0 0.0
        %3234 = vmatpush1.msra.mxu0 0.0
        %3235 = vmatprep.subr.mxu0 0.0
        %3236 = vmatpush1.msra.mxu0 0.0
        %3237 = vmatprep.subr.mxu0 0.0
        %3238 = vmatpush1.msra.mxu0 0.0
        %3239 = vmatprep.subr.mxu0 0.0
        %3240 = vmatpush1.msra.mxu0 0.0
        %3241 = vmatprep.subr.mxu0 0.0
        %3242 = vmatpush1.msra.mxu0 0.0
        %3243 = vmatprep.subr.mxu0 0.0
        %3244 = vmatpush1.msra.mxu0 0.0
        %3245 = vmatprep.subr.mxu0 0.0
        %3246 = vmatpush1.msra.mxu0 0.0
        %3247 = vmatprep.mubr.f32.mxu0 0.0
        %3248 = vmatmul.mubr.f32.gmra.mrb[0].mxu0 %v2969
        %v3249 = vpop.f32.mrb[0].mxu0
        %v3250 = vadd.f32 %v3108, %v3249
        %v3251 = vpop.f32.mrb[0].mxu0
        %v3252 = vadd.f32 %v3110, %v3251
        %3253 = vdwg.mxu0
        %v3254 = vadd.f32 %v3179, %v1801
        %v3255 = vadd.f32 %v3181, %v1805
        %v3256 = vadd.f32 %v3250, %v1809
        %v3257 = vadd.f32 %v3252, %v1813
        %v3258 = vxor.u32 %v3254, 2147483648
        %v3259 = vmul.f32 %v3258, 1.442695
        %v3260 = vpow.pop %v3259
        %v3261 = vadd.f32 %v3260, 1.0
        %v3262 = vrcp.pop %v3261
        %v3263 = vmul.f32 1.0, %v3262
        %v3264 = vxor.u32 %v3255, 2147483648
        %v3265 = vmul.f32 %v3264, 1.442695
        %v3266 = vpow.pop %v3265
        %v3267 = vadd.f32 %v3266, 1.0
        %v3268 = vrcp.pop %v3267
        %v3269 = vmul.f32 1.0, %v3268
        %v3270 = vtanh.pop %v3256
        %v3271 = vxor.u32 %v3257, 2147483648
        %v3272 = vmul.f32 %v3271, 1.442695
        %v3273 = vpow.pop %v3272
        %v3274 = vadd.f32 %v3273, 1.0
        %v3275 = vrcp.pop %v3274
        %v3276 = vmul.f32 1.0, %v3275
        %v3277 = vmul.f32 %v3269, %v2561
        %v3278 = vmul.f32 %v3263, %v3270
        %v3279 = vadd.f32 %v3277, %v3278
        %v3280 = vtanh.pop %v3279
        %v3281 = vmul.f32 %v3276, %v3280
        %3282 = vset.pattern.permute.xlu0 3
        %3283 = vperm.xlu0 %3282, %v771
        %v3284 = vpop.permute.xlu0 %3283
        %vm3285 = vcmp.eq.s32.totalorder %v1071, %v3284
        %vm3286 = vcmp.eq.s32.totalorder %v1072, %v3284
        %v3287 = vsel %vm3285, 1, 0
        %v3288 = vsel %vm3286, 1, 0
        %v3289 = vcvt.s32.f32 %v3287
        %v3290 = vcvt.s32.f32 %v3288
        %3291 = vmatprep.subr.mxu0 0.0
        %3292 = vmatpush1.msra.mxu0 %v772
        %3293 = vmatprep.subr.mxu0 0.0
        %3294 = vmatpush1.msra.mxu0 %v773
        %3295 = vmatprep.subr.mxu0 0.0
        %3296 = vmatpush1.msra.mxu0 %v774
        %3297 = vmatprep.subr.mxu0 0.0
        %3298 = vmatpush1.msra.mxu0 %v775
        %3299 = vmatprep.subr.mxu0 0.0
        %3300 = vmatpush1.msra.mxu0 %v776
        %3301 = vmatprep.subr.mxu0 0.0
        %3302 = vmatpush1.msra.mxu0 %v777
        %3303 = vmatprep.subr.mxu0 0.0
        %3304 = vmatpush1.msra.mxu0 %v778
        %3305 = vmatprep.subr.mxu0 0.0
        %3306 = vmatpush1.msra.mxu0 %v779
        %3307 = vmatprep.subr.mxu0 0.0
        %3308 = vmatpush1.msra.mxu0 %v780
        %3309 = vmatprep.subr.mxu0 0.0
        %3310 = vmatpush1.msra.mxu0 %v781
        %3311 = vmatprep.subr.mxu0 0.0
        %3312 = vmatpush1.msra.mxu0 %v782
        %3313 = vmatprep.subr.mxu0 0.0
        %3314 = vmatpush1.msra.mxu0 %v783
        %3315 = vmatprep.subr.mxu0 0.0
        %3316 = vmatpush1.msra.mxu0 %v784
        %3317 = vmatprep.subr.mxu0 0.0
        %3318 = vmatpush1.msra.mxu0 %v785
        %3319 = vmatprep.subr.mxu0 0.0
        %3320 = vmatpush1.msra.mxu0 %v786
        %3321 = vmatprep.subr.mxu0 0.0
        %3322 = vmatpush1.msra.mxu0 %v787
        %3323 = vmatprep.subr.mxu0 0.0
        %3324 = vmatpush1.msra.mxu0 %v788
        %3325 = vmatprep.subr.mxu0 0.0
        %3326 = vmatpush1.msra.mxu0 %v789
        %3327 = vmatprep.subr.mxu0 0.0
        %3328 = vmatpush1.msra.mxu0 %v790
        %3329 = vmatprep.subr.mxu0 0.0
        %3330 = vmatpush1.msra.mxu0 %v791
        %3331 = vmatprep.subr.mxu0 0.0
        %3332 = vmatpush1.msra.mxu0 %v792
        %3333 = vmatprep.subr.mxu0 0.0
        %3334 = vmatpush1.msra.mxu0 %v793
        %3335 = vmatprep.subr.mxu0 0.0
        %3336 = vmatpush1.msra.mxu0 %v794
        %3337 = vmatprep.subr.mxu0 0.0
        %3338 = vmatpush1.msra.mxu0 %v795
        %3339 = vmatprep.subr.mxu0 0.0
        %3340 = vmatpush1.msra.mxu0 %v796
        %3341 = vmatprep.subr.mxu0 0.0
        %3342 = vmatpush1.msra.mxu0 %v797
        %3343 = vmatprep.subr.mxu0 0.0
        %3344 = vmatpush1.msra.mxu0 %v798
        %3345 = vmatprep.subr.mxu0 0.0
        %3346 = vmatpush1.msra.mxu0 %v799
        %3347 = vmatprep.subr.mxu0 0.0
        %3348 = vmatpush1.msra.mxu0 %v800
        %3349 = vmatprep.subr.mxu0 0.0
        %3350 = vmatpush1.msra.mxu0 %v801
        %3351 = vmatprep.subr.mxu0 0.0
        %3352 = vmatpush1.msra.mxu0 %v802
        %3353 = vmatprep.subr.mxu0 0.0
        %3354 = vmatpush1.msra.mxu0 %v803
        %3355 = vmatprep.mubr.f32.mxu0 %v3290
        %3356 = vmatmul.mubr.f32.gmra.mrb[0].mxu0 %v3289
        %v3357 = vpop.f32.mrb[0].mxu0
        %v3358 = vadd.f32 0.0, %v3357
        %v3359 = vpop.f32.mrb[0].mxu0
        %3360 = vdwg.mxu0
        %3361 = vadd.xlane.f32.xlu0 %v3358
        %v3362 = vpop.xlane.xlu0 %3361
        %v3363 = vmul.f32 %v3362, %v1154
        %v3364 = vmul.f32 %v3358, %v3358
        %3365 = vadd.xlane.f32.xlu0 %v3364
        %v3366 = vpop.xlane.xlu0 %3365
        %v3367 = vmul.f32 %v3366, %v1154
        %v3368 = vmul.f32 %v3363, %v3363
        %v3369 = vsub.f32 %v3367, %v3368
        %v3370 = vsub.f32 %v3358, %v3363
        %v3371 = vadd.f32 %v3369, 1e-05
        %v3372 = vrsqrt.pop %v3371
        %v3373 = vmul.f32 %v3370, %v3372
        %v3374 = vmul.f32 %v3373, %v1170
        %v3375 = vadd.f32 %v3374, %v1177
        %3376 = vmatprep.subr.mxu0 %v935
        %3377 = vmatpush1.msra.mxu0 %v934
        %3378 = vmatprep.subr.mxu0 %v939
        %3379 = vmatpush1.msra.mxu0 %v938
        %3380 = vmatprep.subr.mxu0 %v943
        %3381 = vmatpush1.msra.mxu0 %v942
        %3382 = vmatprep.subr.mxu0 %v947
        %3383 = vmatpush1.msra.mxu0 %v946
        %3384 = vmatprep.subr.mxu0 %v951
        %3385 = vmatpush1.msra.mxu0 %v950
        %3386 = vmatprep.subr.mxu0 %v955
        %3387 = vmatpush1.msra.mxu0 %v954
        %3388 = vmatprep.subr.mxu0 %v959
        %3389 = vmatpush1.msra.mxu0 %v958
        %3390 = vmatprep.subr.mxu0 %v963
        %3391 = vmatpush1.msra.mxu0 %v962
        %3392 = vmatprep.subr.mxu0 %v967
        %3393 = vmatpush1.msra.mxu0 %v966
        %3394 = vmatprep.subr.mxu0 %v971
        %3395 = vmatpush1.msra.mxu0 %v970
        %3396 = vmatprep.subr.mxu0 %v975
        %3397 = vmatpush1.msra.mxu0 %v974
        %3398 = vmatprep.subr.mxu0 %v979
        %3399 = vmatpush1.msra.mxu0 %v978
        %3400 = vmatprep.subr.mxu0 %v983
        %3401 = vmatpush1.msra.mxu0 %v982
        %3402 = vmatprep.subr.mxu0 %v987
        %3403 = vmatpush1.msra.mxu0 %v986
        %3404 = vmatprep.subr.mxu0 %v991
        %3405 = vmatpush1.msra.mxu0 %v990
        %3406 = vmatprep.subr.mxu0 %v995
        %3407 = vmatpush1.msra.mxu0 %v994
        %3408 = vmatprep.subr.mxu0 0.0
        %3409 = vmatpush1.msra.mxu0 0.0
        %3410 = vmatprep.subr.mxu0 0.0
        %3411 = vmatpush1.msra.mxu0 0.0
        %3412 = vmatprep.subr.mxu0 0.0
        %3413 = vmatpush1.msra.mxu0 0.0
        %3414 = vmatprep.subr.mxu0 0.0
        %3415 = vmatpush1.msra.mxu0 0.0
        %3416 = vmatprep.subr.mxu0 0.0
        %3417 = vmatpush1.msra.mxu0 0.0
        %3418 = vmatprep.subr.mxu0 0.0
        %3419 = vmatpush1.msra.mxu0 0.0
        %3420 = vmatprep.subr.mxu0 0.0
        %3421 = vmatpush1.msra.mxu0 0.0
        %3422 = vmatprep.subr.mxu0 0.0
        %3423 = vmatpush1.msra.mxu0 0.0
        %3424 = vmatprep.subr.mxu0 0.0
        %3425 = vmatpush1.msra.mxu0 0.0
        %3426 = vmatprep.subr.mxu0 0.0
        %3427 = vmatpush1.msra.mxu0 0.0
        %3428 = vmatprep.subr.mxu0 0.0
        %3429 = vmatpush1.msra.mxu0 0.0
        %3430 = vmatprep.subr.mxu0 0.0
        %3431 = vmatpush1.msra.mxu0 0.0
        %3432 = vmatprep.subr.mxu0 0.0
        %3433 = vmatpush1.msra.mxu0 0.0
        %3434 = vmatprep.subr.mxu0 0.0
        %3435 = vmatpush1.msra.mxu0 0.0
        %3436 = vmatprep.subr.mxu0 0.0
        %3437 = vmatpush1.msra.mxu0 0.0
        %3438 = vmatprep.subr.mxu0 0.0
        %3439 = vmatpush1.msra.mxu0 0.0
        %3440 = vmatprep.mubr.f32.mxu0 0.0
        %3441 = vmatmul.mubr.f32.gmra.mrb[0].mxu0 %v2969
        %v3442 = vpop.f32.mrb[0].mxu0
        %v3443 = vadd.f32 0.0, %v3442
        %v3444 = vpop.f32.mrb[0].mxu0
        %v3445 = vadd.f32 0.0, %v3444
        %3446 = vdwg.mxu0
        %3447 = vmatprep.subr.mxu0 %v937
        %3448 = vmatpush1.msra.mxu0 %v936
        %3449 = vmatprep.subr.mxu0 %v941
        %3450 = vmatpush1.msra.mxu0 %v940
        %3451 = vmatprep.subr.mxu0 %v945
        %3452 = vmatpush1.msra.mxu0 %v944
        %3453 = vmatprep.subr.mxu0 %v949
        %3454 = vmatpush1.msra.mxu0 %v948
        %3455 = vmatprep.subr.mxu0 %v953
        %3456 = vmatpush1.msra.mxu0 %v952
        %3457 = vmatprep.subr.mxu0 %v957
        %3458 = vmatpush1.msra.mxu0 %v956
        %3459 = vmatprep.subr.mxu0 %v961
        %3460 = vmatpush1.msra.mxu0 %v960
        %3461 = vmatprep.subr.mxu0 %v965
        %3462 = vmatpush1.msra.mxu0 %v964
        %3463 = vmatprep.subr.mxu0 %v969
        %3464 = vmatpush1.msra.mxu0 %v968
        %3465 = vmatprep.subr.mxu0 %v973
        %3466 = vmatpush1.msra.mxu0 %v972
        %3467 = vmatprep.subr.mxu0 %v977
        %3468 = vmatpush1.msra.mxu0 %v976
        %3469 = vmatprep.subr.mxu0 %v981
        %3470 = vmatpush1.msra.mxu0 %v980
        %3471 = vmatprep.subr.mxu0 %v985
        %3472 = vmatpush1.msra.mxu0 %v984
        %3473 = vmatprep.subr.mxu0 %v989
        %3474 = vmatpush1.msra.mxu0 %v988
        %3475 = vmatprep.subr.mxu0 %v993
        %3476 = vmatpush1.msra.mxu0 %v992
        %3477 = vmatprep.subr.mxu0 %v997
        %3478 = vmatpush1.msra.mxu0 %v996
        %3479 = vmatprep.subr.mxu0 0.0
        %3480 = vmatpush1.msra.mxu0 0.0
        %3481 = vmatprep.subr.mxu0 0.0
        %3482 = vmatpush1.msra.mxu0 0.0
        %3483 = vmatprep.subr.mxu0 0.0
        %3484 = vmatpush1.msra.mxu0 0.0
        %3485 = vmatprep.subr.mxu0 0.0
        %3486 = vmatpush1.msra.mxu0 0.0
        %3487 = vmatprep.subr.mxu0 0.0
        %3488 = vmatpush1.msra.mxu0 0.0
        %3489 = vmatprep.subr.mxu0 0.0
        %3490 = vmatpush1.msra.mxu0 0.0
        %3491 = vmatprep.subr.mxu0 0.0
        %3492 = vmatpush1.msra.mxu0 0.0
        %3493 = vmatprep.subr.mxu0 0.0
        %3494 = vmatpush1.msra.mxu0 0.0
        %3495 = vmatprep.subr.mxu0 0.0
        %3496 = vmatpush1.msra.mxu0 0.0
        %3497 = vmatprep.subr.mxu0 0.0
        %3498 = vmatpush1.msra.mxu0 0.0
        %3499 = vmatprep.subr.mxu0 0.0
        %3500 = vmatpush1.msra.mxu0 0.0
        %3501 = vmatprep.subr.mxu0 0.0
        %3502 = vmatpush1.msra.mxu0 0.0
        %3503 = vmatprep.subr.mxu0 0.0
        %3504 = vmatpush1.msra.mxu0 0.0
        %3505 = vmatprep.subr.mxu0 0.0
        %3506 = vmatpush1.msra.mxu0 0.0
        %3507 = vmatprep.subr.mxu0 0.0
        %3508 = vmatpush1.msra.mxu0 0.0
        %3509 = vmatprep.subr.mxu0 0.0
        %3510 = vmatpush1.msra.mxu0 0.0
        %3511 = vmatprep.mubr.f32.mxu0 0.0
        %3512 = vmatmul.mubr.f32.gmra.mrb[0].mxu0 %v2969
        %v3513 = vpop.f32.mrb[0].mxu0
        %v3514 = vadd.f32 0.0, %v3513
        %v3515 = vpop.f32.mrb[0].mxu0
        %v3516 = vadd.f32 0.0, %v3515
        %3517 = vdwg.mxu0
        %3518 = vmatprep.subr.mxu0 %v807
        %3519 = vmatpush1.msra.mxu0 %v806
        %3520 = vmatprep.subr.mxu0 %v811
        %3521 = vmatpush1.msra.mxu0 %v810
        %3522 = vmatprep.subr.mxu0 %v815
        %3523 = vmatpush1.msra.mxu0 %v814
        %3524 = vmatprep.subr.mxu0 %v819
        %3525 = vmatpush1.msra.mxu0 %v818
        %3526 = vmatprep.subr.mxu0 %v823
        %3527 = vmatpush1.msra.mxu0 %v822
        %3528 = vmatprep.subr.mxu0 %v827
        %3529 = vmatpush1.msra.mxu0 %v826
        %3530 = vmatprep.subr.mxu0 %v831
        %3531 = vmatpush1.msra.mxu0 %v830
        %3532 = vmatprep.subr.mxu0 %v835
        %3533 = vmatpush1.msra.mxu0 %v834
        %3534 = vmatprep.subr.mxu0 %v839
        %3535 = vmatpush1.msra.mxu0 %v838
        %3536 = vmatprep.subr.mxu0 %v843
        %3537 = vmatpush1.msra.mxu0 %v842
        %3538 = vmatprep.subr.mxu0 %v847
        %3539 = vmatpush1.msra.mxu0 %v846
        %3540 = vmatprep.subr.mxu0 %v851
        %3541 = vmatpush1.msra.mxu0 %v850
        %3542 = vmatprep.subr.mxu0 %v855
        %3543 = vmatpush1.msra.mxu0 %v854
        %3544 = vmatprep.subr.mxu0 %v859
        %3545 = vmatpush1.msra.mxu0 %v858
        %3546 = vmatprep.subr.mxu0 %v863
        %3547 = vmatpush1.msra.mxu0 %v862
        %3548 = vmatprep.subr.mxu0 %v867
        %3549 = vmatpush1.msra.mxu0 %v866
        %3550 = vmatprep.subr.mxu0 0.0
        %3551 = vmatpush1.msra.mxu0 0.0
        %3552 = vmatprep.subr.mxu0 0.0
        %3553 = vmatpush1.msra.mxu0 0.0
        %3554 = vmatprep.subr.mxu0 0.0
        %3555 = vmatpush1.msra.mxu0 0.0
        %3556 = vmatprep.subr.mxu0 0.0
        %3557 = vmatpush1.msra.mxu0 0.0
        %3558 = vmatprep.subr.mxu0 0.0
        %3559 = vmatpush1.msra.mxu0 0.0
        %3560 = vmatprep.subr.mxu0 0.0
        %3561 = vmatpush1.msra.mxu0 0.0
        %3562 = vmatprep.subr.mxu0 0.0
        %3563 = vmatpush1.msra.mxu0 0.0
        %3564 = vmatprep.subr.mxu0 0.0
        %3565 = vmatpush1.msra.mxu0 0.0
        %3566 = vmatprep.subr.mxu0 0.0
        %3567 = vmatpush1.msra.mxu0 0.0
        %3568 = vmatprep.subr.mxu0 0.0
        %3569 = vmatpush1.msra.mxu0 0.0
        %3570 = vmatprep.subr.mxu0 0.0
        %3571 = vmatpush1.msra.mxu0 0.0
        %3572 = vmatprep.subr.mxu0 0.0
        %3573 = vmatpush1.msra.mxu0 0.0
        %3574 = vmatprep.subr.mxu0 0.0
        %3575 = vmatpush1.msra.mxu0 0.0
        %3576 = vmatprep.subr.mxu0 0.0
        %3577 = vmatpush1.msra.mxu0 0.0
        %3578 = vmatprep.subr.mxu0 0.0
        %3579 = vmatpush1.msra.mxu0 0.0
        %3580 = vmatprep.subr.mxu0 0.0
        %3581 = vmatpush1.msra.mxu0 0.0
        %3582 = vmatprep.mubr.f32.mxu0 0.0
        %3583 = vmatmul.mubr.f32.gmra.mrb[0].mxu0 %v3375
        %v3584 = vpop.f32.mrb[0].mxu0
        %v3585 = vadd.f32 %v3443, %v3584
        %v3586 = vpop.f32.mrb[0].mxu0
        %v3587 = vadd.f32 %v3445, %v3586
        %3588 = vdwg.mxu0
        %3589 = vmatprep.subr.mxu0 %v809
        %3590 = vmatpush1.msra.mxu0 %v808
        %3591 = vmatprep.subr.mxu0 %v813
        %3592 = vmatpush1.msra.mxu0 %v812
        %3593 = vmatprep.subr.mxu0 %v817
        %3594 = vmatpush1.msra.mxu0 %v816
        %3595 = vmatprep.subr.mxu0 %v821
        %3596 = vmatpush1.msra.mxu0 %v820
        %3597 = vmatprep.subr.mxu0 %v825
        %3598 = vmatpush1.msra.mxu0 %v824
        %3599 = vmatprep.subr.mxu0 %v829
        %3600 = vmatpush1.msra.mxu0 %v828
        %3601 = vmatprep.subr.mxu0 %v833
        %3602 = vmatpush1.msra.mxu0 %v832
        %3603 = vmatprep.subr.mxu0 %v837
        %3604 = vmatpush1.msra.mxu0 %v836
        %3605 = vmatprep.subr.mxu0 %v841
        %3606 = vmatpush1.msra.mxu0 %v840
        %3607 = vmatprep.subr.mxu0 %v845
        %3608 = vmatpush1.msra.mxu0 %v844
        %3609 = vmatprep.subr.mxu0 %v849
        %3610 = vmatpush1.msra.mxu0 %v848
        %3611 = vmatprep.subr.mxu0 %v853
        %3612 = vmatpush1.msra.mxu0 %v852
        %3613 = vmatprep.subr.mxu0 %v857
        %3614 = vmatpush1.msra.mxu0 %v856
        %3615 = vmatprep.subr.mxu0 %v861
        %3616 = vmatpush1.msra.mxu0 %v860
        %3617 = vmatprep.subr.mxu0 %v865
        %3618 = vmatpush1.msra.mxu0 %v864
        %3619 = vmatprep.subr.mxu0 %v869
        %3620 = vmatpush1.msra.mxu0 %v868
        %3621 = vmatprep.subr.mxu0 0.0
        %3622 = vmatpush1.msra.mxu0 0.0
        %3623 = vmatprep.subr.mxu0 0.0
        %3624 = vmatpush1.msra.mxu0 0.0
        %3625 = vmatprep.subr.mxu0 0.0
        %3626 = vmatpush1.msra.mxu0 0.0
        %3627 = vmatprep.subr.mxu0 0.0
        %3628 = vmatpush1.msra.mxu0 0.0
        %3629 = vmatprep.subr.mxu0 0.0
        %3630 = vmatpush1.msra.mxu0 0.0
        %3631 = vmatprep.subr.mxu0 0.0
        %3632 = vmatpush1.msra.mxu0 0.0
        %3633 = vmatprep.subr.mxu0 0.0
        %3634 = vmatpush1.msra.mxu0 0.0
        %3635 = vmatprep.subr.mxu0 0.0
        %3636 = vmatpush1.msra.mxu0 0.0
        %3637 = vmatprep.subr.mxu0 0.0
        %3638 = vmatpush1.msra.mxu0 0.0
        %3639 = vmatprep.subr.mxu0 0.0
        %3640 = vmatpush1.msra.mxu0 0.0
        %3641 = vmatprep.subr.mxu0 0.0
        %3642 = vmatpush1.msra.mxu0 0.0
        %3643 = vmatprep.subr.mxu0 0.0
        %3644 = vmatpush1.msra.mxu0 0.0
        %3645 = vmatprep.subr.mxu0 0.0
        %3646 = vmatpush1.msra.mxu0 0.0
        %3647 = vmatprep.subr.mxu0 0.0
        %3648 = vmatpush1.msra.mxu0 0.0
        %3649 = vmatprep.subr.mxu0 0.0
        %3650 = vmatpush1.msra.mxu0 0.0
        %3651 = vmatprep.subr.mxu0 0.0
        %3652 = vmatpush1.msra.mxu0 0.0
        %3653 = vmatprep.mubr.f32.mxu0 0.0
        %3654 = vmatmul.mubr.f32.gmra.mrb[0].mxu0 %v3375
        %v3655 = vpop.f32.mrb[0].mxu0
        %v3656 = vadd.f32 %v3514, %v3655
        %v3657 = vpop.f32.mrb[0].mxu0
        %v3658 = vadd.f32 %v3516, %v3657
        %3659 = vdwg.mxu0
        %v3660 = vadd.f32 %v3585, %v1468
        %v3661 = vadd.f32 %v3587, %v1472
        %v3662 = vadd.f32 %v3656, %v1476
        %v3663 = vadd.f32 %v3658, %v1480
        %v3664 = vxor.u32 %v3660, 2147483648
        %v3665 = vmul.f32 %v3664, 1.442695
        %v3666 = vpow.pop %v3665
        %v3667 = vadd.f32 %v3666, 1.0
        %v3668 = vrcp.pop %v3667
        %v3669 = vmul.f32 1.0, %v3668
        %v3670 = vxor.u32 %v3661, 2147483648
        %v3671 = vmul.f32 %v3670, 1.442695
        %v3672 = vpow.pop %v3671
        %v3673 = vadd.f32 %v3672, 1.0
        %v3674 = vrcp.pop %v3673
        %v3675 = vmul.f32 1.0, %v3674
        %v3676 = vtanh.pop %v3662
        %v3677 = vxor.u32 %v3663, 2147483648
        %v3678 = vmul.f32 %v3677, 1.442695
        %v3679 = vpow.pop %v3678
        %v3680 = vadd.f32 %v3679, 1.0
        %v3681 = vrcp.pop %v3680
        %v3682 = vmul.f32 1.0, %v3681
        %v3683 = vmul.f32 %v3675, %v2967
        %v3684 = vmul.f32 %v3669, %v3676
        %v3685 = vadd.f32 %v3683, %v3684
        %v3686 = vtanh.pop %v3685
        %v3687 = vmul.f32 %v3682, %v3686
        %3688 = vmatprep.subr.mxu0 %v999
        %3689 = vmatpush1.msra.mxu0 %v998
        %3690 = vmatprep.subr.mxu0 %v1003
        %3691 = vmatpush1.msra.mxu0 %v1002
        %3692 = vmatprep.subr.mxu0 %v1007
        %3693 = vmatpush1.msra.mxu0 %v1006
        %3694 = vmatprep.subr.mxu0 %v1011
        %3695 = vmatpush1.msra.mxu0 %v1010
        %3696 = vmatprep.subr.mxu0 %v1015
        %3697 = vmatpush1.msra.mxu0 %v1014
        %3698 = vmatprep.subr.mxu0 %v1019
        %3699 = vmatpush1.msra.mxu0 %v1018
        %3700 = vmatprep.subr.mxu0 %v1023
        %3701 = vmatpush1.msra.mxu0 %v1022
        %3702 = vmatprep.subr.mxu0 %v1027
        %3703 = vmatpush1.msra.mxu0 %v1026
        %3704 = vmatprep.subr.mxu0 %v1031
        %3705 = vmatpush1.msra.mxu0 %v1030
        %3706 = vmatprep.subr.mxu0 %v1035
        %3707 = vmatpush1.msra.mxu0 %v1034
        %3708 = vmatprep.subr.mxu0 %v1039
        %3709 = vmatpush1.msra.mxu0 %v1038
        %3710 = vmatprep.subr.mxu0 %v1043
        %3711 = vmatpush1.msra.mxu0 %v1042
        %3712 = vmatprep.subr.mxu0 %v1047
        %3713 = vmatpush1.msra.mxu0 %v1046
        %3714 = vmatprep.subr.mxu0 %v1051
        %3715 = vmatpush1.msra.mxu0 %v1050
        %3716 = vmatprep.subr.mxu0 %v1055
        %3717 = vmatpush1.msra.mxu0 %v1054
        %3718 = vmatprep.subr.mxu0 %v1059
        %3719 = vmatpush1.msra.mxu0 %v1058
        %3720 = vmatprep.subr.mxu0 0.0
        %3721 = vmatpush1.msra.mxu0 0.0
        %3722 = vmatprep.subr.mxu0 0.0
        %3723 = vmatpush1.msra.mxu0 0.0
        %3724 = vmatprep.subr.mxu0 0.0
        %3725 = vmatpush1.msra.mxu0 0.0
        %3726 = vmatprep.subr.mxu0 0.0
        %3727 = vmatpush1.msra.mxu0 0.0
        %3728 = vmatprep.subr.mxu0 0.0
        %3729 = vmatpush1.msra.mxu0 0.0
        %3730 = vmatprep.subr.mxu0 0.0
        %3731 = vmatpush1.msra.mxu0 0.0
        %3732 = vmatprep.subr.mxu0 0.0
        %3733 = vmatpush1.msra.mxu0 0.0
        %3734 = vmatprep.subr.mxu0 0.0
        %3735 = vmatpush1.msra.mxu0 0.0
        %3736 = vmatprep.subr.mxu0 0.0
        %3737 = vmatpush1.msra.mxu0 0.0
        %3738 = vmatprep.subr.mxu0 0.0
        %3739 = vmatpush1.msra.mxu0 0.0
        %3740 = vmatprep.subr.mxu0 0.0
        %3741 = vmatpush1.msra.mxu0 0.0
        %3742 = vmatprep.subr.mxu0 0.0
        %3743 = vmatpush1.msra.mxu0 0.0
        %3744 = vmatprep.subr.mxu0 0.0
        %3745 = vmatpush1.msra.mxu0 0.0
        %3746 = vmatprep.subr.mxu0 0.0
        %3747 = vmatpush1.msra.mxu0 0.0
        %3748 = vmatprep.subr.mxu0 0.0
        %3749 = vmatpush1.msra.mxu0 0.0
        %3750 = vmatprep.subr.mxu0 0.0
        %3751 = vmatpush1.msra.mxu0 0.0
        %3752 = vmatprep.mubr.f32.mxu0 0.0
        %3753 = vmatmul.mubr.f32.gmra.mrb[0].mxu0 %v3281
        %v3754 = vpop.f32.mrb[0].mxu0
        %v3755 = vadd.f32 0.0, %v3754
        %v3756 = vpop.f32.mrb[0].mxu0
        %v3757 = vadd.f32 0.0, %v3756
        %3758 = vdwg.mxu0
        %3759 = vmatprep.subr.mxu0 %v1001
        %3760 = vmatpush1.msra.mxu0 %v1000
        %3761 = vmatprep.subr.mxu0 %v1005
        %3762 = vmatpush1.msra.mxu0 %v1004
        %3763 = vmatprep.subr.mxu0 %v1009
        %3764 = vmatpush1.msra.mxu0 %v1008
        %3765 = vmatprep.subr.mxu0 %v1013
        %3766 = vmatpush1.msra.mxu0 %v1012
        %3767 = vmatprep.subr.mxu0 %v1017
        %3768 = vmatpush1.msra.mxu0 %v1016
        %3769 = vmatprep.subr.mxu0 %v1021
        %3770 = vmatpush1.msra.mxu0 %v1020
        %3771 = vmatprep.subr.mxu0 %v1025
        %3772 = vmatpush1.msra.mxu0 %v1024
        %3773 = vmatprep.subr.mxu0 %v1029
        %3774 = vmatpush1.msra.mxu0 %v1028
        %3775 = vmatprep.subr.mxu0 %v1033
        %3776 = vmatpush1.msra.mxu0 %v1032
        %3777 = vmatprep.subr.mxu0 %v1037
        %3778 = vmatpush1.msra.mxu0 %v1036
        %3779 = vmatprep.subr.mxu0 %v1041
        %3780 = vmatpush1.msra.mxu0 %v1040
        %3781 = vmatprep.subr.mxu0 %v1045
        %3782 = vmatpush1.msra.mxu0 %v1044
        %3783 = vmatprep.subr.mxu0 %v1049
        %3784 = vmatpush1.msra.mxu0 %v1048
        %3785 = vmatprep.subr.mxu0 %v1053
        %3786 = vmatpush1.msra.mxu0 %v1052
        %3787 = vmatprep.subr.mxu0 %v1057
        %3788 = vmatpush1.msra.mxu0 %v1056
        %3789 = vmatprep.subr.mxu0 %v1061
        %3790 = vmatpush1.msra.mxu0 %v1060
        %3791 = vmatprep.subr.mxu0 0.0
        %3792 = vmatpush1.msra.mxu0 0.0
        %3793 = vmatprep.subr.mxu0 0.0
        %3794 = vmatpush1.msra.mxu0 0.0
        %3795 = vmatprep.subr.mxu0 0.0
        %3796 = vmatpush1.msra.mxu0 0.0
        %3797 = vmatprep.subr.mxu0 0.0
        %3798 = vmatpush1.msra.mxu0 0.0
        %3799 = vmatprep.subr.mxu0 0.0
        %3800 = vmatpush1.msra.mxu0 0.0
        %3801 = vmatprep.subr.mxu0 0.0
        %3802 = vmatpush1.msra.mxu0 0.0
        %3803 = vmatprep.subr.mxu0 0.0
        %3804 = vmatpush1.msra.mxu0 0.0
        %3805 = vmatprep.subr.mxu0 0.0
        %3806 = vmatpush1.msra.mxu0 0.0
        %3807 = vmatprep.subr.mxu0 0.0
        %3808 = vmatpush1.msra.mxu0 0.0
        %3809 = vmatprep.subr.mxu0 0.0
        %3810 = vmatpush1.msra.mxu0 0.0
        %3811 = vmatprep.subr.mxu0 0.0
        %3812 = vmatpush1.msra.mxu0 0.0
        %3813 = vmatprep.subr.mxu0 0.0
        %3814 = vmatpush1.msra.mxu0 0.0
        %3815 = vmatprep.subr.mxu0 0.0
        %3816 = vmatpush1.msra.mxu0 0.0
        %3817 = vmatprep.subr.mxu0 0.0
        %3818 = vmatpush1.msra.mxu0 0.0
        %3819 = vmatprep.subr.mxu0 0.0
        %3820 = vmatpush1.msra.mxu0 0.0
        %3821 = vmatprep.subr.mxu0 0.0
        %3822 = vmatpush1.msra.mxu0 0.0
        %3823 = vmatprep.mubr.f32.mxu0 0.0
        %3824 = vmatmul.mubr.f32.gmra.mrb[0].mxu0 %v3281
        %v3825 = vpop.f32.mrb[0].mxu0
        %v3826 = vadd.f32 0.0, %v3825
        %v3827 = vpop.f32.mrb[0].mxu0
        %v3828 = vadd.f32 0.0, %v3827
        %3829 = vdwg.mxu0
        %3830 = vmatprep.subr.mxu0 %v871
        %3831 = vmatpush1.msra.mxu0 %v870
        %3832 = vmatprep.subr.mxu0 %v875
        %3833 = vmatpush1.msra.mxu0 %v874
        %3834 = vmatprep.subr.mxu0 %v879
        %3835 = vmatpush1.msra.mxu0 %v878
        %3836 = vmatprep.subr.mxu0 %v883
        %3837 = vmatpush1.msra.mxu0 %v882
        %3838 = vmatprep.subr.mxu0 %v887
        %3839 = vmatpush1.msra.mxu0 %v886
        %3840 = vmatprep.subr.mxu0 %v891
        %3841 = vmatpush1.msra.mxu0 %v890
        %3842 = vmatprep.subr.mxu0 %v895
        %3843 = vmatpush1.msra.mxu0 %v894
        %3844 = vmatprep.subr.mxu0 %v899
        %3845 = vmatpush1.msra.mxu0 %v898
        %3846 = vmatprep.subr.mxu0 %v903
        %3847 = vmatpush1.msra.mxu0 %v902
        %3848 = vmatprep.subr.mxu0 %v907
        %3849 = vmatpush1.msra.mxu0 %v906
        %3850 = vmatprep.subr.mxu0 %v911
        %3851 = vmatpush1.msra.mxu0 %v910
        %3852 = vmatprep.subr.mxu0 %v915
        %3853 = vmatpush1.msra.mxu0 %v914
        %3854 = vmatprep.subr.mxu0 %v919
        %3855 = vmatpush1.msra.mxu0 %v918
        %3856 = vmatprep.subr.mxu0 %v923
        %3857 = vmatpush1.msra.mxu0 %v922
        %3858 = vmatprep.subr.mxu0 %v927
        %3859 = vmatpush1.msra.mxu0 %v926
        %3860 = vmatprep.subr.mxu0 %v931
        %3861 = vmatpush1.msra.mxu0 %v930
        %3862 = vmatprep.subr.mxu0 0.0
        %3863 = vmatpush1.msra.mxu0 0.0
        %3864 = vmatprep.subr.mxu0 0.0
        %3865 = vmatpush1.msra.mxu0 0.0
        %3866 = vmatprep.subr.mxu0 0.0
        %3867 = vmatpush1.msra.mxu0 0.0
        %3868 = vmatprep.subr.mxu0 0.0
        %3869 = vmatpush1.msra.mxu0 0.0
        %3870 = vmatprep.subr.mxu0 0.0
        %3871 = vmatpush1.msra.mxu0 0.0
        %3872 = vmatprep.subr.mxu0 0.0
        %3873 = vmatpush1.msra.mxu0 0.0
        %3874 = vmatprep.subr.mxu0 0.0
        %3875 = vmatpush1.msra.mxu0 0.0
        %3876 = vmatprep.subr.mxu0 0.0
        %3877 = vmatpush1.msra.mxu0 0.0
        %3878 = vmatprep.subr.mxu0 0.0
        %3879 = vmatpush1.msra.mxu0 0.0
        %3880 = vmatprep.subr.mxu0 0.0
        %3881 = vmatpush1.msra.mxu0 0.0
        %3882 = vmatprep.subr.mxu0 0.0
        %3883 = vmatpush1.msra.mxu0 0.0
        %3884 = vmatprep.subr.mxu0 0.0
        %3885 = vmatpush1.msra.mxu0 0.0
        %3886 = vmatprep.subr.mxu0 0.0
        %3887 = vmatpush1.msra.mxu0 0.0
        %3888 = vmatprep.subr.mxu0 0.0
        %3889 = vmatpush1.msra.mxu0 0.0
        %3890 = vmatprep.subr.mxu0 0.0
        %3891 = vmatpush1.msra.mxu0 0.0
        %3892 = vmatprep.subr.mxu0 0.0
        %3893 = vmatpush1.msra.mxu0 0.0
        %3894 = vmatprep.mubr.f32.mxu0 0.0
        %3895 = vmatmul.mubr.f32.gmra.mrb[0].mxu0 %v3687
        %v3896 = vpop.f32.mrb[0].mxu0
        %v3897 = vadd.f32 %v3755, %v3896
        %v3898 = vpop.f32.mrb[0].mxu0
        %v3899 = vadd.f32 %v3757, %v3898
        %3900 = vdwg.mxu0
        %3901 = vmatprep.subr.mxu0 %v873
        %3902 = vmatpush1.msra.mxu0 %v872
        %3903 = vmatprep.subr.mxu0 %v877
        %3904 = vmatpush1.msra.mxu0 %v876
        %3905 = vmatprep.subr.mxu0 %v881
        %3906 = vmatpush1.msra.mxu0 %v880
        %3907 = vmatprep.subr.mxu0 %v885
        %3908 = vmatpush1.msra.mxu0 %v884
        %3909 = vmatprep.subr.mxu0 %v889
        %3910 = vmatpush1.msra.mxu0 %v888
        %3911 = vmatprep.subr.mxu0 %v893
        %3912 = vmatpush1.msra.mxu0 %v892
        %3913 = vmatprep.subr.mxu0 %v897
        %3914 = vmatpush1.msra.mxu0 %v896
        %3915 = vmatprep.subr.mxu0 %v901
        %3916 = vmatpush1.msra.mxu0 %v900
        %3917 = vmatprep.subr.mxu0 %v905
        %3918 = vmatpush1.msra.mxu0 %v904
        %3919 = vmatprep.subr.mxu0 %v909
        %3920 = vmatpush1.msra.mxu0 %v908
        %3921 = vmatprep.subr.mxu0 %v913
        %3922 = vmatpush1.msra.mxu0 %v912
        %3923 = vmatprep.subr.mxu0 %v917
        %3924 = vmatpush1.msra.mxu0 %v916
        %3925 = vmatprep.subr.mxu0 %v921
        %3926 = vmatpush1.msra.mxu0 %v920
        %3927 = vmatprep.subr.mxu0 %v925
        %3928 = vmatpush1.msra.mxu0 %v924
        %3929 = vmatprep.subr.mxu0 %v929
        %3930 = vmatpush1.msra.mxu0 %v928
        %3931 = vmatprep.subr.mxu0 %v933
        %3932 = vmatpush1.msra.mxu0 %v932
        %3933 = vmatprep.subr.mxu0 0.0
        %3934 = vmatpush1.msra.mxu0 0.0
        %3935 = vmatprep.subr.mxu0 0.0
        %3936 = vmatpush1.msra.mxu0 0.0
        %3937 = vmatprep.subr.mxu0 0.0
        %3938 = vmatpush1.msra.mxu0 0.0
        %3939 = vmatprep.subr.mxu0 0.0
        %3940 = vmatpush1.msra.mxu0 0.0
        %3941 = vmatprep.subr.mxu0 0.0
        %3942 = vmatpush1.msra.mxu0 0.0
        %3943 = vmatprep.subr.mxu0 0.0
        %3944 = vmatpush1.msra.mxu0 0.0
        %3945 = vmatprep.subr.mxu0 0.0
        %3946 = vmatpush1.msra.mxu0 0.0
        %3947 = vmatprep.subr.mxu0 0.0
        %3948 = vmatpush1.msra.mxu0 0.0
        %3949 = vmatprep.subr.mxu0 0.0
        %3950 = vmatpush1.msra.mxu0 0.0
        %3951 = vmatprep.subr.mxu0 0.0
        %3952 = vmatpush1.msra.mxu0 0.0
        %3953 = vmatprep.subr.mxu0 0.0
        %3954 = vmatpush1.msra.mxu0 0.0
        %3955 = vmatprep.subr.mxu0 0.0
        %3956 = vmatpush1.msra.mxu0 0.0
        %3957 = vmatprep.subr.mxu0 0.0
        %3958 = vmatpush1.msra.mxu0 0.0
        %3959 = vmatprep.subr.mxu0 0.0
        %3960 = vmatpush1.msra.mxu0 0.0
        %3961 = vmatprep.subr.mxu0 0.0
        %3962 = vmatpush1.msra.mxu0 0.0
        %3963 = vmatprep.subr.mxu0 0.0
        %3964 = vmatpush1.msra.mxu0 0.0
        %3965 = vmatprep.mubr.f32.mxu0 0.0
        %3966 = vmatmul.mubr.f32.gmra.mrb[0].mxu0 %v3687
        %v3967 = vpop.f32.mrb[0].mxu0
        %v3968 = vadd.f32 %v3826, %v3967
        %v3969 = vpop.f32.mrb[0].mxu0
        %v3970 = vadd.f32 %v3828, %v3969
        %3971 = vdwg.mxu0
        %v3972 = vadd.f32 %v3897, %v1801
        %v3973 = vadd.f32 %v3899, %v1805
        %v3974 = vadd.f32 %v3968, %v1809
        %v3975 = vadd.f32 %v3970, %v1813
        %v3976 = vxor.u32 %v3972, 2147483648
        %v3977 = vmul.f32 %v3976, 1.442695
        %v3978 = vpow.pop %v3977
        %v3979 = vadd.f32 %v3978, 1.0
        %v3980 = vrcp.pop %v3979
        %v3981 = vmul.f32 1.0, %v3980
        %v3982 = vxor.u32 %v3973, 2147483648
        %v3983 = vmul.f32 %v3982, 1.442695
        %v3984 = vpow.pop %v3983
        %v3985 = vadd.f32 %v3984, 1.0
        %v3986 = vrcp.pop %v3985
        %v3987 = vmul.f32 1.0, %v3986
        %v3988 = vtanh.pop %v3974
        %v3989 = vxor.u32 %v3975, 2147483648
        %v3990 = vmul.f32 %v3989, 1.442695
        %v3991 = vpow.pop %v3990
        %v3992 = vadd.f32 %v3991, 1.0
        %v3993 = vrcp.pop %v3992
        %v3994 = vmul.f32 1.0, %v3993
        %v3995 = vmul.f32 %v3987, %v3279
        %v3996 = vmul.f32 %v3981, %v3988
        %v3997 = vadd.f32 %v3995, %v3996
        %v3998 = vtanh.pop %v3997
        %v3999 = vmul.f32 %v3994, %v3998
        %4000 = vset.pattern.permute.xlu0 4
        %4001 = vperm.xlu0 %4000, %v771
        %v4002 = vpop.permute.xlu0 %4001
        %vm4003 = vcmp.eq.s32.totalorder %v1071, %v4002
        %vm4004 = vcmp.eq.s32.totalorder %v1072, %v4002
        %v4005 = vsel %vm4003, 1, 0
        %v4006 = vsel %vm4004, 1, 0
        %v4007 = vcvt.s32.f32 %v4005
        %v4008 = vcvt.s32.f32 %v4006
        %4009 = vmatprep.subr.mxu0 0.0
        %4010 = vmatpush1.msra.mxu0 %v772
        %4011 = vmatprep.subr.mxu0 0.0
        %4012 = vmatpush1.msra.mxu0 %v773
        %4013 = vmatprep.subr.mxu0 0.0
        %4014 = vmatpush1.msra.mxu0 %v774
        %4015 = vmatprep.subr.mxu0 0.0
        %4016 = vmatpush1.msra.mxu0 %v775
        %4017 = vmatprep.subr.mxu0 0.0
        %4018 = vmatpush1.msra.mxu0 %v776
        %4019 = vmatprep.subr.mxu0 0.0
        %4020 = vmatpush1.msra.mxu0 %v777
        %4021 = vmatprep.subr.mxu0 0.0
        %4022 = vmatpush1.msra.mxu0 %v778
        %4023 = vmatprep.subr.mxu0 0.0
        %4024 = vmatpush1.msra.mxu0 %v779
        %4025 = vmatprep.subr.mxu0 0.0
        %4026 = vmatpush1.msra.mxu0 %v780
        %4027 = vmatprep.subr.mxu0 0.0
        %4028 = vmatpush1.msra.mxu0 %v781
        %4029 = vmatprep.subr.mxu0 0.0
        %4030 = vmatpush1.msra.mxu0 %v782
        %4031 = vmatprep.subr.mxu0 0.0
        %4032 = vmatpush1.msra.mxu0 %v783
        %4033 = vmatprep.subr.mxu0 0.0
        %4034 = vmatpush1.msra.mxu0 %v784
        %4035 = vmatprep.subr.mxu0 0.0
        %4036 = vmatpush1.msra.mxu0 %v785
        %4037 = vmatprep.subr.mxu0 0.0
        %4038 = vmatpush1.msra.mxu0 %v786
        %4039 = vmatprep.subr.mxu0 0.0
        %4040 = vmatpush1.msra.mxu0 %v787
        %4041 = vmatprep.subr.mxu0 0.0
        %4042 = vmatpush1.msra.mxu0 %v788
        %4043 = vmatprep.subr.mxu0 0.0
        %4044 = vmatpush1.msra.mxu0 %v789
        %4045 = vmatprep.subr.mxu0 0.0
        %4046 = vmatpush1.msra.mxu0 %v790
        %4047 = vmatprep.subr.mxu0 0.0
        %4048 = vmatpush1.msra.mxu0 %v791
        %4049 = vmatprep.subr.mxu0 0.0
        %4050 = vmatpush1.msra.mxu0 %v792
        %4051 = vmatprep.subr.mxu0 0.0
        %4052 = vmatpush1.msra.mxu0 %v793
        %4053 = vmatprep.subr.mxu0 0.0
        %4054 = vmatpush1.msra.mxu0 %v794
        %4055 = vmatprep.subr.mxu0 0.0
        %4056 = vmatpush1.msra.mxu0 %v795
        %4057 = vmatprep.subr.mxu0 0.0
        %4058 = vmatpush1.msra.mxu0 %v796
        %4059 = vmatprep.subr.mxu0 0.0
        %4060 = vmatpush1.msra.mxu0 %v797
        %4061 = vmatprep.subr.mxu0 0.0
        %4062 = vmatpush1.msra.mxu0 %v798
        %4063 = vmatprep.subr.mxu0 0.0
        %4064 = vmatpush1.msra.mxu0 %v799
        %4065 = vmatprep.subr.mxu0 0.0
        %4066 = vmatpush1.msra.mxu0 %v800
        %4067 = vmatprep.subr.mxu0 0.0
        %4068 = vmatpush1.msra.mxu0 %v801
        %4069 = vmatprep.subr.mxu0 0.0
        %4070 = vmatpush1.msra.mxu0 %v802
        %4071 = vmatprep.subr.mxu0 0.0
        %4072 = vmatpush1.msra.mxu0 %v803
        %4073 = vmatprep.mubr.f32.mxu0 %v4008
        %4074 = vmatmul.mubr.f32.gmra.mrb[0].mxu0 %v4007
        %v4075 = vpop.f32.mrb[0].mxu0
        %v4076 = vadd.f32 0.0, %v4075
        %v4077 = vpop.f32.mrb[0].mxu0
        %4078 = vdwg.mxu0
        %4079 = vadd.xlane.f32.xlu0 %v4076
        %v4080 = vpop.xlane.xlu0 %4079
        %v4081 = vmul.f32 %v4080, %v1154
        %v4082 = vmul.f32 %v4076, %v4076
        %4083 = vadd.xlane.f32.xlu0 %v4082
        %v4084 = vpop.xlane.xlu0 %4083
        %v4085 = vmul.f32 %v4084, %v1154
        %v4086 = vmul.f32 %v4081, %v4081
        %v4087 = vsub.f32 %v4085, %v4086
        %v4088 = vsub.f32 %v4076, %v4081
        %v4089 = vadd.f32 %v4087, 1e-05
        %v4090 = vrsqrt.pop %v4089
        %v4091 = vmul.f32 %v4088, %v4090
        %v4092 = vmul.f32 %v4091, %v1170
        %v4093 = vadd.f32 %v4092, %v1177
        %4094 = vmatprep.subr.mxu0 %v935
        %4095 = vmatpush1.msra.mxu0 %v934
        %4096 = vmatprep.subr.mxu0 %v939
        %4097 = vmatpush1.msra.mxu0 %v938
        %4098 = vmatprep.subr.mxu0 %v943
        %4099 = vmatpush1.msra.mxu0 %v942
        %4100 = vmatprep.subr.mxu0 %v947
        %4101 = vmatpush1.msra.mxu0 %v946
        %4102 = vmatprep.subr.mxu0 %v951
        %4103 = vmatpush1.msra.mxu0 %v950
        %4104 = vmatprep.subr.mxu0 %v955
        %4105 = vmatpush1.msra.mxu0 %v954
        %4106 = vmatprep.subr.mxu0 %v959
        %4107 = vmatpush1.msra.mxu0 %v958
        %4108 = vmatprep.subr.mxu0 %v963
        %4109 = vmatpush1.msra.mxu0 %v962
        %4110 = vmatprep.subr.mxu0 %v967
        %4111 = vmatpush1.msra.mxu0 %v966
        %4112 = vmatprep.subr.mxu0 %v971
        %4113 = vmatpush1.msra.mxu0 %v970
        %4114 = vmatprep.subr.mxu0 %v975
        %4115 = vmatpush1.msra.mxu0 %v974
        %4116 = vmatprep.subr.mxu0 %v979
        %4117 = vmatpush1.msra.mxu0 %v978
        %4118 = vmatprep.subr.mxu0 %v983
        %4119 = vmatpush1.msra.mxu0 %v982
        %4120 = vmatprep.subr.mxu0 %v987
        %4121 = vmatpush1.msra.mxu0 %v986
        %4122 = vmatprep.subr.mxu0 %v991
        %4123 = vmatpush1.msra.mxu0 %v990
        %4124 = vmatprep.subr.mxu0 %v995
        %4125 = vmatpush1.msra.mxu0 %v994
        %4126 = vmatprep.subr.mxu0 0.0
        %4127 = vmatpush1.msra.mxu0 0.0
        %4128 = vmatprep.subr.mxu0 0.0
        %4129 = vmatpush1.msra.mxu0 0.0
        %4130 = vmatprep.subr.mxu0 0.0
        %4131 = vmatpush1.msra.mxu0 0.0
        %4132 = vmatprep.subr.mxu0 0.0
        %4133 = vmatpush1.msra.mxu0 0.0
        %4134 = vmatprep.subr.mxu0 0.0
        %4135 = vmatpush1.msra.mxu0 0.0
        %4136 = vmatprep.subr.mxu0 0.0
        %4137 = vmatpush1.msra.mxu0 0.0
        %4138 = vmatprep.subr.mxu0 0.0
        %4139 = vmatpush1.msra.mxu0 0.0
        %4140 = vmatprep.subr.mxu0 0.0
        %4141 = vmatpush1.msra.mxu0 0.0
        %4142 = vmatprep.subr.mxu0 0.0
        %4143 = vmatpush1.msra.mxu0 0.0
        %4144 = vmatprep.subr.mxu0 0.0
        %4145 = vmatpush1.msra.mxu0 0.0
        %4146 = vmatprep.subr.mxu0 0.0
        %4147 = vmatpush1.msra.mxu0 0.0
        %4148 = vmatprep.subr.mxu0 0.0
        %4149 = vmatpush1.msra.mxu0 0.0
        %4150 = vmatprep.subr.mxu0 0.0
        %4151 = vmatpush1.msra.mxu0 0.0
        %4152 = vmatprep.subr.mxu0 0.0
        %4153 = vmatpush1.msra.mxu0 0.0
        %4154 = vmatprep.subr.mxu0 0.0
        %4155 = vmatpush1.msra.mxu0 0.0
        %4156 = vmatprep.subr.mxu0 0.0
        %4157 = vmatpush1.msra.mxu0 0.0
        %4158 = vmatprep.mubr.f32.mxu0 0.0
        %4159 = vmatmul.mubr.f32.gmra.mrb[0].mxu0 %v3687
        %v4160 = vpop.f32.mrb[0].mxu0
        %v4161 = vadd.f32 0.0, %v4160
        %v4162 = vpop.f32.mrb[0].mxu0
        %v4163 = vadd.f32 0.0, %v4162
        %4164 = vdwg.mxu0
        %4165 = vmatprep.subr.mxu0 %v937
        %4166 = vmatpush1.msra.mxu0 %v936
        %4167 = vmatprep.subr.mxu0 %v941
        %4168 = vmatpush1.msra.mxu0 %v940
        %4169 = vmatprep.subr.mxu0 %v945
        %4170 = vmatpush1.msra.mxu0 %v944
        %4171 = vmatprep.subr.mxu0 %v949
        %4172 = vmatpush1.msra.mxu0 %v948
        %4173 = vmatprep.subr.mxu0 %v953
        %4174 = vmatpush1.msra.mxu0 %v952
        %4175 = vmatprep.subr.mxu0 %v957
        %4176 = vmatpush1.msra.mxu0 %v956
        %4177 = vmatprep.subr.mxu0 %v961
        %4178 = vmatpush1.msra.mxu0 %v960
        %4179 = vmatprep.subr.mxu0 %v965
        %4180 = vmatpush1.msra.mxu0 %v964
        %4181 = vmatprep.subr.mxu0 %v969
        %4182 = vmatpush1.msra.mxu0 %v968
        %4183 = vmatprep.subr.mxu0 %v973
        %4184 = vmatpush1.msra.mxu0 %v972
        %4185 = vmatprep.subr.mxu0 %v977
        %4186 = vmatpush1.msra.mxu0 %v976
        %4187 = vmatprep.subr.mxu0 %v981
        %4188 = vmatpush1.msra.mxu0 %v980
        %4189 = vmatprep.subr.mxu0 %v985
        %4190 = vmatpush1.msra.mxu0 %v984
        %4191 = vmatprep.subr.mxu0 %v989
        %4192 = vmatpush1.msra.mxu0 %v988
        %4193 = vmatprep.subr.mxu0 %v993
        %4194 = vmatpush1.msra.mxu0 %v992
        %4195 = vmatprep.subr.mxu0 %v997
        %4196 = vmatpush1.msra.mxu0 %v996
        %4197 = vmatprep.subr.mxu0 0.0
        %4198 = vmatpush1.msra.mxu0 0.0
        %4199 = vmatprep.subr.mxu0 0.0
        %4200 = vmatpush1.msra.mxu0 0.0
        %4201 = vmatprep.subr.mxu0 0.0
        %4202 = vmatpush1.msra.mxu0 0.0
        %4203 = vmatprep.subr.mxu0 0.0
        %4204 = vmatpush1.msra.mxu0 0.0
        %4205 = vmatprep.subr.mxu0 0.0
        %4206 = vmatpush1.msra.mxu0 0.0
        %4207 = vmatprep.subr.mxu0 0.0
        %4208 = vmatpush1.msra.mxu0 0.0
        %4209 = vmatprep.subr.mxu0 0.0
        %4210 = vmatpush1.msra.mxu0 0.0
        %4211 = vmatprep.subr.mxu0 0.0
        %4212 = vmatpush1.msra.mxu0 0.0
        %4213 = vmatprep.subr.mxu0 0.0
        %4214 = vmatpush1.msra.mxu0 0.0
        %4215 = vmatprep.subr.mxu0 0.0
        %4216 = vmatpush1.msra.mxu0 0.0
        %4217 = vmatprep.subr.mxu0 0.0
        %4218 = vmatpush1.msra.mxu0 0.0
        %4219 = vmatprep.subr.mxu0 0.0
        %4220 = vmatpush1.msra.mxu0 0.0
        %4221 = vmatprep.subr.mxu0 0.0
        %4222 = vmatpush1.msra.mxu0 0.0
        %4223 = vmatprep.subr.mxu0 0.0
        %4224 = vmatpush1.msra.mxu0 0.0
        %4225 = vmatprep.subr.mxu0 0.0
        %4226 = vmatpush1.msra.mxu0 0.0
        %4227 = vmatprep.subr.mxu0 0.0
        %4228 = vmatpush1.msra.mxu0 0.0
        %4229 = vmatprep.mubr.f32.mxu0 0.0
        %4230 = vmatmul.mubr.f32.gmra.mrb[0].mxu0 %v3687
        %v4231 = vpop.f32.mrb[0].mxu0
        %v4232 = vadd.f32 0.0, %v4231
        %v4233 = vpop.f32.mrb[0].mxu0
        %v4234 = vadd.f32 0.0, %v4233
        %4235 = vdwg.mxu0
        %4236 = vmatprep.subr.mxu0 %v807
        %4237 = vmatpush1.msra.mxu0 %v806
        %4238 = vmatprep.subr.mxu0 %v811
        %4239 = vmatpush1.msra.mxu0 %v810
        %4240 = vmatprep.subr.mxu0 %v815
        %4241 = vmatpush1.msra.mxu0 %v814
        %4242 = vmatprep.subr.mxu0 %v819
        %4243 = vmatpush1.msra.mxu0 %v818
        %4244 = vmatprep.subr.mxu0 %v823
        %4245 = vmatpush1.msra.mxu0 %v822
        %4246 = vmatprep.subr.mxu0 %v827
        %4247 = vmatpush1.msra.mxu0 %v826
        %4248 = vmatprep.subr.mxu0 %v831
        %4249 = vmatpush1.msra.mxu0 %v830
        %4250 = vmatprep.subr.mxu0 %v835
        %4251 = vmatpush1.msra.mxu0 %v834
        %4252 = vmatprep.subr.mxu0 %v839
        %4253 = vmatpush1.msra.mxu0 %v838
        %4254 = vmatprep.subr.mxu0 %v843
        %4255 = vmatpush1.msra.mxu0 %v842
        %4256 = vmatprep.subr.mxu0 %v847
        %4257 = vmatpush1.msra.mxu0 %v846
        %4258 = vmatprep.subr.mxu0 %v851
        %4259 = vmatpush1.msra.mxu0 %v850
        %4260 = vmatprep.subr.mxu0 %v855
        %4261 = vmatpush1.msra.mxu0 %v854
        %4262 = vmatprep.subr.mxu0 %v859
        %4263 = vmatpush1.msra.mxu0 %v858
        %4264 = vmatprep.subr.mxu0 %v863
        %4265 = vmatpush1.msra.mxu0 %v862
        %4266 = vmatprep.subr.mxu0 %v867
        %4267 = vmatpush1.msra.mxu0 %v866
        %4268 = vmatprep.subr.mxu0 0.0
        %4269 = vmatpush1.msra.mxu0 0.0
        %4270 = vmatprep.subr.mxu0 0.0
        %4271 = vmatpush1.msra.mxu0 0.0
        %4272 = vmatprep.subr.mxu0 0.0
        %4273 = vmatpush1.msra.mxu0 0.0
        %4274 = vmatprep.subr.mxu0 0.0
        %4275 = vmatpush1.msra.mxu0 0.0
        %4276 = vmatprep.subr.mxu0 0.0
        %4277 = vmatpush1.msra.mxu0 0.0
        %4278 = vmatprep.subr.mxu0 0.0
        %4279 = vmatpush1.msra.mxu0 0.0
        %4280 = vmatprep.subr.mxu0 0.0
        %4281 = vmatpush1.msra.mxu0 0.0
        %4282 = vmatprep.subr.mxu0 0.0
        %4283 = vmatpush1.msra.mxu0 0.0
        %4284 = vmatprep.subr.mxu0 0.0
        %4285 = vmatpush1.msra.mxu0 0.0
        %4286 = vmatprep.subr.mxu0 0.0
        %4287 = vmatpush1.msra.mxu0 0.0
        %4288 = vmatprep.subr.mxu0 0.0
        %4289 = vmatpush1.msra.mxu0 0.0
        %4290 = vmatprep.subr.mxu0 0.0
        %4291 = vmatpush1.msra.mxu0 0.0
        %4292 = vmatprep.subr.mxu0 0.0
        %4293 = vmatpush1.msra.mxu0 0.0
        %4294 = vmatprep.subr.mxu0 0.0
        %4295 = vmatpush1.msra.mxu0 0.0
        %4296 = vmatprep.subr.mxu0 0.0
        %4297 = vmatpush1.msra.mxu0 0.0
        %4298 = vmatprep.subr.mxu0 0.0
        %4299 = vmatpush1.msra.mxu0 0.0
        %4300 = vmatprep.mubr.f32.mxu0 0.0
        %4301 = vmatmul.mubr.f32.gmra.mrb[0].mxu0 %v4093
        %v4302 = vpop.f32.mrb[0].mxu0
        %v4303 = vadd.f32 %v4161, %v4302
        %v4304 = vpop.f32.mrb[0].mxu0
        %v4305 = vadd.f32 %v4163, %v4304
        %4306 = vdwg.mxu0
        %4307 = vmatprep.subr.mxu0 %v809
        %4308 = vmatpush1.msra.mxu0 %v808
        %4309 = vmatprep.subr.mxu0 %v813
        %4310 = vmatpush1.msra.mxu0 %v812
        %4311 = vmatprep.subr.mxu0 %v817
        %4312 = vmatpush1.msra.mxu0 %v816
        %4313 = vmatprep.subr.mxu0 %v821
        %4314 = vmatpush1.msra.mxu0 %v820
        %4315 = vmatprep.subr.mxu0 %v825
        %4316 = vmatpush1.msra.mxu0 %v824
        %4317 = vmatprep.subr.mxu0 %v829
        %4318 = vmatpush1.msra.mxu0 %v828
        %4319 = vmatprep.subr.mxu0 %v833
        %4320 = vmatpush1.msra.mxu0 %v832
        %4321 = vmatprep.subr.mxu0 %v837
        %4322 = vmatpush1.msra.mxu0 %v836
        %4323 = vmatprep.subr.mxu0 %v841
        %4324 = vmatpush1.msra.mxu0 %v840
        %4325 = vmatprep.subr.mxu0 %v845
        %4326 = vmatpush1.msra.mxu0 %v844
        %4327 = vmatprep.subr.mxu0 %v849
        %4328 = vmatpush1.msra.mxu0 %v848
        %4329 = vmatprep.subr.mxu0 %v853
        %4330 = vmatpush1.msra.mxu0 %v852
        %4331 = vmatprep.subr.mxu0 %v857
        %4332 = vmatpush1.msra.mxu0 %v856
        %4333 = vmatprep.subr.mxu0 %v861
        %4334 = vmatpush1.msra.mxu0 %v860
        %4335 = vmatprep.subr.mxu0 %v865
        %4336 = vmatpush1.msra.mxu0 %v864
        %4337 = vmatprep.subr.mxu0 %v869
        %4338 = vmatpush1.msra.mxu0 %v868
        %4339 = vmatprep.subr.mxu0 0.0
        %4340 = vmatpush1.msra.mxu0 0.0
        %4341 = vmatprep.subr.mxu0 0.0
        %4342 = vmatpush1.msra.mxu0 0.0
        %4343 = vmatprep.subr.mxu0 0.0
        %4344 = vmatpush1.msra.mxu0 0.0
        %4345 = vmatprep.subr.mxu0 0.0
        %4346 = vmatpush1.msra.mxu0 0.0
        %4347 = vmatprep.subr.mxu0 0.0
        %4348 = vmatpush1.msra.mxu0 0.0
        %4349 = vmatprep.subr.mxu0 0.0
        %4350 = vmatpush1.msra.mxu0 0.0
        %4351 = vmatprep.subr.mxu0 0.0
        %4352 = vmatpush1.msra.mxu0 0.0
        %4353 = vmatprep.subr.mxu0 0.0
        %4354 = vmatpush1.msra.mxu0 0.0
        %4355 = vmatprep.subr.mxu0 0.0
        %4356 = vmatpush1.msra.mxu0 0.0
        %4357 = vmatprep.subr.mxu0 0.0
        %4358 = vmatpush1.msra.mxu0 0.0
        %4359 = vmatprep.subr.mxu0 0.0
        %4360 = vmatpush1.msra.mxu0 0.0
        %4361 = vmatprep.subr.mxu0 0.0
        %4362 = vmatpush1.msra.mxu0 0.0
        %4363 = vmatprep.subr.mxu0 0.0
        %4364 = vmatpush1.msra.mxu0 0.0
        %4365 = vmatprep.subr.mxu0 0.0
        %4366 = vmatpush1.msra.mxu0 0.0
        %4367 = vmatprep.subr.mxu0 0.0
        %4368 = vmatpush1.msra.mxu0 0.0
        %4369 = vmatprep.subr.mxu0 0.0
        %4370 = vmatpush1.msra.mxu0 0.0
        %4371 = vmatprep.mubr.f32.mxu0 0.0
        %4372 = vmatmul.mubr.f32.gmra.mrb[0].mxu0 %v4093
        %v4373 = vpop.f32.mrb[0].mxu0
        %v4374 = vadd.f32 %v4232, %v4373
        %v4375 = vpop.f32.mrb[0].mxu0
        %v4376 = vadd.f32 %v4234, %v4375
        %4377 = vdwg.mxu0
        %v4378 = vadd.f32 %v4303, %v1468
        %v4379 = vadd.f32 %v4305, %v1472
        %v4380 = vadd.f32 %v4374, %v1476
        %v4381 = vadd.f32 %v4376, %v1480
        %v4382 = vxor.u32 %v4378, 2147483648
        %v4383 = vmul.f32 %v4382, 1.442695
        %v4384 = vpow.pop %v4383
        %v4385 = vadd.f32 %v4384, 1.0
        %v4386 = vrcp.pop %v4385
        %v4387 = vmul.f32 1.0, %v4386
        %v4388 = vxor.u32 %v4379, 2147483648
        %v4389 = vmul.f32 %v4388, 1.442695
        %v4390 = vpow.pop %v4389
        %v4391 = vadd.f32 %v4390, 1.0
        %v4392 = vrcp.pop %v4391
        %v4393 = vmul.f32 1.0, %v4392
        %v4394 = vtanh.pop %v4380
        %v4395 = vxor.u32 %v4381, 2147483648
        %v4396 = vmul.f32 %v4395, 1.442695
        %v4397 = vpow.pop %v4396
        %v4398 = vadd.f32 %v4397, 1.0
        %v4399 = vrcp.pop %v4398
        %v4400 = vmul.f32 1.0, %v4399
        %v4401 = vmul.f32 %v4393, %v3685
        %v4402 = vmul.f32 %v4387, %v4394
        %v4403 = vadd.f32 %v4401, %v4402
        %v4404 = vtanh.pop %v4403
        %v4405 = vmul.f32 %v4400, %v4404
        %4406 = vmatprep.subr.mxu0 %v999
        %4407 = vmatpush1.msra.mxu0 %v998
        %4408 = vmatprep.subr.mxu0 %v1003
        %4409 = vmatpush1.msra.mxu0 %v1002
        %4410 = vmatprep.subr.mxu0 %v1007
        %4411 = vmatpush1.msra.mxu0 %v1006
        %4412 = vmatprep.subr.mxu0 %v1011
        %4413 = vmatpush1.msra.mxu0 %v1010
        %4414 = vmatprep.subr.mxu0 %v1015
        %4415 = vmatpush1.msra.mxu0 %v1014
        %4416 = vmatprep.subr.mxu0 %v1019
        %4417 = vmatpush1.msra.mxu0 %v1018
        %4418 = vmatprep.subr.mxu0 %v1023
        %4419 = vmatpush1.msra.mxu0 %v1022
        %4420 = vmatprep.subr.mxu0 %v1027
        %4421 = vmatpush1.msra.mxu0 %v1026
        %4422 = vmatprep.subr.mxu0 %v1031
        %4423 = vmatpush1.msra.mxu0 %v1030
        %4424 = vmatprep.subr.mxu0 %v1035
        %4425 = vmatpush1.msra.mxu0 %v1034
        %4426 = vmatprep.subr.mxu0 %v1039
        %4427 = vmatpush1.msra.mxu0 %v1038
        %4428 = vmatprep.subr.mxu0 %v1043
        %4429 = vmatpush1.msra.mxu0 %v1042
        %4430 = vmatprep.subr.mxu0 %v1047
        %4431 = vmatpush1.msra.mxu0 %v1046
        %4432 = vmatprep.subr.mxu0 %v1051
        %4433 = vmatpush1.msra.mxu0 %v1050
        %4434 = vmatprep.subr.mxu0 %v1055
        %4435 = vmatpush1.msra.mxu0 %v1054
        %4436 = vmatprep.subr.mxu0 %v1059
        %4437 = vmatpush1.msra.mxu0 %v1058
        %4438 = vmatprep.subr.mxu0 0.0
        %4439 = vmatpush1.msra.mxu0 0.0
        %4440 = vmatprep.subr.mxu0 0.0
        %4441 = vmatpush1.msra.mxu0 0.0
        %4442 = vmatprep.subr.mxu0 0.0
        %4443 = vmatpush1.msra.mxu0 0.0
        %4444 = vmatprep.subr.mxu0 0.0
        %4445 = vmatpush1.msra.mxu0 0.0
        %4446 = vmatprep.subr.mxu0 0.0
        %4447 = vmatpush1.msra.mxu0 0.0
        %4448 = vmatprep.subr.mxu0 0.0
        %4449 = vmatpush1.msra.mxu0 0.0
        %4450 = vmatprep.subr.mxu0 0.0
        %4451 = vmatpush1.msra.mxu0 0.0
        %4452 = vmatprep.subr.mxu0 0.0
        %4453 = vmatpush1.msra.mxu0 0.0
        %4454 = vmatprep.subr.mxu0 0.0
        %4455 = vmatpush1.msra.mxu0 0.0
        %4456 = vmatprep.subr.mxu0 0.0
        %4457 = vmatpush1.msra.mxu0 0.0
        %4458 = vmatprep.subr.mxu0 0.0
        %4459 = vmatpush1.msra.mxu0 0.0
        %4460 = vmatprep.subr.mxu0 0.0
        %4461 = vmatpush1.msra.mxu0 0.0
        %4462 = vmatprep.subr.mxu0 0.0
        %4463 = vmatpush1.msra.mxu0 0.0
        %4464 = vmatprep.subr.mxu0 0.0
        %4465 = vmatpush1.msra.mxu0 0.0
        %4466 = vmatprep.subr.mxu0 0.0
        %4467 = vmatpush1.msra.mxu0 0.0
        %4468 = vmatprep.subr.mxu0 0.0
        %4469 = vmatpush1.msra.mxu0 0.0
        %4470 = vmatprep.mubr.f32.mxu0 0.0
        %4471 = vmatmul.mubr.f32.gmra.mrb[0].mxu0 %v3999
        %v4472 = vpop.f32.mrb[0].mxu0
        %v4473 = vadd.f32 0.0, %v4472
        %v4474 = vpop.f32.mrb[0].mxu0
        %v4475 = vadd.f32 0.0, %v4474
        %4476 = vdwg.mxu0
        %4477 = vmatprep.subr.mxu0 %v1001
        %4478 = vmatpush1.msra.mxu0 %v1000
        %4479 = vmatprep.subr.mxu0 %v1005
        %4480 = vmatpush1.msra.mxu0 %v1004
        %4481 = vmatprep.subr.mxu0 %v1009
        %4482 = vmatpush1.msra.mxu0 %v1008
        %4483 = vmatprep.subr.mxu0 %v1013
        %4484 = vmatpush1.msra.mxu0 %v1012
        %4485 = vmatprep.subr.mxu0 %v1017
        %4486 = vmatpush1.msra.mxu0 %v1016
        %4487 = vmatprep.subr.mxu0 %v1021
        %4488 = vmatpush1.msra.mxu0 %v1020
        %4489 = vmatprep.subr.mxu0 %v1025
        %4490 = vmatpush1.msra.mxu0 %v1024
        %4491 = vmatprep.subr.mxu0 %v1029
        %4492 = vmatpush1.msra.mxu0 %v1028
        %4493 = vmatprep.subr.mxu0 %v1033
        %4494 = vmatpush1.msra.mxu0 %v1032
        %4495 = vmatprep.subr.mxu0 %v1037
        %4496 = vmatpush1.msra.mxu0 %v1036
        %4497 = vmatprep.subr.mxu0 %v1041
        %4498 = vmatpush1.msra.mxu0 %v1040
        %4499 = vmatprep.subr.mxu0 %v1045
        %4500 = vmatpush1.msra.mxu0 %v1044
        %4501 = vmatprep.subr.mxu0 %v1049
        %4502 = vmatpush1.msra.mxu0 %v1048
        %4503 = vmatprep.subr.mxu0 %v1053
        %4504 = vmatpush1.msra.mxu0 %v1052
        %4505 = vmatprep.subr.mxu0 %v1057
        %4506 = vmatpush1.msra.mxu0 %v1056
        %4507 = vmatprep.subr.mxu0 %v1061
        %4508 = vmatpush1.msra.mxu0 %v1060
        %4509 = vmatprep.subr.mxu0 0.0
        %4510 = vmatpush1.msra.mxu0 0.0
        %4511 = vmatprep.subr.mxu0 0.0
        %4512 = vmatpush1.msra.mxu0 0.0
        %4513 = vmatprep.subr.mxu0 0.0
        %4514 = vmatpush1.msra.mxu0 0.0
        %4515 = vmatprep.subr.mxu0 0.0
        %4516 = vmatpush1.msra.mxu0 0.0
        %4517 = vmatprep.subr.mxu0 0.0
        %4518 = vmatpush1.msra.mxu0 0.0
        %4519 = vmatprep.subr.mxu0 0.0
        %4520 = vmatpush1.msra.mxu0 0.0
        %4521 = vmatprep.subr.mxu0 0.0
        %4522 = vmatpush1.msra.mxu0 0.0
        %4523 = vmatprep.subr.mxu0 0.0
        %4524 = vmatpush1.msra.mxu0 0.0
        %4525 = vmatprep.subr.mxu0 0.0
        %4526 = vmatpush1.msra.mxu0 0.0
        %4527 = vmatprep.subr.mxu0 0.0
        %4528 = vmatpush1.msra.mxu0 0.0
        %4529 = vmatprep.subr.mxu0 0.0
        %4530 = vmatpush1.msra.mxu0 0.0
        %4531 = vmatprep.subr.mxu0 0.0
        %4532 = vmatpush1.msra.mxu0 0.0
        %4533 = vmatprep.subr.mxu0 0.0
        %4534 = vmatpush1.msra.mxu0 0.0
        %4535 = vmatprep.subr.mxu0 0.0
        %4536 = vmatpush1.msra.mxu0 0.0
        %4537 = vmatprep.subr.mxu0 0.0
        %4538 = vmatpush1.msra.mxu0 0.0
        %4539 = vmatprep.subr.mxu0 0.0
        %4540 = vmatpush1.msra.mxu0 0.0
        %4541 = vmatprep.mubr.f32.mxu0 0.0
        %4542 = vmatmul.mubr.f32.gmra.mrb[0].mxu0 %v3999
        %v4543 = vpop.f32.mrb[0].mxu0
        %v4544 = vadd.f32 0.0, %v4543
        %v4545 = vpop.f32.mrb[0].mxu0
        %v4546 = vadd.f32 0.0, %v4545
        %4547 = vdwg.mxu0
        %4548 = vmatprep.subr.mxu0 %v871
        %4549 = vmatpush1.msra.mxu0 %v870
        %4550 = vmatprep.subr.mxu0 %v875
        %4551 = vmatpush1.msra.mxu0 %v874
        %4552 = vmatprep.subr.mxu0 %v879
        %4553 = vmatpush1.msra.mxu0 %v878
        %4554 = vmatprep.subr.mxu0 %v883
        %4555 = vmatpush1.msra.mxu0 %v882
        %4556 = vmatprep.subr.mxu0 %v887
        %4557 = vmatpush1.msra.mxu0 %v886
        %4558 = vmatprep.subr.mxu0 %v891
        %4559 = vmatpush1.msra.mxu0 %v890
        %4560 = vmatprep.subr.mxu0 %v895
        %4561 = vmatpush1.msra.mxu0 %v894
        %4562 = vmatprep.subr.mxu0 %v899
        %4563 = vmatpush1.msra.mxu0 %v898
        %4564 = vmatprep.subr.mxu0 %v903
        %4565 = vmatpush1.msra.mxu0 %v902
        %4566 = vmatprep.subr.mxu0 %v907
        %4567 = vmatpush1.msra.mxu0 %v906
        %4568 = vmatprep.subr.mxu0 %v911
        %4569 = vmatpush1.msra.mxu0 %v910
        %4570 = vmatprep.subr.mxu0 %v915
        %4571 = vmatpush1.msra.mxu0 %v914
        %4572 = vmatprep.subr.mxu0 %v919
        %4573 = vmatpush1.msra.mxu0 %v918
        %4574 = vmatprep.subr.mxu0 %v923
        %4575 = vmatpush1.msra.mxu0 %v922
        %4576 = vmatprep.subr.mxu0 %v927
        %4577 = vmatpush1.msra.mxu0 %v926
        %4578 = vmatprep.subr.mxu0 %v931
        %4579 = vmatpush1.msra.mxu0 %v930
        %4580 = vmatprep.subr.mxu0 0.0
        %4581 = vmatpush1.msra.mxu0 0.0
        %4582 = vmatprep.subr.mxu0 0.0
        %4583 = vmatpush1.msra.mxu0 0.0
        %4584 = vmatprep.subr.mxu0 0.0
        %4585 = vmatpush1.msra.mxu0 0.0
        %4586 = vmatprep.subr.mxu0 0.0
        %4587 = vmatpush1.msra.mxu0 0.0
        %4588 = vmatprep.subr.mxu0 0.0
        %4589 = vmatpush1.msra.mxu0 0.0
        %4590 = vmatprep.subr.mxu0 0.0
        %4591 = vmatpush1.msra.mxu0 0.0
        %4592 = vmatprep.subr.mxu0 0.0
        %4593 = vmatpush1.msra.mxu0 0.0
        %4594 = vmatprep.subr.mxu0 0.0
        %4595 = vmatpush1.msra.mxu0 0.0
        %4596 = vmatprep.subr.mxu0 0.0
        %4597 = vmatpush1.msra.mxu0 0.0
        %4598 = vmatprep.subr.mxu0 0.0
        %4599 = vmatpush1.msra.mxu0 0.0
        %4600 = vmatprep.subr.mxu0 0.0
        %4601 = vmatpush1.msra.mxu0 0.0
        %4602 = vmatprep.subr.mxu0 0.0
        %4603 = vmatpush1.msra.mxu0 0.0
        %4604 = vmatprep.subr.mxu0 0.0
        %4605 = vmatpush1.msra.mxu0 0.0
        %4606 = vmatprep.subr.mxu0 0.0
        %4607 = vmatpush1.msra.mxu0 0.0
        %4608 = vmatprep.subr.mxu0 0.0
        %4609 = vmatpush1.msra.mxu0 0.0
        %4610 = vmatprep.subr.mxu0 0.0
        %4611 = vmatpush1.msra.mxu0 0.0
        %4612 = vmatprep.mubr.f32.mxu0 0.0
        %4613 = vmatmul.mubr.f32.gmra.mrb[0].mxu0 %v4405
        %v4614 = vpop.f32.mrb[0].mxu0
        %v4615 = vadd.f32 %v4473, %v4614
        %v4616 = vpop.f32.mrb[0].mxu0
        %v4617 = vadd.f32 %v4475, %v4616
        %4618 = vdwg.mxu0
        %4619 = vmatprep.subr.mxu0 %v873
        %4620 = vmatpush1.msra.mxu0 %v872
        %4621 = vmatprep.subr.mxu0 %v877
        %4622 = vmatpush1.msra.mxu0 %v876
        %4623 = vmatprep.subr.mxu0 %v881
        %4624 = vmatpush1.msra.mxu0 %v880
        %4625 = vmatprep.subr.mxu0 %v885
        %4626 = vmatpush1.msra.mxu0 %v884
        %4627 = vmatprep.subr.mxu0 %v889
        %4628 = vmatpush1.msra.mxu0 %v888
        %4629 = vmatprep.subr.mxu0 %v893
        %4630 = vmatpush1.msra.mxu0 %v892
        %4631 = vmatprep.subr.mxu0 %v897
        %4632 = vmatpush1.msra.mxu0 %v896
        %4633 = vmatprep.subr.mxu0 %v901
        %4634 = vmatpush1.msra.mxu0 %v900
        %4635 = vmatprep.subr.mxu0 %v905
        %4636 = vmatpush1.msra.mxu0 %v904
        %4637 = vmatprep.subr.mxu0 %v909
        %4638 = vmatpush1.msra.mxu0 %v908
        %4639 = vmatprep.subr.mxu0 %v913
        %4640 = vmatpush1.msra.mxu0 %v912
        %4641 = vmatprep.subr.mxu0 %v917
        %4642 = vmatpush1.msra.mxu0 %v916
        %4643 = vmatprep.subr.mxu0 %v921
        %4644 = vmatpush1.msra.mxu0 %v920
        %4645 = vmatprep.subr.mxu0 %v925
        %4646 = vmatpush1.msra.mxu0 %v924
        %4647 = vmatprep.subr.mxu0 %v929
        %4648 = vmatpush1.msra.mxu0 %v928
        %4649 = vmatprep.subr.mxu0 %v933
        %4650 = vmatpush1.msra.mxu0 %v932
        %4651 = vmatprep.subr.mxu0 0.0
        %4652 = vmatpush1.msra.mxu0 0.0
        %4653 = vmatprep.subr.mxu0 0.0
        %4654 = vmatpush1.msra.mxu0 0.0
        %4655 = vmatprep.subr.mxu0 0.0
        %4656 = vmatpush1.msra.mxu0 0.0
        %4657 = vmatprep.subr.mxu0 0.0
        %4658 = vmatpush1.msra.mxu0 0.0
        %4659 = vmatprep.subr.mxu0 0.0
        %4660 = vmatpush1.msra.mxu0 0.0
        %4661 = vmatprep.subr.mxu0 0.0
        %4662 = vmatpush1.msra.mxu0 0.0
        %4663 = vmatprep.subr.mxu0 0.0
        %4664 = vmatpush1.msra.mxu0 0.0
        %4665 = vmatprep.subr.mxu0 0.0
        %4666 = vmatpush1.msra.mxu0 0.0
        %4667 = vmatprep.subr.mxu0 0.0
        %4668 = vmatpush1.msra.mxu0 0.0
        %4669 = vmatprep.subr.mxu0 0.0
        %4670 = vmatpush1.msra.mxu0 0.0
        %4671 = vmatprep.subr.mxu0 0.0
        %4672 = vmatpush1.msra.mxu0 0.0
        %4673 = vmatprep.subr.mxu0 0.0
        %4674 = vmatpush1.msra.mxu0 0.0
        %4675 = vmatprep.subr.mxu0 0.0
        %4676 = vmatpush1.msra.mxu0 0.0
        %4677 = vmatprep.subr.mxu0 0.0
        %4678 = vmatpush1.msra.mxu0 0.0
        %4679 = vmatprep.subr.mxu0 0.0
        %4680 = vmatpush1.msra.mxu0 0.0
        %4681 = vmatprep.subr.mxu0 0.0
        %4682 = vmatpush1.msra.mxu0 0.0
        %4683 = vmatprep.mubr.f32.mxu0 0.0
        %4684 = vmatmul.mubr.f32.gmra.mrb[0].mxu0 %v4405
        %v4685 = vpop.f32.mrb[0].mxu0
        %v4686 = vadd.f32 %v4544, %v4685
        %v4687 = vpop.f32.mrb[0].mxu0
        %v4688 = vadd.f32 %v4546, %v4687
        %4689 = vdwg.mxu0
        %v4690 = vadd.f32 %v4615, %v1801
        %v4691 = vadd.f32 %v4617, %v1805
        %v4692 = vadd.f32 %v4686, %v1809
        %v4693 = vadd.f32 %v4688, %v1813
        %v4694 = vxor.u32 %v4690, 2147483648
        %v4695 = vmul.f32 %v4694, 1.442695
        %v4696 = vpow.pop %v4695
        %v4697 = vadd.f32 %v4696, 1.0
        %v4698 = vrcp.pop %v4697
        %v4699 = vmul.f32 1.0, %v4698
        %v4700 = vxor.u32 %v4691, 2147483648
        %v4701 = vmul.f32 %v4700, 1.442695
        %v4702 = vpow.pop %v4701
        %v4703 = vadd.f32 %v4702, 1.0
        %v4704 = vrcp.pop %v4703
        %v4705 = vmul.f32 1.0, %v4704
        %v4706 = vtanh.pop %v4692
        %v4707 = vxor.u32 %v4693, 2147483648
        %v4708 = vmul.f32 %v4707, 1.442695
        %v4709 = vpow.pop %v4708
        %v4710 = vadd.f32 %v4709, 1.0
        %v4711 = vrcp.pop %v4710
        %v4712 = vmul.f32 1.0, %v4711
        %v4713 = vmul.f32 %v4705, %v3997
        %v4714 = vmul.f32 %v4699, %v4706
        %v4715 = vadd.f32 %v4713, %v4714
        %v4716 = vtanh.pop %v4715
        %v4717 = vmul.f32 %v4712, %v4716
        %4718 = vset.pattern.permute.xlu0 5
        %4719 = vperm.xlu0 %4718, %v771
        %v4720 = vpop.permute.xlu0 %4719
        %vm4721 = vcmp.eq.s32.totalorder %v1071, %v4720
        %vm4722 = vcmp.eq.s32.totalorder %v1072, %v4720
        %v4723 = vsel %vm4721, 1, 0
        %v4724 = vsel %vm4722, 1, 0
        %v4725 = vcvt.s32.f32 %v4723
        %v4726 = vcvt.s32.f32 %v4724
        %4727 = vmatprep.subr.mxu0 0.0
        %4728 = vmatpush1.msra.mxu0 %v772
        %4729 = vmatprep.subr.mxu0 0.0
        %4730 = vmatpush1.msra.mxu0 %v773
        %4731 = vmatprep.subr.mxu0 0.0
        %4732 = vmatpush1.msra.mxu0 %v774
        %4733 = vmatprep.subr.mxu0 0.0
        %4734 = vmatpush1.msra.mxu0 %v775
        %4735 = vmatprep.subr.mxu0 0.0
        %4736 = vmatpush1.msra.mxu0 %v776
        %4737 = vmatprep.subr.mxu0 0.0
        %4738 = vmatpush1.msra.mxu0 %v777
        %4739 = vmatprep.subr.mxu0 0.0
        %4740 = vmatpush1.msra.mxu0 %v778
        %4741 = vmatprep.subr.mxu0 0.0
        %4742 = vmatpush1.msra.mxu0 %v779
        %4743 = vmatprep.subr.mxu0 0.0
        %4744 = vmatpush1.msra.mxu0 %v780
        %4745 = vmatprep.subr.mxu0 0.0
        %4746 = vmatpush1.msra.mxu0 %v781
        %4747 = vmatprep.subr.mxu0 0.0
        %4748 = vmatpush1.msra.mxu0 %v782
        %4749 = vmatprep.subr.mxu0 0.0
        %4750 = vmatpush1.msra.mxu0 %v783
        %4751 = vmatprep.subr.mxu0 0.0
        %4752 = vmatpush1.msra.mxu0 %v784
        %4753 = vmatprep.subr.mxu0 0.0
        %4754 = vmatpush1.msra.mxu0 %v785
        %4755 = vmatprep.subr.mxu0 0.0
        %4756 = vmatpush1.msra.mxu0 %v786
        %4757 = vmatprep.subr.mxu0 0.0
        %4758 = vmatpush1.msra.mxu0 %v787
        %4759 = vmatprep.subr.mxu0 0.0
        %4760 = vmatpush1.msra.mxu0 %v788
        %4761 = vmatprep.subr.mxu0 0.0
        %4762 = vmatpush1.msra.mxu0 %v789
        %4763 = vmatprep.subr.mxu0 0.0
        %4764 = vmatpush1.msra.mxu0 %v790
        %4765 = vmatprep.subr.mxu0 0.0
        %4766 = vmatpush1.msra.mxu0 %v791
        %4767 = vmatprep.subr.mxu0 0.0
        %4768 = vmatpush1.msra.mxu0 %v792
        %4769 = vmatprep.subr.mxu0 0.0
        %4770 = vmatpush1.msra.mxu0 %v793
        %4771 = vmatprep.subr.mxu0 0.0
        %4772 = vmatpush1.msra.mxu0 %v794
        %4773 = vmatprep.subr.mxu0 0.0
        %4774 = vmatpush1.msra.mxu0 %v795
        %4775 = vmatprep.subr.mxu0 0.0
        %4776 = vmatpush1.msra.mxu0 %v796
        %4777 = vmatprep.subr.mxu0 0.0
        %4778 = vmatpush1.msra.mxu0 %v797
        %4779 = vmatprep.subr.mxu0 0.0
        %4780 = vmatpush1.msra.mxu0 %v798
        %4781 = vmatprep.subr.mxu0 0.0
        %4782 = vmatpush1.msra.mxu0 %v799
        %4783 = vmatprep.subr.mxu0 0.0
        %4784 = vmatpush1.msra.mxu0 %v800
        %4785 = vmatprep.subr.mxu0 0.0
        %4786 = vmatpush1.msra.mxu0 %v801
        %4787 = vmatprep.subr.mxu0 0.0
        %4788 = vmatpush1.msra.mxu0 %v802
        %4789 = vmatprep.subr.mxu0 0.0
        %4790 = vmatpush1.msra.mxu0 %v803
        %4791 = vmatprep.mubr.f32.mxu0 %v4726
        %4792 = vmatmul.mubr.f32.gmra.mrb[0].mxu0 %v4725
        %v4793 = vpop.f32.mrb[0].mxu0
        %v4794 = vadd.f32 0.0, %v4793
        %v4795 = vpop.f32.mrb[0].mxu0
        %4796 = vdwg.mxu0
        %4797 = vadd.xlane.f32.xlu0 %v4794
        %v4798 = vpop.xlane.xlu0 %4797
        %v4799 = vmul.f32 %v4798, %v1154
        %v4800 = vmul.f32 %v4794, %v4794
        %4801 = vadd.xlane.f32.xlu0 %v4800
        %v4802 = vpop.xlane.xlu0 %4801
        %v4803 = vmul.f32 %v4802, %v1154
        %v4804 = vmul.f32 %v4799, %v4799
        %v4805 = vsub.f32 %v4803, %v4804
        %v4806 = vsub.f32 %v4794, %v4799
        %v4807 = vadd.f32 %v4805, 1e-05
        %v4808 = vrsqrt.pop %v4807
        %v4809 = vmul.f32 %v4806, %v4808
        %v4810 = vmul.f32 %v4809, %v1170
        %v4811 = vadd.f32 %v4810, %v1177
        %4812 = vmatprep.subr.mxu0 %v935
        %4813 = vmatpush1.msra.mxu0 %v934
        %4814 = vmatprep.subr.mxu0 %v939
        %4815 = vmatpush1.msra.mxu0 %v938
        %4816 = vmatprep.subr.mxu0 %v943
        %4817 = vmatpush1.msra.mxu0 %v942
        %4818 = vmatprep.subr.mxu0 %v947
        %4819 = vmatpush1.msra.mxu0 %v946
        %4820 = vmatprep.subr.mxu0 %v951
        %4821 = vmatpush1.msra.mxu0 %v950
        %4822 = vmatprep.subr.mxu0 %v955
        %4823 = vmatpush1.msra.mxu0 %v954
        %4824 = vmatprep.subr.mxu0 %v959
        %4825 = vmatpush1.msra.mxu0 %v958
        %4826 = vmatprep.subr.mxu0 %v963
        %4827 = vmatpush1.msra.mxu0 %v962
        %4828 = vmatprep.subr.mxu0 %v967
        %4829 = vmatpush1.msra.mxu0 %v966
        %4830 = vmatprep.subr.mxu0 %v971
        %4831 = vmatpush1.msra.mxu0 %v970
        %4832 = vmatprep.subr.mxu0 %v975
        %4833 = vmatpush1.msra.mxu0 %v974
        %4834 = vmatprep.subr.mxu0 %v979
        %4835 = vmatpush1.msra.mxu0 %v978
        %4836 = vmatprep.subr.mxu0 %v983
        %4837 = vmatpush1.msra.mxu0 %v982
        %4838 = vmatprep.subr.mxu0 %v987
        %4839 = vmatpush1.msra.mxu0 %v986
        %4840 = vmatprep.subr.mxu0 %v991
        %4841 = vmatpush1.msra.mxu0 %v990
        %4842 = vmatprep.subr.mxu0 %v995
        %4843 = vmatpush1.msra.mxu0 %v994
        %4844 = vmatprep.subr.mxu0 0.0
        %4845 = vmatpush1.msra.mxu0 0.0
        %4846 = vmatprep.subr.mxu0 0.0
        %4847 = vmatpush1.msra.mxu0 0.0
        %4848 = vmatprep.subr.mxu0 0.0
        %4849 = vmatpush1.msra.mxu0 0.0
        %4850 = vmatprep.subr.mxu0 0.0
        %4851 = vmatpush1.msra.mxu0 0.0
        %4852 = vmatprep.subr.mxu0 0.0
        %4853 = vmatpush1.msra.mxu0 0.0
        %4854 = vmatprep.subr.mxu0 0.0
        %4855 = vmatpush1.msra.mxu0 0.0
        %4856 = vmatprep.subr.mxu0 0.0
        %4857 = vmatpush1.msra.mxu0 0.0
        %4858 = vmatprep.subr.mxu0 0.0
        %4859 = vmatpush1.msra.mxu0 0.0
        %4860 = vmatprep.subr.mxu0 0.0
        %4861 = vmatpush1.msra.mxu0 0.0
        %4862 = vmatprep.subr.mxu0 0.0
        %4863 = vmatpush1.msra.mxu0 0.0
        %4864 = vmatprep.subr.mxu0 0.0
        %4865 = vmatpush1.msra.mxu0 0.0
        %4866 = vmatprep.subr.mxu0 0.0
        %4867 = vmatpush1.msra.mxu0 0.0
        %4868 = vmatprep.subr.mxu0 0.0
        %4869 = vmatpush1.msra.mxu0 0.0
        %4870 = vmatprep.subr.mxu0 0.0
        %4871 = vmatpush1.msra.mxu0 0.0
        %4872 = vmatprep.subr.mxu0 0.0
        %4873 = vmatpush1.msra.mxu0 0.0
        %4874 = vmatprep.subr.mxu0 0.0
        %4875 = vmatpush1.msra.mxu0 0.0
        %4876 = vmatprep.mubr.f32.mxu0 0.0
        %4877 = vmatmul.mubr.f32.gmra.mrb[0].mxu0 %v4405
        %v4878 = vpop.f32.mrb[0].mxu0
        %v4879 = vadd.f32 0.0, %v4878
        %v4880 = vpop.f32.mrb[0].mxu0
        %v4881 = vadd.f32 0.0, %v4880
        %4882 = vdwg.mxu0
        %4883 = vmatprep.subr.mxu0 %v937
        %4884 = vmatpush1.msra.mxu0 %v936
        %4885 = vmatprep.subr.mxu0 %v941
        %4886 = vmatpush1.msra.mxu0 %v940
        %4887 = vmatprep.subr.mxu0 %v945
        %4888 = vmatpush1.msra.mxu0 %v944
        %4889 = vmatprep.subr.mxu0 %v949
        %4890 = vmatpush1.msra.mxu0 %v948
        %4891 = vmatprep.subr.mxu0 %v953
        %4892 = vmatpush1.msra.mxu0 %v952
        %4893 = vmatprep.subr.mxu0 %v957
        %4894 = vmatpush1.msra.mxu0 %v956
        %4895 = vmatprep.subr.mxu0 %v961
        %4896 = vmatpush1.msra.mxu0 %v960
        %4897 = vmatprep.subr.mxu0 %v965
        %4898 = vmatpush1.msra.mxu0 %v964
        %4899 = vmatprep.subr.mxu0 %v969
        %4900 = vmatpush1.msra.mxu0 %v968
        %4901 = vmatprep.subr.mxu0 %v973
        %4902 = vmatpush1.msra.mxu0 %v972
        %4903 = vmatprep.subr.mxu0 %v977
        %4904 = vmatpush1.msra.mxu0 %v976
        %4905 = vmatprep.subr.mxu0 %v981
        %4906 = vmatpush1.msra.mxu0 %v980
        %4907 = vmatprep.subr.mxu0 %v985
        %4908 = vmatpush1.msra.mxu0 %v984
        %4909 = vmatprep.subr.mxu0 %v989
        %4910 = vmatpush1.msra.mxu0 %v988
        %4911 = vmatprep.subr.mxu0 %v993
        %4912 = vmatpush1.msra.mxu0 %v992
        %4913 = vmatprep.subr.mxu0 %v997
        %4914 = vmatpush1.msra.mxu0 %v996
        %4915 = vmatprep.subr.mxu0 0.0
        %4916 = vmatpush1.msra.mxu0 0.0
        %4917 = vmatprep.subr.mxu0 0.0
        %4918 = vmatpush1.msra.mxu0 0.0
        %4919 = vmatprep.subr.mxu0 0.0
        %4920 = vmatpush1.msra.mxu0 0.0
        %4921 = vmatprep.subr.mxu0 0.0
        %4922 = vmatpush1.msra.mxu0 0.0
        %4923 = vmatprep.subr.mxu0 0.0
        %4924 = vmatpush1.msra.mxu0 0.0
        %4925 = vmatprep.subr.mxu0 0.0
        %4926 = vmatpush1.msra.mxu0 0.0
        %4927 = vmatprep.subr.mxu0 0.0
        %4928 = vmatpush1.msra.mxu0 0.0
        %4929 = vmatprep.subr.mxu0 0.0
        %4930 = vmatpush1.msra.mxu0 0.0
        %4931 = vmatprep.subr.mxu0 0.0
        %4932 = vmatpush1.msra.mxu0 0.0
        %4933 = vmatprep.subr.mxu0 0.0
        %4934 = vmatpush1.msra.mxu0 0.0
        %4935 = vmatprep.subr.mxu0 0.0
        %4936 = vmatpush1.msra.mxu0 0.0
        %4937 = vmatprep.subr.mxu0 0.0
        %4938 = vmatpush1.msra.mxu0 0.0
        %4939 = vmatprep.subr.mxu0 0.0
        %4940 = vmatpush1.msra.mxu0 0.0
        %4941 = vmatprep.subr.mxu0 0.0
        %4942 = vmatpush1.msra.mxu0 0.0
        %4943 = vmatprep.subr.mxu0 0.0
        %4944 = vmatpush1.msra.mxu0 0.0
        %4945 = vmatprep.subr.mxu0 0.0
        %4946 = vmatpush1.msra.mxu0 0.0
        %4947 = vmatprep.mubr.f32.mxu0 0.0
        %4948 = vmatmul.mubr.f32.gmra.mrb[0].mxu0 %v4405
        %v4949 = vpop.f32.mrb[0].mxu0
        %v4950 = vadd.f32 0.0, %v4949
        %v4951 = vpop.f32.mrb[0].mxu0
        %v4952 = vadd.f32 0.0, %v4951
        %4953 = vdwg.mxu0
        %4954 = vmatprep.subr.mxu0 %v807
        %4955 = vmatpush1.msra.mxu0 %v806
        %4956 = vmatprep.subr.mxu0 %v811
        %4957 = vmatpush1.msra.mxu0 %v810
        %4958 = vmatprep.subr.mxu0 %v815
        %4959 = vmatpush1.msra.mxu0 %v814
        %4960 = vmatprep.subr.mxu0 %v819
        %4961 = vmatpush1.msra.mxu0 %v818
        %4962 = vmatprep.subr.mxu0 %v823
        %4963 = vmatpush1.msra.mxu0 %v822
        %4964 = vmatprep.subr.mxu0 %v827
        %4965 = vmatpush1.msra.mxu0 %v826
        %4966 = vmatprep.subr.mxu0 %v831
        %4967 = vmatpush1.msra.mxu0 %v830
        %4968 = vmatprep.subr.mxu0 %v835
        %4969 = vmatpush1.msra.mxu0 %v834
        %4970 = vmatprep.subr.mxu0 %v839
        %4971 = vmatpush1.msra.mxu0 %v838
        %4972 = vmatprep.subr.mxu0 %v843
        %4973 = vmatpush1.msra.mxu0 %v842
        %4974 = vmatprep.subr.mxu0 %v847
        %4975 = vmatpush1.msra.mxu0 %v846
        %4976 = vmatprep.subr.mxu0 %v851
        %4977 = vmatpush1.msra.mxu0 %v850
        %4978 = vmatprep.subr.mxu0 %v855
        %4979 = vmatpush1.msra.mxu0 %v854
        %4980 = vmatprep.subr.mxu0 %v859
        %4981 = vmatpush1.msra.mxu0 %v858
        %4982 = vmatprep.subr.mxu0 %v863
        %4983 = vmatpush1.msra.mxu0 %v862
        %4984 = vmatprep.subr.mxu0 %v867
        %4985 = vmatpush1.msra.mxu0 %v866
        %4986 = vmatprep.subr.mxu0 0.0
        %4987 = vmatpush1.msra.mxu0 0.0
        %4988 = vmatprep.subr.mxu0 0.0
        %4989 = vmatpush1.msra.mxu0 0.0
        %4990 = vmatprep.subr.mxu0 0.0
        %4991 = vmatpush1.msra.mxu0 0.0
        %4992 = vmatprep.subr.mxu0 0.0
        %4993 = vmatpush1.msra.mxu0 0.0
        %4994 = vmatprep.subr.mxu0 0.0
        %4995 = vmatpush1.msra.mxu0 0.0
        %4996 = vmatprep.subr.mxu0 0.0
        %4997 = vmatpush1.msra.mxu0 0.0
        %4998 = vmatprep.subr.mxu0 0.0
        %4999 = vmatpush1.msra.mxu0 0.0
        %5000 = vmatprep.subr.mxu0 0.0
        %5001 = vmatpush1.msra.mxu0 0.0
        %5002 = vmatprep.subr.mxu0 0.0
        %5003 = vmatpush1.msra.mxu0 0.0
        %5004 = vmatprep.subr.mxu0 0.0
        %5005 = vmatpush1.msra.mxu0 0.0
        %5006 = vmatprep.subr.mxu0 0.0
        %5007 = vmatpush1.msra.mxu0 0.0
        %5008 = vmatprep.subr.mxu0 0.0
        %5009 = vmatpush1.msra.mxu0 0.0
        %5010 = vmatprep.subr.mxu0 0.0
        %5011 = vmatpush1.msra.mxu0 0.0
        %5012 = vmatprep.subr.mxu0 0.0
        %5013 = vmatpush1.msra.mxu0 0.0
        %5014 = vmatprep.subr.mxu0 0.0
        %5015 = vmatpush1.msra.mxu0 0.0
        %5016 = vmatprep.subr.mxu0 0.0
        %5017 = vmatpush1.msra.mxu0 0.0
        %5018 = vmatprep.mubr.f32.mxu0 0.0
        %5019 = vmatmul.mubr.f32.gmra.mrb[0].mxu0 %v4811
        %v5020 = vpop.f32.mrb[0].mxu0
        %v5021 = vadd.f32 %v4879, %v5020
        %v5022 = vpop.f32.mrb[0].mxu0
        %v5023 = vadd.f32 %v4881, %v5022
        %5024 = vdwg.mxu0
        %5025 = vmatprep.subr.mxu0 %v809
        %5026 = vmatpush1.msra.mxu0 %v808
        %5027 = vmatprep.subr.mxu0 %v813
        %5028 = vmatpush1.msra.mxu0 %v812
        %5029 = vmatprep.subr.mxu0 %v817
        %5030 = vmatpush1.msra.mxu0 %v816
        %5031 = vmatprep.subr.mxu0 %v821
        %5032 = vmatpush1.msra.mxu0 %v820
        %5033 = vmatprep.subr.mxu0 %v825
        %5034 = vmatpush1.msra.mxu0 %v824
        %5035 = vmatprep.subr.mxu0 %v829
        %5036 = vmatpush1.msra.mxu0 %v828
        %5037 = vmatprep.subr.mxu0 %v833
        %5038 = vmatpush1.msra.mxu0 %v832
        %5039 = vmatprep.subr.mxu0 %v837
        %5040 = vmatpush1.msra.mxu0 %v836
        %5041 = vmatprep.subr.mxu0 %v841
        %5042 = vmatpush1.msra.mxu0 %v840
        %5043 = vmatprep.subr.mxu0 %v845
        %5044 = vmatpush1.msra.mxu0 %v844
        %5045 = vmatprep.subr.mxu0 %v849
        %5046 = vmatpush1.msra.mxu0 %v848
        %5047 = vmatprep.subr.mxu0 %v853
        %5048 = vmatpush1.msra.mxu0 %v852
        %5049 = vmatprep.subr.mxu0 %v857
        %5050 = vmatpush1.msra.mxu0 %v856
        %5051 = vmatprep.subr.mxu0 %v861
        %5052 = vmatpush1.msra.mxu0 %v860
        %5053 = vmatprep.subr.mxu0 %v865
        %5054 = vmatpush1.msra.mxu0 %v864
        %5055 = vmatprep.subr.mxu0 %v869
        %5056 = vmatpush1.msra.mxu0 %v868
        %5057 = vmatprep.subr.mxu0 0.0
        %5058 = vmatpush1.msra.mxu0 0.0
        %5059 = vmatprep.subr.mxu0 0.0
        %5060 = vmatpush1.msra.mxu0 0.0
        %5061 = vmatprep.subr.mxu0 0.0
        %5062 = vmatpush1.msra.mxu0 0.0
        %5063 = vmatprep.subr.mxu0 0.0
        %5064 = vmatpush1.msra.mxu0 0.0
        %5065 = vmatprep.subr.mxu0 0.0
        %5066 = vmatpush1.msra.mxu0 0.0
        %5067 = vmatprep.subr.mxu0 0.0
        %5068 = vmatpush1.msra.mxu0 0.0
        %5069 = vmatprep.subr.mxu0 0.0
        %5070 = vmatpush1.msra.mxu0 0.0
        %5071 = vmatprep.subr.mxu0 0.0
        %5072 = vmatpush1.msra.mxu0 0.0
        %5073 = vmatprep.subr.mxu0 0.0
        %5074 = vmatpush1.msra.mxu0 0.0
        %5075 = vmatprep.subr.mxu0 0.0
        %5076 = vmatpush1.msra.mxu0 0.0
        %5077 = vmatprep.subr.mxu0 0.0
        %5078 = vmatpush1.msra.mxu0 0.0
        %5079 = vmatprep.subr.mxu0 0.0
        %5080 = vmatpush1.msra.mxu0 0.0
        %5081 = vmatprep.subr.mxu0 0.0
        %5082 = vmatpush1.msra.mxu0 0.0
        %5083 = vmatprep.subr.mxu0 0.0
        %5084 = vmatpush1.msra.mxu0 0.0
        %5085 = vmatprep.subr.mxu0 0.0
        %5086 = vmatpush1.msra.mxu0 0.0
        %5087 = vmatprep.subr.mxu0 0.0
        %5088 = vmatpush1.msra.mxu0 0.0
        %5089 = vmatprep.mubr.f32.mxu0 0.0
        %5090 = vmatmul.mubr.f32.gmra.mrb[0].mxu0 %v4811
        %v5091 = vpop.f32.mrb[0].mxu0
        %v5092 = vadd.f32 %v4950, %v5091
        %v5093 = vpop.f32.mrb[0].mxu0
        %v5094 = vadd.f32 %v4952, %v5093
        %5095 = vdwg.mxu0
        %v5096 = vadd.f32 %v5021, %v1468
        %v5097 = vadd.f32 %v5023, %v1472
        %v5098 = vadd.f32 %v5092, %v1476
        %v5099 = vadd.f32 %v5094, %v1480
        %v5100 = vxor.u32 %v5096, 2147483648
        %v5101 = vmul.f32 %v5100, 1.442695
        %v5102 = vpow.pop %v5101
        %v5103 = vadd.f32 %v5102, 1.0
        %v5104 = vrcp.pop %v5103
        %v5105 = vmul.f32 1.0, %v5104
        %v5106 = vxor.u32 %v5097, 2147483648
        %v5107 = vmul.f32 %v5106, 1.442695
        %v5108 = vpow.pop %v5107
        %v5109 = vadd.f32 %v5108, 1.0
        %v5110 = vrcp.pop %v5109
        %v5111 = vmul.f32 1.0, %v5110
        %v5112 = vtanh.pop %v5098
        %v5113 = vxor.u32 %v5099, 2147483648
        %v5114 = vmul.f32 %v5113, 1.442695
        %v5115 = vpow.pop %v5114
        %v5116 = vadd.f32 %v5115, 1.0
        %v5117 = vrcp.pop %v5116
        %v5118 = vmul.f32 1.0, %v5117
        %v5119 = vmul.f32 %v5111, %v4403
        %v5120 = vmul.f32 %v5105, %v5112
        %v5121 = vadd.f32 %v5119, %v5120
        %v5122 = vtanh.pop %v5121
        %v5123 = vmul.f32 %v5118, %v5122
        %5124 = vmatprep.subr.mxu0 %v999
        %5125 = vmatpush1.msra.mxu0 %v998
        %5126 = vmatprep.subr.mxu0 %v1003
        %5127 = vmatpush1.msra.mxu0 %v1002
        %5128 = vmatprep.subr.mxu0 %v1007
        %5129 = vmatpush1.msra.mxu0 %v1006
        %5130 = vmatprep.subr.mxu0 %v1011
        %5131 = vmatpush1.msra.mxu0 %v1010
        %5132 = vmatprep.subr.mxu0 %v1015
        %5133 = vmatpush1.msra.mxu0 %v1014
        %5134 = vmatprep.subr.mxu0 %v1019
        %5135 = vmatpush1.msra.mxu0 %v1018
        %5136 = vmatprep.subr.mxu0 %v1023
        %5137 = vmatpush1.msra.mxu0 %v1022
        %5138 = vmatprep.subr.mxu0 %v1027
        %5139 = vmatpush1.msra.mxu0 %v1026
        %5140 = vmatprep.subr.mxu0 %v1031
        %5141 = vmatpush1.msra.mxu0 %v1030
        %5142 = vmatprep.subr.mxu0 %v1035
        %5143 = vmatpush1.msra.mxu0 %v1034
        %5144 = vmatprep.subr.mxu0 %v1039
        %5145 = vmatpush1.msra.mxu0 %v1038
        %5146 = vmatprep.subr.mxu0 %v1043
        %5147 = vmatpush1.msra.mxu0 %v1042
        %5148 = vmatprep.subr.mxu0 %v1047
        %5149 = vmatpush1.msra.mxu0 %v1046
        %5150 = vmatprep.subr.mxu0 %v1051
        %5151 = vmatpush1.msra.mxu0 %v1050
        %5152 = vmatprep.subr.mxu0 %v1055
        %5153 = vmatpush1.msra.mxu0 %v1054
        %5154 = vmatprep.subr.mxu0 %v1059
        %5155 = vmatpush1.msra.mxu0 %v1058
        %5156 = vmatprep.subr.mxu0 0.0
        %5157 = vmatpush1.msra.mxu0 0.0
        %5158 = vmatprep.subr.mxu0 0.0
        %5159 = vmatpush1.msra.mxu0 0.0
        %5160 = vmatprep.subr.mxu0 0.0
        %5161 = vmatpush1.msra.mxu0 0.0
        %5162 = vmatprep.subr.mxu0 0.0
        %5163 = vmatpush1.msra.mxu0 0.0
        %5164 = vmatprep.subr.mxu0 0.0
        %5165 = vmatpush1.msra.mxu0 0.0
        %5166 = vmatprep.subr.mxu0 0.0
        %5167 = vmatpush1.msra.mxu0 0.0
        %5168 = vmatprep.subr.mxu0 0.0
        %5169 = vmatpush1.msra.mxu0 0.0
        %5170 = vmatprep.subr.mxu0 0.0
        %5171 = vmatpush1.msra.mxu0 0.0
        %5172 = vmatprep.subr.mxu0 0.0
        %5173 = vmatpush1.msra.mxu0 0.0
        %5174 = vmatprep.subr.mxu0 0.0
        %5175 = vmatpush1.msra.mxu0 0.0
        %5176 = vmatprep.subr.mxu0 0.0
        %5177 = vmatpush1.msra.mxu0 0.0
        %5178 = vmatprep.subr.mxu0 0.0
        %5179 = vmatpush1.msra.mxu0 0.0
        %5180 = vmatprep.subr.mxu0 0.0
        %5181 = vmatpush1.msra.mxu0 0.0
        %5182 = vmatprep.subr.mxu0 0.0
        %5183 = vmatpush1.msra.mxu0 0.0
        %5184 = vmatprep.subr.mxu0 0.0
        %5185 = vmatpush1.msra.mxu0 0.0
        %5186 = vmatprep.subr.mxu0 0.0
        %5187 = vmatpush1.msra.mxu0 0.0
        %5188 = vmatprep.mubr.f32.mxu0 0.0
        %5189 = vmatmul.mubr.f32.gmra.mrb[0].mxu0 %v4717
        %v5190 = vpop.f32.mrb[0].mxu0
        %v5191 = vadd.f32 0.0, %v5190
        %v5192 = vpop.f32.mrb[0].mxu0
        %v5193 = vadd.f32 0.0, %v5192
        %5194 = vdwg.mxu0
        %5195 = vmatprep.subr.mxu0 %v1001
        %5196 = vmatpush1.msra.mxu0 %v1000
        %5197 = vmatprep.subr.mxu0 %v1005
        %5198 = vmatpush1.msra.mxu0 %v1004
        %5199 = vmatprep.subr.mxu0 %v1009
        %5200 = vmatpush1.msra.mxu0 %v1008
        %5201 = vmatprep.subr.mxu0 %v1013
        %5202 = vmatpush1.msra.mxu0 %v1012
        %5203 = vmatprep.subr.mxu0 %v1017
        %5204 = vmatpush1.msra.mxu0 %v1016
        %5205 = vmatprep.subr.mxu0 %v1021
        %5206 = vmatpush1.msra.mxu0 %v1020
        %5207 = vmatprep.subr.mxu0 %v1025
        %5208 = vmatpush1.msra.mxu0 %v1024
        %5209 = vmatprep.subr.mxu0 %v1029
        %5210 = vmatpush1.msra.mxu0 %v1028
        %5211 = vmatprep.subr.mxu0 %v1033
        %5212 = vmatpush1.msra.mxu0 %v1032
        %5213 = vmatprep.subr.mxu0 %v1037
        %5214 = vmatpush1.msra.mxu0 %v1036
        %5215 = vmatprep.subr.mxu0 %v1041
        %5216 = vmatpush1.msra.mxu0 %v1040
        %5217 = vmatprep.subr.mxu0 %v1045
        %5218 = vmatpush1.msra.mxu0 %v1044
        %5219 = vmatprep.subr.mxu0 %v1049
        %5220 = vmatpush1.msra.mxu0 %v1048
        %5221 = vmatprep.subr.mxu0 %v1053
        %5222 = vmatpush1.msra.mxu0 %v1052
        %5223 = vmatprep.subr.mxu0 %v1057
        %5224 = vmatpush1.msra.mxu0 %v1056
        %5225 = vmatprep.subr.mxu0 %v1061
        %5226 = vmatpush1.msra.mxu0 %v1060
        %5227 = vmatprep.subr.mxu0 0.0
        %5228 = vmatpush1.msra.mxu0 0.0
        %5229 = vmatprep.subr.mxu0 0.0
        %5230 = vmatpush1.msra.mxu0 0.0
        %5231 = vmatprep.subr.mxu0 0.0
        %5232 = vmatpush1.msra.mxu0 0.0
        %5233 = vmatprep.subr.mxu0 0.0
        %5234 = vmatpush1.msra.mxu0 0.0
        %5235 = vmatprep.subr.mxu0 0.0
        %5236 = vmatpush1.msra.mxu0 0.0
        %5237 = vmatprep.subr.mxu0 0.0
        %5238 = vmatpush1.msra.mxu0 0.0
        %5239 = vmatprep.subr.mxu0 0.0
        %5240 = vmatpush1.msra.mxu0 0.0
        %5241 = vmatprep.subr.mxu0 0.0
        %5242 = vmatpush1.msra.mxu0 0.0
        %5243 = vmatprep.subr.mxu0 0.0
        %5244 = vmatpush1.msra.mxu0 0.0
        %5245 = vmatprep.subr.mxu0 0.0
        %5246 = vmatpush1.msra.mxu0 0.0
        %5247 = vmatprep.subr.mxu0 0.0
        %5248 = vmatpush1.msra.mxu0 0.0
        %5249 = vmatprep.subr.mxu0 0.0
        %5250 = vmatpush1.msra.mxu0 0.0
        %5251 = vmatprep.subr.mxu0 0.0
        %5252 = vmatpush1.msra.mxu0 0.0
        %5253 = vmatprep.subr.mxu0 0.0
        %5254 = vmatpush1.msra.mxu0 0.0
        %5255 = vmatprep.subr.mxu0 0.0
        %5256 = vmatpush1.msra.mxu0 0.0
        %5257 = vmatprep.subr.mxu0 0.0
        %5258 = vmatpush1.msra.mxu0 0.0
        %5259 = vmatprep.mubr.f32.mxu0 0.0
        %5260 = vmatmul.mubr.f32.gmra.mrb[0].mxu0 %v4717
        %v5261 = vpop.f32.mrb[0].mxu0
        %v5262 = vadd.f32 0.0, %v5261
        %v5263 = vpop.f32.mrb[0].mxu0
        %v5264 = vadd.f32 0.0, %v5263
        %5265 = vdwg.mxu0
        %5266 = vmatprep.subr.mxu0 %v871
        %5267 = vmatpush1.msra.mxu0 %v870
        %5268 = vmatprep.subr.mxu0 %v875
        %5269 = vmatpush1.msra.mxu0 %v874
        %5270 = vmatprep.subr.mxu0 %v879
        %5271 = vmatpush1.msra.mxu0 %v878
        %5272 = vmatprep.subr.mxu0 %v883
        %5273 = vmatpush1.msra.mxu0 %v882
        %5274 = vmatprep.subr.mxu0 %v887
        %5275 = vmatpush1.msra.mxu0 %v886
        %5276 = vmatprep.subr.mxu0 %v891
        %5277 = vmatpush1.msra.mxu0 %v890
        %5278 = vmatprep.subr.mxu0 %v895
        %5279 = vmatpush1.msra.mxu0 %v894
        %5280 = vmatprep.subr.mxu0 %v899
        %5281 = vmatpush1.msra.mxu0 %v898
        %5282 = vmatprep.subr.mxu0 %v903
        %5283 = vmatpush1.msra.mxu0 %v902
        %5284 = vmatprep.subr.mxu0 %v907
        %5285 = vmatpush1.msra.mxu0 %v906
        %5286 = vmatprep.subr.mxu0 %v911
        %5287 = vmatpush1.msra.mxu0 %v910
        %5288 = vmatprep.subr.mxu0 %v915
        %5289 = vmatpush1.msra.mxu0 %v914
        %5290 = vmatprep.subr.mxu0 %v919
        %5291 = vmatpush1.msra.mxu0 %v918
        %5292 = vmatprep.subr.mxu0 %v923
        %5293 = vmatpush1.msra.mxu0 %v922
        %5294 = vmatprep.subr.mxu0 %v927
        %5295 = vmatpush1.msra.mxu0 %v926
        %5296 = vmatprep.subr.mxu0 %v931
        %5297 = vmatpush1.msra.mxu0 %v930
        %5298 = vmatprep.subr.mxu0 0.0
        %5299 = vmatpush1.msra.mxu0 0.0
        %5300 = vmatprep.subr.mxu0 0.0
        %5301 = vmatpush1.msra.mxu0 0.0
        %5302 = vmatprep.subr.mxu0 0.0
        %5303 = vmatpush1.msra.mxu0 0.0
        %5304 = vmatprep.subr.mxu0 0.0
        %5305 = vmatpush1.msra.mxu0 0.0
        %5306 = vmatprep.subr.mxu0 0.0
        %5307 = vmatpush1.msra.mxu0 0.0
        %5308 = vmatprep.subr.mxu0 0.0
        %5309 = vmatpush1.msra.mxu0 0.0
        %5310 = vmatprep.subr.mxu0 0.0
        %5311 = vmatpush1.msra.mxu0 0.0
        %5312 = vmatprep.subr.mxu0 0.0
        %5313 = vmatpush1.msra.mxu0 0.0
        %5314 = vmatprep.subr.mxu0 0.0
        %5315 = vmatpush1.msra.mxu0 0.0
        %5316 = vmatprep.subr.mxu0 0.0
        %5317 = vmatpush1.msra.mxu0 0.0
        %5318 = vmatprep.subr.mxu0 0.0
        %5319 = vmatpush1.msra.mxu0 0.0
        %5320 = vmatprep.subr.mxu0 0.0
        %5321 = vmatpush1.msra.mxu0 0.0
        %5322 = vmatprep.subr.mxu0 0.0
        %5323 = vmatpush1.msra.mxu0 0.0
        %5324 = vmatprep.subr.mxu0 0.0
        %5325 = vmatpush1.msra.mxu0 0.0
        %5326 = vmatprep.subr.mxu0 0.0
        %5327 = vmatpush1.msra.mxu0 0.0
        %5328 = vmatprep.subr.mxu0 0.0
        %5329 = vmatpush1.msra.mxu0 0.0
        %5330 = vmatprep.mubr.f32.mxu0 0.0
        %5331 = vmatmul.mubr.f32.gmra.mrb[0].mxu0 %v5123
        %v5332 = vpop.f32.mrb[0].mxu0
        %v5333 = vadd.f32 %v5191, %v5332
        %v5334 = vpop.f32.mrb[0].mxu0
        %v5335 = vadd.f32 %v5193, %v5334
        %5336 = vdwg.mxu0
        %5337 = vmatprep.subr.mxu0 %v873
        %5338 = vmatpush1.msra.mxu0 %v872
        %5339 = vmatprep.subr.mxu0 %v877
        %5340 = vmatpush1.msra.mxu0 %v876
        %5341 = vmatprep.subr.mxu0 %v881
        %5342 = vmatpush1.msra.mxu0 %v880
        %5343 = vmatprep.subr.mxu0 %v885
        %5344 = vmatpush1.msra.mxu0 %v884
        %5345 = vmatprep.subr.mxu0 %v889
        %5346 = vmatpush1.msra.mxu0 %v888
        %5347 = vmatprep.subr.mxu0 %v893
        %5348 = vmatpush1.msra.mxu0 %v892
        %5349 = vmatprep.subr.mxu0 %v897
        %5350 = vmatpush1.msra.mxu0 %v896
        %5351 = vmatprep.subr.mxu0 %v901
        %5352 = vmatpush1.msra.mxu0 %v900
        %5353 = vmatprep.subr.mxu0 %v905
        %5354 = vmatpush1.msra.mxu0 %v904
        %5355 = vmatprep.subr.mxu0 %v909
        %5356 = vmatpush1.msra.mxu0 %v908
        %5357 = vmatprep.subr.mxu0 %v913
        %5358 = vmatpush1.msra.mxu0 %v912
        %5359 = vmatprep.subr.mxu0 %v917
        %5360 = vmatpush1.msra.mxu0 %v916
        %5361 = vmatprep.subr.mxu0 %v921
        %5362 = vmatpush1.msra.mxu0 %v920
        %5363 = vmatprep.subr.mxu0 %v925
        %5364 = vmatpush1.msra.mxu0 %v924
        %5365 = vmatprep.subr.mxu0 %v929
        %5366 = vmatpush1.msra.mxu0 %v928
        %5367 = vmatprep.subr.mxu0 %v933
        %5368 = vmatpush1.msra.mxu0 %v932
        %5369 = vmatprep.subr.mxu0 0.0
        %5370 = vmatpush1.msra.mxu0 0.0
        %5371 = vmatprep.subr.mxu0 0.0
        %5372 = vmatpush1.msra.mxu0 0.0
        %5373 = vmatprep.subr.mxu0 0.0
        %5374 = vmatpush1.msra.mxu0 0.0
        %5375 = vmatprep.subr.mxu0 0.0
        %5376 = vmatpush1.msra.mxu0 0.0
        %5377 = vmatprep.subr.mxu0 0.0
        %5378 = vmatpush1.msra.mxu0 0.0
        %5379 = vmatprep.subr.mxu0 0.0
        %5380 = vmatpush1.msra.mxu0 0.0
        %5381 = vmatprep.subr.mxu0 0.0
        %5382 = vmatpush1.msra.mxu0 0.0
        %5383 = vmatprep.subr.mxu0 0.0
        %5384 = vmatpush1.msra.mxu0 0.0
        %5385 = vmatprep.subr.mxu0 0.0
        %5386 = vmatpush1.msra.mxu0 0.0
        %5387 = vmatprep.subr.mxu0 0.0
        %5388 = vmatpush1.msra.mxu0 0.0
        %5389 = vmatprep.subr.mxu0 0.0
        %5390 = vmatpush1.msra.mxu0 0.0
        %5391 = vmatprep.subr.mxu0 0.0
        %5392 = vmatpush1.msra.mxu0 0.0
        %5393 = vmatprep.subr.mxu0 0.0
        %5394 = vmatpush1.msra.mxu0 0.0
        %5395 = vmatprep.subr.mxu0 0.0
        %5396 = vmatpush1.msra.mxu0 0.0
        %5397 = vmatprep.subr.mxu0 0.0
        %5398 = vmatpush1.msra.mxu0 0.0
        %5399 = vmatprep.subr.mxu0 0.0
        %5400 = vmatpush1.msra.mxu0 0.0
        %5401 = vmatprep.mubr.f32.mxu0 0.0
        %5402 = vmatmul.mubr.f32.gmra.mrb[0].mxu0 %v5123
        %v5403 = vpop.f32.mrb[0].mxu0
        %v5404 = vadd.f32 %v5262, %v5403
        %v5405 = vpop.f32.mrb[0].mxu0
        %v5406 = vadd.f32 %v5264, %v5405
        %5407 = vdwg.mxu0
        %v5408 = vadd.f32 %v5333, %v1801
        %v5409 = vadd.f32 %v5335, %v1805
        %v5410 = vadd.f32 %v5404, %v1809
        %v5411 = vadd.f32 %v5406, %v1813
        %v5412 = vxor.u32 %v5408, 2147483648
        %v5413 = vmul.f32 %v5412, 1.442695
        %v5414 = vpow.pop %v5413
        %v5415 = vadd.f32 %v5414, 1.0
        %v5416 = vrcp.pop %v5415
        %v5417 = vmul.f32 1.0, %v5416
        %v5418 = vxor.u32 %v5409, 2147483648
        %v5419 = vmul.f32 %v5418, 1.442695
        %v5420 = vpow.pop %v5419
        %v5421 = vadd.f32 %v5420, 1.0
        %v5422 = vrcp.pop %v5421
        %v5423 = vmul.f32 1.0, %v5422
        %v5424 = vtanh.pop %v5410
        %v5425 = vxor.u32 %v5411, 2147483648
        %v5426 = vmul.f32 %v5425, 1.442695
        %v5427 = vpow.pop %v5426
        %v5428 = vadd.f32 %v5427, 1.0
        %v5429 = vrcp.pop %v5428
        %v5430 = vmul.f32 1.0, %v5429
        %v5431 = vmul.f32 %v5423, %v4715
        %v5432 = vmul.f32 %v5417, %v5424
        %v5433 = vadd.f32 %v5431, %v5432
        %v5434 = vtanh.pop %v5433
        %v5435 = vmul.f32 %v5430, %v5434
        %5436 = vset.pattern.permute.xlu0 6
        %5437 = vperm.xlu0 %5436, %v771
        %v5438 = vpop.permute.xlu0 %5437
        %vm5439 = vcmp.eq.s32.totalorder %v1071, %v5438
        %vm5440 = vcmp.eq.s32.totalorder %v1072, %v5438
        %v5441 = vsel %vm5439, 1, 0
        %v5442 = vsel %vm5440, 1, 0
        %v5443 = vcvt.s32.f32 %v5441
        %v5444 = vcvt.s32.f32 %v5442
        %5445 = vmatprep.subr.mxu0 0.0
        %5446 = vmatpush1.msra.mxu0 %v772
        %5447 = vmatprep.subr.mxu0 0.0
        %5448 = vmatpush1.msra.mxu0 %v773
        %5449 = vmatprep.subr.mxu0 0.0
        %5450 = vmatpush1.msra.mxu0 %v774
        %5451 = vmatprep.subr.mxu0 0.0
        %5452 = vmatpush1.msra.mxu0 %v775
        %5453 = vmatprep.subr.mxu0 0.0
        %5454 = vmatpush1.msra.mxu0 %v776
        %5455 = vmatprep.subr.mxu0 0.0
        %5456 = vmatpush1.msra.mxu0 %v777
        %5457 = vmatprep.subr.mxu0 0.0
        %5458 = vmatpush1.msra.mxu0 %v778
        %5459 = vmatprep.subr.mxu0 0.0
        %5460 = vmatpush1.msra.mxu0 %v779
        %5461 = vmatprep.subr.mxu0 0.0
        %5462 = vmatpush1.msra.mxu0 %v780
        %5463 = vmatprep.subr.mxu0 0.0
        %5464 = vmatpush1.msra.mxu0 %v781
        %5465 = vmatprep.subr.mxu0 0.0
        %5466 = vmatpush1.msra.mxu0 %v782
        %5467 = vmatprep.subr.mxu0 0.0
        %5468 = vmatpush1.msra.mxu0 %v783
        %5469 = vmatprep.subr.mxu0 0.0
        %5470 = vmatpush1.msra.mxu0 %v784
        %5471 = vmatprep.subr.mxu0 0.0
        %5472 = vmatpush1.msra.mxu0 %v785
        %5473 = vmatprep.subr.mxu0 0.0
        %5474 = vmatpush1.msra.mxu0 %v786
        %5475 = vmatprep.subr.mxu0 0.0
        %5476 = vmatpush1.msra.mxu0 %v787
        %5477 = vmatprep.subr.mxu0 0.0
        %5478 = vmatpush1.msra.mxu0 %v788
        %5479 = vmatprep.subr.mxu0 0.0
        %5480 = vmatpush1.msra.mxu0 %v789
        %5481 = vmatprep.subr.mxu0 0.0
        %5482 = vmatpush1.msra.mxu0 %v790
        %5483 = vmatprep.subr.mxu0 0.0
        %5484 = vmatpush1.msra.mxu0 %v791
        %5485 = vmatprep.subr.mxu0 0.0
        %5486 = vmatpush1.msra.mxu0 %v792
        %5487 = vmatprep.subr.mxu0 0.0
        %5488 = vmatpush1.msra.mxu0 %v793
        %5489 = vmatprep.subr.mxu0 0.0
        %5490 = vmatpush1.msra.mxu0 %v794
        %5491 = vmatprep.subr.mxu0 0.0
        %5492 = vmatpush1.msra.mxu0 %v795
        %5493 = vmatprep.subr.mxu0 0.0
        %5494 = vmatpush1.msra.mxu0 %v796
        %5495 = vmatprep.subr.mxu0 0.0
        %5496 = vmatpush1.msra.mxu0 %v797
        %5497 = vmatprep.subr.mxu0 0.0
        %5498 = vmatpush1.msra.mxu0 %v798
        %5499 = vmatprep.subr.mxu0 0.0
        %5500 = vmatpush1.msra.mxu0 %v799
        %5501 = vmatprep.subr.mxu0 0.0
        %5502 = vmatpush1.msra.mxu0 %v800
        %5503 = vmatprep.subr.mxu0 0.0
        %5504 = vmatpush1.msra.mxu0 %v801
        %5505 = vmatprep.subr.mxu0 0.0
        %5506 = vmatpush1.msra.mxu0 %v802
        %5507 = vmatprep.subr.mxu0 0.0
        %5508 = vmatpush1.msra.mxu0 %v803
        %5509 = vmatprep.mubr.f32.mxu0 %v5444
        %5510 = vmatmul.mubr.f32.gmra.mrb[0].mxu0 %v5443
        %v5511 = vpop.f32.mrb[0].mxu0
        %v5512 = vadd.f32 0.0, %v5511
        %v5513 = vpop.f32.mrb[0].mxu0
        %5514 = vdwg.mxu0
        %5515 = vadd.xlane.f32.xlu0 %v5512
        %v5516 = vpop.xlane.xlu0 %5515
        %v5517 = vmul.f32 %v5516, %v1154
        %v5518 = vmul.f32 %v5512, %v5512
        %5519 = vadd.xlane.f32.xlu0 %v5518
        %v5520 = vpop.xlane.xlu0 %5519
        %v5521 = vmul.f32 %v5520, %v1154
        %v5522 = vmul.f32 %v5517, %v5517
        %v5523 = vsub.f32 %v5521, %v5522
        %v5524 = vsub.f32 %v5512, %v5517
        %v5525 = vadd.f32 %v5523, 1e-05
        %v5526 = vrsqrt.pop %v5525
        %v5527 = vmul.f32 %v5524, %v5526
        %v5528 = vmul.f32 %v5527, %v1170
        %v5529 = vadd.f32 %v5528, %v1177
        %5530 = vmatprep.subr.mxu0 %v935
        %5531 = vmatpush1.msra.mxu0 %v934
        %5532 = vmatprep.subr.mxu0 %v939
        %5533 = vmatpush1.msra.mxu0 %v938
        %5534 = vmatprep.subr.mxu0 %v943
        %5535 = vmatpush1.msra.mxu0 %v942
        %5536 = vmatprep.subr.mxu0 %v947
        %5537 = vmatpush1.msra.mxu0 %v946
        %5538 = vmatprep.subr.mxu0 %v951
        %5539 = vmatpush1.msra.mxu0 %v950
        %5540 = vmatprep.subr.mxu0 %v955
        %5541 = vmatpush1.msra.mxu0 %v954
        %5542 = vmatprep.subr.mxu0 %v959
        %5543 = vmatpush1.msra.mxu0 %v958
        %5544 = vmatprep.subr.mxu0 %v963
        %5545 = vmatpush1.msra.mxu0 %v962
        %5546 = vmatprep.subr.mxu0 %v967
        %5547 = vmatpush1.msra.mxu0 %v966
        %5548 = vmatprep.subr.mxu0 %v971
        %5549 = vmatpush1.msra.mxu0 %v970
        %5550 = vmatprep.subr.mxu0 %v975
        %5551 = vmatpush1.msra.mxu0 %v974
        %5552 = vmatprep.subr.mxu0 %v979
        %5553 = vmatpush1.msra.mxu0 %v978
        %5554 = vmatprep.subr.mxu0 %v983
        %5555 = vmatpush1.msra.mxu0 %v982
        %5556 = vmatprep.subr.mxu0 %v987
        %5557 = vmatpush1.msra.mxu0 %v986
        %5558 = vmatprep.subr.mxu0 %v991
        %5559 = vmatpush1.msra.mxu0 %v990
        %5560 = vmatprep.subr.mxu0 %v995
        %5561 = vmatpush1.msra.mxu0 %v994
        %5562 = vmatprep.subr.mxu0 0.0
        %5563 = vmatpush1.msra.mxu0 0.0
        %5564 = vmatprep.subr.mxu0 0.0
        %5565 = vmatpush1.msra.mxu0 0.0
        %5566 = vmatprep.subr.mxu0 0.0
        %5567 = vmatpush1.msra.mxu0 0.0
        %5568 = vmatprep.subr.mxu0 0.0
        %5569 = vmatpush1.msra.mxu0 0.0
        %5570 = vmatprep.subr.mxu0 0.0
        %5571 = vmatpush1.msra.mxu0 0.0
        %5572 = vmatprep.subr.mxu0 0.0
        %5573 = vmatpush1.msra.mxu0 0.0
        %5574 = vmatprep.subr.mxu0 0.0
        %5575 = vmatpush1.msra.mxu0 0.0
        %5576 = vmatprep.subr.mxu0 0.0
        %5577 = vmatpush1.msra.mxu0 0.0
        %5578 = vmatprep.subr.mxu0 0.0
        %5579 = vmatpush1.msra.mxu0 0.0
        %5580 = vmatprep.subr.mxu0 0.0
        %5581 = vmatpush1.msra.mxu0 0.0
        %5582 = vmatprep.subr.mxu0 0.0
        %5583 = vmatpush1.msra.mxu0 0.0
        %5584 = vmatprep.subr.mxu0 0.0
        %5585 = vmatpush1.msra.mxu0 0.0
        %5586 = vmatprep.subr.mxu0 0.0
        %5587 = vmatpush1.msra.mxu0 0.0
        %5588 = vmatprep.subr.mxu0 0.0
        %5589 = vmatpush1.msra.mxu0 0.0
        %5590 = vmatprep.subr.mxu0 0.0
        %5591 = vmatpush1.msra.mxu0 0.0
        %5592 = vmatprep.subr.mxu0 0.0
        %5593 = vmatpush1.msra.mxu0 0.0
        %5594 = vmatprep.mubr.f32.mxu0 0.0
        %5595 = vmatmul.mubr.f32.gmra.mrb[0].mxu0 %v5123
        %v5596 = vpop.f32.mrb[0].mxu0
        %v5597 = vadd.f32 0.0, %v5596
        %v5598 = vpop.f32.mrb[0].mxu0
        %v5599 = vadd.f32 0.0, %v5598
        %5600 = vdwg.mxu0
        %5601 = vmatprep.subr.mxu0 %v937
        %5602 = vmatpush1.msra.mxu0 %v936
        %5603 = vmatprep.subr.mxu0 %v941
        %5604 = vmatpush1.msra.mxu0 %v940
        %5605 = vmatprep.subr.mxu0 %v945
        %5606 = vmatpush1.msra.mxu0 %v944
        %5607 = vmatprep.subr.mxu0 %v949
        %5608 = vmatpush1.msra.mxu0 %v948
        %5609 = vmatprep.subr.mxu0 %v953
        %5610 = vmatpush1.msra.mxu0 %v952
        %5611 = vmatprep.subr.mxu0 %v957
        %5612 = vmatpush1.msra.mxu0 %v956
        %5613 = vmatprep.subr.mxu0 %v961
        %5614 = vmatpush1.msra.mxu0 %v960
        %5615 = vmatprep.subr.mxu0 %v965
        %5616 = vmatpush1.msra.mxu0 %v964
        %5617 = vmatprep.subr.mxu0 %v969
        %5618 = vmatpush1.msra.mxu0 %v968
        %5619 = vmatprep.subr.mxu0 %v973
        %5620 = vmatpush1.msra.mxu0 %v972
        %5621 = vmatprep.subr.mxu0 %v977
        %5622 = vmatpush1.msra.mxu0 %v976
        %5623 = vmatprep.subr.mxu0 %v981
        %5624 = vmatpush1.msra.mxu0 %v980
        %5625 = vmatprep.subr.mxu0 %v985
        %5626 = vmatpush1.msra.mxu0 %v984
        %5627 = vmatprep.subr.mxu0 %v989
        %5628 = vmatpush1.msra.mxu0 %v988
        %5629 = vmatprep.subr.mxu0 %v993
        %5630 = vmatpush1.msra.mxu0 %v992
        %5631 = vmatprep.subr.mxu0 %v997
        %5632 = vmatpush1.msra.mxu0 %v996
        %5633 = vmatprep.subr.mxu0 0.0
        %5634 = vmatpush1.msra.mxu0 0.0
        %5635 = vmatprep.subr.mxu0 0.0
        %5636 = vmatpush1.msra.mxu0 0.0
        %5637 = vmatprep.subr.mxu0 0.0
        %5638 = vmatpush1.msra.mxu0 0.0
        %5639 = vmatprep.subr.mxu0 0.0
        %5640 = vmatpush1.msra.mxu0 0.0
        %5641 = vmatprep.subr.mxu0 0.0
        %5642 = vmatpush1.msra.mxu0 0.0
        %5643 = vmatprep.subr.mxu0 0.0
        %5644 = vmatpush1.msra.mxu0 0.0
        %5645 = vmatprep.subr.mxu0 0.0
        %5646 = vmatpush1.msra.mxu0 0.0
        %5647 = vmatprep.subr.mxu0 0.0
        %5648 = vmatpush1.msra.mxu0 0.0
        %5649 = vmatprep.subr.mxu0 0.0
        %5650 = vmatpush1.msra.mxu0 0.0
        %5651 = vmatprep.subr.mxu0 0.0
        %5652 = vmatpush1.msra.mxu0 0.0
        %5653 = vmatprep.subr.mxu0 0.0
        %5654 = vmatpush1.msra.mxu0 0.0
        %5655 = vmatprep.subr.mxu0 0.0
        %5656 = vmatpush1.msra.mxu0 0.0
        %5657 = vmatprep.subr.mxu0 0.0
        %5658 = vmatpush1.msra.mxu0 0.0
        %5659 = vmatprep.subr.mxu0 0.0
        %5660 = vmatpush1.msra.mxu0 0.0
        %5661 = vmatprep.subr.mxu0 0.0
        %5662 = vmatpush1.msra.mxu0 0.0
        %5663 = vmatprep.subr.mxu0 0.0
        %5664 = vmatpush1.msra.mxu0 0.0
        %5665 = vmatprep.mubr.f32.mxu0 0.0
        %5666 = vmatmul.mubr.f32.gmra.mrb[0].mxu0 %v5123
        %v5667 = vpop.f32.mrb[0].mxu0
        %v5668 = vadd.f32 0.0, %v5667
        %v5669 = vpop.f32.mrb[0].mxu0
        %v5670 = vadd.f32 0.0, %v5669
        %5671 = vdwg.mxu0
        %5672 = vmatprep.subr.mxu0 %v807
        %5673 = vmatpush1.msra.mxu0 %v806
        %5674 = vmatprep.subr.mxu0 %v811
        %5675 = vmatpush1.msra.mxu0 %v810
        %5676 = vmatprep.subr.mxu0 %v815
        %5677 = vmatpush1.msra.mxu0 %v814
        %5678 = vmatprep.subr.mxu0 %v819
        %5679 = vmatpush1.msra.mxu0 %v818
        %5680 = vmatprep.subr.mxu0 %v823
        %5681 = vmatpush1.msra.mxu0 %v822
        %5682 = vmatprep.subr.mxu0 %v827
        %5683 = vmatpush1.msra.mxu0 %v826
        %5684 = vmatprep.subr.mxu0 %v831
        %5685 = vmatpush1.msra.mxu0 %v830
        %5686 = vmatprep.subr.mxu0 %v835
        %5687 = vmatpush1.msra.mxu0 %v834
        %5688 = vmatprep.subr.mxu0 %v839
        %5689 = vmatpush1.msra.mxu0 %v838
        %5690 = vmatprep.subr.mxu0 %v843
        %5691 = vmatpush1.msra.mxu0 %v842
        %5692 = vmatprep.subr.mxu0 %v847
        %5693 = vmatpush1.msra.mxu0 %v846
        %5694 = vmatprep.subr.mxu0 %v851
        %5695 = vmatpush1.msra.mxu0 %v850
        %5696 = vmatprep.subr.mxu0 %v855
        %5697 = vmatpush1.msra.mxu0 %v854
        %5698 = vmatprep.subr.mxu0 %v859
        %5699 = vmatpush1.msra.mxu0 %v858
        %5700 = vmatprep.subr.mxu0 %v863
        %5701 = vmatpush1.msra.mxu0 %v862
        %5702 = vmatprep.subr.mxu0 %v867
        %5703 = vmatpush1.msra.mxu0 %v866
        %5704 = vmatprep.subr.mxu0 0.0
        %5705 = vmatpush1.msra.mxu0 0.0
        %5706 = vmatprep.subr.mxu0 0.0
        %5707 = vmatpush1.msra.mxu0 0.0
        %5708 = vmatprep.subr.mxu0 0.0
        %5709 = vmatpush1.msra.mxu0 0.0
        %5710 = vmatprep.subr.mxu0 0.0
        %5711 = vmatpush1.msra.mxu0 0.0
        %5712 = vmatprep.subr.mxu0 0.0
        %5713 = vmatpush1.msra.mxu0 0.0
        %5714 = vmatprep.subr.mxu0 0.0
        %5715 = vmatpush1.msra.mxu0 0.0
        %5716 = vmatprep.subr.mxu0 0.0
        %5717 = vmatpush1.msra.mxu0 0.0
        %5718 = vmatprep.subr.mxu0 0.0
        %5719 = vmatpush1.msra.mxu0 0.0
        %5720 = vmatprep.subr.mxu0 0.0
        %5721 = vmatpush1.msra.mxu0 0.0
        %5722 = vmatprep.subr.mxu0 0.0
        %5723 = vmatpush1.msra.mxu0 0.0
        %5724 = vmatprep.subr.mxu0 0.0
        %5725 = vmatpush1.msra.mxu0 0.0
        %5726 = vmatprep.subr.mxu0 0.0
        %5727 = vmatpush1.msra.mxu0 0.0
        %5728 = vmatprep.subr.mxu0 0.0
        %5729 = vmatpush1.msra.mxu0 0.0
        %5730 = vmatprep.subr.mxu0 0.0
        %5731 = vmatpush1.msra.mxu0 0.0
        %5732 = vmatprep.subr.mxu0 0.0
        %5733 = vmatpush1.msra.mxu0 0.0
        %5734 = vmatprep.subr.mxu0 0.0
        %5735 = vmatpush1.msra.mxu0 0.0
        %5736 = vmatprep.mubr.f32.mxu0 0.0
        %5737 = vmatmul.mubr.f32.gmra.mrb[0].mxu0 %v5529
        %v5738 = vpop.f32.mrb[0].mxu0
        %v5739 = vadd.f32 %v5597, %v5738
        %v5740 = vpop.f32.mrb[0].mxu0
        %v5741 = vadd.f32 %v5599, %v5740
        %5742 = vdwg.mxu0
        %5743 = vmatprep.subr.mxu0 %v809
        %5744 = vmatpush1.msra.mxu0 %v808
        %5745 = vmatprep.subr.mxu0 %v813
        %5746 = vmatpush1.msra.mxu0 %v812
        %5747 = vmatprep.subr.mxu0 %v817
        %5748 = vmatpush1.msra.mxu0 %v816
        %5749 = vmatprep.subr.mxu0 %v821
        %5750 = vmatpush1.msra.mxu0 %v820
        %5751 = vmatprep.subr.mxu0 %v825
        %5752 = vmatpush1.msra.mxu0 %v824
        %5753 = vmatprep.subr.mxu0 %v829
        %5754 = vmatpush1.msra.mxu0 %v828
        %5755 = vmatprep.subr.mxu0 %v833
        %5756 = vmatpush1.msra.mxu0 %v832
        %5757 = vmatprep.subr.mxu0 %v837
        %5758 = vmatpush1.msra.mxu0 %v836
        %5759 = vmatprep.subr.mxu0 %v841
        %5760 = vmatpush1.msra.mxu0 %v840
        %5761 = vmatprep.subr.mxu0 %v845
        %5762 = vmatpush1.msra.mxu0 %v844
        %5763 = vmatprep.subr.mxu0 %v849
        %5764 = vmatpush1.msra.mxu0 %v848
        %5765 = vmatprep.subr.mxu0 %v853
        %5766 = vmatpush1.msra.mxu0 %v852
        %5767 = vmatprep.subr.mxu0 %v857
        %5768 = vmatpush1.msra.mxu0 %v856
        %5769 = vmatprep.subr.mxu0 %v861
        %5770 = vmatpush1.msra.mxu0 %v860
        %5771 = vmatprep.subr.mxu0 %v865
        %5772 = vmatpush1.msra.mxu0 %v864
        %5773 = vmatprep.subr.mxu0 %v869
        %5774 = vmatpush1.msra.mxu0 %v868
        %5775 = vmatprep.subr.mxu0 0.0
        %5776 = vmatpush1.msra.mxu0 0.0
        %5777 = vmatprep.subr.mxu0 0.0
        %5778 = vmatpush1.msra.mxu0 0.0
        %5779 = vmatprep.subr.mxu0 0.0
        %5780 = vmatpush1.msra.mxu0 0.0
        %5781 = vmatprep.subr.mxu0 0.0
        %5782 = vmatpush1.msra.mxu0 0.0
        %5783 = vmatprep.subr.mxu0 0.0
        %5784 = vmatpush1.msra.mxu0 0.0
        %5785 = vmatprep.subr.mxu0 0.0
        %5786 = vmatpush1.msra.mxu0 0.0
        %5787 = vmatprep.subr.mxu0 0.0
        %5788 = vmatpush1.msra.mxu0 0.0
        %5789 = vmatprep.subr.mxu0 0.0
        %5790 = vmatpush1.msra.mxu0 0.0
        %5791 = vmatprep.subr.mxu0 0.0
        %5792 = vmatpush1.msra.mxu0 0.0
        %5793 = vmatprep.subr.mxu0 0.0
        %5794 = vmatpush1.msra.mxu0 0.0
        %5795 = vmatprep.subr.mxu0 0.0
        %5796 = vmatpush1.msra.mxu0 0.0
        %5797 = vmatprep.subr.mxu0 0.0
        %5798 = vmatpush1.msra.mxu0 0.0
        %5799 = vmatprep.subr.mxu0 0.0
        %5800 = vmatpush1.msra.mxu0 0.0
        %5801 = vmatprep.subr.mxu0 0.0
        %5802 = vmatpush1.msra.mxu0 0.0
        %5803 = vmatprep.subr.mxu0 0.0
        %5804 = vmatpush1.msra.mxu0 0.0
        %5805 = vmatprep.subr.mxu0 0.0
        %5806 = vmatpush1.msra.mxu0 0.0
        %5807 = vmatprep.mubr.f32.mxu0 0.0
        %5808 = vmatmul.mubr.f32.gmra.mrb[0].mxu0 %v5529
        %v5809 = vpop.f32.mrb[0].mxu0
        %v5810 = vadd.f32 %v5668, %v5809
        %v5811 = vpop.f32.mrb[0].mxu0
        %v5812 = vadd.f32 %v5670, %v5811
        %5813 = vdwg.mxu0
        %v5814 = vadd.f32 %v5739, %v1468
        %v5815 = vadd.f32 %v5741, %v1472
        %v5816 = vadd.f32 %v5810, %v1476
        %v5817 = vadd.f32 %v5812, %v1480
        %v5818 = vxor.u32 %v5814, 2147483648
        %v5819 = vmul.f32 %v5818, 1.442695
        %v5820 = vpow.pop %v5819
        %v5821 = vadd.f32 %v5820, 1.0
        %v5822 = vrcp.pop %v5821
        %v5823 = vmul.f32 1.0, %v5822
        %v5824 = vxor.u32 %v5815, 2147483648
        %v5825 = vmul.f32 %v5824, 1.442695
        %v5826 = vpow.pop %v5825
        %v5827 = vadd.f32 %v5826, 1.0
        %v5828 = vrcp.pop %v5827
        %v5829 = vmul.f32 1.0, %v5828
        %v5830 = vtanh.pop %v5816
        %v5831 = vxor.u32 %v5817, 2147483648
        %v5832 = vmul.f32 %v5831, 1.442695
        %v5833 = vpow.pop %v5832
        %v5834 = vadd.f32 %v5833, 1.0
        %v5835 = vrcp.pop %v5834
        %v5836 = vmul.f32 1.0, %v5835
        %v5837 = vmul.f32 %v5829, %v5121
        %v5838 = vmul.f32 %v5823, %v5830
        %v5839 = vadd.f32 %v5837, %v5838
        %v5840 = vtanh.pop %v5839
        %v5841 = vmul.f32 %v5836, %v5840
        %5842 = vmatprep.subr.mxu0 %v999
        %5843 = vmatpush1.msra.mxu0 %v998
        %5844 = vmatprep.subr.mxu0 %v1003
        %5845 = vmatpush1.msra.mxu0 %v1002
        %5846 = vmatprep.subr.mxu0 %v1007
        %5847 = vmatpush1.msra.mxu0 %v1006
        %5848 = vmatprep.subr.mxu0 %v1011
        %5849 = vmatpush1.msra.mxu0 %v1010
        %5850 = vmatprep.subr.mxu0 %v1015
        %5851 = vmatpush1.msra.mxu0 %v1014
        %5852 = vmatprep.subr.mxu0 %v1019
        %5853 = vmatpush1.msra.mxu0 %v1018
        %5854 = vmatprep.subr.mxu0 %v1023
        %5855 = vmatpush1.msra.mxu0 %v1022
        %5856 = vmatprep.subr.mxu0 %v1027
        %5857 = vmatpush1.msra.mxu0 %v1026
        %5858 = vmatprep.subr.mxu0 %v1031
        %5859 = vmatpush1.msra.mxu0 %v1030
        %5860 = vmatprep.subr.mxu0 %v1035
        %5861 = vmatpush1.msra.mxu0 %v1034
        %5862 = vmatprep.subr.mxu0 %v1039
        %5863 = vmatpush1.msra.mxu0 %v1038
        %5864 = vmatprep.subr.mxu0 %v1043
        %5865 = vmatpush1.msra.mxu0 %v1042
        %5866 = vmatprep.subr.mxu0 %v1047
        %5867 = vmatpush1.msra.mxu0 %v1046
        %5868 = vmatprep.subr.mxu0 %v1051
        %5869 = vmatpush1.msra.mxu0 %v1050
        %5870 = vmatprep.subr.mxu0 %v1055
        %5871 = vmatpush1.msra.mxu0 %v1054
        %5872 = vmatprep.subr.mxu0 %v1059
        %5873 = vmatpush1.msra.mxu0 %v1058
        %5874 = vmatprep.subr.mxu0 0.0
        %5875 = vmatpush1.msra.mxu0 0.0
        %5876 = vmatprep.subr.mxu0 0.0
        %5877 = vmatpush1.msra.mxu0 0.0
        %5878 = vmatprep.subr.mxu0 0.0
        %5879 = vmatpush1.msra.mxu0 0.0
        %5880 = vmatprep.subr.mxu0 0.0
        %5881 = vmatpush1.msra.mxu0 0.0
        %5882 = vmatprep.subr.mxu0 0.0
        %5883 = vmatpush1.msra.mxu0 0.0
        %5884 = vmatprep.subr.mxu0 0.0
        %5885 = vmatpush1.msra.mxu0 0.0
        %5886 = vmatprep.subr.mxu0 0.0
        %5887 = vmatpush1.msra.mxu0 0.0
        %5888 = vmatprep.subr.mxu0 0.0
        %5889 = vmatpush1.msra.mxu0 0.0
        %5890 = vmatprep.subr.mxu0 0.0
        %5891 = vmatpush1.msra.mxu0 0.0
        %5892 = vmatprep.subr.mxu0 0.0
        %5893 = vmatpush1.msra.mxu0 0.0
        %5894 = vmatprep.subr.mxu0 0.0
        %5895 = vmatpush1.msra.mxu0 0.0
        %5896 = vmatprep.subr.mxu0 0.0
        %5897 = vmatpush1.msra.mxu0 0.0
        %5898 = vmatprep.subr.mxu0 0.0
        %5899 = vmatpush1.msra.mxu0 0.0
        %5900 = vmatprep.subr.mxu0 0.0
        %5901 = vmatpush1.msra.mxu0 0.0
        %5902 = vmatprep.subr.mxu0 0.0
        %5903 = vmatpush1.msra.mxu0 0.0
        %5904 = vmatprep.subr.mxu0 0.0
        %5905 = vmatpush1.msra.mxu0 0.0
        %5906 = vmatprep.mubr.f32.mxu0 0.0
        %5907 = vmatmul.mubr.f32.gmra.mrb[0].mxu0 %v5435
        %v5908 = vpop.f32.mrb[0].mxu0
        %v5909 = vadd.f32 0.0, %v5908
        %v5910 = vpop.f32.mrb[0].mxu0
        %v5911 = vadd.f32 0.0, %v5910
        %5912 = vdwg.mxu0
        %5913 = vmatprep.subr.mxu0 %v1001
        %5914 = vmatpush1.msra.mxu0 %v1000
        %5915 = vmatprep.subr.mxu0 %v1005
        %5916 = vmatpush1.msra.mxu0 %v1004
        %5917 = vmatprep.subr.mxu0 %v1009
        %5918 = vmatpush1.msra.mxu0 %v1008
        %5919 = vmatprep.subr.mxu0 %v1013
        %5920 = vmatpush1.msra.mxu0 %v1012
        %5921 = vmatprep.subr.mxu0 %v1017
        %5922 = vmatpush1.msra.mxu0 %v1016
        %5923 = vmatprep.subr.mxu0 %v1021
        %5924 = vmatpush1.msra.mxu0 %v1020
        %5925 = vmatprep.subr.mxu0 %v1025
        %5926 = vmatpush1.msra.mxu0 %v1024
        %5927 = vmatprep.subr.mxu0 %v1029
        %5928 = vmatpush1.msra.mxu0 %v1028
        %5929 = vmatprep.subr.mxu0 %v1033
        %5930 = vmatpush1.msra.mxu0 %v1032
        %5931 = vmatprep.subr.mxu0 %v1037
        %5932 = vmatpush1.msra.mxu0 %v1036
        %5933 = vmatprep.subr.mxu0 %v1041
        %5934 = vmatpush1.msra.mxu0 %v1040
        %5935 = vmatprep.subr.mxu0 %v1045
        %5936 = vmatpush1.msra.mxu0 %v1044
        %5937 = vmatprep.subr.mxu0 %v1049
        %5938 = vmatpush1.msra.mxu0 %v1048
        %5939 = vmatprep.subr.mxu0 %v1053
        %5940 = vmatpush1.msra.mxu0 %v1052
        %5941 = vmatprep.subr.mxu0 %v1057
        %5942 = vmatpush1.msra.mxu0 %v1056
        %5943 = vmatprep.subr.mxu0 %v1061
        %5944 = vmatpush1.msra.mxu0 %v1060
        %5945 = vmatprep.subr.mxu0 0.0
        %5946 = vmatpush1.msra.mxu0 0.0
        %5947 = vmatprep.subr.mxu0 0.0
        %5948 = vmatpush1.msra.mxu0 0.0
        %5949 = vmatprep.subr.mxu0 0.0
        %5950 = vmatpush1.msra.mxu0 0.0
        %5951 = vmatprep.subr.mxu0 0.0
        %5952 = vmatpush1.msra.mxu0 0.0
        %5953 = vmatprep.subr.mxu0 0.0
        %5954 = vmatpush1.msra.mxu0 0.0
        %5955 = vmatprep.subr.mxu0 0.0
        %5956 = vmatpush1.msra.mxu0 0.0
        %5957 = vmatprep.subr.mxu0 0.0
        %5958 = vmatpush1.msra.mxu0 0.0
        %5959 = vmatprep.subr.mxu0 0.0
        %5960 = vmatpush1.msra.mxu0 0.0
        %5961 = vmatprep.subr.mxu0 0.0
        %5962 = vmatpush1.msra.mxu0 0.0
        %5963 = vmatprep.subr.mxu0 0.0
        %5964 = vmatpush1.msra.mxu0 0.0
        %5965 = vmatprep.subr.mxu0 0.0
        %5966 = vmatpush1.msra.mxu0 0.0
        %5967 = vmatprep.subr.mxu0 0.0
        %5968 = vmatpush1.msra.mxu0 0.0
        %5969 = vmatprep.subr.mxu0 0.0
        %5970 = vmatpush1.msra.mxu0 0.0
        %5971 = vmatprep.subr.mxu0 0.0
        %5972 = vmatpush1.msra.mxu0 0.0
        %5973 = vmatprep.subr.mxu0 0.0
        %5974 = vmatpush1.msra.mxu0 0.0
        %5975 = vmatprep.subr.mxu0 0.0
        %5976 = vmatpush1.msra.mxu0 0.0
        %5977 = vmatprep.mubr.f32.mxu0 0.0
        %5978 = vmatmul.mubr.f32.gmra.mrb[0].mxu0 %v5435
        %v5979 = vpop.f32.mrb[0].mxu0
        %v5980 = vadd.f32 0.0, %v5979
        %v5981 = vpop.f32.mrb[0].mxu0
        %v5982 = vadd.f32 0.0, %v5981
        %5983 = vdwg.mxu0
        %5984 = vmatprep.subr.mxu0 %v871
        %5985 = vmatpush1.msra.mxu0 %v870
        %5986 = vmatprep.subr.mxu0 %v875
        %5987 = vmatpush1.msra.mxu0 %v874
        %5988 = vmatprep.subr.mxu0 %v879
        %5989 = vmatpush1.msra.mxu0 %v878
        %5990 = vmatprep.subr.mxu0 %v883
        %5991 = vmatpush1.msra.mxu0 %v882
        %5992 = vmatprep.subr.mxu0 %v887
        %5993 = vmatpush1.msra.mxu0 %v886
        %5994 = vmatprep.subr.mxu0 %v891
        %5995 = vmatpush1.msra.mxu0 %v890
        %5996 = vmatprep.subr.mxu0 %v895
        %5997 = vmatpush1.msra.mxu0 %v894
        %5998 = vmatprep.subr.mxu0 %v899
        %5999 = vmatpush1.msra.mxu0 %v898
        %6000 = vmatprep.subr.mxu0 %v903
        %6001 = vmatpush1.msra.mxu0 %v902
        %6002 = vmatprep.subr.mxu0 %v907
        %6003 = vmatpush1.msra.mxu0 %v906
        %6004 = vmatprep.subr.mxu0 %v911
        %6005 = vmatpush1.msra.mxu0 %v910
        %6006 = vmatprep.subr.mxu0 %v915
        %6007 = vmatpush1.msra.mxu0 %v914
        %6008 = vmatprep.subr.mxu0 %v919
        %6009 = vmatpush1.msra.mxu0 %v918
        %6010 = vmatprep.subr.mxu0 %v923
        %6011 = vmatpush1.msra.mxu0 %v922
        %6012 = vmatprep.subr.mxu0 %v927
        %6013 = vmatpush1.msra.mxu0 %v926
        %6014 = vmatprep.subr.mxu0 %v931
        %6015 = vmatpush1.msra.mxu0 %v930
        %6016 = vmatprep.subr.mxu0 0.0
        %6017 = vmatpush1.msra.mxu0 0.0
        %6018 = vmatprep.subr.mxu0 0.0
        %6019 = vmatpush1.msra.mxu0 0.0
        %6020 = vmatprep.subr.mxu0 0.0
        %6021 = vmatpush1.msra.mxu0 0.0
        %6022 = vmatprep.subr.mxu0 0.0
        %6023 = vmatpush1.msra.mxu0 0.0
        %6024 = vmatprep.subr.mxu0 0.0
        %6025 = vmatpush1.msra.mxu0 0.0
        %6026 = vmatprep.subr.mxu0 0.0
        %6027 = vmatpush1.msra.mxu0 0.0
        %6028 = vmatprep.subr.mxu0 0.0
        %6029 = vmatpush1.msra.mxu0 0.0
        %6030 = vmatprep.subr.mxu0 0.0
        %6031 = vmatpush1.msra.mxu0 0.0
        %6032 = vmatprep.subr.mxu0 0.0
        %6033 = vmatpush1.msra.mxu0 0.0
        %6034 = vmatprep.subr.mxu0 0.0
        %6035 = vmatpush1.msra.mxu0 0.0
        %6036 = vmatprep.subr.mxu0 0.0
        %6037 = vmatpush1.msra.mxu0 0.0
        %6038 = vmatprep.subr.mxu0 0.0
        %6039 = vmatpush1.msra.mxu0 0.0
        %6040 = vmatprep.subr.mxu0 0.0
        %6041 = vmatpush1.msra.mxu0 0.0
        %6042 = vmatprep.subr.mxu0 0.0
        %6043 = vmatpush1.msra.mxu0 0.0
        %6044 = vmatprep.subr.mxu0 0.0
        %6045 = vmatpush1.msra.mxu0 0.0
        %6046 = vmatprep.subr.mxu0 0.0
        %6047 = vmatpush1.msra.mxu0 0.0
        %6048 = vmatprep.mubr.f32.mxu0 0.0
        %6049 = vmatmul.mubr.f32.gmra.mrb[0].mxu0 %v5841
        %v6050 = vpop.f32.mrb[0].mxu0
        %v6051 = vadd.f32 %v5909, %v6050
        %v6052 = vpop.f32.mrb[0].mxu0
        %v6053 = vadd.f32 %v5911, %v6052
        %6054 = vdwg.mxu0
        %6055 = vmatprep.subr.mxu0 %v873
        %6056 = vmatpush1.msra.mxu0 %v872
        %6057 = vmatprep.subr.mxu0 %v877
        %6058 = vmatpush1.msra.mxu0 %v876
        %6059 = vmatprep.subr.mxu0 %v881
        %6060 = vmatpush1.msra.mxu0 %v880
        %6061 = vmatprep.subr.mxu0 %v885
        %6062 = vmatpush1.msra.mxu0 %v884
        %6063 = vmatprep.subr.mxu0 %v889
        %6064 = vmatpush1.msra.mxu0 %v888
        %6065 = vmatprep.subr.mxu0 %v893
        %6066 = vmatpush1.msra.mxu0 %v892
        %6067 = vmatprep.subr.mxu0 %v897
        %6068 = vmatpush1.msra.mxu0 %v896
        %6069 = vmatprep.subr.mxu0 %v901
        %6070 = vmatpush1.msra.mxu0 %v900
        %6071 = vmatprep.subr.mxu0 %v905
        %6072 = vmatpush1.msra.mxu0 %v904
        %6073 = vmatprep.subr.mxu0 %v909
        %6074 = vmatpush1.msra.mxu0 %v908
        %6075 = vmatprep.subr.mxu0 %v913
        %6076 = vmatpush1.msra.mxu0 %v912
        %6077 = vmatprep.subr.mxu0 %v917
        %6078 = vmatpush1.msra.mxu0 %v916
        %6079 = vmatprep.subr.mxu0 %v921
        %6080 = vmatpush1.msra.mxu0 %v920
        %6081 = vmatprep.subr.mxu0 %v925
        %6082 = vmatpush1.msra.mxu0 %v924
        %6083 = vmatprep.subr.mxu0 %v929
        %6084 = vmatpush1.msra.mxu0 %v928
        %6085 = vmatprep.subr.mxu0 %v933
        %6086 = vmatpush1.msra.mxu0 %v932
        %6087 = vmatprep.subr.mxu0 0.0
        %6088 = vmatpush1.msra.mxu0 0.0
        %6089 = vmatprep.subr.mxu0 0.0
        %6090 = vmatpush1.msra.mxu0 0.0
        %6091 = vmatprep.subr.mxu0 0.0
        %6092 = vmatpush1.msra.mxu0 0.0
        %6093 = vmatprep.subr.mxu0 0.0
        %6094 = vmatpush1.msra.mxu0 0.0
        %6095 = vmatprep.subr.mxu0 0.0
        %6096 = vmatpush1.msra.mxu0 0.0
        %6097 = vmatprep.subr.mxu0 0.0
        %6098 = vmatpush1.msra.mxu0 0.0
        %6099 = vmatprep.subr.mxu0 0.0
        %6100 = vmatpush1.msra.mxu0 0.0
        %6101 = vmatprep.subr.mxu0 0.0
        %6102 = vmatpush1.msra.mxu0 0.0
        %6103 = vmatprep.subr.mxu0 0.0
        %6104 = vmatpush1.msra.mxu0 0.0
        %6105 = vmatprep.subr.mxu0 0.0
        %6106 = vmatpush1.msra.mxu0 0.0
        %6107 = vmatprep.subr.mxu0 0.0
        %6108 = vmatpush1.msra.mxu0 0.0
        %6109 = vmatprep.subr.mxu0 0.0
        %6110 = vmatpush1.msra.mxu0 0.0
        %6111 = vmatprep.subr.mxu0 0.0
        %6112 = vmatpush1.msra.mxu0 0.0
        %6113 = vmatprep.subr.mxu0 0.0
        %6114 = vmatpush1.msra.mxu0 0.0
        %6115 = vmatprep.subr.mxu0 0.0
        %6116 = vmatpush1.msra.mxu0 0.0
        %6117 = vmatprep.subr.mxu0 0.0
        %6118 = vmatpush1.msra.mxu0 0.0
        %6119 = vmatprep.mubr.f32.mxu0 0.0
        %6120 = vmatmul.mubr.f32.gmra.mrb[0].mxu0 %v5841
        %v6121 = vpop.f32.mrb[0].mxu0
        %v6122 = vadd.f32 %v5980, %v6121
        %v6123 = vpop.f32.mrb[0].mxu0
        %v6124 = vadd.f32 %v5982, %v6123
        %6125 = vdwg.mxu0
        %v6126 = vadd.f32 %v6051, %v1801
        %v6127 = vadd.f32 %v6053, %v1805
        %v6128 = vadd.f32 %v6122, %v1809
        %v6129 = vadd.f32 %v6124, %v1813
        %v6130 = vxor.u32 %v6126, 2147483648
        %v6131 = vmul.f32 %v6130, 1.442695
        %v6132 = vpow.pop %v6131
        %v6133 = vadd.f32 %v6132, 1.0
        %v6134 = vrcp.pop %v6133
        %v6135 = vmul.f32 1.0, %v6134
        %v6136 = vxor.u32 %v6127, 2147483648
        %v6137 = vmul.f32 %v6136, 1.442695
        %v6138 = vpow.pop %v6137
        %v6139 = vadd.f32 %v6138, 1.0
        %v6140 = vrcp.pop %v6139
        %v6141 = vmul.f32 1.0, %v6140
        %v6142 = vtanh.pop %v6128
        %v6143 = vxor.u32 %v6129, 2147483648
        %v6144 = vmul.f32 %v6143, 1.442695
        %v6145 = vpow.pop %v6144
        %v6146 = vadd.f32 %v6145, 1.0
        %v6147 = vrcp.pop %v6146
        %v6148 = vmul.f32 1.0, %v6147
        %v6149 = vmul.f32 %v6141, %v5433
        %v6150 = vmul.f32 %v6135, %v6142
        %v6151 = vadd.f32 %v6149, %v6150
        %v6152 = vtanh.pop %v6151
        %v6153 = vmul.f32 %v6148, %v6152
        %6154 = vset.pattern.permute.xlu0 7
        %6155 = vperm.xlu0 %6154, %v771
        %v6156 = vpop.permute.xlu0 %6155
        %vm6157 = vcmp.eq.s32.totalorder %v1071, %v6156
        %vm6158 = vcmp.eq.s32.totalorder %v1072, %v6156
        %v6159 = vsel %vm6157, 1, 0
        %v6160 = vsel %vm6158, 1, 0
        %v6161 = vcvt.s32.f32 %v6159
        %v6162 = vcvt.s32.f32 %v6160
        %6163 = vmatprep.subr.mxu0 0.0
        %6164 = vmatpush1.msra.mxu0 %v772
        %6165 = vmatprep.subr.mxu0 0.0
        %6166 = vmatpush1.msra.mxu0 %v773
        %6167 = vmatprep.subr.mxu0 0.0
        %6168 = vmatpush1.msra.mxu0 %v774
        %6169 = vmatprep.subr.mxu0 0.0
        %6170 = vmatpush1.msra.mxu0 %v775
        %6171 = vmatprep.subr.mxu0 0.0
        %6172 = vmatpush1.msra.mxu0 %v776
        %6173 = vmatprep.subr.mxu0 0.0
        %6174 = vmatpush1.msra.mxu0 %v777
        %6175 = vmatprep.subr.mxu0 0.0
        %6176 = vmatpush1.msra.mxu0 %v778
        %6177 = vmatprep.subr.mxu0 0.0
        %6178 = vmatpush1.msra.mxu0 %v779
        %6179 = vmatprep.subr.mxu0 0.0
        %6180 = vmatpush1.msra.mxu0 %v780
        %6181 = vmatprep.subr.mxu0 0.0
        %6182 = vmatpush1.msra.mxu0 %v781
        %6183 = vmatprep.subr.mxu0 0.0
        %6184 = vmatpush1.msra.mxu0 %v782
        %6185 = vmatprep.subr.mxu0 0.0
        %6186 = vmatpush1.msra.mxu0 %v783
        %6187 = vmatprep.subr.mxu0 0.0
        %6188 = vmatpush1.msra.mxu0 %v784
        %6189 = vmatprep.subr.mxu0 0.0
        %6190 = vmatpush1.msra.mxu0 %v785
        %6191 = vmatprep.subr.mxu0 0.0
        %6192 = vmatpush1.msra.mxu0 %v786
        %6193 = vmatprep.subr.mxu0 0.0
        %6194 = vmatpush1.msra.mxu0 %v787
        %6195 = vmatprep.subr.mxu0 0.0
        %6196 = vmatpush1.msra.mxu0 %v788
        %6197 = vmatprep.subr.mxu0 0.0
        %6198 = vmatpush1.msra.mxu0 %v789
        %6199 = vmatprep.subr.mxu0 0.0
        %6200 = vmatpush1.msra.mxu0 %v790
        %6201 = vmatprep.subr.mxu0 0.0
        %6202 = vmatpush1.msra.mxu0 %v791
        %6203 = vmatprep.subr.mxu0 0.0
        %6204 = vmatpush1.msra.mxu0 %v792
        %6205 = vmatprep.subr.mxu0 0.0
        %6206 = vmatpush1.msra.mxu0 %v793
        %6207 = vmatprep.subr.mxu0 0.0
        %6208 = vmatpush1.msra.mxu0 %v794
        %6209 = vmatprep.subr.mxu0 0.0
        %6210 = vmatpush1.msra.mxu0 %v795
        %6211 = vmatprep.subr.mxu0 0.0
        %6212 = vmatpush1.msra.mxu0 %v796
        %6213 = vmatprep.subr.mxu0 0.0
        %6214 = vmatpush1.msra.mxu0 %v797
        %6215 = vmatprep.subr.mxu0 0.0
        %6216 = vmatpush1.msra.mxu0 %v798
        %6217 = vmatprep.subr.mxu0 0.0
        %6218 = vmatpush1.msra.mxu0 %v799
        %6219 = vmatprep.subr.mxu0 0.0
        %6220 = vmatpush1.msra.mxu0 %v800
        %6221 = vmatprep.subr.mxu0 0.0
        %6222 = vmatpush1.msra.mxu0 %v801
        %6223 = vmatprep.subr.mxu0 0.0
        %6224 = vmatpush1.msra.mxu0 %v802
        %6225 = vmatprep.subr.mxu0 0.0
        %6226 = vmatpush1.msra.mxu0 %v803
        %6227 = vmatprep.mubr.f32.mxu0 %v6162
        %6228 = vmatmul.mubr.f32.gmra.mrb[0].mxu0 %v6161
        %v6229 = vpop.f32.mrb[0].mxu0
        %v6230 = vadd.f32 0.0, %v6229
        %v6231 = vpop.f32.mrb[0].mxu0
        %6232 = vdwg.mxu0
        %6233 = vadd.xlane.f32.xlu0 %v6230
        %v6234 = vpop.xlane.xlu0 %6233
        %v6235 = vmul.f32 %v6234, %v1154
        %v6236 = vmul.f32 %v6230, %v6230
        %6237 = vadd.xlane.f32.xlu0 %v6236
        %v6238 = vpop.xlane.xlu0 %6237
        %v6239 = vmul.f32 %v6238, %v1154
        %v6240 = vmul.f32 %v6235, %v6235
        %v6241 = vsub.f32 %v6239, %v6240
        %v6242 = vsub.f32 %v6230, %v6235
        %v6243 = vadd.f32 %v6241, 1e-05
        %v6244 = vrsqrt.pop %v6243
        %v6245 = vmul.f32 %v6242, %v6244
        %v6246 = vmul.f32 %v6245, %v1170
        %v6247 = vadd.f32 %v6246, %v1177
        %6248 = vmatprep.subr.mxu0 %v935
        %6249 = vmatpush1.msra.mxu0 %v934
        %6250 = vmatprep.subr.mxu0 %v939
        %6251 = vmatpush1.msra.mxu0 %v938
        %6252 = vmatprep.subr.mxu0 %v943
        %6253 = vmatpush1.msra.mxu0 %v942
        %6254 = vmatprep.subr.mxu0 %v947
        %6255 = vmatpush1.msra.mxu0 %v946
        %6256 = vmatprep.subr.mxu0 %v951
        %6257 = vmatpush1.msra.mxu0 %v950
        %6258 = vmatprep.subr.mxu0 %v955
        %6259 = vmatpush1.msra.mxu0 %v954
        %6260 = vmatprep.subr.mxu0 %v959
        %6261 = vmatpush1.msra.mxu0 %v958
        %6262 = vmatprep.subr.mxu0 %v963
        %6263 = vmatpush1.msra.mxu0 %v962
        %6264 = vmatprep.subr.mxu0 %v967
        %6265 = vmatpush1.msra.mxu0 %v966
        %6266 = vmatprep.subr.mxu0 %v971
        %6267 = vmatpush1.msra.mxu0 %v970
        %6268 = vmatprep.subr.mxu0 %v975
        %6269 = vmatpush1.msra.mxu0 %v974
        %6270 = vmatprep.subr.mxu0 %v979
        %6271 = vmatpush1.msra.mxu0 %v978
        %6272 = vmatprep.subr.mxu0 %v983
        %6273 = vmatpush1.msra.mxu0 %v982
        %6274 = vmatprep.subr.mxu0 %v987
        %6275 = vmatpush1.msra.mxu0 %v986
        %6276 = vmatprep.subr.mxu0 %v991
        %6277 = vmatpush1.msra.mxu0 %v990
        %6278 = vmatprep.subr.mxu0 %v995
        %6279 = vmatpush1.msra.mxu0 %v994
        %6280 = vmatprep.subr.mxu0 0.0
        %6281 = vmatpush1.msra.mxu0 0.0
        %6282 = vmatprep.subr.mxu0 0.0
        %6283 = vmatpush1.msra.mxu0 0.0
        %6284 = vmatprep.subr.mxu0 0.0
        %6285 = vmatpush1.msra.mxu0 0.0
        %6286 = vmatprep.subr.mxu0 0.0
        %6287 = vmatpush1.msra.mxu0 0.0
        %6288 = vmatprep.subr.mxu0 0.0
        %6289 = vmatpush1.msra.mxu0 0.0
        %6290 = vmatprep.subr.mxu0 0.0
        %6291 = vmatpush1.msra.mxu0 0.0
        %6292 = vmatprep.subr.mxu0 0.0
        %6293 = vmatpush1.msra.mxu0 0.0
        %6294 = vmatprep.subr.mxu0 0.0
        %6295 = vmatpush1.msra.mxu0 0.0
        %6296 = vmatprep.subr.mxu0 0.0
        %6297 = vmatpush1.msra.mxu0 0.0
        %6298 = vmatprep.subr.mxu0 0.0
        %6299 = vmatpush1.msra.mxu0 0.0
        %6300 = vmatprep.subr.mxu0 0.0
        %6301 = vmatpush1.msra.mxu0 0.0
        %6302 = vmatprep.subr.mxu0 0.0
        %6303 = vmatpush1.msra.mxu0 0.0
        %6304 = vmatprep.subr.mxu0 0.0
        %6305 = vmatpush1.msra.mxu0 0.0
        %6306 = vmatprep.subr.mxu0 0.0
        %6307 = vmatpush1.msra.mxu0 0.0
        %6308 = vmatprep.subr.mxu0 0.0
        %6309 = vmatpush1.msra.mxu0 0.0
        %6310 = vmatprep.subr.mxu0 0.0
        %6311 = vmatpush1.msra.mxu0 0.0
        %6312 = vmatprep.mubr.f32.mxu0 0.0
        %6313 = vmatmul.mubr.f32.gmra.mrb[0].mxu0 %v5841
        %v6314 = vpop.f32.mrb[0].mxu0
        %v6315 = vadd.f32 0.0, %v6314
        %v6316 = vpop.f32.mrb[0].mxu0
        %v6317 = vadd.f32 0.0, %v6316
        %6318 = vdwg.mxu0
        %6319 = vmatprep.subr.mxu0 %v937
        %6320 = vmatpush1.msra.mxu0 %v936
        %6321 = vmatprep.subr.mxu0 %v941
        %6322 = vmatpush1.msra.mxu0 %v940
        %6323 = vmatprep.subr.mxu0 %v945
        %6324 = vmatpush1.msra.mxu0 %v944
        %6325 = vmatprep.subr.mxu0 %v949
        %6326 = vmatpush1.msra.mxu0 %v948
        %6327 = vmatprep.subr.mxu0 %v953
        %6328 = vmatpush1.msra.mxu0 %v952
        %6329 = vmatprep.subr.mxu0 %v957
        %6330 = vmatpush1.msra.mxu0 %v956
        %6331 = vmatprep.subr.mxu0 %v961
        %6332 = vmatpush1.msra.mxu0 %v960
        %6333 = vmatprep.subr.mxu0 %v965
        %6334 = vmatpush1.msra.mxu0 %v964
        %6335 = vmatprep.subr.mxu0 %v969
        %6336 = vmatpush1.msra.mxu0 %v968
        %6337 = vmatprep.subr.mxu0 %v973
        %6338 = vmatpush1.msra.mxu0 %v972
        %6339 = vmatprep.subr.mxu0 %v977
        %6340 = vmatpush1.msra.mxu0 %v976
        %6341 = vmatprep.subr.mxu0 %v981
        %6342 = vmatpush1.msra.mxu0 %v980
        %6343 = vmatprep.subr.mxu0 %v985
        %6344 = vmatpush1.msra.mxu0 %v984
        %6345 = vmatprep.subr.mxu0 %v989
        %6346 = vmatpush1.msra.mxu0 %v988
        %6347 = vmatprep.subr.mxu0 %v993
        %6348 = vmatpush1.msra.mxu0 %v992
        %6349 = vmatprep.subr.mxu0 %v997
        %6350 = vmatpush1.msra.mxu0 %v996
        %6351 = vmatprep.subr.mxu0 0.0
        %6352 = vmatpush1.msra.mxu0 0.0
        %6353 = vmatprep.subr.mxu0 0.0
        %6354 = vmatpush1.msra.mxu0 0.0
        %6355 = vmatprep.subr.mxu0 0.0
        %6356 = vmatpush1.msra.mxu0 0.0
        %6357 = vmatprep.subr.mxu0 0.0
        %6358 = vmatpush1.msra.mxu0 0.0
        %6359 = vmatprep.subr.mxu0 0.0
        %6360 = vmatpush1.msra.mxu0 0.0
        %6361 = vmatprep.subr.mxu0 0.0
        %6362 = vmatpush1.msra.mxu0 0.0
        %6363 = vmatprep.subr.mxu0 0.0
        %6364 = vmatpush1.msra.mxu0 0.0
        %6365 = vmatprep.subr.mxu0 0.0
        %6366 = vmatpush1.msra.mxu0 0.0
        %6367 = vmatprep.subr.mxu0 0.0
        %6368 = vmatpush1.msra.mxu0 0.0
        %6369 = vmatprep.subr.mxu0 0.0
        %6370 = vmatpush1.msra.mxu0 0.0
        %6371 = vmatprep.subr.mxu0 0.0
        %6372 = vmatpush1.msra.mxu0 0.0
        %6373 = vmatprep.subr.mxu0 0.0
        %6374 = vmatpush1.msra.mxu0 0.0
        %6375 = vmatprep.subr.mxu0 0.0
        %6376 = vmatpush1.msra.mxu0 0.0
        %6377 = vmatprep.subr.mxu0 0.0
        %6378 = vmatpush1.msra.mxu0 0.0
        %6379 = vmatprep.subr.mxu0 0.0
        %6380 = vmatpush1.msra.mxu0 0.0
        %6381 = vmatprep.subr.mxu0 0.0
        %6382 = vmatpush1.msra.mxu0 0.0
        %6383 = vmatprep.mubr.f32.mxu0 0.0
        %6384 = vmatmul.mubr.f32.gmra.mrb[0].mxu0 %v5841
        %v6385 = vpop.f32.mrb[0].mxu0
        %v6386 = vadd.f32 0.0, %v6385
        %v6387 = vpop.f32.mrb[0].mxu0
        %v6388 = vadd.f32 0.0, %v6387
        %6389 = vdwg.mxu0
        %6390 = vmatprep.subr.mxu0 %v807
        %6391 = vmatpush1.msra.mxu0 %v806
        %6392 = vmatprep.subr.mxu0 %v811
        %6393 = vmatpush1.msra.mxu0 %v810
        %6394 = vmatprep.subr.mxu0 %v815
        %6395 = vmatpush1.msra.mxu0 %v814
        %6396 = vmatprep.subr.mxu0 %v819
        %6397 = vmatpush1.msra.mxu0 %v818
        %6398 = vmatprep.subr.mxu0 %v823
        %6399 = vmatpush1.msra.mxu0 %v822
        %6400 = vmatprep.subr.mxu0 %v827
        %6401 = vmatpush1.msra.mxu0 %v826
        %6402 = vmatprep.subr.mxu0 %v831
        %6403 = vmatpush1.msra.mxu0 %v830
        %6404 = vmatprep.subr.mxu0 %v835
        %6405 = vmatpush1.msra.mxu0 %v834
        %6406 = vmatprep.subr.mxu0 %v839
        %6407 = vmatpush1.msra.mxu0 %v838
        %6408 = vmatprep.subr.mxu0 %v843
        %6409 = vmatpush1.msra.mxu0 %v842
        %6410 = vmatprep.subr.mxu0 %v847
        %6411 = vmatpush1.msra.mxu0 %v846
        %6412 = vmatprep.subr.mxu0 %v851
        %6413 = vmatpush1.msra.mxu0 %v850
        %6414 = vmatprep.subr.mxu0 %v855
        %6415 = vmatpush1.msra.mxu0 %v854
        %6416 = vmatprep.subr.mxu0 %v859
        %6417 = vmatpush1.msra.mxu0 %v858
        %6418 = vmatprep.subr.mxu0 %v863
        %6419 = vmatpush1.msra.mxu0 %v862
        %6420 = vmatprep.subr.mxu0 %v867
        %6421 = vmatpush1.msra.mxu0 %v866
        %6422 = vmatprep.subr.mxu0 0.0
        %6423 = vmatpush1.msra.mxu0 0.0
        %6424 = vmatprep.subr.mxu0 0.0
        %6425 = vmatpush1.msra.mxu0 0.0
        %6426 = vmatprep.subr.mxu0 0.0
        %6427 = vmatpush1.msra.mxu0 0.0
        %6428 = vmatprep.subr.mxu0 0.0
        %6429 = vmatpush1.msra.mxu0 0.0
        %6430 = vmatprep.subr.mxu0 0.0
        %6431 = vmatpush1.msra.mxu0 0.0
        %6432 = vmatprep.subr.mxu0 0.0
        %6433 = vmatpush1.msra.mxu0 0.0
        %6434 = vmatprep.subr.mxu0 0.0
        %6435 = vmatpush1.msra.mxu0 0.0
        %6436 = vmatprep.subr.mxu0 0.0
        %6437 = vmatpush1.msra.mxu0 0.0
        %6438 = vmatprep.subr.mxu0 0.0
        %6439 = vmatpush1.msra.mxu0 0.0
        %6440 = vmatprep.subr.mxu0 0.0
        %6441 = vmatpush1.msra.mxu0 0.0
        %6442 = vmatprep.subr.mxu0 0.0
        %6443 = vmatpush1.msra.mxu0 0.0
        %6444 = vmatprep.subr.mxu0 0.0
        %6445 = vmatpush1.msra.mxu0 0.0
        %6446 = vmatprep.subr.mxu0 0.0
        %6447 = vmatpush1.msra.mxu0 0.0
        %6448 = vmatprep.subr.mxu0 0.0
        %6449 = vmatpush1.msra.mxu0 0.0
        %6450 = vmatprep.subr.mxu0 0.0
        %6451 = vmatpush1.msra.mxu0 0.0
        %6452 = vmatprep.subr.mxu0 0.0
        %6453 = vmatpush1.msra.mxu0 0.0
        %6454 = vmatprep.mubr.f32.mxu0 0.0
        %6455 = vmatmul.mubr.f32.gmra.mrb[0].mxu0 %v6247
        %v6456 = vpop.f32.mrb[0].mxu0
        %v6457 = vadd.f32 %v6315, %v6456
        %v6458 = vpop.f32.mrb[0].mxu0
        %v6459 = vadd.f32 %v6317, %v6458
        %6460 = vdwg.mxu0
        %6461 = vmatprep.subr.mxu0 %v809
        %6462 = vmatpush1.msra.mxu0 %v808
        %6463 = vmatprep.subr.mxu0 %v813
        %6464 = vmatpush1.msra.mxu0 %v812
        %6465 = vmatprep.subr.mxu0 %v817
        %6466 = vmatpush1.msra.mxu0 %v816
        %6467 = vmatprep.subr.mxu0 %v821
        %6468 = vmatpush1.msra.mxu0 %v820
        %6469 = vmatprep.subr.mxu0 %v825
        %6470 = vmatpush1.msra.mxu0 %v824
        %6471 = vmatprep.subr.mxu0 %v829
        %6472 = vmatpush1.msra.mxu0 %v828
        %6473 = vmatprep.subr.mxu0 %v833
        %6474 = vmatpush1.msra.mxu0 %v832
        %6475 = vmatprep.subr.mxu0 %v837
        %6476 = vmatpush1.msra.mxu0 %v836
        %6477 = vmatprep.subr.mxu0 %v841
        %6478 = vmatpush1.msra.mxu0 %v840
        %6479 = vmatprep.subr.mxu0 %v845
        %6480 = vmatpush1.msra.mxu0 %v844
        %6481 = vmatprep.subr.mxu0 %v849
        %6482 = vmatpush1.msra.mxu0 %v848
        %6483 = vmatprep.subr.mxu0 %v853
        %6484 = vmatpush1.msra.mxu0 %v852
        %6485 = vmatprep.subr.mxu0 %v857
        %6486 = vmatpush1.msra.mxu0 %v856
        %6487 = vmatprep.subr.mxu0 %v861
        %6488 = vmatpush1.msra.mxu0 %v860
        %6489 = vmatprep.subr.mxu0 %v865
        %6490 = vmatpush1.msra.mxu0 %v864
        %6491 = vmatprep.subr.mxu0 %v869
        %6492 = vmatpush1.msra.mxu0 %v868
        %6493 = vmatprep.subr.mxu0 0.0
        %6494 = vmatpush1.msra.mxu0 0.0
        %6495 = vmatprep.subr.mxu0 0.0
        %6496 = vmatpush1.msra.mxu0 0.0
        %6497 = vmatprep.subr.mxu0 0.0
        %6498 = vmatpush1.msra.mxu0 0.0
        %6499 = vmatprep.subr.mxu0 0.0
        %6500 = vmatpush1.msra.mxu0 0.0
        %6501 = vmatprep.subr.mxu0 0.0
        %6502 = vmatpush1.msra.mxu0 0.0
        %6503 = vmatprep.subr.mxu0 0.0
        %6504 = vmatpush1.msra.mxu0 0.0
        %6505 = vmatprep.subr.mxu0 0.0
        %6506 = vmatpush1.msra.mxu0 0.0
        %6507 = vmatprep.subr.mxu0 0.0
        %6508 = vmatpush1.msra.mxu0 0.0
        %6509 = vmatprep.subr.mxu0 0.0
        %6510 = vmatpush1.msra.mxu0 0.0
        %6511 = vmatprep.subr.mxu0 0.0
        %6512 = vmatpush1.msra.mxu0 0.0
        %6513 = vmatprep.subr.mxu0 0.0
        %6514 = vmatpush1.msra.mxu0 0.0
        %6515 = vmatprep.subr.mxu0 0.0
        %6516 = vmatpush1.msra.mxu0 0.0
        %6517 = vmatprep.subr.mxu0 0.0
        %6518 = vmatpush1.msra.mxu0 0.0
        %6519 = vmatprep.subr.mxu0 0.0
        %6520 = vmatpush1.msra.mxu0 0.0
        %6521 = vmatprep.subr.mxu0 0.0
        %6522 = vmatpush1.msra.mxu0 0.0
        %6523 = vmatprep.subr.mxu0 0.0
        %6524 = vmatpush1.msra.mxu0 0.0
        %6525 = vmatprep.mubr.f32.mxu0 0.0
        %6526 = vmatmul.mubr.f32.gmra.mrb[0].mxu0 %v6247
        %v6527 = vpop.f32.mrb[0].mxu0
        %v6528 = vadd.f32 %v6386, %v6527
        %v6529 = vpop.f32.mrb[0].mxu0
        %v6530 = vadd.f32 %v6388, %v6529
        %6531 = vdwg.mxu0
        %v6532 = vadd.f32 %v6457, %v1468
        %v6533 = vadd.f32 %v6459, %v1472
        %v6534 = vadd.f32 %v6528, %v1476
        %v6535 = vadd.f32 %v6530, %v1480
        %v6536 = vxor.u32 %v6532, 2147483648
        %v6537 = vmul.f32 %v6536, 1.442695
        %v6538 = vpow.pop %v6537
        %v6539 = vadd.f32 %v6538, 1.0
        %v6540 = vrcp.pop %v6539
        %v6541 = vmul.f32 1.0, %v6540
        %v6542 = vxor.u32 %v6533, 2147483648
        %v6543 = vmul.f32 %v6542, 1.442695
        %v6544 = vpow.pop %v6543
        %v6545 = vadd.f32 %v6544, 1.0
        %v6546 = vrcp.pop %v6545
        %v6547 = vmul.f32 1.0, %v6546
        %v6548 = vtanh.pop %v6534
        %v6549 = vxor.u32 %v6535, 2147483648
        %v6550 = vmul.f32 %v6549, 1.442695
        %v6551 = vpow.pop %v6550
        %v6552 = vadd.f32 %v6551, 1.0
        %v6553 = vrcp.pop %v6552
        %v6554 = vmul.f32 1.0, %v6553
        %v6555 = vmul.f32 %v6547, %v5839
        %v6556 = vmul.f32 %v6541, %v6548
        %v6557 = vadd.f32 %v6555, %v6556
        %v6558 = vtanh.pop %v6557
        %v6559 = vmul.f32 %v6554, %v6558
        %6560 = vmatprep.subr.mxu0 %v999
        %6561 = vmatpush1.msra.mxu0 %v998
        %6562 = vmatprep.subr.mxu0 %v1003
        %6563 = vmatpush1.msra.mxu0 %v1002
        %6564 = vmatprep.subr.mxu0 %v1007
        %6565 = vmatpush1.msra.mxu0 %v1006
        %6566 = vmatprep.subr.mxu0 %v1011
        %6567 = vmatpush1.msra.mxu0 %v1010
        %6568 = vmatprep.subr.mxu0 %v1015
        %6569 = vmatpush1.msra.mxu0 %v1014
        %6570 = vmatprep.subr.mxu0 %v1019
        %6571 = vmatpush1.msra.mxu0 %v1018
        %6572 = vmatprep.subr.mxu0 %v1023
        %6573 = vmatpush1.msra.mxu0 %v1022
        %6574 = vmatprep.subr.mxu0 %v1027
        %6575 = vmatpush1.msra.mxu0 %v1026
        %6576 = vmatprep.subr.mxu0 %v1031
        %6577 = vmatpush1.msra.mxu0 %v1030
        %6578 = vmatprep.subr.mxu0 %v1035
        %6579 = vmatpush1.msra.mxu0 %v1034
        %6580 = vmatprep.subr.mxu0 %v1039
        %6581 = vmatpush1.msra.mxu0 %v1038
        %6582 = vmatprep.subr.mxu0 %v1043
        %6583 = vmatpush1.msra.mxu0 %v1042
        %6584 = vmatprep.subr.mxu0 %v1047
        %6585 = vmatpush1.msra.mxu0 %v1046
        %6586 = vmatprep.subr.mxu0 %v1051
        %6587 = vmatpush1.msra.mxu0 %v1050
        %6588 = vmatprep.subr.mxu0 %v1055
        %6589 = vmatpush1.msra.mxu0 %v1054
        %6590 = vmatprep.subr.mxu0 %v1059
        %6591 = vmatpush1.msra.mxu0 %v1058
        %6592 = vmatprep.subr.mxu0 0.0
        %6593 = vmatpush1.msra.mxu0 0.0
        %6594 = vmatprep.subr.mxu0 0.0
        %6595 = vmatpush1.msra.mxu0 0.0
        %6596 = vmatprep.subr.mxu0 0.0
        %6597 = vmatpush1.msra.mxu0 0.0
        %6598 = vmatprep.subr.mxu0 0.0
        %6599 = vmatpush1.msra.mxu0 0.0
        %6600 = vmatprep.subr.mxu0 0.0
        %6601 = vmatpush1.msra.mxu0 0.0
        %6602 = vmatprep.subr.mxu0 0.0
        %6603 = vmatpush1.msra.mxu0 0.0
        %6604 = vmatprep.subr.mxu0 0.0
        %6605 = vmatpush1.msra.mxu0 0.0
        %6606 = vmatprep.subr.mxu0 0.0
        %6607 = vmatpush1.msra.mxu0 0.0
        %6608 = vmatprep.subr.mxu0 0.0
        %6609 = vmatpush1.msra.mxu0 0.0
        %6610 = vmatprep.subr.mxu0 0.0
        %6611 = vmatpush1.msra.mxu0 0.0
        %6612 = vmatprep.subr.mxu0 0.0
        %6613 = vmatpush1.msra.mxu0 0.0
        %6614 = vmatprep.subr.mxu0 0.0
        %6615 = vmatpush1.msra.mxu0 0.0
        %6616 = vmatprep.subr.mxu0 0.0
        %6617 = vmatpush1.msra.mxu0 0.0
        %6618 = vmatprep.subr.mxu0 0.0
        %6619 = vmatpush1.msra.mxu0 0.0
        %6620 = vmatprep.subr.mxu0 0.0
        %6621 = vmatpush1.msra.mxu0 0.0
        %6622 = vmatprep.subr.mxu0 0.0
        %6623 = vmatpush1.msra.mxu0 0.0
        %6624 = vmatprep.mubr.f32.mxu0 0.0
        %6625 = vmatmul.mubr.f32.gmra.mrb[0].mxu0 %v6153
        %v6626 = vpop.f32.mrb[0].mxu0
        %v6627 = vadd.f32 0.0, %v6626
        %v6628 = vpop.f32.mrb[0].mxu0
        %v6629 = vadd.f32 0.0, %v6628
        %6630 = vdwg.mxu0
        %6631 = vmatprep.subr.mxu0 %v1001
        %6632 = vmatpush1.msra.mxu0 %v1000
        %6633 = vmatprep.subr.mxu0 %v1005
        %6634 = vmatpush1.msra.mxu0 %v1004
        %6635 = vmatprep.subr.mxu0 %v1009
        %6636 = vmatpush1.msra.mxu0 %v1008
        %6637 = vmatprep.subr.mxu0 %v1013
        %6638 = vmatpush1.msra.mxu0 %v1012
        %6639 = vmatprep.subr.mxu0 %v1017
        %6640 = vmatpush1.msra.mxu0 %v1016
        %6641 = vmatprep.subr.mxu0 %v1021
        %6642 = vmatpush1.msra.mxu0 %v1020
        %6643 = vmatprep.subr.mxu0 %v1025
        %6644 = vmatpush1.msra.mxu0 %v1024
        %6645 = vmatprep.subr.mxu0 %v1029
        %6646 = vmatpush1.msra.mxu0 %v1028
        %6647 = vmatprep.subr.mxu0 %v1033
        %6648 = vmatpush1.msra.mxu0 %v1032
        %6649 = vmatprep.subr.mxu0 %v1037
        %6650 = vmatpush1.msra.mxu0 %v1036
        %6651 = vmatprep.subr.mxu0 %v1041
        %6652 = vmatpush1.msra.mxu0 %v1040
        %6653 = vmatprep.subr.mxu0 %v1045
        %6654 = vmatpush1.msra.mxu0 %v1044
        %6655 = vmatprep.subr.mxu0 %v1049
        %6656 = vmatpush1.msra.mxu0 %v1048
        %6657 = vmatprep.subr.mxu0 %v1053
        %6658 = vmatpush1.msra.mxu0 %v1052
        %6659 = vmatprep.subr.mxu0 %v1057
        %6660 = vmatpush1.msra.mxu0 %v1056
        %6661 = vmatprep.subr.mxu0 %v1061
        %6662 = vmatpush1.msra.mxu0 %v1060
        %6663 = vmatprep.subr.mxu0 0.0
        %6664 = vmatpush1.msra.mxu0 0.0
        %6665 = vmatprep.subr.mxu0 0.0
        %6666 = vmatpush1.msra.mxu0 0.0
        %6667 = vmatprep.subr.mxu0 0.0
        %6668 = vmatpush1.msra.mxu0 0.0
        %6669 = vmatprep.subr.mxu0 0.0
        %6670 = vmatpush1.msra.mxu0 0.0
        %6671 = vmatprep.subr.mxu0 0.0
        %6672 = vmatpush1.msra.mxu0 0.0
        %6673 = vmatprep.subr.mxu0 0.0
        %6674 = vmatpush1.msra.mxu0 0.0
        %6675 = vmatprep.subr.mxu0 0.0
        %6676 = vmatpush1.msra.mxu0 0.0
        %6677 = vmatprep.subr.mxu0 0.0
        %6678 = vmatpush1.msra.mxu0 0.0
        %6679 = vmatprep.subr.mxu0 0.0
        %6680 = vmatpush1.msra.mxu0 0.0
        %6681 = vmatprep.subr.mxu0 0.0
        %6682 = vmatpush1.msra.mxu0 0.0
        %6683 = vmatprep.subr.mxu0 0.0
        %6684 = vmatpush1.msra.mxu0 0.0
        %6685 = vmatprep.subr.mxu0 0.0
        %6686 = vmatpush1.msra.mxu0 0.0
        %6687 = vmatprep.subr.mxu0 0.0
        %6688 = vmatpush1.msra.mxu0 0.0
        %6689 = vmatprep.subr.mxu0 0.0
        %6690 = vmatpush1.msra.mxu0 0.0
        %6691 = vmatprep.subr.mxu0 0.0
        %6692 = vmatpush1.msra.mxu0 0.0
        %6693 = vmatprep.subr.mxu0 0.0
        %6694 = vmatpush1.msra.mxu0 0.0
        %6695 = vmatprep.mubr.f32.mxu0 0.0
        %6696 = vmatmul.mubr.f32.gmra.mrb[0].mxu0 %v6153
        %v6697 = vpop.f32.mrb[0].mxu0
        %v6698 = vadd.f32 0.0, %v6697
        %v6699 = vpop.f32.mrb[0].mxu0
        %v6700 = vadd.f32 0.0, %v6699
        %6701 = vdwg.mxu0
        %6702 = vmatprep.subr.mxu0 %v871
        %6703 = vmatpush1.msra.mxu0 %v870
        %6704 = vmatprep.subr.mxu0 %v875
        %6705 = vmatpush1.msra.mxu0 %v874
        %6706 = vmatprep.subr.mxu0 %v879
        %6707 = vmatpush1.msra.mxu0 %v878
        %6708 = vmatprep.subr.mxu0 %v883
        %6709 = vmatpush1.msra.mxu0 %v882
        %6710 = vmatprep.subr.mxu0 %v887
        %6711 = vmatpush1.msra.mxu0 %v886
        %6712 = vmatprep.subr.mxu0 %v891
        %6713 = vmatpush1.msra.mxu0 %v890
        %6714 = vmatprep.subr.mxu0 %v895
        %6715 = vmatpush1.msra.mxu0 %v894
        %6716 = vmatprep.subr.mxu0 %v899
        %6717 = vmatpush1.msra.mxu0 %v898
        %6718 = vmatprep.subr.mxu0 %v903
        %6719 = vmatpush1.msra.mxu0 %v902
        %6720 = vmatprep.subr.mxu0 %v907
        %6721 = vmatpush1.msra.mxu0 %v906
        %6722 = vmatprep.subr.mxu0 %v911
        %6723 = vmatpush1.msra.mxu0 %v910
        %6724 = vmatprep.subr.mxu0 %v915
        %6725 = vmatpush1.msra.mxu0 %v914
        %6726 = vmatprep.subr.mxu0 %v919
        %6727 = vmatpush1.msra.mxu0 %v918
        %6728 = vmatprep.subr.mxu0 %v923
        %6729 = vmatpush1.msra.mxu0 %v922
        %6730 = vmatprep.subr.mxu0 %v927
        %6731 = vmatpush1.msra.mxu0 %v926
        %6732 = vmatprep.subr.mxu0 %v931
        %6733 = vmatpush1.msra.mxu0 %v930
        %6734 = vmatprep.subr.mxu0 0.0
        %6735 = vmatpush1.msra.mxu0 0.0
        %6736 = vmatprep.subr.mxu0 0.0
        %6737 = vmatpush1.msra.mxu0 0.0
        %6738 = vmatprep.subr.mxu0 0.0
        %6739 = vmatpush1.msra.mxu0 0.0
        %6740 = vmatprep.subr.mxu0 0.0
        %6741 = vmatpush1.msra.mxu0 0.0
        %6742 = vmatprep.subr.mxu0 0.0
        %6743 = vmatpush1.msra.mxu0 0.0
        %6744 = vmatprep.subr.mxu0 0.0
        %6745 = vmatpush1.msra.mxu0 0.0
        %6746 = vmatprep.subr.mxu0 0.0
        %6747 = vmatpush1.msra.mxu0 0.0
        %6748 = vmatprep.subr.mxu0 0.0
        %6749 = vmatpush1.msra.mxu0 0.0
        %6750 = vmatprep.subr.mxu0 0.0
        %6751 = vmatpush1.msra.mxu0 0.0
        %6752 = vmatprep.subr.mxu0 0.0
        %6753 = vmatpush1.msra.mxu0 0.0
        %6754 = vmatprep.subr.mxu0 0.0
        %6755 = vmatpush1.msra.mxu0 0.0
        %6756 = vmatprep.subr.mxu0 0.0
        %6757 = vmatpush1.msra.mxu0 0.0
        %6758 = vmatprep.subr.mxu0 0.0
        %6759 = vmatpush1.msra.mxu0 0.0
        %6760 = vmatprep.subr.mxu0 0.0
        %6761 = vmatpush1.msra.mxu0 0.0
        %6762 = vmatprep.subr.mxu0 0.0
        %6763 = vmatpush1.msra.mxu0 0.0
        %6764 = vmatprep.subr.mxu0 0.0
        %6765 = vmatpush1.msra.mxu0 0.0
        %6766 = vmatprep.mubr.f32.mxu0 0.0
        %6767 = vmatmul.mubr.f32.gmra.mrb[0].mxu0 %v6559
        %v6768 = vpop.f32.mrb[0].mxu0
        %v6769 = vadd.f32 %v6627, %v6768
        %v6770 = vpop.f32.mrb[0].mxu0
        %v6771 = vadd.f32 %v6629, %v6770
        %6772 = vdwg.mxu0
        %6773 = vmatprep.subr.mxu0 %v873
        %6774 = vmatpush1.msra.mxu0 %v872
        %6775 = vmatprep.subr.mxu0 %v877
        %6776 = vmatpush1.msra.mxu0 %v876
        %6777 = vmatprep.subr.mxu0 %v881
        %6778 = vmatpush1.msra.mxu0 %v880
        %6779 = vmatprep.subr.mxu0 %v885
        %6780 = vmatpush1.msra.mxu0 %v884
        %6781 = vmatprep.subr.mxu0 %v889
        %6782 = vmatpush1.msra.mxu0 %v888
        %6783 = vmatprep.subr.mxu0 %v893
        %6784 = vmatpush1.msra.mxu0 %v892
        %6785 = vmatprep.subr.mxu0 %v897
        %6786 = vmatpush1.msra.mxu0 %v896
        %6787 = vmatprep.subr.mxu0 %v901
        %6788 = vmatpush1.msra.mxu0 %v900
        %6789 = vmatprep.subr.mxu0 %v905
        %6790 = vmatpush1.msra.mxu0 %v904
        %6791 = vmatprep.subr.mxu0 %v909
        %6792 = vmatpush1.msra.mxu0 %v908
        %6793 = vmatprep.subr.mxu0 %v913
        %6794 = vmatpush1.msra.mxu0 %v912
        %6795 = vmatprep.subr.mxu0 %v917
        %6796 = vmatpush1.msra.mxu0 %v916
        %6797 = vmatprep.subr.mxu0 %v921
        %6798 = vmatpush1.msra.mxu0 %v920
        %6799 = vmatprep.subr.mxu0 %v925
        %6800 = vmatpush1.msra.mxu0 %v924
        %6801 = vmatprep.subr.mxu0 %v929
        %6802 = vmatpush1.msra.mxu0 %v928
        %6803 = vmatprep.subr.mxu0 %v933
        %6804 = vmatpush1.msra.mxu0 %v932
        %6805 = vmatprep.subr.mxu0 0.0
        %6806 = vmatpush1.msra.mxu0 0.0
        %6807 = vmatprep.subr.mxu0 0.0
        %6808 = vmatpush1.msra.mxu0 0.0
        %6809 = vmatprep.subr.mxu0 0.0
        %6810 = vmatpush1.msra.mxu0 0.0
        %6811 = vmatprep.subr.mxu0 0.0
        %6812 = vmatpush1.msra.mxu0 0.0
        %6813 = vmatprep.subr.mxu0 0.0
        %6814 = vmatpush1.msra.mxu0 0.0
        %6815 = vmatprep.subr.mxu0 0.0
        %6816 = vmatpush1.msra.mxu0 0.0
        %6817 = vmatprep.subr.mxu0 0.0
        %6818 = vmatpush1.msra.mxu0 0.0
        %6819 = vmatprep.subr.mxu0 0.0
        %6820 = vmatpush1.msra.mxu0 0.0
        %6821 = vmatprep.subr.mxu0 0.0
        %6822 = vmatpush1.msra.mxu0 0.0
        %6823 = vmatprep.subr.mxu0 0.0
        %6824 = vmatpush1.msra.mxu0 0.0
        %6825 = vmatprep.subr.mxu0 0.0
        %6826 = vmatpush1.msra.mxu0 0.0
        %6827 = vmatprep.subr.mxu0 0.0
        %6828 = vmatpush1.msra.mxu0 0.0
        %6829 = vmatprep.subr.mxu0 0.0
        %6830 = vmatpush1.msra.mxu0 0.0
        %6831 = vmatprep.subr.mxu0 0.0
        %6832 = vmatpush1.msra.mxu0 0.0
        %6833 = vmatprep.subr.mxu0 0.0
        %6834 = vmatpush1.msra.mxu0 0.0
        %6835 = vmatprep.subr.mxu0 0.0
        %6836 = vmatpush1.msra.mxu0 0.0
        %6837 = vmatprep.mubr.f32.mxu0 0.0
        %6838 = vmatmul.mubr.f32.gmra.mrb[0].mxu0 %v6559
        %v6839 = vpop.f32.mrb[0].mxu0
        %v6840 = vadd.f32 %v6698, %v6839
        %v6841 = vpop.f32.mrb[0].mxu0
        %v6842 = vadd.f32 %v6700, %v6841
        %6843 = vdwg.mxu0
        %v6844 = vadd.f32 %v6769, %v1801
        %v6845 = vadd.f32 %v6771, %v1805
        %v6846 = vadd.f32 %v6840, %v1809
        %v6847 = vadd.f32 %v6842, %v1813
        %v6848 = vxor.u32 %v6844, 2147483648
        %v6849 = vmul.f32 %v6848, 1.442695
        %v6850 = vpow.pop %v6849
        %v6851 = vadd.f32 %v6850, 1.0
        %v6852 = vrcp.pop %v6851
        %v6853 = vmul.f32 1.0, %v6852
        %v6854 = vxor.u32 %v6845, 2147483648
        %v6855 = vmul.f32 %v6854, 1.442695
        %v6856 = vpow.pop %v6855
        %v6857 = vadd.f32 %v6856, 1.0
        %v6858 = vrcp.pop %v6857
        %v6859 = vmul.f32 1.0, %v6858
        %v6860 = vtanh.pop %v6846
        %v6861 = vxor.u32 %v6847, 2147483648
        %v6862 = vmul.f32 %v6861, 1.442695
        %v6863 = vpow.pop %v6862
        %v6864 = vadd.f32 %v6863, 1.0
        %v6865 = vrcp.pop %v6864
        %v6866 = vmul.f32 1.0, %v6865
        %v6867 = vmul.f32 %v6859, %v6151
        %v6868 = vmul.f32 %v6853, %v6860
        %v6869 = vadd.f32 %v6867, %v6868
        %v6870 = vtanh.pop %v6869
        %v6871 = vmul.f32 %v6866, %v6870
        %v6872 = vld [vmem:[%s10] sm:$0x1]
        %v6873 = vld [vmem:[%s11] sm:$0x1]
        %6874 = vadd.xlane.f32.xlu0 %v6871
        %v6875 = vpop.xlane.xlu0 %6874
        %v6876 = vmul.f32 %v6875, %v1154
        %v6877 = vmul.f32 %v6871, %v6871
        %6878 = vadd.xlane.f32.xlu0 %v6877
        %v6879 = vpop.xlane.xlu0 %6878
        %v6880 = vmul.f32 %v6879, %v1154
        %v6881 = vmul.f32 %v6876, %v6876
        %v6882 = vsub.f32 %v6880, %v6881
        %v6883 = vsub.f32 %v6871, %v6876
        %v6884 = vadd.f32 %v6882, 1e-05
        %v6885 = vrsqrt.pop %v6884
        %v6886 = vmul.f32 %v6883, %v6885
        %v6888 = vlaneseq
        %v6889 = vshrl.u32 %v6888, 7
        %v6890 = vsub.s32 0, %v6889
        %v6891 = vrot.slane %v6872, %v6890
        %v6893 = vmul.f32 %v6886, %v6891
        %v6895 = vlaneseq
        %v6896 = vshrl.u32 %v6895, 7
        %v6897 = vsub.s32 0, %v6896
        %v6898 = vrot.slane %v6873, %v6897
        %v6900 = vadd.f32 %v6893, %v6898
        %v6901 = vld [vmem:[#allocation11] sm:$0xff]
        %v6902 = vld [vmem:[#allocation11 + $0x8] sm:$0xff]
        %v6903 = vld [vmem:[#allocation11 + $0x10] sm:$0xff]
        %v6904 = vld [vmem:[#allocation11 + $0x18] sm:$0xff]
        %v6905 = vld [vmem:[#allocation11 + $0x20] sm:$0xff]
        %v6906 = vld [vmem:[#allocation11 + $0x28] sm:$0xff]
        %v6907 = vld [vmem:[#allocation11 + $0x30] sm:$0xff]
        %v6908 = vld [vmem:[#allocation11 + $0x38] sm:$0xff]
        %v6909 = vld [vmem:[#allocation11 + $0x40] sm:$0xff]
        %v6910 = vld [vmem:[#allocation11 + $0x48] sm:$0xff]
        %v6911 = vld [vmem:[#allocation11 + $0x50] sm:$0xff]
        %v6912 = vld [vmem:[#allocation11 + $0x58] sm:$0xff]
        %v6913 = vld [vmem:[#allocation11 + $0x60] sm:$0xff]
        %v6914 = vld [vmem:[#allocation11 + $0x68] sm:$0xff]
        %v6915 = vld [vmem:[#allocation11 + $0x70] sm:$0xff]
        %v6916 = vld [vmem:[#allocation11 + $0x78] sm:$0xff]
        %v6917 = vld [vmem:[#allocation11 + $0x80] sm:$0xff]
        %v6918 = vld [vmem:[#allocation11 + $0x88] sm:$0xff]
        %v6919 = vld [vmem:[#allocation11 + $0x90] sm:$0xff]
        %v6920 = vld [vmem:[#allocation11 + $0x98] sm:$0xff]
        %v6921 = vld [vmem:[#allocation11 + $0xa0] sm:$0xff]
        %v6922 = vld [vmem:[#allocation11 + $0xa8] sm:$0xff]
        %v6923 = vld [vmem:[#allocation11 + $0xb0] sm:$0xff]
        %v6924 = vld [vmem:[#allocation11 + $0xb8] sm:$0xff]
        %v6925 = vld [vmem:[#allocation11 + $0xc0] sm:$0xff]
        %v6926 = vld [vmem:[#allocation11 + $0xc8] sm:$0xff]
        %v6927 = vld [vmem:[#allocation11 + $0xd0] sm:$0xff]
        %v6928 = vld [vmem:[#allocation11 + $0xd8] sm:$0xff]
        %v6929 = vld [vmem:[#allocation11 + $0xe0] sm:$0xff]
        %v6930 = vld [vmem:[#allocation11 + $0xe8] sm:$0xff]
        %v6931 = vld [vmem:[#allocation11 + $0xf0] sm:$0xff]
        %v6932 = vld [vmem:[#allocation11 + $0xf8] sm:$0xff]
        %v6933 = vld [vmem:[%s13] sm:$0x3]
        %v6935 = vlaneseq
        %v6936 = vshrl.u32 %v6935, 7
        %v6937 = vsub.s32 0, %v6936
        %v6938 = vrot.slane %v6933, %v6937
        %v6939 = vlaneseq
        %v6940 = vshrl.u32 %v6939, 7
        %v6941 = vsub.s32 1, %v6940
        %v6942 = vrot.slane %v6933, %v6941
        %6945 = vmatprep.subr.mxu0 %v6902
        %6946 = vmatpush1.msra.mxu0 %v6901
        %6947 = vmatprep.subr.mxu0 %v6904
        %6948 = vmatpush1.msra.mxu0 %v6903
        %6949 = vmatprep.subr.mxu0 %v6906
        %6950 = vmatpush1.msra.mxu0 %v6905
        %6951 = vmatprep.subr.mxu0 %v6908
        %6952 = vmatpush1.msra.mxu0 %v6907
        %6953 = vmatprep.subr.mxu0 %v6910
        %6954 = vmatpush1.msra.mxu0 %v6909
        %6955 = vmatprep.subr.mxu0 %v6912
        %6956 = vmatpush1.msra.mxu0 %v6911
        %6957 = vmatprep.subr.mxu0 %v6914
        %6958 = vmatpush1.msra.mxu0 %v6913
        %6959 = vmatprep.subr.mxu0 %v6916
        %6960 = vmatpush1.msra.mxu0 %v6915
        %6961 = vmatprep.subr.mxu0 %v6918
        %6962 = vmatpush1.msra.mxu0 %v6917
        %6963 = vmatprep.subr.mxu0 %v6920
        %6964 = vmatpush1.msra.mxu0 %v6919
        %6965 = vmatprep.subr.mxu0 %v6922
        %6966 = vmatpush1.msra.mxu0 %v6921
        %6967 = vmatprep.subr.mxu0 %v6924
        %6968 = vmatpush1.msra.mxu0 %v6923
        %6969 = vmatprep.subr.mxu0 %v6926
        %6970 = vmatpush1.msra.mxu0 %v6925
        %6971 = vmatprep.subr.mxu0 %v6928
        %6972 = vmatpush1.msra.mxu0 %v6927
        %6973 = vmatprep.subr.mxu0 %v6930
        %6974 = vmatpush1.msra.mxu0 %v6929
        %6975 = vmatprep.subr.mxu0 %v6932
        %6976 = vmatpush1.msra.mxu0 %v6931
        %6977 = vmatprep.subr.mxu0 0.0
        %6978 = vmatpush1.msra.mxu0 0.0
        %6979 = vmatprep.subr.mxu0 0.0
        %6980 = vmatpush1.msra.mxu0 0.0
        %6981 = vmatprep.subr.mxu0 0.0
        %6982 = vmatpush1.msra.mxu0 0.0
        %6983 = vmatprep.subr.mxu0 0.0
        %6984 = vmatpush1.msra.mxu0 0.0
        %6985 = vmatprep.subr.mxu0 0.0
        %6986 = vmatpush1.msra.mxu0 0.0
        %6987 = vmatprep.subr.mxu0 0.0
        %6988 = vmatpush1.msra.mxu0 0.0
        %6989 = vmatprep.subr.mxu0 0.0
        %6990 = vmatpush1.msra.mxu0 0.0
        %6991 = vmatprep.subr.mxu0 0.0
        %6992 = vmatpush1.msra.mxu0 0.0
        %6993 = vmatprep.subr.mxu0 0.0
        %6994 = vmatpush1.msra.mxu0 0.0
        %6995 = vmatprep.subr.mxu0 0.0
        %6996 = vmatpush1.msra.mxu0 0.0
        %6997 = vmatprep.subr.mxu0 0.0
        %6998 = vmatpush1.msra.mxu0 0.0
        %6999 = vmatprep.subr.mxu0 0.0
        %7000 = vmatpush1.msra.mxu0 0.0
        %7001 = vmatprep.subr.mxu0 0.0
        %7002 = vmatpush1.msra.mxu0 0.0
        %7003 = vmatprep.subr.mxu0 0.0
        %7004 = vmatpush1.msra.mxu0 0.0
        %7005 = vmatprep.subr.mxu0 0.0
        %7006 = vmatpush1.msra.mxu0 0.0
        %7007 = vmatprep.subr.mxu0 0.0
        %7008 = vmatpush1.msra.mxu0 0.0
        %7009 = vmatprep.mubr.f32.mxu0 0.0
        %7010 = vmatmul.mubr.f32.gmra.mrb[0].mxu0 %v6900
        %v7011 = vpop.f32.mrb[0].mxu0
        %v7012 = vadd.f32 %v6938, %v7011
        %v7013 = vpop.f32.mrb[0].mxu0
        %v7014 = vadd.f32 %v6942, %v7013
        %7015 = vdwg.mxu0
        %v7016 = vmax.f32 %v7012, %v7014
        %7017 = vmax.xlane.f32.xlu0 %v7016
        %v7018 = vpop.xlane.xlu0 %7017
        %v7019 = vsub.f32 %v7012, %v7018
        %v7020 = vsub.f32 %v7014, %v7018
        %v7021 = vmul.f32 %v7019, 1.442695
        %v7022 = vpow.pop %v7021
        %v7023 = vmul.f32 %v7020, 1.442695
        %v7024 = vpow.pop %v7023
        %v7025 = vadd.f32 %v7022, %v7024
        %7026 = vadd.xlane.f32.xlu0 %v7025
        %v7027 = vpop.xlane.xlu0 %7026
        %v7028 = vlog2.pop %v7027
        %v7029 = vmul.f32 %v7028, 0.6931472
        %v7030 = vsub.f32 %v7019, %v7029
        %v7031 = vsub.f32 %v7020, %v7029
        %7032 = vst [vmem:[%s752] sm:$0xff] %v7030
        %7033 = vst [vmem:[%s752 + $0x8] sm:$0xff] %v7031
        %7034 = vst [vmem:[%s759] sm:$0xff] %v6559
        %7035 = vst [vmem:[%s766] sm:$0xff] %v6557
        %s7036 = scalar_lea.vmem %s759, 8 [#allocation16]
        %7037 = vst [vmem:[%s7036] sm:$0xff] %v6871
        %s7038 = scalar_lea.vmem %s766, 8 [#allocation18]
        %7039 = vst [vmem:[%s7038] sm:$0xff] %v6869
        %s7040 = sand.u32 %s399, 1
        %s7041 = scalar_lea.sflag [#allocation4], %s7040
        %s7042 = sand.u32 %s399, 1
        %s7043 = smul.addr %s7042, 16
        %s7044 = scalar_lea.vmem [#allocation15], %s7043
        %s7045 = sand.u32 %s40, 1
        %s7046 = scalar_lea.sflag [#allocation17], %s7045
        %s7047 = sand.u32 %s425, 1
        %s7048 = smul.addr %s7047, 16
        %s7049 = scalar_lea.vmem [#allocation16], %s7048
        %s7050 = sand.u32 %s40, 1
        %s7051 = scalar_lea.sflag [#allocation17], %s7050
        %s7052 = sand.u32 %s451, 1
        %s7053 = smul.addr %s7052, 16
        %s7054 = scalar_lea.vmem [#allocation18], %s7053
        // Predicated region
        $region151: #{tpu_custom_call.1} parent=117 // pred_check
          %p7055 = pneg %p409
        $region152: #{tpu_custom_call.1} parent=117 // pred_check_branch
          %7057 = sbr.rel (%p7055) target = $region154
        $region153: #{tpu_custom_call.1} parent=117 // pred_region
          %s7059 = ssub.s32 256, 256
          %7060 = vsyncadd %s7041, %s7059
          %s7061 = smul.addr %s40, 2
          %s7062 = smul.addr %s7061, 128
          %s7063 = scalar_lea.hbm %s16, %s7062
          %s7065 = sshll.u32 %s7044, 4
          %s7066 = int_to_ptr.vmem [resolvable:$true] %s7065
          %7068 = dma.vmem_to_hbm [thread:$0]  %s7066, 256, %s7063, %s7041
        $region154: #{tpu_custom_call.1} parent=117 // pred_fallthru
          _
        // Predicated region
        $region155: #{tpu_custom_call.1} parent=117 // pred_check
          %p7069 = pneg %p435
        $region156: #{tpu_custom_call.1} parent=117 // pred_check_branch
          %7071 = sbr.rel (%p7069) target = $region158
        $region157: #{tpu_custom_call.1} parent=117 // pred_region
          %s7073 = ssub.s32 256, 256
          %7074 = vsyncadd %s7046, %s7073
          %s7075 = smul.addr %s40, 128
          %s7076 = scalar_lea.hbm %s17, %s7075
          %s7077 = sshll.u32 %s7049, 4
          %s7078 = int_to_ptr.vmem [resolvable:$true] %s7077
          %7083 = dma.vmem_to_hbm [thread:$0]  %s7078, 256, %s7076, %s7046, 128, 512, 8
        $region158: #{tpu_custom_call.1} parent=117 // pred_fallthru
          _
        // Predicated region
        $region159: #{tpu_custom_call.1} parent=117 // pred_check
          %p7084 = pneg %p461
        $region160: #{tpu_custom_call.1} parent=117 // pred_check_branch
          %7086 = sbr.rel (%p7084) target = $region162
        $region161: #{tpu_custom_call.1} parent=117 // pred_region
          %s7088 = ssub.s32 256, 256
          %7089 = vsyncadd %s7051, %s7088
          %s7090 = smul.addr %s40, 128
          %s7091 = scalar_lea.hbm %s18, %s7090
          %s7092 = sshll.u32 %s7054, 4
          %s7093 = int_to_ptr.vmem [resolvable:$true] %s7092
          %7098 = dma.vmem_to_hbm [thread:$0]  %s7093, 256, %s7091, %s7051, 128, 512, 8
        $region162: #{tpu_custom_call.1} parent=117 // pred_fallthru
          _
      $region118: #{tpu_custom_call.1} parent=5 // pred_fallthru
        _
      %p7099 = scmp.le.s32.totalorder 2, %s35
      // Predicated region
      $region163: #{tpu_custom_call.1} parent=5 // pred_check
        %p7100 = pneg %p7099
      $region164: #{tpu_custom_call.1} parent=5 // pred_check_branch
        %7102 = sbr.rel (%p7100) target = $region166
      $region165: #{tpu_custom_call.1} parent=5 // pred_region
        %s7103 = ssub.s32 %s35, 2
        // Predicated region
        $region167: #{tpu_custom_call.1} parent=165 // pred_check
          %p7104 = pneg %p415
        $region168: #{tpu_custom_call.1} parent=165 // pred_check_branch
          %7106 = sbr.rel (%p7104) target = $region170
        $region169: #{tpu_custom_call.1} parent=165 // pred_region
          %s7107 = sand.u32 %s400, 1
          %s7108 = scalar_lea.sflag [#allocation4], %s7107
          %s7109 = sand.u32 %s400, 1
          %s7110 = smul.addr %s7109, 16
          %s7111 = scalar_lea.vmem [#allocation15], %s7110
          %7112 = dma.done %s7108, 256
        $region170: #{tpu_custom_call.1} parent=165 // pred_fallthru
          _
        // Predicated region
        $region171: #{tpu_custom_call.1} parent=165 // pred_check
          %p7113 = pneg %p441
        $region172: #{tpu_custom_call.1} parent=165 // pred_check_branch
          %7115 = sbr.rel (%p7113) target = $region174
        $region173: #{tpu_custom_call.1} parent=165 // pred_region
          %s7116 = sand.u32 %s41, 1
          %s7117 = scalar_lea.sflag [#allocation17], %s7116
          %s7118 = sand.u32 %s426, 1
          %s7119 = smul.addr %s7118, 16
          %s7120 = scalar_lea.vmem [#allocation16], %s7119
          %7121 = dma.done %s7117, 256
        $region174: #{tpu_custom_call.1} parent=165 // pred_fallthru
          _
        // Predicated region
        $region175: #{tpu_custom_call.1} parent=165 // pred_check
          %p7122 = pneg %p467
        $region176: #{tpu_custom_call.1} parent=165 // pred_check_branch
          %7124 = sbr.rel (%p7122) target = $region178
        $region177: #{tpu_custom_call.1} parent=165 // pred_region
          %s7125 = sand.u32 %s41, 1
          %s7126 = scalar_lea.sflag [#allocation17], %s7125
          %s7127 = sand.u32 %s452, 1
          %s7128 = smul.addr %s7127, 16
          %s7129 = scalar_lea.vmem [#allocation18], %s7128
          %7130 = dma.done %s7126, 256
        $region178: #{tpu_custom_call.1} parent=165 // pred_fallthru
          _
      $region166: #{tpu_custom_call.1} parent=5 // pred_fallthru
        _
    $region6: #{tpu_custom_call.1} parent=1 // loop_footer
      %s39 = sadd.s32 1, %s35
    $region7: #{tpu_custom_call.1} parent=1 // loop_footer_branch
      %34 = sbr.rel target = $region3
    $region8: #{tpu_custom_call.1} parent=1 // loop_exit
      _
    %7131 = vsyncpa [#allocation3], 1
    %s7132 = scalar_lea.sflag [#allocation3], 1
    %7133 = vsyncpa %s7132, 1
    %7134 = vsyncpa [#allocation6], 1
    %7135 = vsyncpa [#allocation9], 1
    %7136 = vsyncpa [#allocation12], 1
    %7137 = vsyncpa [#allocation4], 1
    %s7138 = scalar_lea.sflag [#allocation4], 1
    %7139 = vsyncpa %s7138, 1
    %7140 = vsyncpa [#allocation17], 1
    %s7141 = scalar_lea.sflag [#allocation17], 1
    %7142 = vsyncpa %s7141, 1

</llo_original>
